<compile_context>
chip_gen: v5e
topology: v5e:2x2
jax: 0.10.0
libtpu: 0.0.40
codegen_flags: <defaults>
</compile_context>

<pallas_src>
import jax
import jax.numpy as jnp
import numpy as np
from jax import lax
from jax.experimental import pallas as pl
from jax.experimental.pallas import tpu as pltpu


# --------------------------------------------------------------------------- #
# Pallas kernel                                                               #
# --------------------------------------------------------------------------- #
def _elastic_kernel(x_ref, w1_ref, o1_ref, w2_ref, o2_ref, out_ref):
    neg = 0.01                                     # LeakyReLU(0.01)
    _, H, W, C1 = x_ref.shape                      # unpadded NHWC input block
    Cmid = w1_ref.shape[1]                         # = c1 // 4
    ph, pw = H % 2, W % 2                          # static
    He, We = H + ph, W + pw
    Hd, Wd = He // 2, We // 2
    n_hi, n_lo = H * W, Hd * Wd

    w1 = w1_ref[...]                               # (C1, Cmid)        bf16, BN1 scale folded
    o1 = o1_ref[...]                               # (1, Cmid)         f32 folded BN1 bias
    w2 = w2_ref[...]                               # (3, 3, Cmid, C1)  bf16, BN2 scale folded
    o2 = o2_ref[...]                               # (1, C1)           f32 folded BN2 bias

    def lrelu(v):
        return jnp.where(v > 0, v, neg * v)

    x32 = x_ref[0].astype(jnp.float32)             # (H, W, C1)

    # ---- replicate-pad to even sizes, in VMEM (no wrapper-side HBM pad pass) -
    xe = x32
    if ph:
        xe = jnp.concatenate([xe, xe[H - 1:H]], axis=0)
    if pw:
        xe = jnp.concatenate([xe, xe[:, W - 1:W]], axis=1)

    # ---- AvgPool2d(2, 2) -----------------------------------------------------
    xr = xe.reshape(Hd, 2, We, C1)
    rows = xr[:, 0] + xr[:, 1]                                   # (Hd, We, C1)
    rr = rows.reshape(Hd, Wd, 2, C1)
    pooled = 0.25 * (rr[:, :, 0] + rr[:, :, 1])                  # (Hd, Wd, C1)

    # ---- layer1: 1x1 conv (bf16 MXU) + folded-BN bias + LeakyReLU ------------
    def layer1(v_mat):                                           # (n, C1) -> (n, Cmid)
        z = jnp.dot(v_mat.astype(jnp.bfloat16), w1,
                    preferred_element_type=jnp.float32)
        return lrelu(z + o1)

    h_hi = layer1(x32.reshape(n_hi, C1))                         # (n_hi, Cmid)
    h_lo = layer1(pooled.reshape(n_lo, C1))                      # (n_lo, Cmid)

    # ---- layer2: 3x3 conv, zero pad 1, via XLU rolls + iota edge masks -------
    # Activations stay flat (n, C).  Column (+/-1) taps and row (+/-W) shifts are
    # pltpu.roll sublane rotations; wrapped elements are zeroed with iota masks, which
    # reproduces the zero padding without any unaligned slices or pad copies.
    def layer2(h_mat, ww):                                       # (n, Cmid) -> (n, C1)
        n = h_mat.shape[0]
        idx = lax.broadcasted_iota(jnp.int32, (n, 1), 0)         # flat pixel index
        col = idx % ww
        left = jnp.where(col == 0, 0.0,
                         pltpu.roll(h_mat, shift=1, axis=0))     # h[i, j-1]
        right = jnp.where(col == ww - 1, 0.0,
                          pltpu.roll(h_mat, shift=n - 1, axis=0))  # h[i, j+1]
        taps = (left.astype(jnp.bfloat16),
                h_mat.astype(jnp.bfloat16),
                right.astype(jnp.bfloat16))

        def tap_dot(kr):                                         # sum over kernel columns
            return (jnp.dot(taps[0], w2[kr, 0], preferred_element_type=jnp.float32)
                    + jnp.dot(taps[1], w2[kr, 1], preferred_element_type=jnp.float32)
                    + jnp.dot(taps[2], w2[kr, 2], preferred_element_type=jnp.float32))

        top, mid, bot = tap_dot(0), tap_dot(1), tap_dot(2)
        # kernel row 0 uses input row i-1; kernel row 2 uses input row i+1.
        top = jnp.where(idx < ww, 0.0, pltpu.roll(top, shift=ww, axis=0))
        bot = jnp.where(idx >= n - ww, 0.0, pltpu.roll(bot, shift=n - ww, axis=0))
        return lrelu(top + mid + bot + o2)

    half = layer2(h_hi, W).reshape(H, W, C1)
    low = layer2(h_lo, Wd).reshape(Hd, Wd, C1)

    # ---- bilinear x2 upsample of the low branch (align_corners=False) --------
    # Separable fixed-weight taps: even output = 0.75*v[k] + 0.25*v[k-1],
    # odd output = 0.75*v[k] + 0.25*v[k+1], edges clamped (PyTorch semantics).
    prev_h = jnp.concatenate([low[:1], low[:-1]], axis=0)        # major-axis shift: cheap
    next_h = jnp.concatenate([low[1:], low[-1:]], axis=0)
    uph = jnp.stack([0.75 * low + 0.25 * prev_h,
                     0.75 * low + 0.25 * next_h], axis=1).reshape(2 * Hd, Wd, C1)

    wcol = lax.broadcasted_iota(jnp.int32, (2 * Hd, Wd, 1), 1)
    prev_w = jnp.where(wcol == 0, uph,
                       pltpu.roll(uph, shift=1, axis=1))         # clamp at col 0
    next_w = jnp.where(wcol == Wd - 1, uph,
                       pltpu.roll(uph, shift=Wd - 1, axis=1))    # clamp at col Wd-1
    up = jnp.stack([0.75 * uph + 0.25 * prev_w,
                    0.75 * uph + 0.25 * next_w], axis=2).reshape(2 * Hd, 2 * Wd, C1)
    up = up[:H, :W]                                              # crop if H or W odd

    out = up + half + x32                                        # residual add
    # Lane-dense store: last dim W*C1 instead of C1 (avoids masked sub-128-lane stores).
    out_ref[0] = out.reshape(H, W * C1).astype(out_ref.dtype)


# --------------------------------------------------------------------------- #
# Wrapper                                                                     #
# --------------------------------------------------------------------------- #
def _vmem_limit_bytes(requested):
    """Clamp the requested scoped-VMEM limit to 3/4 of this chip's physical VMEM."""
    cap = 64 * 1024 * 1024                         # v7x per-TensorCore (the smallest)
    try:
        info = pltpu.get_tpu_info()
        cap = int(getattr(info, "vmem_capacity_bytes", cap))
    except Exception:
        pass
    return int(min(max(int(requested), 8 * 1024 * 1024), (cap * 3) // 4))


def elastic_forward(x, w1, w2, bn1, bn2, *, eps=1e-5):
    """Elastic.forward.

    x  : (B, C1, H, W)        NCHW, like PyTorch
    w1 : (C1//4, C1, 1, 1)    layer1 conv weight (OIHW, bias=False)
    w2 : (C1, C1//4, 3, 3)    layer2 conv weight (OIHW, bias=False)
    bn1, bn2 : (gamma, beta, running_mean, running_var)  (eval-mode BatchNorm)
    Returns (B, C1, H, W).
    """
    B, C1, H, W = x.shape
    Cmid = w1.shape[0]
    ph, pw = H % 2, W % 2
    Hd, Wd = (H + ph) // 2, (W + pw) // 2

    g1, b1, m1, v1 = bn1
    g2, b2, m2, v2 = bn2
    s1 = g1 / jnp.sqrt(v1 + eps)
    s2 = g2 / jnp.sqrt(v2 + eps)

    # Fold BN scales into the conv weights; feed the MXU bf16 operands.
    w1k = jnp.transpose(w1[:, :, 0, 0] * s1[:, None], (1, 0)).astype(jnp.bfloat16)
    w2k = jnp.transpose(w2 * s2[:, None, None, None], (2, 3, 1, 0)).astype(jnp.bfloat16)
    o1k = (b1 - m1 * s1).reshape(1, Cmid).astype(jnp.float32)
    o2k = (b2 - m2 * s2).reshape(1, C1).astype(jnp.float32)

    # NHWC so channels sit on the 128-wide lane axis and both convs are MXU matmuls.
    x_nhwc = jnp.transpose(x, (0, 2, 3, 1))

    itemsize = jnp.dtype(x.dtype).itemsize
    flops = 2 * B * (H * W + Hd * Wd) * (C1 * Cmid + 9 * Cmid * C1)
    bytes_accessed = (2 * B * H * W * C1 * itemsize
                      + 2 * (w1k.size + w2k.size) + 4 * (o1k.size + o2k.size))

    img_f32 = H * W * C1 * 4
    vmem_need = (4 * H * W * C1 * itemsize          # double-buffered in/out blocks
                 + 14 * img_f32                     # f32/bf16 intermediates in VMEM
                 + 2 * (w1k.size + w2k.size) + 4 * (o1k.size + o2k.size)
                 + (2 << 20))                       # headroom

    out_flat = pl.pallas_call(
        _elastic_kernel,
        grid=(B,),
        in_specs=[
            pl.BlockSpec((1, H, W, C1), lambda b: (b, 0, 0, 0)),     # streamed per image
            pl.BlockSpec((C1, Cmid), lambda b: (0, 0)),              # weights stay resident
            pl.BlockSpec((1, Cmid), lambda b: (0, 0)),
            pl.BlockSpec((3, 3, Cmid, C1), lambda b: (0, 0, 0, 0)),
            pl.BlockSpec((1, C1), lambda b: (0, 0)),
        ],
        out_specs=pl.BlockSpec((1, H, W * C1), lambda b: (b, 0, 0)),  # lane-dense output
        out_shape=jax.ShapeDtypeStruct((B, H, W * C1), x.dtype),
        compiler_params=pltpu.CompilerParams(
            dimension_semantics=("parallel",),
            vmem_limit_bytes=_vmem_limit_bytes(vmem_need)),
        cost_estimate=pl.CostEstimate(flops=int(flops), transcendentals=0,
                                      bytes_accessed=int(bytes_accessed)),
    )(x_nhwc, w1k, o1k, w2k, o2k)

    return jnp.transpose(out_flat.reshape(B, H, W, C1), (0, 3, 1, 2))


# --------------------------------------------------------------------------- #
# Pure-JAX reference (mirrors the PyTorch module, eval-mode BN)               #
# --------------------------------------------------------------------------- #
def _bilinear_up2_ref(y):
    _, _, h, w = y.shape

    def taps(n_in):
        o = jnp.arange(2 * n_in, dtype=jnp.float32)
        src = jnp.clip((o + 0.5) / 2.0 - 0.5, 0.0, None)
        i0 = jnp.floor(src).astype(jnp.int32)
        i1 = jnp.minimum(i0 + 1, n_in - 1)
        lam = src - i0.astype(jnp.float32)
        return i0, i1, lam

    r0, r1, lr = taps(h)
    c0, c1, lc = taps(w)
    yr = (y[:, :, r0, :] * (1.0 - lr)[None, None, :, None]
          + y[:, :, r1, :] * lr[None, None, :, None])
    return (yr[:, :, :, c0] * (1.0 - lc)[None, None, None, :]
            + yr[:, :, :, c1] * lc[None, None, None, :])


def elastic_ref(x, w1, w2, bn1, bn2, *, eps=1e-5, neg_slope=0.01):
    B, C1, H, W = x.shape

    def conv_bn_act(y, w, bn, pad):
        g, b, m, v = bn
        z = lax.conv_general_dilated(
            y, w, window_strides=(1, 1), padding=[(pad, pad), (pad, pad)],
            dimension_numbers=("NCHW", "OIHW", "NCHW"),
            precision=lax.Precision.HIGHEST)
        s = g / jnp.sqrt(v + eps)
        z = z * s[None, :, None, None] + (b - m * s)[None, :, None, None]
        return jnp.where(z > 0, z, neg_slope * z)

    ph, pw = H % 2, W % 2
    xe = jnp.pad(x, ((0, 0), (0, 0), (0, ph), (0, pw)), mode="edge")
    He, We = H + ph, W + pw
    down = xe.reshape(B, C1, He // 2, 2, We // 2, 2).mean(axis=(3, 5))
    el = conv_bn_act(down, w1, bn1, 0)
    el = conv_bn_act(el, w2, bn2, 1)
    up = _bilinear_up2_ref(el)[:, :, :H, :W]
    half = conv_bn_act(x, w1, bn1, 0)
    half = conv_bn_act(half, w2, bn2, 1)
    return up + half + x


# --------------------------------------------------------------------------- #
# Self-test                                                                   #
# --------------------------------------------------------------------------- #
if __name__ == "__main__":
    B, C1, H, W = 2, 8, 16, 16
    C2 = C1 // 2
    Cmid = C2 // 2                      # layer1 output channels = c1 // 4

    key = jax.random.PRNGKey(0)
    ks = jax.random.split(key, 11)
    x = jax.random.normal(ks[0], (B, C1, H, W), dtype=jnp.float32)
    w1 = 0.4 * jax.random.normal(ks[1], (Cmid, C1, 1, 1), dtype=jnp.float32)
    w2 = 0.2 * jax.random.normal(ks[2], (C1, Cmid, 3, 3), dtype=jnp.float32)
    bn1 = (1.0 + 0.1 * jax.random.normal(ks[3], (Cmid,), dtype=jnp.float32),
           0.1 * jax.random.normal(ks[4], (Cmid,), dtype=jnp.float32),
           0.1 * jax.random.normal(ks[5], (Cmid,), dtype=jnp.float32),
           0.5 + jnp.abs(jax.random.normal(ks[6], (Cmid,), dtype=jnp.float32)))
    bn2 = (1.0 + 0.1 * jax.random.normal(ks[7], (C1,), dtype=jnp.float32),
           0.1 * jax.random.normal(ks[8], (C1,), dtype=jnp.float32),
           0.1 * jax.random.normal(ks[9], (C1,), dtype=jnp.float32),
           0.5 + jnp.abs(jax.random.normal(ks[10], (C1,), dtype=jnp.float32)))

    out = jax.block_until_ready(jax.jit(elastic_forward)(x, w1, w2, bn1, bn2))
    ref = jax.block_until_ready(elastic_ref(x, w1, w2, bn1, bn2))

    assert out.shape == (B, C1, H, W), out.shape
    # bf16 MXU operands (f32 accumulation) vs an f32 HIGHEST-precision reference.
    np.testing.assert_allclose(np.asarray(out), np.asarray(ref),
                               rtol=3e-2, atol=3e-2)
    print("KERNEL_OK")
</pallas_src>

<mosaic_0001>
module attributes {stable_mosaic.version = 11 : i64} {
  func.func @_elastic_kernel(%arg0: i32, %arg1: memref<1x16x16x8xf32, #tpu.memory_space<vmem>>, %arg2: memref<8x2xbf16, #tpu.memory_space<vmem>>, %arg3: memref<1x2xf32, #tpu.memory_space<vmem>>, %arg4: memref<3x3x2x8xbf16, #tpu.memory_space<vmem>>, %arg5: memref<1x8xf32, #tpu.memory_space<vmem>>, %arg6: memref<1x16x128xf32, #tpu.memory_space<vmem>>) attributes {dimension_semantics = [#tpu.dimension_semantics<parallel>], iteration_bounds = array<i64: 2>, scalar_prefetch = 0 : i64, scratch_operands = 0 : i64, tpu.core_type = #tpu.core_type<tc>, window_params = [{transform_indices = @transform_0, window_bounds = array<i64: 1, 16, 16, 8>}, {pipeline_mode = #tpu.pipeline_mode<synchronous>, transform_indices = @transform_1, window_bounds = array<i64: 8, 2>}, {pipeline_mode = #tpu.pipeline_mode<synchronous>, transform_indices = @transform_2, window_bounds = array<i64: 1, 2>}, {pipeline_mode = #tpu.pipeline_mode<synchronous>, transform_indices = @transform_3, window_bounds = array<i64: 3, 3, 2, 8>}, {pipeline_mode = #tpu.pipeline_mode<synchronous>, transform_indices = @transform_4, window_bounds = array<i64: 1, 8>}, {transform_indices = @transform_5, window_bounds = array<i64: 1, 16, 128>}]} {
    %c0 = arith.constant 0 : index
    %c0_0 = arith.constant 0 : index
    %0 = vector.load %arg2[%c0, %c0_0] : memref<8x2xbf16, #tpu.memory_space<vmem>>, vector<8x2xbf16>
    %c0_1 = arith.constant 0 : index
    %c0_2 = arith.constant 0 : index
    %1 = vector.load %arg3[%c0_1, %c0_2] : memref<1x2xf32, #tpu.memory_space<vmem>>, vector<1x2xf32>
    %c0_3 = arith.constant 0 : index
    %c0_4 = arith.constant 0 : index
    %c0_5 = arith.constant 0 : index
    %c0_6 = arith.constant 0 : index
    %2 = vector.load %arg4[%c0_3, %c0_4, %c0_5, %c0_6] : memref<3x3x2x8xbf16, #tpu.memory_space<vmem>>, vector<3x3x2x8xbf16>
    %c0_7 = arith.constant 0 : index
    %c0_8 = arith.constant 0 : index
    %3 = vector.load %arg5[%c0_7, %c0_8] : memref<1x8xf32, #tpu.memory_space<vmem>>, vector<1x8xf32>
    %c0_9 = arith.constant 0 : index
    %c0_10 = arith.constant 0 : index
    %c0_11 = arith.constant 0 : index
    %c0_12 = arith.constant 0 : index
    %4 = vector.load %arg1[%c0_9, %c0_10, %c0_11, %c0_12] : memref<1x16x16x8xf32, #tpu.memory_space<vmem>>, vector<1x16x16x8xf32>
    %5 = vector.shape_cast %4 : vector<1x16x16x8xf32> to vector<16x16x8xf32>
    %6 = vector.shape_cast %5 : vector<16x16x8xf32> to vector<8x2x16x8xf32>
    %7 = vector.extract_strided_slice %6 {offsets = [0, 0, 0, 0], sizes = [8, 1, 16, 8], strides = [1, 1, 1, 1]} : vector<8x2x16x8xf32> to vector<8x1x16x8xf32>
    %8 = vector.shape_cast %7 : vector<8x1x16x8xf32> to vector<8x16x8xf32>
    %9 = vector.extract_strided_slice %6 {offsets = [0, 1, 0, 0], sizes = [8, 1, 16, 8], strides = [1, 1, 1, 1]} : vector<8x2x16x8xf32> to vector<8x1x16x8xf32>
    %10 = vector.shape_cast %9 : vector<8x1x16x8xf32> to vector<8x16x8xf32>
    %11 = arith.addf %8, %10 : vector<8x16x8xf32>
    %12 = vector.shape_cast %11 : vector<8x16x8xf32> to vector<8x8x2x8xf32>
    %13 = vector.extract_strided_slice %12 {offsets = [0, 0, 0, 0], sizes = [8, 8, 1, 8], strides = [1, 1, 1, 1]} : vector<8x8x2x8xf32> to vector<8x8x1x8xf32>
    %14 = vector.shape_cast %13 : vector<8x8x1x8xf32> to vector<8x8x8xf32>
    %15 = vector.extract_strided_slice %12 {offsets = [0, 0, 1, 0], sizes = [8, 8, 1, 8], strides = [1, 1, 1, 1]} : vector<8x8x2x8xf32> to vector<8x8x1x8xf32>
    %16 = vector.shape_cast %15 : vector<8x8x1x8xf32> to vector<8x8x8xf32>
    %17 = arith.addf %14, %16 : vector<8x8x8xf32>
    %cst = arith.constant 2.500000e-01 : f32
    %18 = vector.broadcast %cst : f32 to vector<8x8x8xf32>
    %19 = arith.mulf %18, %17 : vector<8x8x8xf32>
    %20 = vector.shape_cast %5 : vector<16x16x8xf32> to vector<256x8xf32>
    %21 = arith.truncf %20 : vector<256x8xf32> to vector<256x8xbf16>
    %cst_13 = arith.constant dense<0.000000e+00> : vector<256x2xf32>
    %22 = tpu.matmul %21, %0, %cst_13 {dimension_numbers = #tpu.dot_dimension_numbers<[1], [0], [0], [1], [0, 0, 1, 1], [], []>} : vector<256x8xbf16>, vector<8x2xbf16>, vector<256x2xf32> -> vector<256x2xf32>
    %23 = vector.broadcast %1 : vector<1x2xf32> to vector<256x2xf32>
    %24 = arith.addf %22, %23 : vector<256x2xf32>
    %cst_14 = arith.constant 0.000000e+00 : f32
    %25 = vector.broadcast %cst_14 : f32 to vector<256x2xf32>
    %26 = arith.cmpf ogt, %24, %25 : vector<256x2xf32>
    %cst_15 = arith.constant 0.00999999977 : f32
    %27 = vector.broadcast %cst_15 : f32 to vector<256x2xf32>
    %28 = arith.mulf %27, %24 : vector<256x2xf32>
    %29 = arith.select %26, %24, %28 : vector<256x2xi1>, vector<256x2xf32>
    %30 = vector.shape_cast %19 : vector<8x8x8xf32> to vector<64x8xf32>
    %31 = arith.truncf %30 : vector<64x8xf32> to vector<64x8xbf16>
    %cst_16 = arith.constant dense<0.000000e+00> : vector<64x2xf32>
    %32 = tpu.matmul %31, %0, %cst_16 {dimension_numbers = #tpu.dot_dimension_numbers<[1], [0], [0], [1], [0, 0, 1, 1], [], []>} : vector<64x8xbf16>, vector<8x2xbf16>, vector<64x2xf32> -> vector<64x2xf32>
    %33 = vector.broadcast %1 : vector<1x2xf32> to vector<64x2xf32>
    %34 = arith.addf %32, %33 : vector<64x2xf32>
    %cst_17 = arith.constant 0.000000e+00 : f32
    %35 = vector.broadcast %cst_17 : f32 to vector<64x2xf32>
    %36 = arith.cmpf ogt, %34, %35 : vector<64x2xf32>
    %cst_18 = arith.constant 0.00999999977 : f32
    %37 = vector.broadcast %cst_18 : f32 to vector<64x2xf32>
    %38 = arith.mulf %37, %34 : vector<64x2xf32>
    %39 = arith.select %36, %34, %38 : vector<64x2xi1>, vector<64x2xf32>
    %40 = tpu.iota {dimensions = array<i32: 0>} : vector<256x1xi32>
    %c16_i32 = arith.constant 16 : i32
    %c0_i32 = arith.constant 0 : i32
    %41 = arith.cmpi eq, %c16_i32, %c0_i32 : i32
    %c1_i32 = arith.constant 1 : i32
    %42 = arith.select %41, %c1_i32, %c16_i32 : i32
    %43 = vector.broadcast %42 : i32 to vector<256x1xi32>
    %44 = arith.remsi %40, %43 : vector<256x1xi32>
    %c0_i32_19 = arith.constant 0 : i32
    %45 = vector.broadcast %c0_i32_19 : i32 to vector<256x1xi32>
    %46 = arith.cmpi ne, %44, %45 : vector<256x1xi32>
    %c0_i32_20 = arith.constant 0 : i32
    %47 = vector.broadcast %c0_i32_20 : i32 to vector<256x1xi32>
    %48 = arith.cmpi slt, %44, %47 : vector<256x1xi32>
    %c0_i32_21 = arith.constant 0 : i32
    %49 = arith.cmpi slt, %42, %c0_i32_21 : i32
    %50 = vector.broadcast %49 : i1 to vector<256x1xi1>
    %51 = vector.broadcast %50 : vector<256x1xi1> to vector<256x1xi1>
    %52 = arith.xori %48, %51 : vector<256x1xi1>
    %53 = arith.andi %52, %46 : vector<256x1xi1>
    %54 = vector.broadcast %42 : i32 to vector<256x1xi32>
    %55 = arith.addi %44, %54 : vector<256x1xi32>
    %56 = arith.select %53, %55, %44 : vector<256x1xi1>, vector<256x1xi32>
    %c0_i32_22 = arith.constant 0 : i32
    %57 = vector.broadcast %c0_i32_22 : i32 to vector<256x1xi32>
    %58 = arith.cmpi eq, %56, %57 : vector<256x1xi32>
    %c1_i32_23 = arith.constant 1 : i32
    %59 = tpu.dynamic_rotate %29 by %c1_i32_23 dim 0 : vector<256x2xf32>, i32 -> vector<256x2xf32>
    %cst_24 = arith.constant 0.000000e+00 : f32
    %60 = vector.shape_cast %58 : vector<256x1xi1> to vector<256x1xi1>
    %61 = vector.broadcast %60 : vector<256x1xi1> to vector<256x2xi1>
    %62 = vector.broadcast %cst_24 : f32 to vector<256x2xf32>
    %63 = arith.select %61, %62, %59 : vector<256x2xi1>, vector<256x2xf32>
    %c15_i32 = arith.constant 15 : i32
    %64 = vector.broadcast %c15_i32 : i32 to vector<256x1xi32>
    %65 = arith.cmpi eq, %56, %64 : vector<256x1xi32>
    %c255_i32 = arith.constant 255 : i32
    %66 = tpu.dynamic_rotate %29 by %c255_i32 dim 0 : vector<256x2xf32>, i32 -> vector<256x2xf32>
    %cst_25 = arith.constant 0.000000e+00 : f32
    %67 = vector.shape_cast %65 : vector<256x1xi1> to vector<256x1xi1>
    %68 = vector.broadcast %67 : vector<256x1xi1> to vector<256x2xi1>
    %69 = vector.broadcast %cst_25 : f32 to vector<256x2xf32>
    %70 = arith.select %68, %69, %66 : vector<256x2xi1>, vector<256x2xf32>
    %71 = arith.truncf %63 : vector<256x2xf32> to vector<256x2xbf16>
    %72 = arith.truncf %29 : vector<256x2xf32> to vector<256x2xbf16>
    %73 = arith.truncf %70 : vector<256x2xf32> to vector<256x2xbf16>
    %74 = vector.extract_strided_slice %2 {offsets = [0, 0, 0, 0], sizes = [1, 1, 2, 8], strides = [1, 1, 1, 1]} : vector<3x3x2x8xbf16> to vector<1x1x2x8xbf16>
    %75 = vector.shape_cast %74 : vector<1x1x2x8xbf16> to vector<2x8xbf16>
    %cst_26 = arith.constant dense<0.000000e+00> : vector<256x8xf32>
    %76 = tpu.matmul %71, %75, %cst_26 {dimension_numbers = #tpu.dot_dimension_numbers<[1], [0], [0], [1], [0, 0, 1, 1], [], []>} : vector<256x2xbf16>, vector<2x8xbf16>, vector<256x8xf32> -> vector<256x8xf32>
    %77 = vector.extract_strided_slice %2 {offsets = [0, 1, 0, 0], sizes = [1, 1, 2, 8], strides = [1, 1, 1, 1]} : vector<3x3x2x8xbf16> to vector<1x1x2x8xbf16>
    %78 = vector.shape_cast %77 : vector<1x1x2x8xbf16> to vector<2x8xbf16>
    %cst_27 = arith.constant dense<0.000000e+00> : vector<256x8xf32>
    %79 = tpu.matmul %72, %78, %cst_27 {dimension_numbers = #tpu.dot_dimension_numbers<[1], [0], [0], [1], [0, 0, 1, 1], [], []>} : vector<256x2xbf16>, vector<2x8xbf16>, vector<256x8xf32> -> vector<256x8xf32>
    %80 = arith.addf %76, %79 : vector<256x8xf32>
    %81 = vector.extract_strided_slice %2 {offsets = [0, 2, 0, 0], sizes = [1, 1, 2, 8], strides = [1, 1, 1, 1]} : vector<3x3x2x8xbf16> to vector<1x1x2x8xbf16>
    %82 = vector.shape_cast %81 : vector<1x1x2x8xbf16> to vector<2x8xbf16>
    %cst_28 = arith.constant dense<0.000000e+00> : vector<256x8xf32>
    %83 = tpu.matmul %73, %82, %cst_28 {dimension_numbers = #tpu.dot_dimension_numbers<[1], [0], [0], [1], [0, 0, 1, 1], [], []>} : vector<256x2xbf16>, vector<2x8xbf16>, vector<256x8xf32> -> vector<256x8xf32>
    %84 = arith.addf %80, %83 : vector<256x8xf32>
    %85 = vector.extract_strided_slice %2 {offsets = [1, 0, 0, 0], sizes = [1, 1, 2, 8], strides = [1, 1, 1, 1]} : vector<3x3x2x8xbf16> to vector<1x1x2x8xbf16>
    %86 = vector.shape_cast %85 : vector<1x1x2x8xbf16> to vector<2x8xbf16>
    %cst_29 = arith.constant dense<0.000000e+00> : vector<256x8xf32>
    %87 = tpu.matmul %71, %86, %cst_29 {dimension_numbers = #tpu.dot_dimension_numbers<[1], [0], [0], [1], [0, 0, 1, 1], [], []>} : vector<256x2xbf16>, vector<2x8xbf16>, vector<256x8xf32> -> vector<256x8xf32>
    %88 = vector.extract_strided_slice %2 {offsets = [1, 1, 0, 0], sizes = [1, 1, 2, 8], strides = [1, 1, 1, 1]} : vector<3x3x2x8xbf16> to vector<1x1x2x8xbf16>
    %89 = vector.shape_cast %88 : vector<1x1x2x8xbf16> to vector<2x8xbf16>
    %cst_30 = arith.constant dense<0.000000e+00> : vector<256x8xf32>
    %90 = tpu.matmul %72, %89, %cst_30 {dimension_numbers = #tpu.dot_dimension_numbers<[1], [0], [0], [1], [0, 0, 1, 1], [], []>} : vector<256x2xbf16>, vector<2x8xbf16>, vector<256x8xf32> -> vector<256x8xf32>
    %91 = arith.addf %87, %90 : vector<256x8xf32>
    %92 = vector.extract_strided_slice %2 {offsets = [1, 2, 0, 0], sizes = [1, 1, 2, 8], strides = [1, 1, 1, 1]} : vector<3x3x2x8xbf16> to vector<1x1x2x8xbf16>
    %93 = vector.shape_cast %92 : vector<1x1x2x8xbf16> to vector<2x8xbf16>
    %cst_31 = arith.constant dense<0.000000e+00> : vector<256x8xf32>
    %94 = tpu.matmul %73, %93, %cst_31 {dimension_numbers = #tpu.dot_dimension_numbers<[1], [0], [0], [1], [0, 0, 1, 1], [], []>} : vector<256x2xbf16>, vector<2x8xbf16>, vector<256x8xf32> -> vector<256x8xf32>
    %95 = arith.addf %91, %94 : vector<256x8xf32>
    %96 = vector.extract_strided_slice %2 {offsets = [2, 0, 0, 0], sizes = [1, 1, 2, 8], strides = [1, 1, 1, 1]} : vector<3x3x2x8xbf16> to vector<1x1x2x8xbf16>
    %97 = vector.shape_cast %96 : vector<1x1x2x8xbf16> to vector<2x8xbf16>
    %cst_32 = arith.constant dense<0.000000e+00> : vector<256x8xf32>
    %98 = tpu.matmul %71, %97, %cst_32 {dimension_numbers = #tpu.dot_dimension_numbers<[1], [0], [0], [1], [0, 0, 1, 1], [], []>} : vector<256x2xbf16>, vector<2x8xbf16>, vector<256x8xf32> -> vector<256x8xf32>
    %99 = vector.extract_strided_slice %2 {offsets = [2, 1, 0, 0], sizes = [1, 1, 2, 8], strides = [1, 1, 1, 1]} : vector<3x3x2x8xbf16> to vector<1x1x2x8xbf16>
    %100 = vector.shape_cast %99 : vector<1x1x2x8xbf16> to vector<2x8xbf16>
    %cst_33 = arith.constant dense<0.000000e+00> : vector<256x8xf32>
    %101 = tpu.matmul %72, %100, %cst_33 {dimension_numbers = #tpu.dot_dimension_numbers<[1], [0], [0], [1], [0, 0, 1, 1], [], []>} : vector<256x2xbf16>, vector<2x8xbf16>, vector<256x8xf32> -> vector<256x8xf32>
    %102 = arith.addf %98, %101 : vector<256x8xf32>
    %103 = vector.extract_strided_slice %2 {offsets = [2, 2, 0, 0], sizes = [1, 1, 2, 8], strides = [1, 1, 1, 1]} : vector<3x3x2x8xbf16> to vector<1x1x2x8xbf16>
    %104 = vector.shape_cast %103 : vector<1x1x2x8xbf16> to vector<2x8xbf16>
    %cst_34 = arith.constant dense<0.000000e+00> : vector<256x8xf32>
    %105 = tpu.matmul %73, %104, %cst_34 {dimension_numbers = #tpu.dot_dimension_numbers<[1], [0], [0], [1], [0, 0, 1, 1], [], []>} : vector<256x2xbf16>, vector<2x8xbf16>, vector<256x8xf32> -> vector<256x8xf32>
    %106 = arith.addf %102, %105 : vector<256x8xf32>
    %c16_i32_35 = arith.constant 16 : i32
    %107 = vector.broadcast %c16_i32_35 : i32 to vector<256x1xi32>
    %108 = arith.cmpi slt, %40, %107 : vector<256x1xi32>
    %c16_i32_36 = arith.constant 16 : i32
    %109 = tpu.dynamic_rotate %84 by %c16_i32_36 dim 0 : vector<256x8xf32>, i32 -> vector<256x8xf32>
    %cst_37 = arith.constant 0.000000e+00 : f32
    %110 = vector.shape_cast %108 : vector<256x1xi1> to vector<256x1xi1>
    %111 = vector.broadcast %110 : vector<256x1xi1> to vector<256x8xi1>
    %112 = vector.broadcast %cst_37 : f32 to vector<256x8xf32>
    %113 = arith.select %111, %112, %109 : vector<256x8xi1>, vector<256x8xf32>
    %c240_i32 = arith.constant 240 : i32
    %114 = vector.broadcast %c240_i32 : i32 to vector<256x1xi32>
    %115 = arith.cmpi sge, %40, %114 : vector<256x1xi32>
    %c240_i32_38 = arith.constant 240 : i32
    %116 = tpu.dynamic_rotate %106 by %c240_i32_38 dim 0 : vector<256x8xf32>, i32 -> vector<256x8xf32>
    %cst_39 = arith.constant 0.000000e+00 : f32
    %117 = vector.shape_cast %115 : vector<256x1xi1> to vector<256x1xi1>
    %118 = vector.broadcast %117 : vector<256x1xi1> to vector<256x8xi1>
    %119 = vector.broadcast %cst_39 : f32 to vector<256x8xf32>
    %120 = arith.select %118, %119, %116 : vector<256x8xi1>, vector<256x8xf32>
    %121 = arith.addf %113, %95 : vector<256x8xf32>
    %122 = arith.addf %121, %120 : vector<256x8xf32>
    %123 = vector.broadcast %3 : vector<1x8xf32> to vector<256x8xf32>
    %124 = arith.addf %122, %123 : vector<256x8xf32>
    %cst_40 = arith.constant 0.000000e+00 : f32
    %125 = vector.broadcast %cst_40 : f32 to vector<256x8xf32>
    %126 = arith.cmpf ogt, %124, %125 : vector<256x8xf32>
    %cst_41 = arith.constant 0.00999999977 : f32
    %127 = vector.broadcast %cst_41 : f32 to vector<256x8xf32>
    %128 = arith.mulf %127, %124 : vector<256x8xf32>
    %129 = arith.select %126, %124, %128 : vector<256x8xi1>, vector<256x8xf32>
    %130 = vector.shape_cast %129 : vector<256x8xf32> to vector<16x16x8xf32>
    %131 = tpu.iota {dimensions = array<i32: 0>} : vector<64x1xi32>
    %c8_i32 = arith.constant 8 : i32
    %c0_i32_42 = arith.constant 0 : i32
    %132 = arith.cmpi eq, %c8_i32, %c0_i32_42 : i32
    %c1_i32_43 = arith.constant 1 : i32
    %133 = arith.select %132, %c1_i32_43, %c8_i32 : i32
    %134 = vector.broadcast %133 : i32 to vector<64x1xi32>
    %135 = arith.remsi %131, %134 : vector<64x1xi32>
    %c0_i32_44 = arith.constant 0 : i32
    %136 = vector.broadcast %c0_i32_44 : i32 to vector<64x1xi32>
    %137 = arith.cmpi ne, %135, %136 : vector<64x1xi32>
    %c0_i32_45 = arith.constant 0 : i32
    %138 = vector.broadcast %c0_i32_45 : i32 to vector<64x1xi32>
    %139 = arith.cmpi slt, %135, %138 : vector<64x1xi32>
    %c0_i32_46 = arith.constant 0 : i32
    %140 = arith.cmpi slt, %133, %c0_i32_46 : i32
    %141 = vector.broadcast %140 : i1 to vector<64x1xi1>
    %142 = vector.broadcast %141 : vector<64x1xi1> to vector<64x1xi1>
    %143 = arith.xori %139, %142 : vector<64x1xi1>
    %144 = arith.andi %143, %137 : vector<64x1xi1>
    %145 = vector.broadcast %133 : i32 to vector<64x1xi32>
    %146 = arith.addi %135, %145 : vector<64x1xi32>
    %147 = arith.select %144, %146, %135 : vector<64x1xi1>, vector<64x1xi32>
    %c0_i32_47 = arith.constant 0 : i32
    %148 = vector.broadcast %c0_i32_47 : i32 to vector<64x1xi32>
    %149 = arith.cmpi eq, %147, %148 : vector<64x1xi32>
    %c1_i32_48 = arith.constant 1 : i32
    %150 = tpu.dynamic_rotate %39 by %c1_i32_48 dim 0 : vector<64x2xf32>, i32 -> vector<64x2xf32>
    %cst_49 = arith.constant 0.000000e+00 : f32
    %151 = vector.shape_cast %149 : vector<64x1xi1> to vector<64x1xi1>
    %152 = vector.broadcast %151 : vector<64x1xi1> to vector<64x2xi1>
    %153 = vector.broadcast %cst_49 : f32 to vector<64x2xf32>
    %154 = arith.select %152, %153, %150 : vector<64x2xi1>, vector<64x2xf32>
    %c7_i32 = arith.constant 7 : i32
    %155 = vector.broadcast %c7_i32 : i32 to vector<64x1xi32>
    %156 = arith.cmpi eq, %147, %155 : vector<64x1xi32>
    %c63_i32 = arith.constant 63 : i32
    %157 = tpu.dynamic_rotate %39 by %c63_i32 dim 0 : vector<64x2xf32>, i32 -> vector<64x2xf32>
    %cst_50 = arith.constant 0.000000e+00 : f32
    %158 = vector.shape_cast %156 : vector<64x1xi1> to vector<64x1xi1>
    %159 = vector.broadcast %158 : vector<64x1xi1> to vector<64x2xi1>
    %160 = vector.broadcast %cst_50 : f32 to vector<64x2xf32>
    %161 = arith.select %159, %160, %157 : vector<64x2xi1>, vector<64x2xf32>
    %162 = arith.truncf %154 : vector<64x2xf32> to vector<64x2xbf16>
    %163 = arith.truncf %39 : vector<64x2xf32> to vector<64x2xbf16>
    %164 = arith.truncf %161 : vector<64x2xf32> to vector<64x2xbf16>
    %165 = vector.extract_strided_slice %2 {offsets = [0, 0, 0, 0], sizes = [1, 1, 2, 8], strides = [1, 1, 1, 1]} : vector<3x3x2x8xbf16> to vector<1x1x2x8xbf16>
    %166 = vector.shape_cast %165 : vector<1x1x2x8xbf16> to vector<2x8xbf16>
    %cst_51 = arith.constant dense<0.000000e+00> : vector<64x8xf32>
    %167 = tpu.matmul %162, %166, %cst_51 {dimension_numbers = #tpu.dot_dimension_numbers<[1], [0], [0], [1], [0, 0, 1, 1], [], []>} : vector<64x2xbf16>, vector<2x8xbf16>, vector<64x8xf32> -> vector<64x8xf32>
    %168 = vector.extract_strided_slice %2 {offsets = [0, 1, 0, 0], sizes = [1, 1, 2, 8], strides = [1, 1, 1, 1]} : vector<3x3x2x8xbf16> to vector<1x1x2x8xbf16>
    %169 = vector.shape_cast %168 : vector<1x1x2x8xbf16> to vector<2x8xbf16>
    %cst_52 = arith.constant dense<0.000000e+00> : vector<64x8xf32>
    %170 = tpu.matmul %163, %169, %cst_52 {dimension_numbers = #tpu.dot_dimension_numbers<[1], [0], [0], [1], [0, 0, 1, 1], [], []>} : vector<64x2xbf16>, vector<2x8xbf16>, vector<64x8xf32> -> vector<64x8xf32>
    %171 = arith.addf %167, %170 : vector<64x8xf32>
    %172 = vector.extract_strided_slice %2 {offsets = [0, 2, 0, 0], sizes = [1, 1, 2, 8], strides = [1, 1, 1, 1]} : vector<3x3x2x8xbf16> to vector<1x1x2x8xbf16>
    %173 = vector.shape_cast %172 : vector<1x1x2x8xbf16> to vector<2x8xbf16>
    %cst_53 = arith.constant dense<0.000000e+00> : vector<64x8xf32>
    %174 = tpu.matmul %164, %173, %cst_53 {dimension_numbers = #tpu.dot_dimension_numbers<[1], [0], [0], [1], [0, 0, 1, 1], [], []>} : vector<64x2xbf16>, vector<2x8xbf16>, vector<64x8xf32> -> vector<64x8xf32>
    %175 = arith.addf %171, %174 : vector<64x8xf32>
    %176 = vector.extract_strided_slice %2 {offsets = [1, 0, 0, 0], sizes = [1, 1, 2, 8], strides = [1, 1, 1, 1]} : vector<3x3x2x8xbf16> to vector<1x1x2x8xbf16>
    %177 = vector.shape_cast %176 : vector<1x1x2x8xbf16> to vector<2x8xbf16>
    %cst_54 = arith.constant dense<0.000000e+00> : vector<64x8xf32>
    %178 = tpu.matmul %162, %177, %cst_54 {dimension_numbers = #tpu.dot_dimension_numbers<[1], [0], [0], [1], [0, 0, 1, 1], [], []>} : vector<64x2xbf16>, vector<2x8xbf16>, vector<64x8xf32> -> vector<64x8xf32>
    %179 = vector.extract_strided_slice %2 {offsets = [1, 1, 0, 0], sizes = [1, 1, 2, 8], strides = [1, 1, 1, 1]} : vector<3x3x2x8xbf16> to vector<1x1x2x8xbf16>
    %180 = vector.shape_cast %179 : vector<1x1x2x8xbf16> to vector<2x8xbf16>
    %cst_55 = arith.constant dense<0.000000e+00> : vector<64x8xf32>
    %181 = tpu.matmul %163, %180, %cst_55 {dimension_numbers = #tpu.dot_dimension_numbers<[1], [0], [0], [1], [0, 0, 1, 1], [], []>} : vector<64x2xbf16>, vector<2x8xbf16>, vector<64x8xf32> -> vector<64x8xf32>
    %182 = arith.addf %178, %181 : vector<64x8xf32>
    %183 = vector.extract_strided_slice %2 {offsets = [1, 2, 0, 0], sizes = [1, 1, 2, 8], strides = [1, 1, 1, 1]} : vector<3x3x2x8xbf16> to vector<1x1x2x8xbf16>
    %184 = vector.shape_cast %183 : vector<1x1x2x8xbf16> to vector<2x8xbf16>
    %cst_56 = arith.constant dense<0.000000e+00> : vector<64x8xf32>
    %185 = tpu.matmul %164, %184, %cst_56 {dimension_numbers = #tpu.dot_dimension_numbers<[1], [0], [0], [1], [0, 0, 1, 1], [], []>} : vector<64x2xbf16>, vector<2x8xbf16>, vector<64x8xf32> -> vector<64x8xf32>
    %186 = arith.addf %182, %185 : vector<64x8xf32>
    %187 = vector.extract_strided_slice %2 {offsets = [2, 0, 0, 0], sizes = [1, 1, 2, 8], strides = [1, 1, 1, 1]} : vector<3x3x2x8xbf16> to vector<1x1x2x8xbf16>
    %188 = vector.shape_cast %187 : vector<1x1x2x8xbf16> to vector<2x8xbf16>
    %cst_57 = arith.constant dense<0.000000e+00> : vector<64x8xf32>
    %189 = tpu.matmul %162, %188, %cst_57 {dimension_numbers = #tpu.dot_dimension_numbers<[1], [0], [0], [1], [0, 0, 1, 1], [], []>} : vector<64x2xbf16>, vector<2x8xbf16>, vector<64x8xf32> -> vector<64x8xf32>
    %190 = vector.extract_strided_slice %2 {offsets = [2, 1, 0, 0], sizes = [1, 1, 2, 8], strides = [1, 1, 1, 1]} : vector<3x3x2x8xbf16> to vector<1x1x2x8xbf16>
    %191 = vector.shape_cast %190 : vector<1x1x2x8xbf16> to vector<2x8xbf16>
    %cst_58 = arith.constant dense<0.000000e+00> : vector<64x8xf32>
    %192 = tpu.matmul %163, %191, %cst_58 {dimension_numbers = #tpu.dot_dimension_numbers<[1], [0], [0], [1], [0, 0, 1, 1], [], []>} : vector<64x2xbf16>, vector<2x8xbf16>, vector<64x8xf32> -> vector<64x8xf32>
    %193 = arith.addf %189, %192 : vector<64x8xf32>
    %194 = vector.extract_strided_slice %2 {offsets = [2, 2, 0, 0], sizes = [1, 1, 2, 8], strides = [1, 1, 1, 1]} : vector<3x3x2x8xbf16> to vector<1x1x2x8xbf16>
    %195 = vector.shape_cast %194 : vector<1x1x2x8xbf16> to vector<2x8xbf16>
    %cst_59 = arith.constant dense<0.000000e+00> : vector<64x8xf32>
    %196 = tpu.matmul %164, %195, %cst_59 {dimension_numbers = #tpu.dot_dimension_numbers<[1], [0], [0], [1], [0, 0, 1, 1], [], []>} : vector<64x2xbf16>, vector<2x8xbf16>, vector<64x8xf32> -> vector<64x8xf32>
    %197 = arith.addf %193, %196 : vector<64x8xf32>
    %c8_i32_60 = arith.constant 8 : i32
    %198 = vector.broadcast %c8_i32_60 : i32 to vector<64x1xi32>
    %199 = arith.cmpi slt, %131, %198 : vector<64x1xi32>
    %c8_i32_61 = arith.constant 8 : i32
    %200 = tpu.dynamic_rotate %175 by %c8_i32_61 dim 0 : vector<64x8xf32>, i32 -> vector<64x8xf32>
    %cst_62 = arith.constant 0.000000e+00 : f32
    %201 = vector.shape_cast %199 : vector<64x1xi1> to vector<64x1xi1>
    %202 = vector.broadcast %201 : vector<64x1xi1> to vector<64x8xi1>
    %203 = vector.broadcast %cst_62 : f32 to vector<64x8xf32>
    %204 = arith.select %202, %203, %200 : vector<64x8xi1>, vector<64x8xf32>
    %c56_i32 = arith.constant 56 : i32
    %205 = vector.broadcast %c56_i32 : i32 to vector<64x1xi32>
    %206 = arith.cmpi sge, %131, %205 : vector<64x1xi32>
    %c56_i32_63 = arith.constant 56 : i32
    %207 = tpu.dynamic_rotate %197 by %c56_i32_63 dim 0 : vector<64x8xf32>, i32 -> vector<64x8xf32>
    %cst_64 = arith.constant 0.000000e+00 : f32
    %208 = vector.shape_cast %206 : vector<64x1xi1> to vector<64x1xi1>
    %209 = vector.broadcast %208 : vector<64x1xi1> to vector<64x8xi1>
    %210 = vector.broadcast %cst_64 : f32 to vector<64x8xf32>
    %211 = arith.select %209, %210, %207 : vector<64x8xi1>, vector<64x8xf32>
    %212 = arith.addf %204, %186 : vector<64x8xf32>
    %213 = arith.addf %212, %211 : vector<64x8xf32>
    %214 = vector.broadcast %3 : vector<1x8xf32> to vector<64x8xf32>
    %215 = arith.addf %213, %214 : vector<64x8xf32>
    %cst_65 = arith.constant 0.000000e+00 : f32
    %216 = vector.broadcast %cst_65 : f32 to vector<64x8xf32>
    %217 = arith.cmpf ogt, %215, %216 : vector<64x8xf32>
    %cst_66 = arith.constant 0.00999999977 : f32
    %218 = vector.broadcast %cst_66 : f32 to vector<64x8xf32>
    %219 = arith.mulf %218, %215 : vector<64x8xf32>
    %220 = arith.select %217, %215, %219 : vector<64x8xi1>, vector<64x8xf32>
    %221 = vector.shape_cast %220 : vector<64x8xf32> to vector<8x8x8xf32>
    %222 = vector.extract_strided_slice %221 {offsets = [0, 0, 0], sizes = [1, 8, 8], strides = [1, 1, 1]} : vector<8x8x8xf32> to vector<1x8x8xf32>
    %223 = vector.extract_strided_slice %221 {offsets = [0, 0, 0], sizes = [7, 8, 8], strides = [1, 1, 1]} : vector<8x8x8xf32> to vector<7x8x8xf32>
    %224 = tpu.concatenate %222, %223 in 0 : vector<1x8x8xf32>, vector<7x8x8xf32> -> vector<8x8x8xf32>
    %225 = vector.extract_strided_slice %221 {offsets = [1, 0, 0], sizes = [7, 8, 8], strides = [1, 1, 1]} : vector<8x8x8xf32> to vector<7x8x8xf32>
    %226 = vector.extract_strided_slice %221 {offsets = [7, 0, 0], sizes = [1, 8, 8], strides = [1, 1, 1]} : vector<8x8x8xf32> to vector<1x8x8xf32>
    %227 = tpu.concatenate %225, %226 in 0 : vector<7x8x8xf32>, vector<1x8x8xf32> -> vector<8x8x8xf32>
    %cst_67 = arith.constant 7.500000e-01 : f32
    %228 = vector.broadcast %cst_67 : f32 to vector<8x8x8xf32>
    %229 = arith.mulf %228, %221 : vector<8x8x8xf32>
    %cst_68 = arith.constant 2.500000e-01 : f32
    %230 = vector.broadcast %cst_68 : f32 to vector<8x8x8xf32>
    %231 = arith.mulf %230, %224 : vector<8x8x8xf32>
    %232 = arith.addf %229, %231 : vector<8x8x8xf32>
    %cst_69 = arith.constant 7.500000e-01 : f32
    %233 = vector.broadcast %cst_69 : f32 to vector<8x8x8xf32>
    %234 = arith.mulf %233, %221 : vector<8x8x8xf32>
    %cst_70 = arith.constant 2.500000e-01 : f32
    %235 = vector.broadcast %cst_70 : f32 to vector<8x8x8xf32>
    %236 = arith.mulf %235, %227 : vector<8x8x8xf32>
    %237 = arith.addf %234, %236 : vector<8x8x8xf32>
    %238 = vector.shape_cast %232 : vector<8x8x8xf32> to vector<8x1x8x8xf32>
    %239 = vector.shape_cast %237 : vector<8x8x8xf32> to vector<8x1x8x8xf32>
    %240 = tpu.concatenate %238, %239 in 1 : vector<8x1x8x8xf32>, vector<8x1x8x8xf32> -> vector<8x2x8x8xf32>
    %241 = vector.shape_cast %240 : vector<8x2x8x8xf32> to vector<16x8x8xf32>
    %242 = tpu.iota {dimensions = array<i32: 1>} : vector<16x8x1xi32>
    %c0_i32_71 = arith.constant 0 : i32
    %243 = vector.broadcast %c0_i32_71 : i32 to vector<16x8x1xi32>
    %244 = arith.cmpi eq, %242, %243 : vector<16x8x1xi32>
    %c1_i32_72 = arith.constant 1 : i32
    %245 = tpu.dynamic_rotate %241 by %c1_i32_72 dim 1 : vector<16x8x8xf32>, i32 -> vector<16x8x8xf32>
    %246 = vector.shape_cast %244 : vector<16x8x1xi1> to vector<16x8x1xi1>
    %247 = vector.broadcast %246 : vector<16x8x1xi1> to vector<16x8x8xi1>
    %248 = arith.select %247, %241, %245 : vector<16x8x8xi1>, vector<16x8x8xf32>
    %c7_i32_73 = arith.constant 7 : i32
    %249 = vector.broadcast %c7_i32_73 : i32 to vector<16x8x1xi32>
    %250 = arith.cmpi eq, %242, %249 : vector<16x8x1xi32>
    %c7_i32_74 = arith.constant 7 : i32
    %251 = tpu.dynamic_rotate %241 by %c7_i32_74 dim 1 : vector<16x8x8xf32>, i32 -> vector<16x8x8xf32>
    %252 = vector.shape_cast %250 : vector<16x8x1xi1> to vector<16x8x1xi1>
    %253 = vector.broadcast %252 : vector<16x8x1xi1> to vector<16x8x8xi1>
    %254 = arith.select %253, %241, %251 : vector<16x8x8xi1>, vector<16x8x8xf32>
    %cst_75 = arith.constant 7.500000e-01 : f32
    %255 = vector.broadcast %cst_75 : f32 to vector<16x8x8xf32>
    %256 = arith.mulf %255, %241 : vector<16x8x8xf32>
    %cst_76 = arith.constant 2.500000e-01 : f32
    %257 = vector.broadcast %cst_76 : f32 to vector<16x8x8xf32>
    %258 = arith.mulf %257, %248 : vector<16x8x8xf32>
    %259 = arith.addf %256, %258 : vector<16x8x8xf32>
    %cst_77 = arith.constant 7.500000e-01 : f32
    %260 = vector.broadcast %cst_77 : f32 to vector<16x8x8xf32>
    %261 = arith.mulf %260, %241 : vector<16x8x8xf32>
    %cst_78 = arith.constant 2.500000e-01 : f32
    %262 = vector.broadcast %cst_78 : f32 to vector<16x8x8xf32>
    %263 = arith.mulf %262, %254 : vector<16x8x8xf32>
    %264 = arith.addf %261, %263 : vector<16x8x8xf32>
    %265 = vector.shape_cast %259 : vector<16x8x8xf32> to vector<16x8x1x8xf32>
    %266 = vector.shape_cast %264 : vector<16x8x8xf32> to vector<16x8x1x8xf32>
    %267 = tpu.concatenate %265, %266 in 2 : vector<16x8x1x8xf32>, vector<16x8x1x8xf32> -> vector<16x8x2x8xf32>
    %268 = vector.shape_cast %267 : vector<16x8x2x8xf32> to vector<16x16x8xf32>
    %269 = arith.addf %268, %130 : vector<16x16x8xf32>
    %270 = arith.addf %269, %5 : vector<16x16x8xf32>
    %271 = vector.shape_cast %270 : vector<16x16x8xf32> to vector<16x128xf32>
    %c0_79 = arith.constant 0 : index
    %c0_80 = arith.constant 0 : index
    %c0_81 = arith.constant 0 : index
    %272 = vector.load %arg6[%c0_79, %c0_80, %c0_81] : memref<1x16x128xf32, #tpu.memory_space<vmem>>, vector<1x16x128xf32>
    %273 = vector.shape_cast %272 : vector<1x16x128xf32> to vector<16x128xf32>
    %274 = vector.shape_cast %271 : vector<16x128xf32> to vector<1x16x128xf32>
    tpu.vector_store %arg6[%c0_79, %c0_80, %c0_81], %274 {strides = array<i32>} : memref<1x16x128xf32, #tpu.memory_space<vmem>>, vector<1x16x128xf32>,
    return
  }
  func.func @transform_0(%arg0: i32) -> (i32, i32, i32, i32) {
    %c0_i32 = arith.constant 0 : i32
    %c0_i32_0 = arith.constant 0 : i32
    %c0_i32_1 = arith.constant 0 : i32
    %c0_i32_2 = arith.constant 0 : i32
    return %arg0, %c0_i32, %c0_i32_0, %c0_i32_1 : i32, i32, i32, i32
  }
  func.func @transform_1(%arg0: i32) -> (i32, i32) {
    %c0_i32 = arith.constant 0 : i32
    %c0_i32_0 = arith.constant 0 : i32
    %c0_i32_1 = arith.constant 0 : i32
    return %c0_i32, %c0_i32_0 : i32, i32
  }
  func.func @transform_2(%arg0: i32) -> (i32, i32) {
    %c0_i32 = arith.constant 0 : i32
    %c0_i32_0 = arith.constant 0 : i32
    %c0_i32_1 = arith.constant 0 : i32
    return %c0_i32, %c0_i32_0 : i32, i32
  }
  func.func @transform_3(%arg0: i32) -> (i32, i32, i32, i32) {
    %c0_i32 = arith.constant 0 : i32
    %c0_i32_0 = arith.constant 0 : i32
    %c0_i32_1 = arith.constant 0 : i32
    %c0_i32_2 = arith.constant 0 : i32
    %c0_i32_3 = arith.constant 0 : i32
    return %c0_i32, %c0_i32_0, %c0_i32_1, %c0_i32_2 : i32, i32, i32, i32
  }
  func.func @transform_4(%arg0: i32) -> (i32, i32) {
    %c0_i32 = arith.constant 0 : i32
    %c0_i32_0 = arith.constant 0 : i32
    %c0_i32_1 = arith.constant 0 : i32
    return %c0_i32, %c0_i32_0 : i32, i32
  }
  func.func @transform_5(%arg0: i32) -> (i32, i32, i32) {
    %c0_i32 = arith.constant 0 : i32
    %c0_i32_0 = arith.constant 0 : i32
    %c0_i32_1 = arith.constant 0 : i32
    return %arg0, %c0_i32, %c0_i32_0 : i32, i32, i32
  }
}

</mosaic_0001>

<llo_original>
// kernel: elastic_forward.1
$region0: #{elastic_forward.1}
  #allocation0 [shape = 'u32[]', space=smem, size = 0x4, offset = 0x4, fixed_abs, tag = 'smem constant byte address 0x4 - core index']
  #allocation1 [shape = 'u32[72,128]{1,0:T(1,128)}', space=vmem, size = 0x9000, scoped, tag = 'internal scratch']
  %s0 = inlined_call_operand.vmem [shape: f32[2,16,16,8], index: 0, kind: input, shape index: {}]
  %s1 = inlined_call_operand.vmem [shape: bf16[8,2], index: 1, kind: input, shape index: {}]
  %s2 = inlined_call_operand.vmem [shape: f32[1,2], index: 2, kind: input, shape index: {}]
  %s3 = inlined_call_operand.vmem [shape: bf16[3,3,2,8], index: 3, kind: input, shape index: {}]
  %s4 = inlined_call_operand.vmem [shape: f32[1,8], index: 4, kind: input, shape index: {}]
  %s5 = inlined_call_operand.vmem [shape: f32[2,16,128], index: 5, kind: output, shape index: {}]
  %s6 = sld [smem:[#allocation0]]
  $region53: #{elastic_forward.1} parent=0
    _
  %s8 = ssub.s32 1, %s6
  %s9 = scalar_select 0, %s8, %s6
  loop: start=0, step=1, limit=4
  $region2: #{elastic_forward.1} parent=0 // loop_pre_header
    _
  $region3: #{elastic_forward.1} parent=0 // loop_header
    %s11 = sphi 0, %s15
    %p12 = scmp.ge.s32.totalorder %s11, 4
    %s21 = sphi 0, %s23
    %s24 = sphi 0, %s21
    %s25 = sphi 0, %s24
    %s41 = sphi 0, %s25
    %s45 = sphi 0, %s45
    %s47 = sphi 0, %s45
    %s48 = sphi 0, %s47
    %s62 = sphi 0, %s48
    %s66 = sphi 0, %s66
    %s68 = sphi 0, %s66
    %s69 = sphi 0, %s68
    %s83 = sphi 0, %s69
    %s87 = sphi 0, %s87
    %s89 = sphi 0, %s87
    %s90 = sphi 0, %s89
    %s104 = sphi 0, %s90
    %s108 = sphi 0, %s108
    %s110 = sphi 0, %s108
    %s111 = sphi 0, %s110
    %s125 = sphi 0, %s111
    %s131 = sphi 0, %s133
    %s134 = sphi 0, %s131
    %s135 = sphi 0, %s134
    %s151 = sphi 0, %s135
  $region4: #{elastic_forward.1} parent=0 // loop_header_branch
    %14 = sbr.rel (%p12) target = $region8
  $region5: #{elastic_forward.1} parent=0 // loop_body
    %s16 = ssub.s32 %s11, 1
    %s17 = ssub.s32 %s11, 2
    %s18 = sadd.s32 %s11, 1
    %s19 = ssub.s32 %s11, %s18
    %p20 = scmp.eq.s32.totalorder %s19, 0
    %s22 = sadd.s32 %s21, 1
    %s23 = scalar_select %p20, %s21, %s22
    %p26 = pneg %p20
    %p27 = scmp.eq.s32.totalorder %s11, 1
    %p28 = por %p26, %p27
    %p29 = scmp.ne.s32.totalorder %s21, %s24
    %p30 = scmp.eq.s32.totalorder %s11, 0
    %p31 = por %p29, %p30
    %p32 = scmp.ne.s32.totalorder %s21, %s24
    %p33 = scmp.eq.s32.totalorder %s16, 1
    %p34 = por %p32, %p33
    %p35 = scmp.ne.s32.totalorder %s24, %s25
    %p36 = scmp.eq.s32.totalorder %s16, 0
    %p37 = por %p35, %p36
    %p38 = scmp.ne.s32.totalorder %s24, %s25
    %p39 = scmp.eq.s32.totalorder %s17, 1
    %p40 = por %p38, %p39
    %p42 = scmp.ne.s32.totalorder %s25, %s41
    %p43 = scmp.eq.s32.totalorder %s17, 0
    %p44 = por %p42, %p43
    %s46 = sadd.s32 %s45, 1
    %p49 = scmp.eq.s32.totalorder %s11, 1
    %p50 = scmp.ne.s32.totalorder %s45, %s47
    %p51 = scmp.eq.s32.totalorder %s11, 0
    %p52 = por %p50, %p51
    %p53 = scmp.ne.s32.totalorder %s45, %s47
    %p54 = scmp.eq.s32.totalorder %s16, 1
    %p55 = por %p53, %p54
    %p56 = scmp.ne.s32.totalorder %s47, %s48
    %p57 = scmp.eq.s32.totalorder %s16, 0
    %p58 = por %p56, %p57
    %p59 = scmp.ne.s32.totalorder %s47, %s48
    %p60 = scmp.eq.s32.totalorder %s17, 1
    %p61 = por %p59, %p60
    %p63 = scmp.ne.s32.totalorder %s48, %s62
    %p64 = scmp.eq.s32.totalorder %s17, 0
    %p65 = por %p63, %p64
    %s67 = sadd.s32 %s66, 1
    %p70 = scmp.eq.s32.totalorder %s11, 1
    %p71 = scmp.ne.s32.totalorder %s66, %s68
    %p72 = scmp.eq.s32.totalorder %s11, 0
    %p73 = por %p71, %p72
    %p74 = scmp.ne.s32.totalorder %s66, %s68
    %p75 = scmp.eq.s32.totalorder %s16, 1
    %p76 = por %p74, %p75
    %p77 = scmp.ne.s32.totalorder %s68, %s69
    %p78 = scmp.eq.s32.totalorder %s16, 0
    %p79 = por %p77, %p78
    %p80 = scmp.ne.s32.totalorder %s68, %s69
    %p81 = scmp.eq.s32.totalorder %s17, 1
    %p82 = por %p80, %p81
    %p84 = scmp.ne.s32.totalorder %s69, %s83
    %p85 = scmp.eq.s32.totalorder %s17, 0
    %p86 = por %p84, %p85
    %s88 = sadd.s32 %s87, 1
    %p91 = scmp.eq.s32.totalorder %s11, 1
    %p92 = scmp.ne.s32.totalorder %s87, %s89
    %p93 = scmp.eq.s32.totalorder %s11, 0
    %p94 = por %p92, %p93
    %p95 = scmp.ne.s32.totalorder %s87, %s89
    %p96 = scmp.eq.s32.totalorder %s16, 1
    %p97 = por %p95, %p96
    %p98 = scmp.ne.s32.totalorder %s89, %s90
    %p99 = scmp.eq.s32.totalorder %s16, 0
    %p100 = por %p98, %p99
    %p101 = scmp.ne.s32.totalorder %s89, %s90
    %p102 = scmp.eq.s32.totalorder %s17, 1
    %p103 = por %p101, %p102
    %p105 = scmp.ne.s32.totalorder %s90, %s104
    %p106 = scmp.eq.s32.totalorder %s17, 0
    %p107 = por %p105, %p106
    %s109 = sadd.s32 %s108, 1
    %p112 = scmp.eq.s32.totalorder %s11, 1
    %p113 = scmp.ne.s32.totalorder %s108, %s110
    %p114 = scmp.eq.s32.totalorder %s11, 0
    %p115 = por %p113, %p114
    %p116 = scmp.ne.s32.totalorder %s108, %s110
    %p117 = scmp.eq.s32.totalorder %s16, 1
    %p118 = por %p116, %p117
    %p119 = scmp.ne.s32.totalorder %s110, %s111
    %p120 = scmp.eq.s32.totalorder %s16, 0
    %p121 = por %p119, %p120
    %p122 = scmp.ne.s32.totalorder %s110, %s111
    %p123 = scmp.eq.s32.totalorder %s17, 1
    %p124 = por %p122, %p123
    %p126 = scmp.ne.s32.totalorder %s111, %s125
    %p127 = scmp.eq.s32.totalorder %s17, 0
    %p128 = por %p126, %p127
    %s129 = ssub.s32 %s11, %s18
    %p130 = scmp.eq.s32.totalorder %s129, 0
    %s132 = sadd.s32 %s131, 1
    %s133 = scalar_select %p130, %s131, %s132
    %p136 = pneg %p130
    %p137 = scmp.eq.s32.totalorder %s11, 1
    %p138 = por %p136, %p137
    %p139 = scmp.ne.s32.totalorder %s131, %s134
    %p140 = scmp.eq.s32.totalorder %s11, 0
    %p141 = por %p139, %p140
    %p142 = scmp.ne.s32.totalorder %s131, %s134
    %p143 = scmp.eq.s32.totalorder %s16, 1
    %p144 = por %p142, %p143
    %p145 = scmp.ne.s32.totalorder %s134, %s135
    %p146 = scmp.eq.s32.totalorder %s16, 0
    %p147 = por %p145, %p146
    %p148 = scmp.ne.s32.totalorder %s134, %s135
    %p149 = scmp.eq.s32.totalorder %s17, 1
    %p150 = por %p148, %p149
    %p152 = scmp.ne.s32.totalorder %s135, %s151
    %p153 = scmp.eq.s32.totalorder %s17, 0
    %p154 = por %p152, %p153
    %p155 = scmp.le.s32.totalorder 1, %s11
    %p156 = scmp.lt.s32.totalorder %s11, 3
    %p157 = pnand %p155, %p156
    %p158 = pneg %p157
    // Predicated region
    $region9: #{elastic_forward.1} parent=5 // pred_check
      _
    $region10: #{elastic_forward.1} parent=5 // pred_check_branch
      %160 = sbr.rel (%p157) target = $region12
    $region11: #{elastic_forward.1} parent=5 // pred_region
      %s161 = ssub.s32 %s11, 1
      // Predicated region
      $region13: #{elastic_forward.1} parent=11 // pred_check
        %p162 = pneg %p58
      $region14: #{elastic_forward.1} parent=11 // pred_check_branch
        %164 = sbr.rel (%p162) target = $region16
      $region15: #{elastic_forward.1} parent=11 // pred_region
        _
      $region16: #{elastic_forward.1} parent=11 // pred_fallthru
        _
      // Predicated region
      $region17: #{elastic_forward.1} parent=11 // pred_check
        %p165 = pneg %p79
      $region18: #{elastic_forward.1} parent=11 // pred_check_branch
        %167 = sbr.rel (%p165) target = $region20
      $region19: #{elastic_forward.1} parent=11 // pred_region
        _
      $region20: #{elastic_forward.1} parent=11 // pred_fallthru
        _
      // Predicated region
      $region21: #{elastic_forward.1} parent=11 // pred_check
        %p168 = pneg %p100
      $region22: #{elastic_forward.1} parent=11 // pred_check_branch
        %170 = sbr.rel (%p168) target = $region24
      $region23: #{elastic_forward.1} parent=11 // pred_region
        _
      $region24: #{elastic_forward.1} parent=11 // pred_fallthru
        _
      // Predicated region
      $region25: #{elastic_forward.1} parent=11 // pred_check
        %p171 = pneg %p121
      $region26: #{elastic_forward.1} parent=11 // pred_check_branch
        %173 = sbr.rel (%p171) target = $region28
      $region27: #{elastic_forward.1} parent=11 // pred_region
        _
      $region28: #{elastic_forward.1} parent=11 // pred_fallthru
        _
    $region12: #{elastic_forward.1} parent=5 // pred_fallthru
      _
    %p174 = scmp.lt.s32.totalorder %s11, 2
    // Predicated region
    $region29: #{elastic_forward.1} parent=5 // pred_check
      %p175 = pneg %p174
    $region30: #{elastic_forward.1} parent=5 // pred_check_branch
      %177 = sbr.rel (%p175) target = $region32
    $region31: #{elastic_forward.1} parent=5 // pred_region
      // Predicated region
      $region33: #{elastic_forward.1} parent=31 // pred_check
        %p178 = pneg %p31
      $region34: #{elastic_forward.1} parent=31 // pred_check_branch
        %180 = sbr.rel (%p178) target = $region36
      $region35: #{elastic_forward.1} parent=31 // pred_region
        %p181 = scmp.lt.s32.totalorder %s11, 1
        %s182 = scalar_select %p181, %s11, 1
        %s183 = smul.addr %s182, 32
        %s184 = smul.addr %s183, 8
        %s185 = scalar_lea.vmem %s0, %s184
      $region36: #{elastic_forward.1} parent=31 // pred_fallthru
        _
    $region32: #{elastic_forward.1} parent=5 // pred_fallthru
      _
    %p186 = scmp.le.s32.totalorder 1, %s11
    %p187 = scmp.lt.s32.totalorder %s11, 3
    %p188 = pnand %p186, %p187
    %p189 = pneg %p188
    // Predicated region
    $region37: #{elastic_forward.1} parent=5 // pred_check
      _
    $region38: #{elastic_forward.1} parent=5 // pred_check_branch
      %191 = sbr.rel (%p188) target = $region40
    $region39: #{elastic_forward.1} parent=5 // pred_region
      %s192 = ssub.s32 %s11, 1
      %p193 = scmp.lt.s32.totalorder %s16, 1
      %s194 = scalar_select %p193, %s16, 1
      %s195 = smul.addr %s194, 32
      %s196 = smul.addr %s195, 8
      %s197 = scalar_lea.vmem %s0, %s196
      %p198 = pneg %p37
      %p199 = pneg %p34
      %p200 = pneg %p58
      %p201 = pneg %p55
      %p202 = pneg %p79
      %p203 = pneg %p76
      %p204 = pneg %p100
      %p205 = pneg %p97
      %p206 = pneg %p121
      %p207 = pneg %p118
      %p208 = pneg %p147
      %p209 = pneg %p144
      %p210 = scmp.lt.s32.totalorder %s16, 1
      %s211 = scalar_select %p210, %s16, 1
      %s212 = smul.addr %s211, 2
      %s213 = smul.addr %s212, 8
      %s214 = scalar_lea.vmem %s5, %s213
      %p215 = scmp.lt.s32.totalorder %s16, 1
      %s216 = scalar_select %p215, %s16, 1
      %s217 = smul.addr %s216, 32
      %s218 = smul.addr %s217, 8
      %s219 = scalar_lea.vmem %s0, %s218
      %p220 = scmp.lt.s32.totalorder %s16, 1
      %s221 = scalar_select %p220, %s16, 1
      %s222 = smul.addr %s221, 2
      %s223 = smul.addr %s222, 8
      %s224 = scalar_lea.vmem %s5, %s223
      %v226 = vld [vmem:[%s1] sm:$0xf]
      %v227 = vld [vmem:[%s2] sm:$0x1]
      %v228 = vld [vmem:[%s3] sm:$0x1]
      %v229 = vld [vmem:[%s3 + $0x1] sm:$0x1]
      %v230 = vld [vmem:[%s3 + $0x2] sm:$0x1]
      %v231 = vld [vmem:[%s3 + $0x3] sm:$0x1]
      %v232 = vld [vmem:[%s3 + $0x4] sm:$0x1]
      %v233 = vld [vmem:[%s3 + $0x5] sm:$0x1]
      %v234 = vld [vmem:[%s3 + $0x6] sm:$0x1]
      %v235 = vld [vmem:[%s3 + $0x7] sm:$0x1]
      %v236 = vld [vmem:[%s3 + $0x8] sm:$0x1]
      %v237 = vld [vmem:[%s4] sm:$0x1]
      %v238 = vld [vmem:[%s219] sm:$0xff]
      %v239 = vld [vmem:[%s219 + $0x8] sm:$0xff]
      %v240 = vld [vmem:[%s219 + $0x10] sm:$0xff]
      %v241 = vld [vmem:[%s219 + $0x18] sm:$0xff]
      %v242 = vld [vmem:[%s219 + $0x20] sm:$0xff]
      %v243 = vld [vmem:[%s219 + $0x28] sm:$0xff]
      %v244 = vld [vmem:[%s219 + $0x30] sm:$0xff]
      %v245 = vld [vmem:[%s219 + $0x38] sm:$0xff]
      %v246 = vld [vmem:[%s219 + $0x40] sm:$0xff]
      %v247 = vld [vmem:[%s219 + $0x48] sm:$0xff]
      %v248 = vld [vmem:[%s219 + $0x50] sm:$0xff]
      %v249 = vld [vmem:[%s219 + $0x58] sm:$0xff]
      %v250 = vld [vmem:[%s219 + $0x60] sm:$0xff]
      %v251 = vld [vmem:[%s219 + $0x68] sm:$0xff]
      %v252 = vld [vmem:[%s219 + $0x70] sm:$0xff]
      %v253 = vld [vmem:[%s219 + $0x78] sm:$0xff]
      %v254 = vld [vmem:[%s219 + $0x80] sm:$0xff]
      %v255 = vld [vmem:[%s219 + $0x88] sm:$0xff]
      %v256 = vld [vmem:[%s219 + $0x90] sm:$0xff]
      %v257 = vld [vmem:[%s219 + $0x98] sm:$0xff]
      %v258 = vld [vmem:[%s219 + $0xa0] sm:$0xff]
      %v259 = vld [vmem:[%s219 + $0xa8] sm:$0xff]
      %v260 = vld [vmem:[%s219 + $0xb0] sm:$0xff]
      %v261 = vld [vmem:[%s219 + $0xb8] sm:$0xff]
      %v262 = vld [vmem:[%s219 + $0xc0] sm:$0xff]
      %v263 = vld [vmem:[%s219 + $0xc8] sm:$0xff]
      %v264 = vld [vmem:[%s219 + $0xd0] sm:$0xff]
      %v265 = vld [vmem:[%s219 + $0xd8] sm:$0xff]
      %v266 = vld [vmem:[%s219 + $0xe0] sm:$0xff]
      %v267 = vld [vmem:[%s219 + $0xe8] sm:$0xff]
      %v268 = vld [vmem:[%s219 + $0xf0] sm:$0xff]
      %v269 = vld [vmem:[%s219 + $0xf8] sm:$0xff]
      %v270 = vadd.f32 %v238, %v240
      %v271 = vadd.f32 %v239, %v241
      %v272 = vadd.f32 %v242, %v244
      %v273 = vadd.f32 %v243, %v245
      %v274 = vadd.f32 %v246, %v248
      %v275 = vadd.f32 %v247, %v249
      %v276 = vadd.f32 %v250, %v252
      %v277 = vadd.f32 %v251, %v253
      %v278 = vadd.f32 %v254, %v256
      %v279 = vadd.f32 %v255, %v257
      %v280 = vadd.f32 %v258, %v260
      %v281 = vadd.f32 %v259, %v261
      %v282 = vadd.f32 %v262, %v264
      %v283 = vadd.f32 %v263, %v265
      %v284 = vadd.f32 %v266, %v268
      %v285 = vadd.f32 %v267, %v269
      %v302 = vrot.slane %v270, 2
      %v303 = vrot.slane %v270, 4
      %v304 = vrot.slane %v270, 6
      %v305 = vrot.slane %v271, 2
      %v306 = vrot.slane %v271, 4
      %v307 = vrot.slane %v271, 6
      %v308 = vrot.slane %v272, 2
      %v309 = vrot.slane %v272, 4
      %v310 = vrot.slane %v272, 6
      %v311 = vrot.slane %v273, 2
      %v312 = vrot.slane %v273, 4
      %v313 = vrot.slane %v273, 6
      %v314 = vrot.slane %v274, 2
      %v315 = vrot.slane %v274, 4
      %v316 = vrot.slane %v274, 6
      %v317 = vrot.slane %v275, 2
      %v318 = vrot.slane %v275, 4
      %v319 = vrot.slane %v275, 6
      %v320 = vrot.slane %v276, 2
      %v321 = vrot.slane %v276, 4
      %v322 = vrot.slane %v276, 6
      %v323 = vrot.slane %v277, 2
      %v324 = vrot.slane %v277, 4
      %v325 = vrot.slane %v277, 6
      %v326 = vrot.slane %v278, 2
      %v327 = vrot.slane %v278, 4
      %v328 = vrot.slane %v278, 6
      %v329 = vrot.slane %v279, 2
      %v330 = vrot.slane %v279, 4
      %v331 = vrot.slane %v279, 6
      %v332 = vrot.slane %v280, 2
      %v333 = vrot.slane %v280, 4
      %v334 = vrot.slane %v280, 6
      %v335 = vrot.slane %v281, 2
      %v336 = vrot.slane %v281, 4
      %v337 = vrot.slane %v281, 6
      %v338 = vrot.slane %v282, 2
      %v339 = vrot.slane %v282, 4
      %v340 = vrot.slane %v282, 6
      %v341 = vrot.slane %v283, 2
      %v342 = vrot.slane %v283, 4
      %v343 = vrot.slane %v283, 6
      %v344 = vrot.slane %v284, 2
      %v345 = vrot.slane %v284, 4
      %v346 = vrot.slane %v284, 6
      %v347 = vrot.slane %v285, 2
      %v348 = vrot.slane %v285, 4
      %v349 = vrot.slane %v285, 6
      %v398 = vrot.slane %v270, 7
      %v399 = vrot.slane %v398, 2
      %v400 = vrot.slane %v302, 7
      %v401 = vrot.slane %v400, 2
      %v402 = vrot.slane %v303, 7
      %v403 = vrot.slane %v402, 2
      %v404 = vrot.slane %v304, 7
      %v405 = vrot.slane %v404, 2
      %v406 = vrot.slane %v271, 7
      %v407 = vrot.slane %v406, 2
      %v408 = vrot.slane %v305, 7
      %v409 = vrot.slane %v408, 2
      %v410 = vrot.slane %v306, 7
      %v411 = vrot.slane %v410, 2
      %v412 = vrot.slane %v307, 7
      %v413 = vrot.slane %v412, 2
      %v414 = vrot.slane %v272, 7
      %v415 = vrot.slane %v414, 2
      %v416 = vrot.slane %v308, 7
      %v417 = vrot.slane %v416, 2
      %v418 = vrot.slane %v309, 7
      %v419 = vrot.slane %v418, 2
      %v420 = vrot.slane %v310, 7
      %v421 = vrot.slane %v420, 2
      %v422 = vrot.slane %v273, 7
      %v423 = vrot.slane %v422, 2
      %v424 = vrot.slane %v311, 7
      %v425 = vrot.slane %v424, 2
      %v426 = vrot.slane %v312, 7
      %v427 = vrot.slane %v426, 2
      %v428 = vrot.slane %v313, 7
      %v429 = vrot.slane %v428, 2
      %v430 = vrot.slane %v274, 7
      %v431 = vrot.slane %v430, 2
      %v432 = vrot.slane %v314, 7
      %v433 = vrot.slane %v432, 2
      %v434 = vrot.slane %v315, 7
      %v435 = vrot.slane %v434, 2
      %v436 = vrot.slane %v316, 7
      %v437 = vrot.slane %v436, 2
      %v438 = vrot.slane %v275, 7
      %v439 = vrot.slane %v438, 2
      %v440 = vrot.slane %v317, 7
      %v441 = vrot.slane %v440, 2
      %v442 = vrot.slane %v318, 7
      %v443 = vrot.slane %v442, 2
      %v444 = vrot.slane %v319, 7
      %v445 = vrot.slane %v444, 2
      %v446 = vrot.slane %v276, 7
      %v447 = vrot.slane %v446, 2
      %v448 = vrot.slane %v320, 7
      %v449 = vrot.slane %v448, 2
      %v450 = vrot.slane %v321, 7
      %v451 = vrot.slane %v450, 2
      %v452 = vrot.slane %v322, 7
      %v453 = vrot.slane %v452, 2
      %v454 = vrot.slane %v277, 7
      %v455 = vrot.slane %v454, 2
      %v456 = vrot.slane %v323, 7
      %v457 = vrot.slane %v456, 2
      %v458 = vrot.slane %v324, 7
      %v459 = vrot.slane %v458, 2
      %v460 = vrot.slane %v325, 7
      %v461 = vrot.slane %v460, 2
      %v462 = vrot.slane %v278, 7
      %v463 = vrot.slane %v462, 2
      %v464 = vrot.slane %v326, 7
      %v465 = vrot.slane %v464, 2
      %v466 = vrot.slane %v327, 7
      %v467 = vrot.slane %v466, 2
      %v468 = vrot.slane %v328, 7
      %v469 = vrot.slane %v468, 2
      %v470 = vrot.slane %v279, 7
      %v471 = vrot.slane %v470, 2
      %v472 = vrot.slane %v329, 7
      %v473 = vrot.slane %v472, 2
      %v474 = vrot.slane %v330, 7
      %v475 = vrot.slane %v474, 2
      %v476 = vrot.slane %v331, 7
      %v477 = vrot.slane %v476, 2
      %v478 = vrot.slane %v280, 7
      %v479 = vrot.slane %v478, 2
      %v480 = vrot.slane %v332, 7
      %v481 = vrot.slane %v480, 2
      %v482 = vrot.slane %v333, 7
      %v483 = vrot.slane %v482, 2
      %v484 = vrot.slane %v334, 7
      %v485 = vrot.slane %v484, 2
      %v486 = vrot.slane %v281, 7
      %v487 = vrot.slane %v486, 2
      %v488 = vrot.slane %v335, 7
      %v489 = vrot.slane %v488, 2
      %v490 = vrot.slane %v336, 7
      %v491 = vrot.slane %v490, 2
      %v492 = vrot.slane %v337, 7
      %v493 = vrot.slane %v492, 2
      %v494 = vrot.slane %v282, 7
      %v495 = vrot.slane %v494, 2
      %v496 = vrot.slane %v338, 7
      %v497 = vrot.slane %v496, 2
      %v498 = vrot.slane %v339, 7
      %v499 = vrot.slane %v498, 2
      %v500 = vrot.slane %v340, 7
      %v501 = vrot.slane %v500, 2
      %v502 = vrot.slane %v283, 7
      %v503 = vrot.slane %v502, 2
      %v504 = vrot.slane %v341, 7
      %v505 = vrot.slane %v504, 2
      %v506 = vrot.slane %v342, 7
      %v507 = vrot.slane %v506, 2
      %v508 = vrot.slane %v343, 7
      %v509 = vrot.slane %v508, 2
      %v510 = vrot.slane %v284, 7
      %v511 = vrot.slane %v510, 2
      %v512 = vrot.slane %v344, 7
      %v513 = vrot.slane %v512, 2
      %v514 = vrot.slane %v345, 7
      %v515 = vrot.slane %v514, 2
      %v516 = vrot.slane %v346, 7
      %v517 = vrot.slane %v516, 2
      %v518 = vrot.slane %v285, 7
      %v519 = vrot.slane %v518, 2
      %v520 = vrot.slane %v347, 7
      %v521 = vrot.slane %v520, 2
      %v522 = vrot.slane %v348, 7
      %v523 = vrot.slane %v522, 2
      %v524 = vrot.slane %v349, 7
      %v525 = vrot.slane %v524, 2
      %v590 = vadd.f32 %v270, %v399
      %v591 = vadd.f32 %v302, %v401
      %v592 = vadd.f32 %v303, %v403
      %v593 = vadd.f32 %v304, %v405
      %v594 = vadd.f32 %v271, %v407
      %v595 = vadd.f32 %v305, %v409
      %v596 = vadd.f32 %v306, %v411
      %v597 = vadd.f32 %v307, %v413
      %v598 = vadd.f32 %v272, %v415
      %v599 = vadd.f32 %v308, %v417
      %v600 = vadd.f32 %v309, %v419
      %v601 = vadd.f32 %v310, %v421
      %v602 = vadd.f32 %v273, %v423
      %v603 = vadd.f32 %v311, %v425
      %v604 = vadd.f32 %v312, %v427
      %v605 = vadd.f32 %v313, %v429
      %v606 = vadd.f32 %v274, %v431
      %v607 = vadd.f32 %v314, %v433
      %v608 = vadd.f32 %v315, %v435
      %v609 = vadd.f32 %v316, %v437
      %v610 = vadd.f32 %v275, %v439
      %v611 = vadd.f32 %v317, %v441
      %v612 = vadd.f32 %v318, %v443
      %v613 = vadd.f32 %v319, %v445
      %v614 = vadd.f32 %v276, %v447
      %v615 = vadd.f32 %v320, %v449
      %v616 = vadd.f32 %v321, %v451
      %v617 = vadd.f32 %v322, %v453
      %v618 = vadd.f32 %v277, %v455
      %v619 = vadd.f32 %v323, %v457
      %v620 = vadd.f32 %v324, %v459
      %v621 = vadd.f32 %v325, %v461
      %v622 = vadd.f32 %v278, %v463
      %v623 = vadd.f32 %v326, %v465
      %v624 = vadd.f32 %v327, %v467
      %v625 = vadd.f32 %v328, %v469
      %v626 = vadd.f32 %v279, %v471
      %v627 = vadd.f32 %v329, %v473
      %v628 = vadd.f32 %v330, %v475
      %v629 = vadd.f32 %v331, %v477
      %v630 = vadd.f32 %v280, %v479
      %v631 = vadd.f32 %v332, %v481
      %v632 = vadd.f32 %v333, %v483
      %v633 = vadd.f32 %v334, %v485
      %v634 = vadd.f32 %v281, %v487
      %v635 = vadd.f32 %v335, %v489
      %v636 = vadd.f32 %v336, %v491
      %v637 = vadd.f32 %v337, %v493
      %v638 = vadd.f32 %v282, %v495
      %v639 = vadd.f32 %v338, %v497
      %v640 = vadd.f32 %v339, %v499
      %v641 = vadd.f32 %v340, %v501
      %v642 = vadd.f32 %v283, %v503
      %v643 = vadd.f32 %v341, %v505
      %v644 = vadd.f32 %v342, %v507
      %v645 = vadd.f32 %v343, %v509
      %v646 = vadd.f32 %v284, %v511
      %v647 = vadd.f32 %v344, %v513
      %v648 = vadd.f32 %v345, %v515
      %v649 = vadd.f32 %v346, %v517
      %v650 = vadd.f32 %v285, %v519
      %v651 = vadd.f32 %v347, %v521
      %v652 = vadd.f32 %v348, %v523
      %v653 = vadd.f32 %v349, %v525
      %v654 = vmul.f32 %v590, 0.25
      %v655 = vmul.f32 %v591, 0.25
      %v656 = vmul.f32 %v592, 0.25
      %v657 = vmul.f32 %v593, 0.25
      %v658 = vmul.f32 %v594, 0.25
      %v659 = vmul.f32 %v595, 0.25
      %v660 = vmul.f32 %v596, 0.25
      %v661 = vmul.f32 %v597, 0.25
      %v662 = vmul.f32 %v598, 0.25
      %v663 = vmul.f32 %v599, 0.25
      %v664 = vmul.f32 %v600, 0.25
      %v665 = vmul.f32 %v601, 0.25
      %v666 = vmul.f32 %v602, 0.25
      %v667 = vmul.f32 %v603, 0.25
      %v668 = vmul.f32 %v604, 0.25
      %v669 = vmul.f32 %v605, 0.25
      %v670 = vmul.f32 %v606, 0.25
      %v671 = vmul.f32 %v607, 0.25
      %v672 = vmul.f32 %v608, 0.25
      %v673 = vmul.f32 %v609, 0.25
      %v674 = vmul.f32 %v610, 0.25
      %v675 = vmul.f32 %v611, 0.25
      %v676 = vmul.f32 %v612, 0.25
      %v677 = vmul.f32 %v613, 0.25
      %v678 = vmul.f32 %v614, 0.25
      %v679 = vmul.f32 %v615, 0.25
      %v680 = vmul.f32 %v616, 0.25
      %v681 = vmul.f32 %v617, 0.25
      %v682 = vmul.f32 %v618, 0.25
      %v683 = vmul.f32 %v619, 0.25
      %v684 = vmul.f32 %v620, 0.25
      %v685 = vmul.f32 %v621, 0.25
      %v686 = vmul.f32 %v622, 0.25
      %v687 = vmul.f32 %v623, 0.25
      %v688 = vmul.f32 %v624, 0.25
      %v689 = vmul.f32 %v625, 0.25
      %v690 = vmul.f32 %v626, 0.25
      %v691 = vmul.f32 %v627, 0.25
      %v692 = vmul.f32 %v628, 0.25
      %v693 = vmul.f32 %v629, 0.25
      %v694 = vmul.f32 %v630, 0.25
      %v695 = vmul.f32 %v631, 0.25
      %v696 = vmul.f32 %v632, 0.25
      %v697 = vmul.f32 %v633, 0.25
      %v698 = vmul.f32 %v634, 0.25
      %v699 = vmul.f32 %v635, 0.25
      %v700 = vmul.f32 %v636, 0.25
      %v701 = vmul.f32 %v637, 0.25
      %v702 = vmul.f32 %v638, 0.25
      %v703 = vmul.f32 %v639, 0.25
      %v704 = vmul.f32 %v640, 0.25
      %v705 = vmul.f32 %v641, 0.25
      %v706 = vmul.f32 %v642, 0.25
      %v707 = vmul.f32 %v643, 0.25
      %v708 = vmul.f32 %v644, 0.25
      %v709 = vmul.f32 %v645, 0.25
      %v710 = vmul.f32 %v646, 0.25
      %v711 = vmul.f32 %v647, 0.25
      %v712 = vmul.f32 %v648, 0.25
      %v713 = vmul.f32 %v649, 0.25
      %v714 = vmul.f32 %v650, 0.25
      %v715 = vmul.f32 %v651, 0.25
      %v716 = vmul.f32 %v652, 0.25
      %v717 = vmul.f32 %v653, 0.25
      %v718 = vpack.c.bf16 %v239, %v238
      %v719 = vpack.c.bf16 %v241, %v240
      %v720 = vpack.c.bf16 %v243, %v242
      %v721 = vpack.c.bf16 %v245, %v244
      %v722 = vpack.c.bf16 %v247, %v246
      %v723 = vpack.c.bf16 %v249, %v248
      %v724 = vpack.c.bf16 %v251, %v250
      %v725 = vpack.c.bf16 %v253, %v252
      %v726 = vpack.c.bf16 %v255, %v254
      %v727 = vpack.c.bf16 %v257, %v256
      %v728 = vpack.c.bf16 %v259, %v258
      %v729 = vpack.c.bf16 %v261, %v260
      %v730 = vpack.c.bf16 %v263, %v262
      %v731 = vpack.c.bf16 %v265, %v264
      %v732 = vpack.c.bf16 %v267, %v266
      %v733 = vpack.c.bf16 %v269, %v268
      %v735 = vperm.slane %v227, 0
      %vm737 = vcmask 64512
      %v739 = vsel %vm737, %v718, 0
      %v742 = vsel %vm737, %v719, 0
      %v745 = vsel %vm737, %v720, 0
      %v748 = vsel %vm737, %v721, 0
      %v751 = vsel %vm737, %v722, 0
      %v754 = vsel %vm737, %v723, 0
      %v757 = vsel %vm737, %v724, 0
      %v760 = vsel %vm737, %v725, 0
      %v763 = vsel %vm737, %v726, 0
      %v766 = vsel %vm737, %v727, 0
      %v769 = vsel %vm737, %v728, 0
      %v772 = vsel %vm737, %v729, 0
      %v775 = vsel %vm737, %v730, 0
      %v778 = vsel %vm737, %v731, 0
      %v781 = vsel %vm737, %v732, 0
      %v784 = vsel %vm737, %v733, 0
      %vm786 = vcmask 1043456
      %v788 = vsel %vm786, %v226, 0
      %790 = vmatpush.bf16.msra.mxu0 0
      %791 = vmatpush.bf16.msra.mxu0 0
      %792 = vmatpush.bf16.msra.mxu0 0
      %793 = vmatpush.bf16.msra.mxu0 0
      %794 = vmatpush.bf16.msra.mxu0 0
      %795 = vmatpush.bf16.msra.mxu0 0
      %796 = vmatpush.bf16.msra.mxu0 0
      %797 = vmatpush.bf16.msra.mxu0 %v788
      %798 = vmatmul.bf16.gmra.mxu0 %v739
      %v799 = vpop.f32.mrf.mxu0
      %v800 = vadd.f32 %v735, %v799
      %v801 = vpop.f32.mrf.mxu0
      %v802 = vadd.f32 %v735, %v801
      %803 = vmatmul.bf16.gmra.mxu0 %v742
      %v804 = vpop.f32.mrf.mxu0
      %v805 = vadd.f32 %v735, %v804
      %v806 = vpop.f32.mrf.mxu0
      %v807 = vadd.f32 %v735, %v806
      %808 = vmatmul.bf16.gmra.mxu0 %v745
      %v809 = vpop.f32.mrf.mxu0
      %v810 = vadd.f32 %v735, %v809
      %v811 = vpop.f32.mrf.mxu0
      %v812 = vadd.f32 %v735, %v811
      %813 = vmatmul.bf16.gmra.mxu0 %v748
      %v814 = vpop.f32.mrf.mxu0
      %v815 = vadd.f32 %v735, %v814
      %v816 = vpop.f32.mrf.mxu0
      %v817 = vadd.f32 %v735, %v816
      %818 = vmatmul.bf16.gmra.mxu0 %v751
      %v819 = vpop.f32.mrf.mxu0
      %v820 = vadd.f32 %v735, %v819
      %v821 = vpop.f32.mrf.mxu0
      %v822 = vadd.f32 %v735, %v821
      %823 = vmatmul.bf16.gmra.mxu0 %v754
      %v824 = vpop.f32.mrf.mxu0
      %v825 = vadd.f32 %v735, %v824
      %v826 = vpop.f32.mrf.mxu0
      %v827 = vadd.f32 %v735, %v826
      %828 = vmatmul.bf16.gmra.mxu0 %v757
      %v829 = vpop.f32.mrf.mxu0
      %v830 = vadd.f32 %v735, %v829
      %v831 = vpop.f32.mrf.mxu0
      %v832 = vadd.f32 %v735, %v831
      %833 = vmatmul.bf16.gmra.mxu0 %v760
      %v834 = vpop.f32.mrf.mxu0
      %v835 = vadd.f32 %v735, %v834
      %v836 = vpop.f32.mrf.mxu0
      %v837 = vadd.f32 %v735, %v836
      %838 = vmatmul.bf16.gmra.mxu0 %v763
      %v839 = vpop.f32.mrf.mxu0
      %v840 = vadd.f32 %v735, %v839
      %v841 = vpop.f32.mrf.mxu0
      %v842 = vadd.f32 %v735, %v841
      %843 = vmatmul.bf16.gmra.mxu0 %v766
      %v844 = vpop.f32.mrf.mxu0
      %v845 = vadd.f32 %v735, %v844
      %v846 = vpop.f32.mrf.mxu0
      %v847 = vadd.f32 %v735, %v846
      %848 = vmatmul.bf16.gmra.mxu0 %v769
      %v849 = vpop.f32.mrf.mxu0
      %v850 = vadd.f32 %v735, %v849
      %v851 = vpop.f32.mrf.mxu0
      %v852 = vadd.f32 %v735, %v851
      %853 = vmatmul.bf16.gmra.mxu0 %v772
      %v854 = vpop.f32.mrf.mxu0
      %v855 = vadd.f32 %v735, %v854
      %v856 = vpop.f32.mrf.mxu0
      %v857 = vadd.f32 %v735, %v856
      %858 = vmatmul.bf16.gmra.mxu0 %v775
      %v859 = vpop.f32.mrf.mxu0
      %v860 = vadd.f32 %v735, %v859
      %v861 = vpop.f32.mrf.mxu0
      %v862 = vadd.f32 %v735, %v861
      %863 = vmatmul.bf16.gmra.mxu0 %v778
      %v864 = vpop.f32.mrf.mxu0
      %v865 = vadd.f32 %v735, %v864
      %v866 = vpop.f32.mrf.mxu0
      %v867 = vadd.f32 %v735, %v866
      %868 = vmatmul.bf16.gmra.mxu0 %v781
      %v869 = vpop.f32.mrf.mxu0
      %v870 = vadd.f32 %v735, %v869
      %v871 = vpop.f32.mrf.mxu0
      %v872 = vadd.f32 %v735, %v871
      %873 = vmatmul.bf16.gmra.mxu0 %v784
      %v874 = vpop.f32.mrf.mxu0
      %v875 = vadd.f32 %v735, %v874
      %v876 = vpop.f32.mrf.mxu0
      %v877 = vadd.f32 %v735, %v876
      %878 = vdwg.mxu0
      %vm879 = vcmp.gt.f32.partialorder %v800, 0.0
      %vm880 = vcmp.gt.f32.partialorder %v802, 0.0
      %vm881 = vcmp.gt.f32.partialorder %v805, 0.0
      %vm882 = vcmp.gt.f32.partialorder %v807, 0.0
      %vm883 = vcmp.gt.f32.partialorder %v810, 0.0
      %vm884 = vcmp.gt.f32.partialorder %v812, 0.0
      %vm885 = vcmp.gt.f32.partialorder %v815, 0.0
      %vm886 = vcmp.gt.f32.partialorder %v817, 0.0
      %vm887 = vcmp.gt.f32.partialorder %v820, 0.0
      %vm888 = vcmp.gt.f32.partialorder %v822, 0.0
      %vm889 = vcmp.gt.f32.partialorder %v825, 0.0
      %vm890 = vcmp.gt.f32.partialorder %v827, 0.0
      %vm891 = vcmp.gt.f32.partialorder %v830, 0.0
      %vm892 = vcmp.gt.f32.partialorder %v832, 0.0
      %vm893 = vcmp.gt.f32.partialorder %v835, 0.0
      %vm894 = vcmp.gt.f32.partialorder %v837, 0.0
      %vm895 = vcmp.gt.f32.partialorder %v840, 0.0
      %vm896 = vcmp.gt.f32.partialorder %v842, 0.0
      %vm897 = vcmp.gt.f32.partialorder %v845, 0.0
      %vm898 = vcmp.gt.f32.partialorder %v847, 0.0
      %vm899 = vcmp.gt.f32.partialorder %v850, 0.0
      %vm900 = vcmp.gt.f32.partialorder %v852, 0.0
      %vm901 = vcmp.gt.f32.partialorder %v855, 0.0
      %vm902 = vcmp.gt.f32.partialorder %v857, 0.0
      %vm903 = vcmp.gt.f32.partialorder %v860, 0.0
      %vm904 = vcmp.gt.f32.partialorder %v862, 0.0
      %vm905 = vcmp.gt.f32.partialorder %v865, 0.0
      %vm906 = vcmp.gt.f32.partialorder %v867, 0.0
      %vm907 = vcmp.gt.f32.partialorder %v870, 0.0
      %vm908 = vcmp.gt.f32.partialorder %v872, 0.0
      %vm909 = vcmp.gt.f32.partialorder %v875, 0.0
      %vm910 = vcmp.gt.f32.partialorder %v877, 0.0
      %v911 = vmul.f32 %v800, 0.01
      %v912 = vmul.f32 %v802, 0.01
      %v913 = vmul.f32 %v805, 0.01
      %v914 = vmul.f32 %v807, 0.01
      %v915 = vmul.f32 %v810, 0.01
      %v916 = vmul.f32 %v812, 0.01
      %v917 = vmul.f32 %v815, 0.01
      %v918 = vmul.f32 %v817, 0.01
      %v919 = vmul.f32 %v820, 0.01
      %v920 = vmul.f32 %v822, 0.01
      %v921 = vmul.f32 %v825, 0.01
      %v922 = vmul.f32 %v827, 0.01
      %v923 = vmul.f32 %v830, 0.01
      %v924 = vmul.f32 %v832, 0.01
      %v925 = vmul.f32 %v835, 0.01
      %v926 = vmul.f32 %v837, 0.01
      %v927 = vmul.f32 %v840, 0.01
      %v928 = vmul.f32 %v842, 0.01
      %v929 = vmul.f32 %v845, 0.01
      %v930 = vmul.f32 %v847, 0.01
      %v931 = vmul.f32 %v850, 0.01
      %v932 = vmul.f32 %v852, 0.01
      %v933 = vmul.f32 %v855, 0.01
      %v934 = vmul.f32 %v857, 0.01
      %v935 = vmul.f32 %v860, 0.01
      %v936 = vmul.f32 %v862, 0.01
      %v937 = vmul.f32 %v865, 0.01
      %v938 = vmul.f32 %v867, 0.01
      %v939 = vmul.f32 %v870, 0.01
      %v940 = vmul.f32 %v872, 0.01
      %v941 = vmul.f32 %v875, 0.01
      %v942 = vmul.f32 %v877, 0.01
      %v943 = vsel %vm879, %v800, %v911
      %v944 = vsel %vm880, %v802, %v912
      %v945 = vsel %vm881, %v805, %v913
      %v946 = vsel %vm882, %v807, %v914
      %v947 = vsel %vm883, %v810, %v915
      %v948 = vsel %vm884, %v812, %v916
      %v949 = vsel %vm885, %v815, %v917
      %v950 = vsel %vm886, %v817, %v918
      %v951 = vsel %vm887, %v820, %v919
      %v952 = vsel %vm888, %v822, %v920
      %v953 = vsel %vm889, %v825, %v921
      %v954 = vsel %vm890, %v827, %v922
      %v955 = vsel %vm891, %v830, %v923
      %v956 = vsel %vm892, %v832, %v924
      %v957 = vsel %vm893, %v835, %v925
      %v958 = vsel %vm894, %v837, %v926
      %v959 = vsel %vm895, %v840, %v927
      %v960 = vsel %vm896, %v842, %v928
      %v961 = vsel %vm897, %v845, %v929
      %v962 = vsel %vm898, %v847, %v930
      %v963 = vsel %vm899, %v850, %v931
      %v964 = vsel %vm900, %v852, %v932
      %v965 = vsel %vm901, %v855, %v933
      %v966 = vsel %vm902, %v857, %v934
      %v967 = vsel %vm903, %v860, %v935
      %v968 = vsel %vm904, %v862, %v936
      %v969 = vsel %vm905, %v865, %v937
      %v970 = vsel %vm906, %v867, %v938
      %v971 = vsel %vm907, %v870, %v939
      %v972 = vsel %vm908, %v872, %v940
      %v973 = vsel %vm909, %v875, %v941
      %v974 = vsel %vm910, %v877, %v942
      %v975 = vpack.c.bf16 %v654, %v654
      %v976 = vpack.c.bf16 %v655, %v655
      %v977 = vpack.c.bf16 %v656, %v656
      %v978 = vpack.c.bf16 %v657, %v657
      %v979 = vpack.c.bf16 %v658, %v658
      %v980 = vpack.c.bf16 %v659, %v659
      %v981 = vpack.c.bf16 %v660, %v660
      %v982 = vpack.c.bf16 %v661, %v661
      %v983 = vpack.c.bf16 %v662, %v662
      %v984 = vpack.c.bf16 %v663, %v663
      %v985 = vpack.c.bf16 %v664, %v664
      %v986 = vpack.c.bf16 %v665, %v665
      %v987 = vpack.c.bf16 %v666, %v666
      %v988 = vpack.c.bf16 %v667, %v667
      %v989 = vpack.c.bf16 %v668, %v668
      %v990 = vpack.c.bf16 %v669, %v669
      %v991 = vpack.c.bf16 %v670, %v670
      %v992 = vpack.c.bf16 %v671, %v671
      %v993 = vpack.c.bf16 %v672, %v672
      %v994 = vpack.c.bf16 %v673, %v673
      %v995 = vpack.c.bf16 %v674, %v674
      %v996 = vpack.c.bf16 %v675, %v675
      %v997 = vpack.c.bf16 %v676, %v676
      %v998 = vpack.c.bf16 %v677, %v677
      %v999 = vpack.c.bf16 %v678, %v678
      %v1000 = vpack.c.bf16 %v679, %v679
      %v1001 = vpack.c.bf16 %v680, %v680
      %v1002 = vpack.c.bf16 %v681, %v681
      %v1003 = vpack.c.bf16 %v682, %v682
      %v1004 = vpack.c.bf16 %v683, %v683
      %v1005 = vpack.c.bf16 %v684, %v684
      %v1006 = vpack.c.bf16 %v685, %v685
      %v1007 = vpack.c.bf16 %v686, %v686
      %v1008 = vpack.c.bf16 %v687, %v687
      %v1009 = vpack.c.bf16 %v688, %v688
      %v1010 = vpack.c.bf16 %v689, %v689
      %v1011 = vpack.c.bf16 %v690, %v690
      %v1012 = vpack.c.bf16 %v691, %v691
      %v1013 = vpack.c.bf16 %v692, %v692
      %v1014 = vpack.c.bf16 %v693, %v693
      %v1015 = vpack.c.bf16 %v694, %v694
      %v1016 = vpack.c.bf16 %v695, %v695
      %v1017 = vpack.c.bf16 %v696, %v696
      %v1018 = vpack.c.bf16 %v697, %v697
      %v1019 = vpack.c.bf16 %v698, %v698
      %v1020 = vpack.c.bf16 %v699, %v699
      %v1021 = vpack.c.bf16 %v700, %v700
      %v1022 = vpack.c.bf16 %v701, %v701
      %v1023 = vpack.c.bf16 %v702, %v702
      %v1024 = vpack.c.bf16 %v703, %v703
      %v1025 = vpack.c.bf16 %v704, %v704
      %v1026 = vpack.c.bf16 %v705, %v705
      %v1027 = vpack.c.bf16 %v706, %v706
      %v1028 = vpack.c.bf16 %v707, %v707
      %v1029 = vpack.c.bf16 %v708, %v708
      %v1030 = vpack.c.bf16 %v709, %v709
      %v1031 = vpack.c.bf16 %v710, %v710
      %v1032 = vpack.c.bf16 %v711, %v711
      %v1033 = vpack.c.bf16 %v712, %v712
      %v1034 = vpack.c.bf16 %v713, %v713
      %v1035 = vpack.c.bf16 %v714, %v714
      %v1036 = vpack.c.bf16 %v715, %v715
      %v1037 = vpack.c.bf16 %v716, %v716
      %v1038 = vpack.c.bf16 %v717, %v717
      %v1103 = vunpack.c.l.b16 %v975
      %v1104 = vunpack.c.l.b16 %v976
      %v1105 = vunpack.c.l.b16 %v977
      %v1106 = vunpack.c.l.b16 %v978
      %v1107 = vunpack.c.l.b16 %v979
      %v1108 = vunpack.c.l.b16 %v980
      %v1109 = vunpack.c.l.b16 %v981
      %v1110 = vunpack.c.l.b16 %v982
      %v1111 = vunpack.c.l.b16 %v983
      %v1112 = vunpack.c.l.b16 %v984
      %v1113 = vunpack.c.l.b16 %v985
      %v1114 = vunpack.c.l.b16 %v986
      %v1115 = vunpack.c.l.b16 %v987
      %v1116 = vunpack.c.l.b16 %v988
      %v1117 = vunpack.c.l.b16 %v989
      %v1118 = vunpack.c.l.b16 %v990
      %v1119 = vunpack.c.l.b16 %v991
      %v1120 = vunpack.c.l.b16 %v992
      %v1121 = vunpack.c.l.b16 %v993
      %v1122 = vunpack.c.l.b16 %v994
      %v1123 = vunpack.c.l.b16 %v995
      %v1124 = vunpack.c.l.b16 %v996
      %v1125 = vunpack.c.l.b16 %v997
      %v1126 = vunpack.c.l.b16 %v998
      %v1127 = vunpack.c.l.b16 %v999
      %v1128 = vunpack.c.l.b16 %v1000
      %v1129 = vunpack.c.l.b16 %v1001
      %v1130 = vunpack.c.l.b16 %v1002
      %v1131 = vunpack.c.l.b16 %v1003
      %v1132 = vunpack.c.l.b16 %v1004
      %v1133 = vunpack.c.l.b16 %v1005
      %v1134 = vunpack.c.l.b16 %v1006
      %v1135 = vunpack.c.l.b16 %v1007
      %v1136 = vunpack.c.l.b16 %v1008
      %v1137 = vunpack.c.l.b16 %v1009
      %v1138 = vunpack.c.l.b16 %v1010
      %v1139 = vunpack.c.l.b16 %v1011
      %v1140 = vunpack.c.l.b16 %v1012
      %v1141 = vunpack.c.l.b16 %v1013
      %v1142 = vunpack.c.l.b16 %v1014
      %v1143 = vunpack.c.l.b16 %v1015
      %v1144 = vunpack.c.l.b16 %v1016
      %v1145 = vunpack.c.l.b16 %v1017
      %v1146 = vunpack.c.l.b16 %v1018
      %v1147 = vunpack.c.l.b16 %v1019
      %v1148 = vunpack.c.l.b16 %v1020
      %v1149 = vunpack.c.l.b16 %v1021
      %v1150 = vunpack.c.l.b16 %v1022
      %v1151 = vunpack.c.l.b16 %v1023
      %v1152 = vunpack.c.l.b16 %v1024
      %v1153 = vunpack.c.l.b16 %v1025
      %v1154 = vunpack.c.l.b16 %v1026
      %v1155 = vunpack.c.l.b16 %v1027
      %v1156 = vunpack.c.l.b16 %v1028
      %v1157 = vunpack.c.l.b16 %v1029
      %v1158 = vunpack.c.l.b16 %v1030
      %v1159 = vunpack.c.l.b16 %v1031
      %v1160 = vunpack.c.l.b16 %v1032
      %v1161 = vunpack.c.l.b16 %v1033
      %v1162 = vunpack.c.l.b16 %v1034
      %v1163 = vunpack.c.l.b16 %v1035
      %v1164 = vunpack.c.l.b16 %v1036
      %v1165 = vunpack.c.l.b16 %v1037
      %v1166 = vunpack.c.l.b16 %v1038
      %v1167 = vrot.slane %v1104, 7
      %vm1168 = vcmask 1041409
      %v1169 = vsel %vm1168, %v1167, %v1103
      %v1170 = vrot.slane %v1105, 6
      %vm1171 = vcmask 1042434
      %v1172 = vsel %vm1171, %v1170, %v1169
      %v1173 = vrot.slane %v1106, 5
      %vm1174 = vcmask 1043459
      %v1175 = vsel %vm1174, %v1173, %v1172
      %v1176 = vrot.slane %v1107, 4
      %vm1177 = vcmask 1044484
      %v1178 = vsel %vm1177, %v1176, %v1175
      %v1179 = vrot.slane %v1108, 3
      %vm1180 = vcmask 1045509
      %v1181 = vsel %vm1180, %v1179, %v1178
      %v1182 = vrot.slane %v1109, 2
      %vm1183 = vcmask 1046534
      %v1184 = vsel %vm1183, %v1182, %v1181
      %v1185 = vrot.slane %v1110, 1
      %vm1186 = vcmask 1047559
      %v1187 = vsel %vm1186, %v1185, %v1184
      %v1188 = vrot.slane %v1112, 7
      %v1189 = vsel %vm1168, %v1188, %v1111
      %v1190 = vrot.slane %v1113, 6
      %v1191 = vsel %vm1171, %v1190, %v1189
      %v1192 = vrot.slane %v1114, 5
      %v1193 = vsel %vm1174, %v1192, %v1191
      %v1194 = vrot.slane %v1115, 4
      %v1195 = vsel %vm1177, %v1194, %v1193
      %v1196 = vrot.slane %v1116, 3
      %v1197 = vsel %vm1180, %v1196, %v1195
      %v1198 = vrot.slane %v1117, 2
      %v1199 = vsel %vm1183, %v1198, %v1197
      %v1200 = vrot.slane %v1118, 1
      %v1201 = vsel %vm1186, %v1200, %v1199
      %v1202 = vrot.slane %v1120, 7
      %v1203 = vsel %vm1168, %v1202, %v1119
      %v1204 = vrot.slane %v1121, 6
      %v1205 = vsel %vm1171, %v1204, %v1203
      %v1206 = vrot.slane %v1122, 5
      %v1207 = vsel %vm1174, %v1206, %v1205
      %v1208 = vrot.slane %v1123, 4
      %v1209 = vsel %vm1177, %v1208, %v1207
      %v1210 = vrot.slane %v1124, 3
      %v1211 = vsel %vm1180, %v1210, %v1209
      %v1212 = vrot.slane %v1125, 2
      %v1213 = vsel %vm1183, %v1212, %v1211
      %v1214 = vrot.slane %v1126, 1
      %v1215 = vsel %vm1186, %v1214, %v1213
      %v1216 = vrot.slane %v1128, 7
      %v1217 = vsel %vm1168, %v1216, %v1127
      %v1218 = vrot.slane %v1129, 6
      %v1219 = vsel %vm1171, %v1218, %v1217
      %v1220 = vrot.slane %v1130, 5
      %v1221 = vsel %vm1174, %v1220, %v1219
      %v1222 = vrot.slane %v1131, 4
      %v1223 = vsel %vm1177, %v1222, %v1221
      %v1224 = vrot.slane %v1132, 3
      %v1225 = vsel %vm1180, %v1224, %v1223
      %v1226 = vrot.slane %v1133, 2
      %v1227 = vsel %vm1183, %v1226, %v1225
      %v1228 = vrot.slane %v1134, 1
      %v1229 = vsel %vm1186, %v1228, %v1227
      %v1230 = vrot.slane %v1136, 7
      %v1231 = vsel %vm1168, %v1230, %v1135
      %v1232 = vrot.slane %v1137, 6
      %v1233 = vsel %vm1171, %v1232, %v1231
      %v1234 = vrot.slane %v1138, 5
      %v1235 = vsel %vm1174, %v1234, %v1233
      %v1236 = vrot.slane %v1139, 4
      %v1237 = vsel %vm1177, %v1236, %v1235
      %v1238 = vrot.slane %v1140, 3
      %v1239 = vsel %vm1180, %v1238, %v1237
      %v1240 = vrot.slane %v1141, 2
      %v1241 = vsel %vm1183, %v1240, %v1239
      %v1242 = vrot.slane %v1142, 1
      %v1243 = vsel %vm1186, %v1242, %v1241
      %v1244 = vrot.slane %v1144, 7
      %v1245 = vsel %vm1168, %v1244, %v1143
      %v1246 = vrot.slane %v1145, 6
      %v1247 = vsel %vm1171, %v1246, %v1245
      %v1248 = vrot.slane %v1146, 5
      %v1249 = vsel %vm1174, %v1248, %v1247
      %v1250 = vrot.slane %v1147, 4
      %v1251 = vsel %vm1177, %v1250, %v1249
      %v1252 = vrot.slane %v1148, 3
      %v1253 = vsel %vm1180, %v1252, %v1251
      %v1254 = vrot.slane %v1149, 2
      %v1255 = vsel %vm1183, %v1254, %v1253
      %v1256 = vrot.slane %v1150, 1
      %v1257 = vsel %vm1186, %v1256, %v1255
      %v1258 = vrot.slane %v1152, 7
      %v1259 = vsel %vm1168, %v1258, %v1151
      %v1260 = vrot.slane %v1153, 6
      %v1261 = vsel %vm1171, %v1260, %v1259
      %v1262 = vrot.slane %v1154, 5
      %v1263 = vsel %vm1174, %v1262, %v1261
      %v1264 = vrot.slane %v1155, 4
      %v1265 = vsel %vm1177, %v1264, %v1263
      %v1266 = vrot.slane %v1156, 3
      %v1267 = vsel %vm1180, %v1266, %v1265
      %v1268 = vrot.slane %v1157, 2
      %v1269 = vsel %vm1183, %v1268, %v1267
      %v1270 = vrot.slane %v1158, 1
      %v1271 = vsel %vm1186, %v1270, %v1269
      %v1272 = vrot.slane %v1160, 7
      %v1273 = vsel %vm1168, %v1272, %v1159
      %v1274 = vrot.slane %v1161, 6
      %v1275 = vsel %vm1171, %v1274, %v1273
      %v1276 = vrot.slane %v1162, 5
      %v1277 = vsel %vm1174, %v1276, %v1275
      %v1278 = vrot.slane %v1163, 4
      %v1279 = vsel %vm1177, %v1278, %v1277
      %v1280 = vrot.slane %v1164, 3
      %v1281 = vsel %vm1180, %v1280, %v1279
      %v1282 = vrot.slane %v1165, 2
      %v1283 = vsel %vm1183, %v1282, %v1281
      %v1284 = vrot.slane %v1166, 1
      %v1285 = vsel %vm1186, %v1284, %v1283
      %v1286 = vpack.c.b16 %v1201, %v1187
      %v1287 = vpack.c.b16 %v1229, %v1215
      %v1288 = vpack.c.b16 %v1257, %v1243
      %v1289 = vpack.c.b16 %v1285, %v1271
      %v1291 = vsel %vm737, %v1286, 0
      %v1294 = vsel %vm737, %v1287, 0
      %v1297 = vsel %vm737, %v1288, 0
      %v1300 = vsel %vm737, %v1289, 0
      %1302 = vmatpush.bf16.msra.mxu0 0
      %1303 = vmatpush.bf16.msra.mxu0 0
      %1304 = vmatpush.bf16.msra.mxu0 0
      %1305 = vmatpush.bf16.msra.mxu0 0
      %1306 = vmatpush.bf16.msra.mxu0 0
      %1307 = vmatpush.bf16.msra.mxu0 0
      %1308 = vmatpush.bf16.msra.mxu0 0
      %1309 = vmatpush.bf16.msra.mxu0 %v788
      %1310 = vmatmul.bf16.gmra.mxu0 %v1291
      %v1311 = vpop.f32.mrf.mxu0
      %v1312 = vadd.f32 %v735, %v1311
      %v1313 = vpop.f32.mrf.mxu0
      %v1314 = vadd.f32 %v735, %v1313
      %1315 = vmatmul.bf16.gmra.mxu0 %v1294
      %v1316 = vpop.f32.mrf.mxu0
      %v1317 = vadd.f32 %v735, %v1316
      %v1318 = vpop.f32.mrf.mxu0
      %v1319 = vadd.f32 %v735, %v1318
      %1320 = vmatmul.bf16.gmra.mxu0 %v1297
      %v1321 = vpop.f32.mrf.mxu0
      %v1322 = vadd.f32 %v735, %v1321
      %v1323 = vpop.f32.mrf.mxu0
      %v1324 = vadd.f32 %v735, %v1323
      %1325 = vmatmul.bf16.gmra.mxu0 %v1300
      %v1326 = vpop.f32.mrf.mxu0
      %v1327 = vadd.f32 %v735, %v1326
      %v1328 = vpop.f32.mrf.mxu0
      %v1329 = vadd.f32 %v735, %v1328
      %1330 = vdwg.mxu0
      %vm1331 = vcmp.gt.f32.partialorder %v1312, 0.0
      %vm1332 = vcmp.gt.f32.partialorder %v1314, 0.0
      %vm1333 = vcmp.gt.f32.partialorder %v1317, 0.0
      %vm1334 = vcmp.gt.f32.partialorder %v1319, 0.0
      %vm1335 = vcmp.gt.f32.partialorder %v1322, 0.0
      %vm1336 = vcmp.gt.f32.partialorder %v1324, 0.0
      %vm1337 = vcmp.gt.f32.partialorder %v1327, 0.0
      %vm1338 = vcmp.gt.f32.partialorder %v1329, 0.0
      %v1339 = vmul.f32 %v1312, 0.01
      %v1340 = vmul.f32 %v1314, 0.01
      %v1341 = vmul.f32 %v1317, 0.01
      %v1342 = vmul.f32 %v1319, 0.01
      %v1343 = vmul.f32 %v1322, 0.01
      %v1344 = vmul.f32 %v1324, 0.01
      %v1345 = vmul.f32 %v1327, 0.01
      %v1346 = vmul.f32 %v1329, 0.01
      %v1347 = vsel %vm1331, %v1312, %v1339
      %v1348 = vsel %vm1332, %v1314, %v1340
      %v1349 = vsel %vm1333, %v1317, %v1341
      %v1350 = vsel %vm1334, %v1319, %v1342
      %v1351 = vsel %vm1335, %v1322, %v1343
      %v1352 = vsel %vm1336, %v1324, %v1344
      %v1353 = vsel %vm1337, %v1327, %v1345
      %v1354 = vsel %vm1338, %v1329, %v1346
      %v1355 = vlaneseq
      %v1356 = vshrl.u32 %v1355, 7
      %v1357 = vadd.s32 %v1356, 8
      %v1358 = vadd.s32 %v1356, 16
      %v1359 = vadd.s32 %v1356, 24
      %v1360 = vadd.s32 %v1356, 32
      %v1361 = vadd.s32 %v1356, 40
      %v1362 = vadd.s32 %v1356, 48
      %v1363 = vadd.s32 %v1356, 56
      %v1364 = vadd.s32 %v1356, 64
      %v1365 = vadd.s32 %v1356, 72
      %v1366 = vadd.s32 %v1356, 80
      %v1367 = vadd.s32 %v1356, 88
      %v1368 = vadd.s32 %v1356, 96
      %v1369 = vadd.s32 %v1356, 104
      %v1370 = vadd.s32 %v1356, 112
      %v1371 = vadd.s32 %v1356, 120
      %v1372 = vadd.s32 %v1356, 128
      %v1373 = vadd.s32 %v1356, 136
      %v1374 = vadd.s32 %v1356, 144
      %v1375 = vadd.s32 %v1356, 152
      %v1376 = vadd.s32 %v1356, 160
      %v1377 = vadd.s32 %v1356, 168
      %v1378 = vadd.s32 %v1356, 176
      %v1379 = vadd.s32 %v1356, 184
      %v1380 = vadd.s32 %v1356, 192
      %v1381 = vadd.s32 %v1356, 200
      %v1382 = vadd.s32 %v1356, 208
      %v1383 = vadd.s32 %v1356, 216
      %v1384 = vadd.s32 %v1356, 224
      %v1385 = vadd.s32 %v1356, 232
      %v1386 = vadd.s32 %v1356, 240
      %v1387 = vadd.s32 %v1356, 248
      %vm1388 = vcmp.lt.s32.totalorder %v1356, 0
      %v1389 = vsub.s32 0, %v1356
      %v1390 = vsel %vm1388, %v1389, %v1356
      %v1391 = vshrl.u32 %v1390, 4
      %v1392 = vand.u32 %v1390, 15
      %v1393 = vsub.s32 0, %v1392
      %v1394 = vsel %vm1388, %v1393, %v1392
      %vm1395 = vcmp.lt.s32.totalorder %v1357, 0
      %v1396 = vsub.s32 0, %v1357
      %v1397 = vsel %vm1395, %v1396, %v1357
      %v1398 = vshrl.u32 %v1397, 4
      %v1399 = vand.u32 %v1397, 15
      %v1400 = vsub.s32 0, %v1399
      %v1401 = vsel %vm1395, %v1400, %v1399
      %vm1402 = vcmp.lt.s32.totalorder %v1358, 0
      %v1403 = vsub.s32 0, %v1358
      %v1404 = vsel %vm1402, %v1403, %v1358
      %v1405 = vshrl.u32 %v1404, 4
      %v1406 = vand.u32 %v1404, 15
      %v1407 = vsub.s32 0, %v1406
      %v1408 = vsel %vm1402, %v1407, %v1406
      %vm1409 = vcmp.lt.s32.totalorder %v1359, 0
      %v1410 = vsub.s32 0, %v1359
      %v1411 = vsel %vm1409, %v1410, %v1359
      %v1412 = vshrl.u32 %v1411, 4
      %v1413 = vand.u32 %v1411, 15
      %v1414 = vsub.s32 0, %v1413
      %v1415 = vsel %vm1409, %v1414, %v1413
      %vm1416 = vcmp.lt.s32.totalorder %v1360, 0
      %v1417 = vsub.s32 0, %v1360
      %v1418 = vsel %vm1416, %v1417, %v1360
      %v1419 = vshrl.u32 %v1418, 4
      %v1420 = vand.u32 %v1418, 15
      %v1421 = vsub.s32 0, %v1420
      %v1422 = vsel %vm1416, %v1421, %v1420
      %vm1423 = vcmp.lt.s32.totalorder %v1361, 0
      %v1424 = vsub.s32 0, %v1361
      %v1425 = vsel %vm1423, %v1424, %v1361
      %v1426 = vshrl.u32 %v1425, 4
      %v1427 = vand.u32 %v1425, 15
      %v1428 = vsub.s32 0, %v1427
      %v1429 = vsel %vm1423, %v1428, %v1427
      %vm1430 = vcmp.lt.s32.totalorder %v1362, 0
      %v1431 = vsub.s32 0, %v1362
      %v1432 = vsel %vm1430, %v1431, %v1362
      %v1433 = vshrl.u32 %v1432, 4
      %v1434 = vand.u32 %v1432, 15
      %v1435 = vsub.s32 0, %v1434
      %v1436 = vsel %vm1430, %v1435, %v1434
      %vm1437 = vcmp.lt.s32.totalorder %v1363, 0
      %v1438 = vsub.s32 0, %v1363
      %v1439 = vsel %vm1437, %v1438, %v1363
      %v1440 = vshrl.u32 %v1439, 4
      %v1441 = vand.u32 %v1439, 15
      %v1442 = vsub.s32 0, %v1441
      %v1443 = vsel %vm1437, %v1442, %v1441
      %vm1444 = vcmp.lt.s32.totalorder %v1364, 0
      %v1445 = vsub.s32 0, %v1364
      %v1446 = vsel %vm1444, %v1445, %v1364
      %v1447 = vshrl.u32 %v1446, 4
      %v1448 = vand.u32 %v1446, 15
      %v1449 = vsub.s32 0, %v1448
      %v1450 = vsel %vm1444, %v1449, %v1448
      %vm1451 = vcmp.lt.s32.totalorder %v1365, 0
      %v1452 = vsub.s32 0, %v1365
      %v1453 = vsel %vm1451, %v1452, %v1365
      %v1454 = vshrl.u32 %v1453, 4
      %v1455 = vand.u32 %v1453, 15
      %v1456 = vsub.s32 0, %v1455
      %v1457 = vsel %vm1451, %v1456, %v1455
      %vm1458 = vcmp.lt.s32.totalorder %v1366, 0
      %v1459 = vsub.s32 0, %v1366
      %v1460 = vsel %vm1458, %v1459, %v1366
      %v1461 = vshrl.u32 %v1460, 4
      %v1462 = vand.u32 %v1460, 15
      %v1463 = vsub.s32 0, %v1462
      %v1464 = vsel %vm1458, %v1463, %v1462
      %vm1465 = vcmp.lt.s32.totalorder %v1367, 0
      %v1466 = vsub.s32 0, %v1367
      %v1467 = vsel %vm1465, %v1466, %v1367
      %v1468 = vshrl.u32 %v1467, 4
      %v1469 = vand.u32 %v1467, 15
      %v1470 = vsub.s32 0, %v1469
      %v1471 = vsel %vm1465, %v1470, %v1469
      %vm1472 = vcmp.lt.s32.totalorder %v1368, 0
      %v1473 = vsub.s32 0, %v1368
      %v1474 = vsel %vm1472, %v1473, %v1368
      %v1475 = vshrl.u32 %v1474, 4
      %v1476 = vand.u32 %v1474, 15
      %v1477 = vsub.s32 0, %v1476
      %v1478 = vsel %vm1472, %v1477, %v1476
      %vm1479 = vcmp.lt.s32.totalorder %v1369, 0
      %v1480 = vsub.s32 0, %v1369
      %v1481 = vsel %vm1479, %v1480, %v1369
      %v1482 = vshrl.u32 %v1481, 4
      %v1483 = vand.u32 %v1481, 15
      %v1484 = vsub.s32 0, %v1483
      %v1485 = vsel %vm1479, %v1484, %v1483
      %vm1486 = vcmp.lt.s32.totalorder %v1370, 0
      %v1487 = vsub.s32 0, %v1370
      %v1488 = vsel %vm1486, %v1487, %v1370
      %v1489 = vshrl.u32 %v1488, 4
      %v1490 = vand.u32 %v1488, 15
      %v1491 = vsub.s32 0, %v1490
      %v1492 = vsel %vm1486, %v1491, %v1490
      %vm1493 = vcmp.lt.s32.totalorder %v1371, 0
      %v1494 = vsub.s32 0, %v1371
      %v1495 = vsel %vm1493, %v1494, %v1371
      %v1496 = vshrl.u32 %v1495, 4
      %v1497 = vand.u32 %v1495, 15
      %v1498 = vsub.s32 0, %v1497
      %v1499 = vsel %vm1493, %v1498, %v1497
      %vm1500 = vcmp.lt.s32.totalorder %v1372, 0
      %v1501 = vsub.s32 0, %v1372
      %v1502 = vsel %vm1500, %v1501, %v1372
      %v1503 = vshrl.u32 %v1502, 4
      %v1504 = vand.u32 %v1502, 15
      %v1505 = vsub.s32 0, %v1504
      %v1506 = vsel %vm1500, %v1505, %v1504
      %vm1507 = vcmp.lt.s32.totalorder %v1373, 0
      %v1508 = vsub.s32 0, %v1373
      %v1509 = vsel %vm1507, %v1508, %v1373
      %v1510 = vshrl.u32 %v1509, 4
      %v1511 = vand.u32 %v1509, 15
      %v1512 = vsub.s32 0, %v1511
      %v1513 = vsel %vm1507, %v1512, %v1511
      %vm1514 = vcmp.lt.s32.totalorder %v1374, 0
      %v1515 = vsub.s32 0, %v1374
      %v1516 = vsel %vm1514, %v1515, %v1374
      %v1517 = vshrl.u32 %v1516, 4
      %v1518 = vand.u32 %v1516, 15
      %v1519 = vsub.s32 0, %v1518
      %v1520 = vsel %vm1514, %v1519, %v1518
      %vm1521 = vcmp.lt.s32.totalorder %v1375, 0
      %v1522 = vsub.s32 0, %v1375
      %v1523 = vsel %vm1521, %v1522, %v1375
      %v1524 = vshrl.u32 %v1523, 4
      %v1525 = vand.u32 %v1523, 15
      %v1526 = vsub.s32 0, %v1525
      %v1527 = vsel %vm1521, %v1526, %v1525
      %vm1528 = vcmp.lt.s32.totalorder %v1376, 0
      %v1529 = vsub.s32 0, %v1376
      %v1530 = vsel %vm1528, %v1529, %v1376
      %v1531 = vshrl.u32 %v1530, 4
      %v1532 = vand.u32 %v1530, 15
      %v1533 = vsub.s32 0, %v1532
      %v1534 = vsel %vm1528, %v1533, %v1532
      %vm1535 = vcmp.lt.s32.totalorder %v1377, 0
      %v1536 = vsub.s32 0, %v1377
      %v1537 = vsel %vm1535, %v1536, %v1377
      %v1538 = vshrl.u32 %v1537, 4
      %v1539 = vand.u32 %v1537, 15
      %v1540 = vsub.s32 0, %v1539
      %v1541 = vsel %vm1535, %v1540, %v1539
      %vm1542 = vcmp.lt.s32.totalorder %v1378, 0
      %v1543 = vsub.s32 0, %v1378
      %v1544 = vsel %vm1542, %v1543, %v1378
      %v1545 = vshrl.u32 %v1544, 4
      %v1546 = vand.u32 %v1544, 15
      %v1547 = vsub.s32 0, %v1546
      %v1548 = vsel %vm1542, %v1547, %v1546
      %vm1549 = vcmp.lt.s32.totalorder %v1379, 0
      %v1550 = vsub.s32 0, %v1379
      %v1551 = vsel %vm1549, %v1550, %v1379
      %v1552 = vshrl.u32 %v1551, 4
      %v1553 = vand.u32 %v1551, 15
      %v1554 = vsub.s32 0, %v1553
      %v1555 = vsel %vm1549, %v1554, %v1553
      %vm1556 = vcmp.lt.s32.totalorder %v1380, 0
      %v1557 = vsub.s32 0, %v1380
      %v1558 = vsel %vm1556, %v1557, %v1380
      %v1559 = vshrl.u32 %v1558, 4
      %v1560 = vand.u32 %v1558, 15
      %v1561 = vsub.s32 0, %v1560
      %v1562 = vsel %vm1556, %v1561, %v1560
      %vm1563 = vcmp.lt.s32.totalorder %v1381, 0
      %v1564 = vsub.s32 0, %v1381
      %v1565 = vsel %vm1563, %v1564, %v1381
      %v1566 = vshrl.u32 %v1565, 4
      %v1567 = vand.u32 %v1565, 15
      %v1568 = vsub.s32 0, %v1567
      %v1569 = vsel %vm1563, %v1568, %v1567
      %vm1570 = vcmp.lt.s32.totalorder %v1382, 0
      %v1571 = vsub.s32 0, %v1382
      %v1572 = vsel %vm1570, %v1571, %v1382
      %v1573 = vshrl.u32 %v1572, 4
      %v1574 = vand.u32 %v1572, 15
      %v1575 = vsub.s32 0, %v1574
      %v1576 = vsel %vm1570, %v1575, %v1574
      %vm1577 = vcmp.lt.s32.totalorder %v1383, 0
      %v1578 = vsub.s32 0, %v1383
      %v1579 = vsel %vm1577, %v1578, %v1383
      %v1580 = vshrl.u32 %v1579, 4
      %v1581 = vand.u32 %v1579, 15
      %v1582 = vsub.s32 0, %v1581
      %v1583 = vsel %vm1577, %v1582, %v1581
      %vm1584 = vcmp.lt.s32.totalorder %v1384, 0
      %v1585 = vsub.s32 0, %v1384
      %v1586 = vsel %vm1584, %v1585, %v1384
      %v1587 = vshrl.u32 %v1586, 4
      %v1588 = vand.u32 %v1586, 15
      %v1589 = vsub.s32 0, %v1588
      %v1590 = vsel %vm1584, %v1589, %v1588
      %vm1591 = vcmp.lt.s32.totalorder %v1385, 0
      %v1592 = vsub.s32 0, %v1385
      %v1593 = vsel %vm1591, %v1592, %v1385
      %v1594 = vshrl.u32 %v1593, 4
      %v1595 = vand.u32 %v1593, 15
      %v1596 = vsub.s32 0, %v1595
      %v1597 = vsel %vm1591, %v1596, %v1595
      %vm1598 = vcmp.lt.s32.totalorder %v1386, 0
      %v1599 = vsub.s32 0, %v1386
      %v1600 = vsel %vm1598, %v1599, %v1386
      %v1601 = vshrl.u32 %v1600, 4
      %v1602 = vand.u32 %v1600, 15
      %v1603 = vsub.s32 0, %v1602
      %v1604 = vsel %vm1598, %v1603, %v1602
      %vm1605 = vcmp.lt.s32.totalorder %v1387, 0
      %v1606 = vsub.s32 0, %v1387
      %v1607 = vsel %vm1605, %v1606, %v1387
      %v1608 = vshrl.u32 %v1607, 4
      %v1609 = vand.u32 %v1607, 15
      %v1610 = vsub.s32 0, %v1609
      %v1611 = vsel %vm1605, %v1610, %v1609
      %vm1612 = vcmp.ne.s32.totalorder %v1394, 0
      %vm1613 = vcmp.ne.s32.totalorder %v1401, 0
      %vm1614 = vcmp.ne.s32.totalorder %v1408, 0
      %vm1615 = vcmp.ne.s32.totalorder %v1415, 0
      %vm1616 = vcmp.ne.s32.totalorder %v1422, 0
      %vm1617 = vcmp.ne.s32.totalorder %v1429, 0
      %vm1618 = vcmp.ne.s32.totalorder %v1436, 0
      %vm1619 = vcmp.ne.s32.totalorder %v1443, 0
      %vm1620 = vcmp.ne.s32.totalorder %v1450, 0
      %vm1621 = vcmp.ne.s32.totalorder %v1457, 0
      %vm1622 = vcmp.ne.s32.totalorder %v1464, 0
      %vm1623 = vcmp.ne.s32.totalorder %v1471, 0
      %vm1624 = vcmp.ne.s32.totalorder %v1478, 0
      %vm1625 = vcmp.ne.s32.totalorder %v1485, 0
      %vm1626 = vcmp.ne.s32.totalorder %v1492, 0
      %vm1627 = vcmp.ne.s32.totalorder %v1499, 0
      %vm1628 = vcmp.ne.s32.totalorder %v1506, 0
      %vm1629 = vcmp.ne.s32.totalorder %v1513, 0
      %vm1630 = vcmp.ne.s32.totalorder %v1520, 0
      %vm1631 = vcmp.ne.s32.totalorder %v1527, 0
      %vm1632 = vcmp.ne.s32.totalorder %v1534, 0
      %vm1633 = vcmp.ne.s32.totalorder %v1541, 0
      %vm1634 = vcmp.ne.s32.totalorder %v1548, 0
      %vm1635 = vcmp.ne.s32.totalorder %v1555, 0
      %vm1636 = vcmp.ne.s32.totalorder %v1562, 0
      %vm1637 = vcmp.ne.s32.totalorder %v1569, 0
      %vm1638 = vcmp.ne.s32.totalorder %v1576, 0
      %vm1639 = vcmp.ne.s32.totalorder %v1583, 0
      %vm1640 = vcmp.ne.s32.totalorder %v1590, 0
      %vm1641 = vcmp.ne.s32.totalorder %v1597, 0
      %vm1642 = vcmp.ne.s32.totalorder %v1604, 0
      %vm1643 = vcmp.ne.s32.totalorder %v1611, 0
      %vm1644 = vcmp.lt.s32.totalorder %v1394, 0
      %vm1645 = vcmp.lt.s32.totalorder %v1401, 0
      %vm1646 = vcmp.lt.s32.totalorder %v1408, 0
      %vm1647 = vcmp.lt.s32.totalorder %v1415, 0
      %vm1648 = vcmp.lt.s32.totalorder %v1422, 0
      %vm1649 = vcmp.lt.s32.totalorder %v1429, 0
      %vm1650 = vcmp.lt.s32.totalorder %v1436, 0
      %vm1651 = vcmp.lt.s32.totalorder %v1443, 0
      %vm1652 = vcmp.lt.s32.totalorder %v1450, 0
      %vm1653 = vcmp.lt.s32.totalorder %v1457, 0
      %vm1654 = vcmp.lt.s32.totalorder %v1464, 0
      %vm1655 = vcmp.lt.s32.totalorder %v1471, 0
      %vm1656 = vcmp.lt.s32.totalorder %v1478, 0
      %vm1657 = vcmp.lt.s32.totalorder %v1485, 0
      %vm1658 = vcmp.lt.s32.totalorder %v1492, 0
      %vm1659 = vcmp.lt.s32.totalorder %v1499, 0
      %vm1660 = vcmp.lt.s32.totalorder %v1506, 0
      %vm1661 = vcmp.lt.s32.totalorder %v1513, 0
      %vm1662 = vcmp.lt.s32.totalorder %v1520, 0
      %vm1663 = vcmp.lt.s32.totalorder %v1527, 0
      %vm1664 = vcmp.lt.s32.totalorder %v1534, 0
      %vm1665 = vcmp.lt.s32.totalorder %v1541, 0
      %vm1666 = vcmp.lt.s32.totalorder %v1548, 0
      %vm1667 = vcmp.lt.s32.totalorder %v1555, 0
      %vm1668 = vcmp.lt.s32.totalorder %v1562, 0
      %vm1669 = vcmp.lt.s32.totalorder %v1569, 0
      %vm1670 = vcmp.lt.s32.totalorder %v1576, 0
      %vm1671 = vcmp.lt.s32.totalorder %v1583, 0
      %vm1672 = vcmp.lt.s32.totalorder %v1590, 0
      %vm1673 = vcmp.lt.s32.totalorder %v1597, 0
      %vm1674 = vcmp.lt.s32.totalorder %v1604, 0
      %vm1675 = vcmp.lt.s32.totalorder %v1611, 0
      %vm1676 = vmand %vm1644, %vm1612
      %vm1677 = vmand %vm1645, %vm1613
      %vm1678 = vmand %vm1646, %vm1614
      %vm1679 = vmand %vm1647, %vm1615
      %vm1680 = vmand %vm1648, %vm1616
      %vm1681 = vmand %vm1649, %vm1617
      %vm1682 = vmand %vm1650, %vm1618
      %vm1683 = vmand %vm1651, %vm1619
      %vm1684 = vmand %vm1652, %vm1620
      %vm1685 = vmand %vm1653, %vm1621
      %vm1686 = vmand %vm1654, %vm1622
      %vm1687 = vmand %vm1655, %vm1623
      %vm1688 = vmand %vm1656, %vm1624
      %vm1689 = vmand %vm1657, %vm1625
      %vm1690 = vmand %vm1658, %vm1626
      %vm1691 = vmand %vm1659, %vm1627
      %vm1692 = vmand %vm1660, %vm1628
      %vm1693 = vmand %vm1661, %vm1629
      %vm1694 = vmand %vm1662, %vm1630
      %vm1695 = vmand %vm1663, %vm1631
      %vm1696 = vmand %vm1664, %vm1632
      %vm1697 = vmand %vm1665, %vm1633
      %vm1698 = vmand %vm1666, %vm1634
      %vm1699 = vmand %vm1667, %vm1635
      %vm1700 = vmand %vm1668, %vm1636
      %vm1701 = vmand %vm1669, %vm1637
      %vm1702 = vmand %vm1670, %vm1638
      %vm1703 = vmand %vm1671, %vm1639
      %vm1704 = vmand %vm1672, %vm1640
      %vm1705 = vmand %vm1673, %vm1641
      %vm1706 = vmand %vm1674, %vm1642
      %vm1707 = vmand %vm1675, %vm1643
      %v1708 = vadd.s32 %v1394, 16
      %v1709 = vadd.s32 %v1401, 16
      %v1710 = vadd.s32 %v1408, 16
      %v1711 = vadd.s32 %v1415, 16
      %v1712 = vadd.s32 %v1422, 16
      %v1713 = vadd.s32 %v1429, 16
      %v1714 = vadd.s32 %v1436, 16
      %v1715 = vadd.s32 %v1443, 16
      %v1716 = vadd.s32 %v1450, 16
      %v1717 = vadd.s32 %v1457, 16
      %v1718 = vadd.s32 %v1464, 16
      %v1719 = vadd.s32 %v1471, 16
      %v1720 = vadd.s32 %v1478, 16
      %v1721 = vadd.s32 %v1485, 16
      %v1722 = vadd.s32 %v1492, 16
      %v1723 = vadd.s32 %v1499, 16
      %v1724 = vadd.s32 %v1506, 16
      %v1725 = vadd.s32 %v1513, 16
      %v1726 = vadd.s32 %v1520, 16
      %v1727 = vadd.s32 %v1527, 16
      %v1728 = vadd.s32 %v1534, 16
      %v1729 = vadd.s32 %v1541, 16
      %v1730 = vadd.s32 %v1548, 16
      %v1731 = vadd.s32 %v1555, 16
      %v1732 = vadd.s32 %v1562, 16
      %v1733 = vadd.s32 %v1569, 16
      %v1734 = vadd.s32 %v1576, 16
      %v1735 = vadd.s32 %v1583, 16
      %v1736 = vadd.s32 %v1590, 16
      %v1737 = vadd.s32 %v1597, 16
      %v1738 = vadd.s32 %v1604, 16
      %v1739 = vadd.s32 %v1611, 16
      %v1740 = vsel %vm1676, %v1708, %v1394
      %v1741 = vsel %vm1677, %v1709, %v1401
      %v1742 = vsel %vm1678, %v1710, %v1408
      %v1743 = vsel %vm1679, %v1711, %v1415
      %v1744 = vsel %vm1680, %v1712, %v1422
      %v1745 = vsel %vm1681, %v1713, %v1429
      %v1746 = vsel %vm1682, %v1714, %v1436
      %v1747 = vsel %vm1683, %v1715, %v1443
      %v1748 = vsel %vm1684, %v1716, %v1450
      %v1749 = vsel %vm1685, %v1717, %v1457
      %v1750 = vsel %vm1686, %v1718, %v1464
      %v1751 = vsel %vm1687, %v1719, %v1471
      %v1752 = vsel %vm1688, %v1720, %v1478
      %v1753 = vsel %vm1689, %v1721, %v1485
      %v1754 = vsel %vm1690, %v1722, %v1492
      %v1755 = vsel %vm1691, %v1723, %v1499
      %v1756 = vsel %vm1692, %v1724, %v1506
      %v1757 = vsel %vm1693, %v1725, %v1513
      %v1758 = vsel %vm1694, %v1726, %v1520
      %v1759 = vsel %vm1695, %v1727, %v1527
      %v1760 = vsel %vm1696, %v1728, %v1534
      %v1761 = vsel %vm1697, %v1729, %v1541
      %v1762 = vsel %vm1698, %v1730, %v1548
      %v1763 = vsel %vm1699, %v1731, %v1555
      %v1764 = vsel %vm1700, %v1732, %v1562
      %v1765 = vsel %vm1701, %v1733, %v1569
      %v1766 = vsel %vm1702, %v1734, %v1576
      %v1767 = vsel %vm1703, %v1735, %v1583
      %v1768 = vsel %vm1704, %v1736, %v1590
      %v1769 = vsel %vm1705, %v1737, %v1597
      %v1770 = vsel %vm1706, %v1738, %v1604
      %v1771 = vsel %vm1707, %v1739, %v1611
      %vm1772 = vcmp.eq.s32.totalorder %v1740, 0
      %vm1773 = vcmp.eq.s32.totalorder %v1741, 0
      %vm1774 = vcmp.eq.s32.totalorder %v1742, 0
      %vm1775 = vcmp.eq.s32.totalorder %v1743, 0
      %vm1776 = vcmp.eq.s32.totalorder %v1744, 0
      %vm1777 = vcmp.eq.s32.totalorder %v1745, 0
      %vm1778 = vcmp.eq.s32.totalorder %v1746, 0
      %vm1779 = vcmp.eq.s32.totalorder %v1747, 0
      %vm1780 = vcmp.eq.s32.totalorder %v1748, 0
      %vm1781 = vcmp.eq.s32.totalorder %v1749, 0
      %vm1782 = vcmp.eq.s32.totalorder %v1750, 0
      %vm1783 = vcmp.eq.s32.totalorder %v1751, 0
      %vm1784 = vcmp.eq.s32.totalorder %v1752, 0
      %vm1785 = vcmp.eq.s32.totalorder %v1753, 0
      %vm1786 = vcmp.eq.s32.totalorder %v1754, 0
      %vm1787 = vcmp.eq.s32.totalorder %v1755, 0
      %vm1788 = vcmp.eq.s32.totalorder %v1756, 0
      %vm1789 = vcmp.eq.s32.totalorder %v1757, 0
      %vm1790 = vcmp.eq.s32.totalorder %v1758, 0
      %vm1791 = vcmp.eq.s32.totalorder %v1759, 0
      %vm1792 = vcmp.eq.s32.totalorder %v1760, 0
      %vm1793 = vcmp.eq.s32.totalorder %v1761, 0
      %vm1794 = vcmp.eq.s32.totalorder %v1762, 0
      %vm1795 = vcmp.eq.s32.totalorder %v1763, 0
      %vm1796 = vcmp.eq.s32.totalorder %v1764, 0
      %vm1797 = vcmp.eq.s32.totalorder %v1765, 0
      %vm1798 = vcmp.eq.s32.totalorder %v1766, 0
      %vm1799 = vcmp.eq.s32.totalorder %v1767, 0
      %vm1800 = vcmp.eq.s32.totalorder %v1768, 0
      %vm1801 = vcmp.eq.s32.totalorder %v1769, 0
      %vm1802 = vcmp.eq.s32.totalorder %v1770, 0
      %vm1803 = vcmp.eq.s32.totalorder %v1771, 0
      %v1804 = vrot.slane %v943, 7
      %v1805 = vrot.slane %v944, 7
      %v1806 = vrot.slane %v945, 7
      %v1807 = vrot.slane %v946, 7
      %v1808 = vrot.slane %v947, 7
      %v1809 = vrot.slane %v948, 7
      %v1810 = vrot.slane %v949, 7
      %v1811 = vrot.slane %v950, 7
      %v1812 = vrot.slane %v951, 7
      %v1813 = vrot.slane %v952, 7
      %v1814 = vrot.slane %v953, 7
      %v1815 = vrot.slane %v954, 7
      %v1816 = vrot.slane %v955, 7
      %v1817 = vrot.slane %v956, 7
      %v1818 = vrot.slane %v957, 7
      %v1819 = vrot.slane %v958, 7
      %v1820 = vrot.slane %v959, 7
      %v1821 = vrot.slane %v960, 7
      %v1822 = vrot.slane %v961, 7
      %v1823 = vrot.slane %v962, 7
      %v1824 = vrot.slane %v963, 7
      %v1825 = vrot.slane %v964, 7
      %v1826 = vrot.slane %v965, 7
      %v1827 = vrot.slane %v966, 7
      %v1828 = vrot.slane %v967, 7
      %v1829 = vrot.slane %v968, 7
      %v1830 = vrot.slane %v969, 7
      %v1831 = vrot.slane %v970, 7
      %v1832 = vrot.slane %v971, 7
      %v1833 = vrot.slane %v972, 7
      %v1834 = vrot.slane %v973, 7
      %v1835 = vrot.slane %v974, 7
      %vm1836 = vcmp.lt.s32.totalorder %v1356, 1
      %v1837 = vsel %vm1836, %v1834, %v1835
      %v1838 = vsel %vm1836, %v1833, %v1834
      %v1839 = vsel %vm1836, %v1832, %v1833
      %v1840 = vsel %vm1836, %v1831, %v1832
      %v1841 = vsel %vm1836, %v1830, %v1831
      %v1842 = vsel %vm1836, %v1829, %v1830
      %v1843 = vsel %vm1836, %v1828, %v1829
      %v1844 = vsel %vm1836, %v1827, %v1828
      %v1845 = vsel %vm1836, %v1826, %v1827
      %v1846 = vsel %vm1836, %v1825, %v1826
      %v1847 = vsel %vm1836, %v1824, %v1825
      %v1848 = vsel %vm1836, %v1823, %v1824
      %v1849 = vsel %vm1836, %v1822, %v1823
      %v1850 = vsel %vm1836, %v1821, %v1822
      %v1851 = vsel %vm1836, %v1820, %v1821
      %v1852 = vsel %vm1836, %v1819, %v1820
      %v1853 = vsel %vm1836, %v1818, %v1819
      %v1854 = vsel %vm1836, %v1817, %v1818
      %v1855 = vsel %vm1836, %v1816, %v1817
      %v1856 = vsel %vm1836, %v1815, %v1816
      %v1857 = vsel %vm1836, %v1814, %v1815
      %v1858 = vsel %vm1836, %v1813, %v1814
      %v1859 = vsel %vm1836, %v1812, %v1813
      %v1860 = vsel %vm1836, %v1811, %v1812
      %v1861 = vsel %vm1836, %v1810, %v1811
      %v1862 = vsel %vm1836, %v1809, %v1810
      %v1863 = vsel %vm1836, %v1808, %v1809
      %v1864 = vsel %vm1836, %v1807, %v1808
      %v1865 = vsel %vm1836, %v1806, %v1807
      %v1866 = vsel %vm1836, %v1805, %v1806
      %v1867 = vsel %vm1836, %v1804, %v1805
      %v1868 = vsel %vm1836, %v1835, %v1804
      %v1869 = vsel %vm1772, 1, 0
      %v1870 = vsel %vm1773, 1, 0
      %v1871 = vsel %vm1774, 1, 0
      %v1872 = vsel %vm1775, 1, 0
      %v1873 = vsel %vm1776, 1, 0
      %v1874 = vsel %vm1777, 1, 0
      %v1875 = vsel %vm1778, 1, 0
      %v1876 = vsel %vm1779, 1, 0
      %v1877 = vsel %vm1780, 1, 0
      %v1878 = vsel %vm1781, 1, 0
      %v1879 = vsel %vm1782, 1, 0
      %v1880 = vsel %vm1783, 1, 0
      %v1881 = vsel %vm1784, 1, 0
      %v1882 = vsel %vm1785, 1, 0
      %v1883 = vsel %vm1786, 1, 0
      %v1884 = vsel %vm1787, 1, 0
      %v1885 = vsel %vm1788, 1, 0
      %v1886 = vsel %vm1789, 1, 0
      %v1887 = vsel %vm1790, 1, 0
      %v1888 = vsel %vm1791, 1, 0
      %v1889 = vsel %vm1792, 1, 0
      %v1890 = vsel %vm1793, 1, 0
      %v1891 = vsel %vm1794, 1, 0
      %v1892 = vsel %vm1795, 1, 0
      %v1893 = vsel %vm1796, 1, 0
      %v1894 = vsel %vm1797, 1, 0
      %v1895 = vsel %vm1798, 1, 0
      %v1896 = vsel %vm1799, 1, 0
      %v1897 = vsel %vm1800, 1, 0
      %v1898 = vsel %vm1801, 1, 0
      %v1899 = vsel %vm1802, 1, 0
      %v1900 = vsel %vm1803, 1, 0
      %vm1901 = vcmp.eq.s32.totalorder %v1869, 1
      %vm1902 = vcmp.eq.s32.totalorder %v1870, 1
      %vm1903 = vcmp.eq.s32.totalorder %v1871, 1
      %vm1904 = vcmp.eq.s32.totalorder %v1872, 1
      %vm1905 = vcmp.eq.s32.totalorder %v1873, 1
      %vm1906 = vcmp.eq.s32.totalorder %v1874, 1
      %vm1907 = vcmp.eq.s32.totalorder %v1875, 1
      %vm1908 = vcmp.eq.s32.totalorder %v1876, 1
      %vm1909 = vcmp.eq.s32.totalorder %v1877, 1
      %vm1910 = vcmp.eq.s32.totalorder %v1878, 1
      %vm1911 = vcmp.eq.s32.totalorder %v1879, 1
      %vm1912 = vcmp.eq.s32.totalorder %v1880, 1
      %vm1913 = vcmp.eq.s32.totalorder %v1881, 1
      %vm1914 = vcmp.eq.s32.totalorder %v1882, 1
      %vm1915 = vcmp.eq.s32.totalorder %v1883, 1
      %vm1916 = vcmp.eq.s32.totalorder %v1884, 1
      %vm1917 = vcmp.eq.s32.totalorder %v1885, 1
      %vm1918 = vcmp.eq.s32.totalorder %v1886, 1
      %vm1919 = vcmp.eq.s32.totalorder %v1887, 1
      %vm1920 = vcmp.eq.s32.totalorder %v1888, 1
      %vm1921 = vcmp.eq.s32.totalorder %v1889, 1
      %vm1922 = vcmp.eq.s32.totalorder %v1890, 1
      %vm1923 = vcmp.eq.s32.totalorder %v1891, 1
      %vm1924 = vcmp.eq.s32.totalorder %v1892, 1
      %vm1925 = vcmp.eq.s32.totalorder %v1893, 1
      %vm1926 = vcmp.eq.s32.totalorder %v1894, 1
      %vm1927 = vcmp.eq.s32.totalorder %v1895, 1
      %vm1928 = vcmp.eq.s32.totalorder %v1896, 1
      %vm1929 = vcmp.eq.s32.totalorder %v1897, 1
      %vm1930 = vcmp.eq.s32.totalorder %v1898, 1
      %vm1931 = vcmp.eq.s32.totalorder %v1899, 1
      %vm1932 = vcmp.eq.s32.totalorder %v1900, 1
      %v1933 = vsel %vm1901, 0.0, %v1868
      %v1934 = vsel %vm1902, 0.0, %v1867
      %v1935 = vsel %vm1903, 0.0, %v1866
      %v1936 = vsel %vm1904, 0.0, %v1865
      %v1937 = vsel %vm1905, 0.0, %v1864
      %v1938 = vsel %vm1906, 0.0, %v1863
      %v1939 = vsel %vm1907, 0.0, %v1862
      %v1940 = vsel %vm1908, 0.0, %v1861
      %v1941 = vsel %vm1909, 0.0, %v1860
      %v1942 = vsel %vm1910, 0.0, %v1859
      %v1943 = vsel %vm1911, 0.0, %v1858
      %v1944 = vsel %vm1912, 0.0, %v1857
      %v1945 = vsel %vm1913, 0.0, %v1856
      %v1946 = vsel %vm1914, 0.0, %v1855
      %v1947 = vsel %vm1915, 0.0, %v1854
      %v1948 = vsel %vm1916, 0.0, %v1853
      %v1949 = vsel %vm1917, 0.0, %v1852
      %v1950 = vsel %vm1918, 0.0, %v1851
      %v1951 = vsel %vm1919, 0.0, %v1850
      %v1952 = vsel %vm1920, 0.0, %v1849
      %v1953 = vsel %vm1921, 0.0, %v1848
      %v1954 = vsel %vm1922, 0.0, %v1847
      %v1955 = vsel %vm1923, 0.0, %v1846
      %v1956 = vsel %vm1924, 0.0, %v1845
      %v1957 = vsel %vm1925, 0.0, %v1844
      %v1958 = vsel %vm1926, 0.0, %v1843
      %v1959 = vsel %vm1927, 0.0, %v1842
      %v1960 = vsel %vm1928, 0.0, %v1841
      %v1961 = vsel %vm1929, 0.0, %v1840
      %v1962 = vsel %vm1930, 0.0, %v1839
      %v1963 = vsel %vm1931, 0.0, %v1838
      %v1964 = vsel %vm1932, 0.0, %v1837
      %vm1965 = vcmp.eq.s32.totalorder %v1740, 15
      %vm1966 = vcmp.eq.s32.totalorder %v1741, 15
      %vm1967 = vcmp.eq.s32.totalorder %v1742, 15
      %vm1968 = vcmp.eq.s32.totalorder %v1743, 15
      %vm1969 = vcmp.eq.s32.totalorder %v1744, 15
      %vm1970 = vcmp.eq.s32.totalorder %v1745, 15
      %vm1971 = vcmp.eq.s32.totalorder %v1746, 15
      %vm1972 = vcmp.eq.s32.totalorder %v1747, 15
      %vm1973 = vcmp.eq.s32.totalorder %v1748, 15
      %vm1974 = vcmp.eq.s32.totalorder %v1749, 15
      %vm1975 = vcmp.eq.s32.totalorder %v1750, 15
      %vm1976 = vcmp.eq.s32.totalorder %v1751, 15
      %vm1977 = vcmp.eq.s32.totalorder %v1752, 15
      %vm1978 = vcmp.eq.s32.totalorder %v1753, 15
      %vm1979 = vcmp.eq.s32.totalorder %v1754, 15
      %vm1980 = vcmp.eq.s32.totalorder %v1755, 15
      %vm1981 = vcmp.eq.s32.totalorder %v1756, 15
      %vm1982 = vcmp.eq.s32.totalorder %v1757, 15
      %vm1983 = vcmp.eq.s32.totalorder %v1758, 15
      %vm1984 = vcmp.eq.s32.totalorder %v1759, 15
      %vm1985 = vcmp.eq.s32.totalorder %v1760, 15
      %vm1986 = vcmp.eq.s32.totalorder %v1761, 15
      %vm1987 = vcmp.eq.s32.totalorder %v1762, 15
      %vm1988 = vcmp.eq.s32.totalorder %v1763, 15
      %vm1989 = vcmp.eq.s32.totalorder %v1764, 15
      %vm1990 = vcmp.eq.s32.totalorder %v1765, 15
      %vm1991 = vcmp.eq.s32.totalorder %v1766, 15
      %vm1992 = vcmp.eq.s32.totalorder %v1767, 15
      %vm1993 = vcmp.eq.s32.totalorder %v1768, 15
      %vm1994 = vcmp.eq.s32.totalorder %v1769, 15
      %vm1995 = vcmp.eq.s32.totalorder %v1770, 15
      %vm1996 = vcmp.eq.s32.totalorder %v1771, 15
      %v1997 = vrot.slane %v943, 1
      %v1998 = vrot.slane %v944, 1
      %v1999 = vrot.slane %v945, 1
      %v2000 = vrot.slane %v946, 1
      %v2001 = vrot.slane %v947, 1
      %v2002 = vrot.slane %v948, 1
      %v2003 = vrot.slane %v949, 1
      %v2004 = vrot.slane %v950, 1
      %v2005 = vrot.slane %v951, 1
      %v2006 = vrot.slane %v952, 1
      %v2007 = vrot.slane %v953, 1
      %v2008 = vrot.slane %v954, 1
      %v2009 = vrot.slane %v955, 1
      %v2010 = vrot.slane %v956, 1
      %v2011 = vrot.slane %v957, 1
      %v2012 = vrot.slane %v958, 1
      %v2013 = vrot.slane %v959, 1
      %v2014 = vrot.slane %v960, 1
      %v2015 = vrot.slane %v961, 1
      %v2016 = vrot.slane %v962, 1
      %v2017 = vrot.slane %v963, 1
      %v2018 = vrot.slane %v964, 1
      %v2019 = vrot.slane %v965, 1
      %v2020 = vrot.slane %v966, 1
      %v2021 = vrot.slane %v967, 1
      %v2022 = vrot.slane %v968, 1
      %v2023 = vrot.slane %v969, 1
      %v2024 = vrot.slane %v970, 1
      %v2025 = vrot.slane %v971, 1
      %v2026 = vrot.slane %v972, 1
      %v2027 = vrot.slane %v973, 1
      %v2028 = vrot.slane %v974, 1
      %vm2029 = vcmp.lt.s32.totalorder %v1356, 7
      %v2030 = vsel %vm2029, %v2027, %v2028
      %v2031 = vsel %vm2029, %v2026, %v2027
      %v2032 = vsel %vm2029, %v2025, %v2026
      %v2033 = vsel %vm2029, %v2024, %v2025
      %v2034 = vsel %vm2029, %v2023, %v2024
      %v2035 = vsel %vm2029, %v2022, %v2023
      %v2036 = vsel %vm2029, %v2021, %v2022
      %v2037 = vsel %vm2029, %v2020, %v2021
      %v2038 = vsel %vm2029, %v2019, %v2020
      %v2039 = vsel %vm2029, %v2018, %v2019
      %v2040 = vsel %vm2029, %v2017, %v2018
      %v2041 = vsel %vm2029, %v2016, %v2017
      %v2042 = vsel %vm2029, %v2015, %v2016
      %v2043 = vsel %vm2029, %v2014, %v2015
      %v2044 = vsel %vm2029, %v2013, %v2014
      %v2045 = vsel %vm2029, %v2012, %v2013
      %v2046 = vsel %vm2029, %v2011, %v2012
      %v2047 = vsel %vm2029, %v2010, %v2011
      %v2048 = vsel %vm2029, %v2009, %v2010
      %v2049 = vsel %vm2029, %v2008, %v2009
      %v2050 = vsel %vm2029, %v2007, %v2008
      %v2051 = vsel %vm2029, %v2006, %v2007
      %v2052 = vsel %vm2029, %v2005, %v2006
      %v2053 = vsel %vm2029, %v2004, %v2005
      %v2054 = vsel %vm2029, %v2003, %v2004
      %v2055 = vsel %vm2029, %v2002, %v2003
      %v2056 = vsel %vm2029, %v2001, %v2002
      %v2057 = vsel %vm2029, %v2000, %v2001
      %v2058 = vsel %vm2029, %v1999, %v2000
      %v2059 = vsel %vm2029, %v1998, %v1999
      %v2060 = vsel %vm2029, %v1997, %v1998
      %v2061 = vsel %vm2029, %v2028, %v1997
      %v2062 = vsel %vm1965, 1, 0
      %v2063 = vsel %vm1966, 1, 0
      %v2064 = vsel %vm1967, 1, 0
      %v2065 = vsel %vm1968, 1, 0
      %v2066 = vsel %vm1969, 1, 0
      %v2067 = vsel %vm1970, 1, 0
      %v2068 = vsel %vm1971, 1, 0
      %v2069 = vsel %vm1972, 1, 0
      %v2070 = vsel %vm1973, 1, 0
      %v2071 = vsel %vm1974, 1, 0
      %v2072 = vsel %vm1975, 1, 0
      %v2073 = vsel %vm1976, 1, 0
      %v2074 = vsel %vm1977, 1, 0
      %v2075 = vsel %vm1978, 1, 0
      %v2076 = vsel %vm1979, 1, 0
      %v2077 = vsel %vm1980, 1, 0
      %v2078 = vsel %vm1981, 1, 0
      %v2079 = vsel %vm1982, 1, 0
      %v2080 = vsel %vm1983, 1, 0
      %v2081 = vsel %vm1984, 1, 0
      %v2082 = vsel %vm1985, 1, 0
      %v2083 = vsel %vm1986, 1, 0
      %v2084 = vsel %vm1987, 1, 0
      %v2085 = vsel %vm1988, 1, 0
      %v2086 = vsel %vm1989, 1, 0
      %v2087 = vsel %vm1990, 1, 0
      %v2088 = vsel %vm1991, 1, 0
      %v2089 = vsel %vm1992, 1, 0
      %v2090 = vsel %vm1993, 1, 0
      %v2091 = vsel %vm1994, 1, 0
      %v2092 = vsel %vm1995, 1, 0
      %v2093 = vsel %vm1996, 1, 0
      %vm2094 = vcmp.eq.s32.totalorder %v2062, 1
      %vm2095 = vcmp.eq.s32.totalorder %v2063, 1
      %vm2096 = vcmp.eq.s32.totalorder %v2064, 1
      %vm2097 = vcmp.eq.s32.totalorder %v2065, 1
      %vm2098 = vcmp.eq.s32.totalorder %v2066, 1
      %vm2099 = vcmp.eq.s32.totalorder %v2067, 1
      %vm2100 = vcmp.eq.s32.totalorder %v2068, 1
      %vm2101 = vcmp.eq.s32.totalorder %v2069, 1
      %vm2102 = vcmp.eq.s32.totalorder %v2070, 1
      %vm2103 = vcmp.eq.s32.totalorder %v2071, 1
      %vm2104 = vcmp.eq.s32.totalorder %v2072, 1
      %vm2105 = vcmp.eq.s32.totalorder %v2073, 1
      %vm2106 = vcmp.eq.s32.totalorder %v2074, 1
      %vm2107 = vcmp.eq.s32.totalorder %v2075, 1
      %vm2108 = vcmp.eq.s32.totalorder %v2076, 1
      %vm2109 = vcmp.eq.s32.totalorder %v2077, 1
      %vm2110 = vcmp.eq.s32.totalorder %v2078, 1
      %vm2111 = vcmp.eq.s32.totalorder %v2079, 1
      %vm2112 = vcmp.eq.s32.totalorder %v2080, 1
      %vm2113 = vcmp.eq.s32.totalorder %v2081, 1
      %vm2114 = vcmp.eq.s32.totalorder %v2082, 1
      %vm2115 = vcmp.eq.s32.totalorder %v2083, 1
      %vm2116 = vcmp.eq.s32.totalorder %v2084, 1
      %vm2117 = vcmp.eq.s32.totalorder %v2085, 1
      %vm2118 = vcmp.eq.s32.totalorder %v2086, 1
      %vm2119 = vcmp.eq.s32.totalorder %v2087, 1
      %vm2120 = vcmp.eq.s32.totalorder %v2088, 1
      %vm2121 = vcmp.eq.s32.totalorder %v2089, 1
      %vm2122 = vcmp.eq.s32.totalorder %v2090, 1
      %vm2123 = vcmp.eq.s32.totalorder %v2091, 1
      %vm2124 = vcmp.eq.s32.totalorder %v2092, 1
      %vm2125 = vcmp.eq.s32.totalorder %v2093, 1
      %v2126 = vsel %vm2094, 0.0, %v2060
      %v2127 = vsel %vm2095, 0.0, %v2059
      %v2128 = vsel %vm2096, 0.0, %v2058
      %v2129 = vsel %vm2097, 0.0, %v2057
      %v2130 = vsel %vm2098, 0.0, %v2056
      %v2131 = vsel %vm2099, 0.0, %v2055
      %v2132 = vsel %vm2100, 0.0, %v2054
      %v2133 = vsel %vm2101, 0.0, %v2053
      %v2134 = vsel %vm2102, 0.0, %v2052
      %v2135 = vsel %vm2103, 0.0, %v2051
      %v2136 = vsel %vm2104, 0.0, %v2050
      %v2137 = vsel %vm2105, 0.0, %v2049
      %v2138 = vsel %vm2106, 0.0, %v2048
      %v2139 = vsel %vm2107, 0.0, %v2047
      %v2140 = vsel %vm2108, 0.0, %v2046
      %v2141 = vsel %vm2109, 0.0, %v2045
      %v2142 = vsel %vm2110, 0.0, %v2044
      %v2143 = vsel %vm2111, 0.0, %v2043
      %v2144 = vsel %vm2112, 0.0, %v2042
      %v2145 = vsel %vm2113, 0.0, %v2041
      %v2146 = vsel %vm2114, 0.0, %v2040
      %v2147 = vsel %vm2115, 0.0, %v2039
      %v2148 = vsel %vm2116, 0.0, %v2038
      %v2149 = vsel %vm2117, 0.0, %v2037
      %v2150 = vsel %vm2118, 0.0, %v2036
      %v2151 = vsel %vm2119, 0.0, %v2035
      %v2152 = vsel %vm2120, 0.0, %v2034
      %v2153 = vsel %vm2121, 0.0, %v2033
      %v2154 = vsel %vm2122, 0.0, %v2032
      %v2155 = vsel %vm2123, 0.0, %v2031
      %v2156 = vsel %vm2124, 0.0, %v2030
      %v2157 = vsel %vm2125, 0.0, %v2061
      %v2158 = vpack.c.bf16 %v1934, %v1933
      %v2159 = vpack.c.bf16 %v1936, %v1935
      %v2160 = vpack.c.bf16 %v1938, %v1937
      %v2161 = vpack.c.bf16 %v1940, %v1939
      %v2162 = vpack.c.bf16 %v1942, %v1941
      %v2163 = vpack.c.bf16 %v1944, %v1943
      %v2164 = vpack.c.bf16 %v1946, %v1945
      %v2165 = vpack.c.bf16 %v1948, %v1947
      %v2166 = vpack.c.bf16 %v1950, %v1949
      %v2167 = vpack.c.bf16 %v1952, %v1951
      %v2168 = vpack.c.bf16 %v1954, %v1953
      %v2169 = vpack.c.bf16 %v1956, %v1955
      %v2170 = vpack.c.bf16 %v1958, %v1957
      %v2171 = vpack.c.bf16 %v1960, %v1959
      %v2172 = vpack.c.bf16 %v1962, %v1961
      %v2173 = vpack.c.bf16 %v1964, %v1963
      %v2174 = vpack.c.bf16 %v944, %v943
      %v2175 = vpack.c.bf16 %v946, %v945
      %v2176 = vpack.c.bf16 %v948, %v947
      %v2177 = vpack.c.bf16 %v950, %v949
      %v2178 = vpack.c.bf16 %v952, %v951
      %v2179 = vpack.c.bf16 %v954, %v953
      %v2180 = vpack.c.bf16 %v956, %v955
      %v2181 = vpack.c.bf16 %v958, %v957
      %v2182 = vpack.c.bf16 %v960, %v959
      %v2183 = vpack.c.bf16 %v962, %v961
      %v2184 = vpack.c.bf16 %v964, %v963
      %v2185 = vpack.c.bf16 %v966, %v965
      %v2186 = vpack.c.bf16 %v968, %v967
      %v2187 = vpack.c.bf16 %v970, %v969
      %v2188 = vpack.c.bf16 %v972, %v971
      %v2189 = vpack.c.bf16 %v974, %v973
      %v2190 = vpack.c.bf16 %v2127, %v2126
      %v2191 = vpack.c.bf16 %v2129, %v2128
      %v2192 = vpack.c.bf16 %v2131, %v2130
      %v2193 = vpack.c.bf16 %v2133, %v2132
      %v2194 = vpack.c.bf16 %v2135, %v2134
      %v2195 = vpack.c.bf16 %v2137, %v2136
      %v2196 = vpack.c.bf16 %v2139, %v2138
      %v2197 = vpack.c.bf16 %v2141, %v2140
      %v2198 = vpack.c.bf16 %v2143, %v2142
      %v2199 = vpack.c.bf16 %v2145, %v2144
      %v2200 = vpack.c.bf16 %v2147, %v2146
      %v2201 = vpack.c.bf16 %v2149, %v2148
      %v2202 = vpack.c.bf16 %v2151, %v2150
      %v2203 = vpack.c.bf16 %v2153, %v2152
      %v2204 = vpack.c.bf16 %v2155, %v2154
      %v2205 = vpack.c.bf16 %v2157, %v2156
      %vm2206 = vcmask 15360
      %v2208 = vsel %vm2206, %v2174, 0
      %v2211 = vsel %vm2206, %v2175, 0
      %v2214 = vsel %vm2206, %v2176, 0
      %v2217 = vsel %vm2206, %v2177, 0
      %v2220 = vsel %vm2206, %v2178, 0
      %v2223 = vsel %vm2206, %v2179, 0
      %v2226 = vsel %vm2206, %v2180, 0
      %v2229 = vsel %vm2206, %v2181, 0
      %v2232 = vsel %vm2206, %v2182, 0
      %v2235 = vsel %vm2206, %v2183, 0
      %v2238 = vsel %vm2206, %v2184, 0
      %v2241 = vsel %vm2206, %v2185, 0
      %v2244 = vsel %vm2206, %v2186, 0
      %v2247 = vsel %vm2206, %v2187, 0
      %v2250 = vsel %vm2206, %v2188, 0
      %v2253 = vsel %vm2206, %v2189, 0
      %vm2255 = vcmask 1040384
      %v2257 = vsel %vm2255, %v229, 0
      %2259 = vmatpush.bf16.msra.mxu0 0
      %2260 = vmatpush.bf16.msra.mxu0 0
      %2261 = vmatpush.bf16.msra.mxu0 0
      %2262 = vmatpush.bf16.msra.mxu0 0
      %2263 = vmatpush.bf16.msra.mxu0 0
      %2264 = vmatpush.bf16.msra.mxu0 0
      %2265 = vmatpush.bf16.msra.mxu0 0
      %2266 = vmatpush.bf16.msra.mxu0 %v2257
      %2267 = vmatmul.bf16.gmra.mxu0 %v2208
      %v2268 = vpop.f32.mrf.mxu0
      %v2269 = vadd.f32 0.0, %v2268
      %v2270 = vpop.f32.mrf.mxu0
      %v2271 = vadd.f32 0.0, %v2270
      %2272 = vmatmul.bf16.gmra.mxu0 %v2211
      %v2273 = vpop.f32.mrf.mxu0
      %v2274 = vadd.f32 0.0, %v2273
      %v2275 = vpop.f32.mrf.mxu0
      %v2276 = vadd.f32 0.0, %v2275
      %2277 = vmatmul.bf16.gmra.mxu0 %v2214
      %v2278 = vpop.f32.mrf.mxu0
      %v2279 = vadd.f32 0.0, %v2278
      %v2280 = vpop.f32.mrf.mxu0
      %v2281 = vadd.f32 0.0, %v2280
      %2282 = vmatmul.bf16.gmra.mxu0 %v2217
      %v2283 = vpop.f32.mrf.mxu0
      %v2284 = vadd.f32 0.0, %v2283
      %v2285 = vpop.f32.mrf.mxu0
      %v2286 = vadd.f32 0.0, %v2285
      %2287 = vmatmul.bf16.gmra.mxu0 %v2220
      %v2288 = vpop.f32.mrf.mxu0
      %v2289 = vadd.f32 0.0, %v2288
      %v2290 = vpop.f32.mrf.mxu0
      %v2291 = vadd.f32 0.0, %v2290
      %2292 = vmatmul.bf16.gmra.mxu0 %v2223
      %v2293 = vpop.f32.mrf.mxu0
      %v2294 = vadd.f32 0.0, %v2293
      %v2295 = vpop.f32.mrf.mxu0
      %v2296 = vadd.f32 0.0, %v2295
      %2297 = vmatmul.bf16.gmra.mxu0 %v2226
      %v2298 = vpop.f32.mrf.mxu0
      %v2299 = vadd.f32 0.0, %v2298
      %v2300 = vpop.f32.mrf.mxu0
      %v2301 = vadd.f32 0.0, %v2300
      %2302 = vmatmul.bf16.gmra.mxu0 %v2229
      %v2303 = vpop.f32.mrf.mxu0
      %v2304 = vadd.f32 0.0, %v2303
      %v2305 = vpop.f32.mrf.mxu0
      %v2306 = vadd.f32 0.0, %v2305
      %2307 = vmatmul.bf16.gmra.mxu0 %v2232
      %v2308 = vpop.f32.mrf.mxu0
      %v2309 = vadd.f32 0.0, %v2308
      %v2310 = vpop.f32.mrf.mxu0
      %v2311 = vadd.f32 0.0, %v2310
      %2312 = vmatmul.bf16.gmra.mxu0 %v2235
      %v2313 = vpop.f32.mrf.mxu0
      %v2314 = vadd.f32 0.0, %v2313
      %v2315 = vpop.f32.mrf.mxu0
      %v2316 = vadd.f32 0.0, %v2315
      %2317 = vmatmul.bf16.gmra.mxu0 %v2238
      %v2318 = vpop.f32.mrf.mxu0
      %v2319 = vadd.f32 0.0, %v2318
      %v2320 = vpop.f32.mrf.mxu0
      %v2321 = vadd.f32 0.0, %v2320
      %2322 = vmatmul.bf16.gmra.mxu0 %v2241
      %v2323 = vpop.f32.mrf.mxu0
      %v2324 = vadd.f32 0.0, %v2323
      %v2325 = vpop.f32.mrf.mxu0
      %v2326 = vadd.f32 0.0, %v2325
      %2327 = vmatmul.bf16.gmra.mxu0 %v2244
      %v2328 = vpop.f32.mrf.mxu0
      %v2329 = vadd.f32 0.0, %v2328
      %v2330 = vpop.f32.mrf.mxu0
      %v2331 = vadd.f32 0.0, %v2330
      %2332 = vmatmul.bf16.gmra.mxu0 %v2247
      %v2333 = vpop.f32.mrf.mxu0
      %v2334 = vadd.f32 0.0, %v2333
      %v2335 = vpop.f32.mrf.mxu0
      %v2336 = vadd.f32 0.0, %v2335
      %2337 = vmatmul.bf16.gmra.mxu0 %v2250
      %v2338 = vpop.f32.mrf.mxu0
      %v2339 = vadd.f32 0.0, %v2338
      %v2340 = vpop.f32.mrf.mxu0
      %v2341 = vadd.f32 0.0, %v2340
      %2342 = vmatmul.bf16.gmra.mxu0 %v2253
      %v2343 = vpop.f32.mrf.mxu0
      %v2344 = vadd.f32 0.0, %v2343
      %v2345 = vpop.f32.mrf.mxu0
      %v2346 = vadd.f32 0.0, %v2345
      %2347 = vdwg.mxu0
      %v2349 = vsel %vm2206, %v2158, 0
      %v2352 = vsel %vm2206, %v2159, 0
      %v2355 = vsel %vm2206, %v2160, 0
      %v2358 = vsel %vm2206, %v2161, 0
      %v2361 = vsel %vm2206, %v2162, 0
      %v2364 = vsel %vm2206, %v2163, 0
      %v2367 = vsel %vm2206, %v2164, 0
      %v2370 = vsel %vm2206, %v2165, 0
      %v2373 = vsel %vm2206, %v2166, 0
      %v2376 = vsel %vm2206, %v2167, 0
      %v2379 = vsel %vm2206, %v2168, 0
      %v2382 = vsel %vm2206, %v2169, 0
      %v2385 = vsel %vm2206, %v2170, 0
      %v2388 = vsel %vm2206, %v2171, 0
      %v2391 = vsel %vm2206, %v2172, 0
      %v2394 = vsel %vm2206, %v2173, 0
      %v2397 = vsel %vm2255, %v228, 0
      %2399 = vmatpush.bf16.msra.mxu0 0
      %2400 = vmatpush.bf16.msra.mxu0 0
      %2401 = vmatpush.bf16.msra.mxu0 0
      %2402 = vmatpush.bf16.msra.mxu0 0
      %2403 = vmatpush.bf16.msra.mxu0 0
      %2404 = vmatpush.bf16.msra.mxu0 0
      %2405 = vmatpush.bf16.msra.mxu0 0
      %2406 = vmatpush.bf16.msra.mxu0 %v2397
      %2407 = vmatmul.bf16.gmra.mxu0 %v2349
      %v2408 = vpop.f32.mrf.mxu0
      %v2409 = vadd.f32 %v2269, %v2408
      %v2410 = vpop.f32.mrf.mxu0
      %v2411 = vadd.f32 %v2271, %v2410
      %2412 = vmatmul.bf16.gmra.mxu0 %v2352
      %v2413 = vpop.f32.mrf.mxu0
      %v2414 = vadd.f32 %v2274, %v2413
      %v2415 = vpop.f32.mrf.mxu0
      %v2416 = vadd.f32 %v2276, %v2415
      %2417 = vmatmul.bf16.gmra.mxu0 %v2355
      %v2418 = vpop.f32.mrf.mxu0
      %v2419 = vadd.f32 %v2279, %v2418
      %v2420 = vpop.f32.mrf.mxu0
      %v2421 = vadd.f32 %v2281, %v2420
      %2422 = vmatmul.bf16.gmra.mxu0 %v2358
      %v2423 = vpop.f32.mrf.mxu0
      %v2424 = vadd.f32 %v2284, %v2423
      %v2425 = vpop.f32.mrf.mxu0
      %v2426 = vadd.f32 %v2286, %v2425
      %2427 = vmatmul.bf16.gmra.mxu0 %v2361
      %v2428 = vpop.f32.mrf.mxu0
      %v2429 = vadd.f32 %v2289, %v2428
      %v2430 = vpop.f32.mrf.mxu0
      %v2431 = vadd.f32 %v2291, %v2430
      %2432 = vmatmul.bf16.gmra.mxu0 %v2364
      %v2433 = vpop.f32.mrf.mxu0
      %v2434 = vadd.f32 %v2294, %v2433
      %v2435 = vpop.f32.mrf.mxu0
      %v2436 = vadd.f32 %v2296, %v2435
      %2437 = vmatmul.bf16.gmra.mxu0 %v2367
      %v2438 = vpop.f32.mrf.mxu0
      %v2439 = vadd.f32 %v2299, %v2438
      %v2440 = vpop.f32.mrf.mxu0
      %v2441 = vadd.f32 %v2301, %v2440
      %2442 = vmatmul.bf16.gmra.mxu0 %v2370
      %v2443 = vpop.f32.mrf.mxu0
      %v2444 = vadd.f32 %v2304, %v2443
      %v2445 = vpop.f32.mrf.mxu0
      %v2446 = vadd.f32 %v2306, %v2445
      %2447 = vmatmul.bf16.gmra.mxu0 %v2373
      %v2448 = vpop.f32.mrf.mxu0
      %v2449 = vadd.f32 %v2309, %v2448
      %v2450 = vpop.f32.mrf.mxu0
      %v2451 = vadd.f32 %v2311, %v2450
      %2452 = vmatmul.bf16.gmra.mxu0 %v2376
      %v2453 = vpop.f32.mrf.mxu0
      %v2454 = vadd.f32 %v2314, %v2453
      %v2455 = vpop.f32.mrf.mxu0
      %v2456 = vadd.f32 %v2316, %v2455
      %2457 = vmatmul.bf16.gmra.mxu0 %v2379
      %v2458 = vpop.f32.mrf.mxu0
      %v2459 = vadd.f32 %v2319, %v2458
      %v2460 = vpop.f32.mrf.mxu0
      %v2461 = vadd.f32 %v2321, %v2460
      %2462 = vmatmul.bf16.gmra.mxu0 %v2382
      %v2463 = vpop.f32.mrf.mxu0
      %v2464 = vadd.f32 %v2324, %v2463
      %v2465 = vpop.f32.mrf.mxu0
      %v2466 = vadd.f32 %v2326, %v2465
      %2467 = vmatmul.bf16.gmra.mxu0 %v2385
      %v2468 = vpop.f32.mrf.mxu0
      %v2469 = vadd.f32 %v2329, %v2468
      %v2470 = vpop.f32.mrf.mxu0
      %v2471 = vadd.f32 %v2331, %v2470
      %2472 = vmatmul.bf16.gmra.mxu0 %v2388
      %v2473 = vpop.f32.mrf.mxu0
      %v2474 = vadd.f32 %v2334, %v2473
      %v2475 = vpop.f32.mrf.mxu0
      %v2476 = vadd.f32 %v2336, %v2475
      %2477 = vmatmul.bf16.gmra.mxu0 %v2391
      %v2478 = vpop.f32.mrf.mxu0
      %v2479 = vadd.f32 %v2339, %v2478
      %v2480 = vpop.f32.mrf.mxu0
      %v2481 = vadd.f32 %v2341, %v2480
      %2482 = vmatmul.bf16.gmra.mxu0 %v2394
      %v2483 = vpop.f32.mrf.mxu0
      %v2484 = vadd.f32 %v2344, %v2483
      %v2485 = vpop.f32.mrf.mxu0
      %v2486 = vadd.f32 %v2346, %v2485
      %2487 = vdwg.mxu0
      %v2489 = vsel %vm2206, %v2190, 0
      %v2492 = vsel %vm2206, %v2191, 0
      %v2495 = vsel %vm2206, %v2192, 0
      %v2498 = vsel %vm2206, %v2193, 0
      %v2501 = vsel %vm2206, %v2194, 0
      %v2504 = vsel %vm2206, %v2195, 0
      %v2507 = vsel %vm2206, %v2196, 0
      %v2510 = vsel %vm2206, %v2197, 0
      %v2513 = vsel %vm2206, %v2198, 0
      %v2516 = vsel %vm2206, %v2199, 0
      %v2519 = vsel %vm2206, %v2200, 0
      %v2522 = vsel %vm2206, %v2201, 0
      %v2525 = vsel %vm2206, %v2202, 0
      %v2528 = vsel %vm2206, %v2203, 0
      %v2531 = vsel %vm2206, %v2204, 0
      %v2534 = vsel %vm2206, %v2205, 0
      %v2537 = vsel %vm2255, %v230, 0
      %2539 = vmatpush.bf16.msra.mxu0 0
      %2540 = vmatpush.bf16.msra.mxu0 0
      %2541 = vmatpush.bf16.msra.mxu0 0
      %2542 = vmatpush.bf16.msra.mxu0 0
      %2543 = vmatpush.bf16.msra.mxu0 0
      %2544 = vmatpush.bf16.msra.mxu0 0
      %2545 = vmatpush.bf16.msra.mxu0 0
      %2546 = vmatpush.bf16.msra.mxu0 %v2537
      %2547 = vmatmul.bf16.gmra.mxu0 %v2489
      %v2548 = vpop.f32.mrf.mxu0
      %v2549 = vadd.f32 0.0, %v2548
      %v2550 = vpop.f32.mrf.mxu0
      %v2551 = vadd.f32 0.0, %v2550
      %2552 = vmatmul.bf16.gmra.mxu0 %v2492
      %v2553 = vpop.f32.mrf.mxu0
      %v2554 = vadd.f32 0.0, %v2553
      %v2555 = vpop.f32.mrf.mxu0
      %v2556 = vadd.f32 0.0, %v2555
      %2557 = vmatmul.bf16.gmra.mxu0 %v2495
      %v2558 = vpop.f32.mrf.mxu0
      %v2559 = vadd.f32 0.0, %v2558
      %v2560 = vpop.f32.mrf.mxu0
      %v2561 = vadd.f32 0.0, %v2560
      %2562 = vmatmul.bf16.gmra.mxu0 %v2498
      %v2563 = vpop.f32.mrf.mxu0
      %v2564 = vadd.f32 0.0, %v2563
      %v2565 = vpop.f32.mrf.mxu0
      %v2566 = vadd.f32 0.0, %v2565
      %2567 = vmatmul.bf16.gmra.mxu0 %v2501
      %v2568 = vpop.f32.mrf.mxu0
      %v2569 = vadd.f32 0.0, %v2568
      %v2570 = vpop.f32.mrf.mxu0
      %v2571 = vadd.f32 0.0, %v2570
      %2572 = vmatmul.bf16.gmra.mxu0 %v2504
      %v2573 = vpop.f32.mrf.mxu0
      %v2574 = vadd.f32 0.0, %v2573
      %v2575 = vpop.f32.mrf.mxu0
      %v2576 = vadd.f32 0.0, %v2575
      %2577 = vmatmul.bf16.gmra.mxu0 %v2507
      %v2578 = vpop.f32.mrf.mxu0
      %v2579 = vadd.f32 0.0, %v2578
      %v2580 = vpop.f32.mrf.mxu0
      %v2581 = vadd.f32 0.0, %v2580
      %2582 = vmatmul.bf16.gmra.mxu0 %v2510
      %v2583 = vpop.f32.mrf.mxu0
      %v2584 = vadd.f32 0.0, %v2583
      %v2585 = vpop.f32.mrf.mxu0
      %v2586 = vadd.f32 0.0, %v2585
      %2587 = vmatmul.bf16.gmra.mxu0 %v2513
      %v2588 = vpop.f32.mrf.mxu0
      %v2589 = vadd.f32 0.0, %v2588
      %v2590 = vpop.f32.mrf.mxu0
      %v2591 = vadd.f32 0.0, %v2590
      %2592 = vmatmul.bf16.gmra.mxu0 %v2516
      %v2593 = vpop.f32.mrf.mxu0
      %v2594 = vadd.f32 0.0, %v2593
      %v2595 = vpop.f32.mrf.mxu0
      %v2596 = vadd.f32 0.0, %v2595
      %2597 = vmatmul.bf16.gmra.mxu0 %v2519
      %v2598 = vpop.f32.mrf.mxu0
      %v2599 = vadd.f32 0.0, %v2598
      %v2600 = vpop.f32.mrf.mxu0
      %v2601 = vadd.f32 0.0, %v2600
      %2602 = vmatmul.bf16.gmra.mxu0 %v2522
      %v2603 = vpop.f32.mrf.mxu0
      %v2604 = vadd.f32 0.0, %v2603
      %v2605 = vpop.f32.mrf.mxu0
      %v2606 = vadd.f32 0.0, %v2605
      %2607 = vmatmul.bf16.gmra.mxu0 %v2525
      %v2608 = vpop.f32.mrf.mxu0
      %v2609 = vadd.f32 0.0, %v2608
      %v2610 = vpop.f32.mrf.mxu0
      %v2611 = vadd.f32 0.0, %v2610
      %2612 = vmatmul.bf16.gmra.mxu0 %v2528
      %v2613 = vpop.f32.mrf.mxu0
      %v2614 = vadd.f32 0.0, %v2613
      %v2615 = vpop.f32.mrf.mxu0
      %v2616 = vadd.f32 0.0, %v2615
      %2617 = vmatmul.bf16.gmra.mxu0 %v2531
      %v2618 = vpop.f32.mrf.mxu0
      %v2619 = vadd.f32 0.0, %v2618
      %v2620 = vpop.f32.mrf.mxu0
      %v2621 = vadd.f32 0.0, %v2620
      %2622 = vmatmul.bf16.gmra.mxu0 %v2534
      %v2623 = vpop.f32.mrf.mxu0
      %v2624 = vadd.f32 0.0, %v2623
      %v2625 = vpop.f32.mrf.mxu0
      %v2626 = vadd.f32 0.0, %v2625
      %2627 = vdwg.mxu0
      %v2628 = vadd.f32 %v2409, %v2549
      %v2629 = vadd.f32 %v2411, %v2551
      %v2630 = vadd.f32 %v2414, %v2554
      %v2631 = vadd.f32 %v2416, %v2556
      %v2632 = vadd.f32 %v2419, %v2559
      %v2633 = vadd.f32 %v2421, %v2561
      %v2634 = vadd.f32 %v2424, %v2564
      %v2635 = vadd.f32 %v2426, %v2566
      %v2636 = vadd.f32 %v2429, %v2569
      %v2637 = vadd.f32 %v2431, %v2571
      %v2638 = vadd.f32 %v2434, %v2574
      %v2639 = vadd.f32 %v2436, %v2576
      %v2640 = vadd.f32 %v2439, %v2579
      %v2641 = vadd.f32 %v2441, %v2581
      %v2642 = vadd.f32 %v2444, %v2584
      %v2643 = vadd.f32 %v2446, %v2586
      %v2644 = vadd.f32 %v2449, %v2589
      %v2645 = vadd.f32 %v2451, %v2591
      %v2646 = vadd.f32 %v2454, %v2594
      %v2647 = vadd.f32 %v2456, %v2596
      %v2648 = vadd.f32 %v2459, %v2599
      %v2649 = vadd.f32 %v2461, %v2601
      %v2650 = vadd.f32 %v2464, %v2604
      %v2651 = vadd.f32 %v2466, %v2606
      %v2652 = vadd.f32 %v2469, %v2609
      %v2653 = vadd.f32 %v2471, %v2611
      %v2654 = vadd.f32 %v2474, %v2614
      %v2655 = vadd.f32 %v2476, %v2616
      %v2656 = vadd.f32 %v2479, %v2619
      %v2657 = vadd.f32 %v2481, %v2621
      %v2658 = vadd.f32 %v2484, %v2624
      %v2659 = vadd.f32 %v2486, %v2626
      %v2661 = vsel %vm2255, %v232, 0
      %2663 = vmatpush.bf16.msra.mxu0 0
      %2664 = vmatpush.bf16.msra.mxu0 0
      %2665 = vmatpush.bf16.msra.mxu0 0
      %2666 = vmatpush.bf16.msra.mxu0 0
      %2667 = vmatpush.bf16.msra.mxu0 0
      %2668 = vmatpush.bf16.msra.mxu0 0
      %2669 = vmatpush.bf16.msra.mxu0 0
      %2670 = vmatpush.bf16.msra.mxu0 %v2661
      %2671 = vmatmul.bf16.gmra.mxu0 %v2208
      %v2672 = vpop.f32.mrf.mxu0
      %v2673 = vadd.f32 0.0, %v2672
      %v2674 = vpop.f32.mrf.mxu0
      %v2675 = vadd.f32 0.0, %v2674
      %2676 = vmatmul.bf16.gmra.mxu0 %v2211
      %v2677 = vpop.f32.mrf.mxu0
      %v2678 = vadd.f32 0.0, %v2677
      %v2679 = vpop.f32.mrf.mxu0
      %v2680 = vadd.f32 0.0, %v2679
      %2681 = vmatmul.bf16.gmra.mxu0 %v2214
      %v2682 = vpop.f32.mrf.mxu0
      %v2683 = vadd.f32 0.0, %v2682
      %v2684 = vpop.f32.mrf.mxu0
      %v2685 = vadd.f32 0.0, %v2684
      %2686 = vmatmul.bf16.gmra.mxu0 %v2217
      %v2687 = vpop.f32.mrf.mxu0
      %v2688 = vadd.f32 0.0, %v2687
      %v2689 = vpop.f32.mrf.mxu0
      %v2690 = vadd.f32 0.0, %v2689
      %2691 = vmatmul.bf16.gmra.mxu0 %v2220
      %v2692 = vpop.f32.mrf.mxu0
      %v2693 = vadd.f32 0.0, %v2692
      %v2694 = vpop.f32.mrf.mxu0
      %v2695 = vadd.f32 0.0, %v2694
      %2696 = vmatmul.bf16.gmra.mxu0 %v2223
      %v2697 = vpop.f32.mrf.mxu0
      %v2698 = vadd.f32 0.0, %v2697
      %v2699 = vpop.f32.mrf.mxu0
      %v2700 = vadd.f32 0.0, %v2699
      %2701 = vmatmul.bf16.gmra.mxu0 %v2226
      %v2702 = vpop.f32.mrf.mxu0
      %v2703 = vadd.f32 0.0, %v2702
      %v2704 = vpop.f32.mrf.mxu0
      %v2705 = vadd.f32 0.0, %v2704
      %2706 = vmatmul.bf16.gmra.mxu0 %v2229
      %v2707 = vpop.f32.mrf.mxu0
      %v2708 = vadd.f32 0.0, %v2707
      %v2709 = vpop.f32.mrf.mxu0
      %v2710 = vadd.f32 0.0, %v2709
      %2711 = vmatmul.bf16.gmra.mxu0 %v2232
      %v2712 = vpop.f32.mrf.mxu0
      %v2713 = vadd.f32 0.0, %v2712
      %v2714 = vpop.f32.mrf.mxu0
      %v2715 = vadd.f32 0.0, %v2714
      %2716 = vmatmul.bf16.gmra.mxu0 %v2235
      %v2717 = vpop.f32.mrf.mxu0
      %v2718 = vadd.f32 0.0, %v2717
      %v2719 = vpop.f32.mrf.mxu0
      %v2720 = vadd.f32 0.0, %v2719
      %2721 = vmatmul.bf16.gmra.mxu0 %v2238
      %v2722 = vpop.f32.mrf.mxu0
      %v2723 = vadd.f32 0.0, %v2722
      %v2724 = vpop.f32.mrf.mxu0
      %v2725 = vadd.f32 0.0, %v2724
      %2726 = vmatmul.bf16.gmra.mxu0 %v2241
      %v2727 = vpop.f32.mrf.mxu0
      %v2728 = vadd.f32 0.0, %v2727
      %v2729 = vpop.f32.mrf.mxu0
      %v2730 = vadd.f32 0.0, %v2729
      %2731 = vmatmul.bf16.gmra.mxu0 %v2244
      %v2732 = vpop.f32.mrf.mxu0
      %v2733 = vadd.f32 0.0, %v2732
      %v2734 = vpop.f32.mrf.mxu0
      %v2735 = vadd.f32 0.0, %v2734
      %2736 = vmatmul.bf16.gmra.mxu0 %v2247
      %v2737 = vpop.f32.mrf.mxu0
      %v2738 = vadd.f32 0.0, %v2737
      %v2739 = vpop.f32.mrf.mxu0
      %v2740 = vadd.f32 0.0, %v2739
      %2741 = vmatmul.bf16.gmra.mxu0 %v2250
      %v2742 = vpop.f32.mrf.mxu0
      %v2743 = vadd.f32 0.0, %v2742
      %v2744 = vpop.f32.mrf.mxu0
      %v2745 = vadd.f32 0.0, %v2744
      %2746 = vmatmul.bf16.gmra.mxu0 %v2253
      %v2747 = vpop.f32.mrf.mxu0
      %v2748 = vadd.f32 0.0, %v2747
      %v2749 = vpop.f32.mrf.mxu0
      %v2750 = vadd.f32 0.0, %v2749
      %2751 = vdwg.mxu0
      %v2753 = vsel %vm2255, %v231, 0
      %2755 = vmatpush.bf16.msra.mxu0 0
      %2756 = vmatpush.bf16.msra.mxu0 0
      %2757 = vmatpush.bf16.msra.mxu0 0
      %2758 = vmatpush.bf16.msra.mxu0 0
      %2759 = vmatpush.bf16.msra.mxu0 0
      %2760 = vmatpush.bf16.msra.mxu0 0
      %2761 = vmatpush.bf16.msra.mxu0 0
      %2762 = vmatpush.bf16.msra.mxu0 %v2753
      %2763 = vmatmul.bf16.gmra.mxu0 %v2349
      %v2764 = vpop.f32.mrf.mxu0
      %v2765 = vadd.f32 %v2673, %v2764
      %v2766 = vpop.f32.mrf.mxu0
      %v2767 = vadd.f32 %v2675, %v2766
      %2768 = vmatmul.bf16.gmra.mxu0 %v2352
      %v2769 = vpop.f32.mrf.mxu0
      %v2770 = vadd.f32 %v2678, %v2769
      %v2771 = vpop.f32.mrf.mxu0
      %v2772 = vadd.f32 %v2680, %v2771
      %2773 = vmatmul.bf16.gmra.mxu0 %v2355
      %v2774 = vpop.f32.mrf.mxu0
      %v2775 = vadd.f32 %v2683, %v2774
      %v2776 = vpop.f32.mrf.mxu0
      %v2777 = vadd.f32 %v2685, %v2776
      %2778 = vmatmul.bf16.gmra.mxu0 %v2358
      %v2779 = vpop.f32.mrf.mxu0
      %v2780 = vadd.f32 %v2688, %v2779
      %v2781 = vpop.f32.mrf.mxu0
      %v2782 = vadd.f32 %v2690, %v2781
      %2783 = vmatmul.bf16.gmra.mxu0 %v2361
      %v2784 = vpop.f32.mrf.mxu0
      %v2785 = vadd.f32 %v2693, %v2784
      %v2786 = vpop.f32.mrf.mxu0
      %v2787 = vadd.f32 %v2695, %v2786
      %2788 = vmatmul.bf16.gmra.mxu0 %v2364
      %v2789 = vpop.f32.mrf.mxu0
      %v2790 = vadd.f32 %v2698, %v2789
      %v2791 = vpop.f32.mrf.mxu0
      %v2792 = vadd.f32 %v2700, %v2791
      %2793 = vmatmul.bf16.gmra.mxu0 %v2367
      %v2794 = vpop.f32.mrf.mxu0
      %v2795 = vadd.f32 %v2703, %v2794
      %v2796 = vpop.f32.mrf.mxu0
      %v2797 = vadd.f32 %v2705, %v2796
      %2798 = vmatmul.bf16.gmra.mxu0 %v2370
      %v2799 = vpop.f32.mrf.mxu0
      %v2800 = vadd.f32 %v2708, %v2799
      %v2801 = vpop.f32.mrf.mxu0
      %v2802 = vadd.f32 %v2710, %v2801
      %2803 = vmatmul.bf16.gmra.mxu0 %v2373
      %v2804 = vpop.f32.mrf.mxu0
      %v2805 = vadd.f32 %v2713, %v2804
      %v2806 = vpop.f32.mrf.mxu0
      %v2807 = vadd.f32 %v2715, %v2806
      %2808 = vmatmul.bf16.gmra.mxu0 %v2376
      %v2809 = vpop.f32.mrf.mxu0
      %v2810 = vadd.f32 %v2718, %v2809
      %v2811 = vpop.f32.mrf.mxu0
      %v2812 = vadd.f32 %v2720, %v2811
      %2813 = vmatmul.bf16.gmra.mxu0 %v2379
      %v2814 = vpop.f32.mrf.mxu0
      %v2815 = vadd.f32 %v2723, %v2814
      %v2816 = vpop.f32.mrf.mxu0
      %v2817 = vadd.f32 %v2725, %v2816
      %2818 = vmatmul.bf16.gmra.mxu0 %v2382
      %v2819 = vpop.f32.mrf.mxu0
      %v2820 = vadd.f32 %v2728, %v2819
      %v2821 = vpop.f32.mrf.mxu0
      %v2822 = vadd.f32 %v2730, %v2821
      %2823 = vmatmul.bf16.gmra.mxu0 %v2385
      %v2824 = vpop.f32.mrf.mxu0
      %v2825 = vadd.f32 %v2733, %v2824
      %v2826 = vpop.f32.mrf.mxu0
      %v2827 = vadd.f32 %v2735, %v2826
      %2828 = vmatmul.bf16.gmra.mxu0 %v2388
      %v2829 = vpop.f32.mrf.mxu0
      %v2830 = vadd.f32 %v2738, %v2829
      %v2831 = vpop.f32.mrf.mxu0
      %v2832 = vadd.f32 %v2740, %v2831
      %2833 = vmatmul.bf16.gmra.mxu0 %v2391
      %v2834 = vpop.f32.mrf.mxu0
      %v2835 = vadd.f32 %v2743, %v2834
      %v2836 = vpop.f32.mrf.mxu0
      %v2837 = vadd.f32 %v2745, %v2836
      %2838 = vmatmul.bf16.gmra.mxu0 %v2394
      %v2839 = vpop.f32.mrf.mxu0
      %v2840 = vadd.f32 %v2748, %v2839
      %v2841 = vpop.f32.mrf.mxu0
      %v2842 = vadd.f32 %v2750, %v2841
      %2843 = vdwg.mxu0
      %v2845 = vsel %vm2255, %v233, 0
      %2847 = vmatpush.bf16.msra.mxu0 0
      %2848 = vmatpush.bf16.msra.mxu0 0
      %2849 = vmatpush.bf16.msra.mxu0 0
      %2850 = vmatpush.bf16.msra.mxu0 0
      %2851 = vmatpush.bf16.msra.mxu0 0
      %2852 = vmatpush.bf16.msra.mxu0 0
      %2853 = vmatpush.bf16.msra.mxu0 0
      %2854 = vmatpush.bf16.msra.mxu0 %v2845
      %2855 = vmatmul.bf16.gmra.mxu0 %v2489
      %v2856 = vpop.f32.mrf.mxu0
      %v2857 = vadd.f32 0.0, %v2856
      %v2858 = vpop.f32.mrf.mxu0
      %v2859 = vadd.f32 0.0, %v2858
      %2860 = vmatmul.bf16.gmra.mxu0 %v2492
      %v2861 = vpop.f32.mrf.mxu0
      %v2862 = vadd.f32 0.0, %v2861
      %v2863 = vpop.f32.mrf.mxu0
      %v2864 = vadd.f32 0.0, %v2863
      %2865 = vmatmul.bf16.gmra.mxu0 %v2495
      %v2866 = vpop.f32.mrf.mxu0
      %v2867 = vadd.f32 0.0, %v2866
      %v2868 = vpop.f32.mrf.mxu0
      %v2869 = vadd.f32 0.0, %v2868
      %2870 = vmatmul.bf16.gmra.mxu0 %v2498
      %v2871 = vpop.f32.mrf.mxu0
      %v2872 = vadd.f32 0.0, %v2871
      %v2873 = vpop.f32.mrf.mxu0
      %v2874 = vadd.f32 0.0, %v2873
      %2875 = vmatmul.bf16.gmra.mxu0 %v2501
      %v2876 = vpop.f32.mrf.mxu0
      %v2877 = vadd.f32 0.0, %v2876
      %v2878 = vpop.f32.mrf.mxu0
      %v2879 = vadd.f32 0.0, %v2878
      %2880 = vmatmul.bf16.gmra.mxu0 %v2504
      %v2881 = vpop.f32.mrf.mxu0
      %v2882 = vadd.f32 0.0, %v2881
      %v2883 = vpop.f32.mrf.mxu0
      %v2884 = vadd.f32 0.0, %v2883
      %2885 = vmatmul.bf16.gmra.mxu0 %v2507
      %v2886 = vpop.f32.mrf.mxu0
      %v2887 = vadd.f32 0.0, %v2886
      %v2888 = vpop.f32.mrf.mxu0
      %v2889 = vadd.f32 0.0, %v2888
      %2890 = vmatmul.bf16.gmra.mxu0 %v2510
      %v2891 = vpop.f32.mrf.mxu0
      %v2892 = vadd.f32 0.0, %v2891
      %v2893 = vpop.f32.mrf.mxu0
      %v2894 = vadd.f32 0.0, %v2893
      %2895 = vmatmul.bf16.gmra.mxu0 %v2513
      %v2896 = vpop.f32.mrf.mxu0
      %v2897 = vadd.f32 0.0, %v2896
      %v2898 = vpop.f32.mrf.mxu0
      %v2899 = vadd.f32 0.0, %v2898
      %2900 = vmatmul.bf16.gmra.mxu0 %v2516
      %v2901 = vpop.f32.mrf.mxu0
      %v2902 = vadd.f32 0.0, %v2901
      %v2903 = vpop.f32.mrf.mxu0
      %v2904 = vadd.f32 0.0, %v2903
      %2905 = vmatmul.bf16.gmra.mxu0 %v2519
      %v2906 = vpop.f32.mrf.mxu0
      %v2907 = vadd.f32 0.0, %v2906
      %v2908 = vpop.f32.mrf.mxu0
      %v2909 = vadd.f32 0.0, %v2908
      %2910 = vmatmul.bf16.gmra.mxu0 %v2522
      %v2911 = vpop.f32.mrf.mxu0
      %v2912 = vadd.f32 0.0, %v2911
      %v2913 = vpop.f32.mrf.mxu0
      %v2914 = vadd.f32 0.0, %v2913
      %2915 = vmatmul.bf16.gmra.mxu0 %v2525
      %v2916 = vpop.f32.mrf.mxu0
      %v2917 = vadd.f32 0.0, %v2916
      %v2918 = vpop.f32.mrf.mxu0
      %v2919 = vadd.f32 0.0, %v2918
      %2920 = vmatmul.bf16.gmra.mxu0 %v2528
      %v2921 = vpop.f32.mrf.mxu0
      %v2922 = vadd.f32 0.0, %v2921
      %v2923 = vpop.f32.mrf.mxu0
      %v2924 = vadd.f32 0.0, %v2923
      %2925 = vmatmul.bf16.gmra.mxu0 %v2531
      %v2926 = vpop.f32.mrf.mxu0
      %v2927 = vadd.f32 0.0, %v2926
      %v2928 = vpop.f32.mrf.mxu0
      %v2929 = vadd.f32 0.0, %v2928
      %2930 = vmatmul.bf16.gmra.mxu0 %v2534
      %v2931 = vpop.f32.mrf.mxu0
      %v2932 = vadd.f32 0.0, %v2931
      %v2933 = vpop.f32.mrf.mxu0
      %v2934 = vadd.f32 0.0, %v2933
      %2935 = vdwg.mxu0
      %v2936 = vadd.f32 %v2765, %v2857
      %v2937 = vadd.f32 %v2767, %v2859
      %v2938 = vadd.f32 %v2770, %v2862
      %v2939 = vadd.f32 %v2772, %v2864
      %v2940 = vadd.f32 %v2775, %v2867
      %v2941 = vadd.f32 %v2777, %v2869
      %v2942 = vadd.f32 %v2780, %v2872
      %v2943 = vadd.f32 %v2782, %v2874
      %v2944 = vadd.f32 %v2785, %v2877
      %v2945 = vadd.f32 %v2787, %v2879
      %v2946 = vadd.f32 %v2790, %v2882
      %v2947 = vadd.f32 %v2792, %v2884
      %v2948 = vadd.f32 %v2795, %v2887
      %v2949 = vadd.f32 %v2797, %v2889
      %v2950 = vadd.f32 %v2800, %v2892
      %v2951 = vadd.f32 %v2802, %v2894
      %v2952 = vadd.f32 %v2805, %v2897
      %v2953 = vadd.f32 %v2807, %v2899
      %v2954 = vadd.f32 %v2810, %v2902
      %v2955 = vadd.f32 %v2812, %v2904
      %v2956 = vadd.f32 %v2815, %v2907
      %v2957 = vadd.f32 %v2817, %v2909
      %v2958 = vadd.f32 %v2820, %v2912
      %v2959 = vadd.f32 %v2822, %v2914
      %v2960 = vadd.f32 %v2825, %v2917
      %v2961 = vadd.f32 %v2827, %v2919
      %v2962 = vadd.f32 %v2830, %v2922
      %v2963 = vadd.f32 %v2832, %v2924
      %v2964 = vadd.f32 %v2835, %v2927
      %v2965 = vadd.f32 %v2837, %v2929
      %v2966 = vadd.f32 %v2840, %v2932
      %v2967 = vadd.f32 %v2842, %v2934
      %v2969 = vsel %vm2255, %v235, 0
      %2971 = vmatpush.bf16.msra.mxu0 0
      %2972 = vmatpush.bf16.msra.mxu0 0
      %2973 = vmatpush.bf16.msra.mxu0 0
      %2974 = vmatpush.bf16.msra.mxu0 0
      %2975 = vmatpush.bf16.msra.mxu0 0
      %2976 = vmatpush.bf16.msra.mxu0 0
      %2977 = vmatpush.bf16.msra.mxu0 0
      %2978 = vmatpush.bf16.msra.mxu0 %v2969
      %2979 = vmatmul.bf16.gmra.mxu0 %v2208
      %v2980 = vpop.f32.mrf.mxu0
      %v2981 = vadd.f32 0.0, %v2980
      %v2982 = vpop.f32.mrf.mxu0
      %v2983 = vadd.f32 0.0, %v2982
      %2984 = vmatmul.bf16.gmra.mxu0 %v2211
      %v2985 = vpop.f32.mrf.mxu0
      %v2986 = vadd.f32 0.0, %v2985
      %v2987 = vpop.f32.mrf.mxu0
      %v2988 = vadd.f32 0.0, %v2987
      %2989 = vmatmul.bf16.gmra.mxu0 %v2214
      %v2990 = vpop.f32.mrf.mxu0
      %v2991 = vadd.f32 0.0, %v2990
      %v2992 = vpop.f32.mrf.mxu0
      %v2993 = vadd.f32 0.0, %v2992
      %2994 = vmatmul.bf16.gmra.mxu0 %v2217
      %v2995 = vpop.f32.mrf.mxu0
      %v2996 = vadd.f32 0.0, %v2995
      %v2997 = vpop.f32.mrf.mxu0
      %v2998 = vadd.f32 0.0, %v2997
      %2999 = vmatmul.bf16.gmra.mxu0 %v2220
      %v3000 = vpop.f32.mrf.mxu0
      %v3001 = vadd.f32 0.0, %v3000
      %v3002 = vpop.f32.mrf.mxu0
      %v3003 = vadd.f32 0.0, %v3002
      %3004 = vmatmul.bf16.gmra.mxu0 %v2223
      %v3005 = vpop.f32.mrf.mxu0
      %v3006 = vadd.f32 0.0, %v3005
      %v3007 = vpop.f32.mrf.mxu0
      %v3008 = vadd.f32 0.0, %v3007
      %3009 = vmatmul.bf16.gmra.mxu0 %v2226
      %v3010 = vpop.f32.mrf.mxu0
      %v3011 = vadd.f32 0.0, %v3010
      %v3012 = vpop.f32.mrf.mxu0
      %v3013 = vadd.f32 0.0, %v3012
      %3014 = vmatmul.bf16.gmra.mxu0 %v2229
      %v3015 = vpop.f32.mrf.mxu0
      %v3016 = vadd.f32 0.0, %v3015
      %v3017 = vpop.f32.mrf.mxu0
      %v3018 = vadd.f32 0.0, %v3017
      %3019 = vmatmul.bf16.gmra.mxu0 %v2232
      %v3020 = vpop.f32.mrf.mxu0
      %v3021 = vadd.f32 0.0, %v3020
      %v3022 = vpop.f32.mrf.mxu0
      %v3023 = vadd.f32 0.0, %v3022
      %3024 = vmatmul.bf16.gmra.mxu0 %v2235
      %v3025 = vpop.f32.mrf.mxu0
      %v3026 = vadd.f32 0.0, %v3025
      %v3027 = vpop.f32.mrf.mxu0
      %v3028 = vadd.f32 0.0, %v3027
      %3029 = vmatmul.bf16.gmra.mxu0 %v2238
      %v3030 = vpop.f32.mrf.mxu0
      %v3031 = vadd.f32 0.0, %v3030
      %v3032 = vpop.f32.mrf.mxu0
      %v3033 = vadd.f32 0.0, %v3032
      %3034 = vmatmul.bf16.gmra.mxu0 %v2241
      %v3035 = vpop.f32.mrf.mxu0
      %v3036 = vadd.f32 0.0, %v3035
      %v3037 = vpop.f32.mrf.mxu0
      %v3038 = vadd.f32 0.0, %v3037
      %3039 = vmatmul.bf16.gmra.mxu0 %v2244
      %v3040 = vpop.f32.mrf.mxu0
      %v3041 = vadd.f32 0.0, %v3040
      %v3042 = vpop.f32.mrf.mxu0
      %v3043 = vadd.f32 0.0, %v3042
      %3044 = vmatmul.bf16.gmra.mxu0 %v2247
      %v3045 = vpop.f32.mrf.mxu0
      %v3046 = vadd.f32 0.0, %v3045
      %v3047 = vpop.f32.mrf.mxu0
      %v3048 = vadd.f32 0.0, %v3047
      %3049 = vmatmul.bf16.gmra.mxu0 %v2250
      %v3050 = vpop.f32.mrf.mxu0
      %v3051 = vadd.f32 0.0, %v3050
      %v3052 = vpop.f32.mrf.mxu0
      %v3053 = vadd.f32 0.0, %v3052
      %3054 = vmatmul.bf16.gmra.mxu0 %v2253
      %v3055 = vpop.f32.mrf.mxu0
      %v3056 = vadd.f32 0.0, %v3055
      %v3057 = vpop.f32.mrf.mxu0
      %v3058 = vadd.f32 0.0, %v3057
      %3059 = vdwg.mxu0
      %v3061 = vsel %vm2255, %v234, 0
      %3063 = vmatpush.bf16.msra.mxu0 0
      %3064 = vmatpush.bf16.msra.mxu0 0
      %3065 = vmatpush.bf16.msra.mxu0 0
      %3066 = vmatpush.bf16.msra.mxu0 0
      %3067 = vmatpush.bf16.msra.mxu0 0
      %3068 = vmatpush.bf16.msra.mxu0 0
      %3069 = vmatpush.bf16.msra.mxu0 0
      %3070 = vmatpush.bf16.msra.mxu0 %v3061
      %3071 = vmatmul.bf16.gmra.mxu0 %v2349
      %v3072 = vpop.f32.mrf.mxu0
      %v3073 = vadd.f32 %v2981, %v3072
      %v3074 = vpop.f32.mrf.mxu0
      %v3075 = vadd.f32 %v2983, %v3074
      %3076 = vmatmul.bf16.gmra.mxu0 %v2352
      %v3077 = vpop.f32.mrf.mxu0
      %v3078 = vadd.f32 %v2986, %v3077
      %v3079 = vpop.f32.mrf.mxu0
      %v3080 = vadd.f32 %v2988, %v3079
      %3081 = vmatmul.bf16.gmra.mxu0 %v2355
      %v3082 = vpop.f32.mrf.mxu0
      %v3083 = vadd.f32 %v2991, %v3082
      %v3084 = vpop.f32.mrf.mxu0
      %v3085 = vadd.f32 %v2993, %v3084
      %3086 = vmatmul.bf16.gmra.mxu0 %v2358
      %v3087 = vpop.f32.mrf.mxu0
      %v3088 = vadd.f32 %v2996, %v3087
      %v3089 = vpop.f32.mrf.mxu0
      %v3090 = vadd.f32 %v2998, %v3089
      %3091 = vmatmul.bf16.gmra.mxu0 %v2361
      %v3092 = vpop.f32.mrf.mxu0
      %v3093 = vadd.f32 %v3001, %v3092
      %v3094 = vpop.f32.mrf.mxu0
      %v3095 = vadd.f32 %v3003, %v3094
      %3096 = vmatmul.bf16.gmra.mxu0 %v2364
      %v3097 = vpop.f32.mrf.mxu0
      %v3098 = vadd.f32 %v3006, %v3097
      %v3099 = vpop.f32.mrf.mxu0
      %v3100 = vadd.f32 %v3008, %v3099
      %3101 = vmatmul.bf16.gmra.mxu0 %v2367
      %v3102 = vpop.f32.mrf.mxu0
      %v3103 = vadd.f32 %v3011, %v3102
      %v3104 = vpop.f32.mrf.mxu0
      %v3105 = vadd.f32 %v3013, %v3104
      %3106 = vmatmul.bf16.gmra.mxu0 %v2370
      %v3107 = vpop.f32.mrf.mxu0
      %v3108 = vadd.f32 %v3016, %v3107
      %v3109 = vpop.f32.mrf.mxu0
      %v3110 = vadd.f32 %v3018, %v3109
      %3111 = vmatmul.bf16.gmra.mxu0 %v2373
      %v3112 = vpop.f32.mrf.mxu0
      %v3113 = vadd.f32 %v3021, %v3112
      %v3114 = vpop.f32.mrf.mxu0
      %v3115 = vadd.f32 %v3023, %v3114
      %3116 = vmatmul.bf16.gmra.mxu0 %v2376
      %v3117 = vpop.f32.mrf.mxu0
      %v3118 = vadd.f32 %v3026, %v3117
      %v3119 = vpop.f32.mrf.mxu0
      %v3120 = vadd.f32 %v3028, %v3119
      %3121 = vmatmul.bf16.gmra.mxu0 %v2379
      %v3122 = vpop.f32.mrf.mxu0
      %v3123 = vadd.f32 %v3031, %v3122
      %v3124 = vpop.f32.mrf.mxu0
      %v3125 = vadd.f32 %v3033, %v3124
      %3126 = vmatmul.bf16.gmra.mxu0 %v2382
      %v3127 = vpop.f32.mrf.mxu0
      %v3128 = vadd.f32 %v3036, %v3127
      %v3129 = vpop.f32.mrf.mxu0
      %v3130 = vadd.f32 %v3038, %v3129
      %3131 = vmatmul.bf16.gmra.mxu0 %v2385
      %v3132 = vpop.f32.mrf.mxu0
      %v3133 = vadd.f32 %v3041, %v3132
      %v3134 = vpop.f32.mrf.mxu0
      %v3135 = vadd.f32 %v3043, %v3134
      %3136 = vmatmul.bf16.gmra.mxu0 %v2388
      %v3137 = vpop.f32.mrf.mxu0
      %v3138 = vadd.f32 %v3046, %v3137
      %v3139 = vpop.f32.mrf.mxu0
      %v3140 = vadd.f32 %v3048, %v3139
      %3141 = vmatmul.bf16.gmra.mxu0 %v2391
      %v3142 = vpop.f32.mrf.mxu0
      %v3143 = vadd.f32 %v3051, %v3142
      %v3144 = vpop.f32.mrf.mxu0
      %v3145 = vadd.f32 %v3053, %v3144
      %3146 = vmatmul.bf16.gmra.mxu0 %v2394
      %v3147 = vpop.f32.mrf.mxu0
      %v3148 = vadd.f32 %v3056, %v3147
      %v3149 = vpop.f32.mrf.mxu0
      %v3150 = vadd.f32 %v3058, %v3149
      %3151 = vdwg.mxu0
      %v3153 = vsel %vm2255, %v236, 0
      %3155 = vmatpush.bf16.msra.mxu0 0
      %3156 = vmatpush.bf16.msra.mxu0 0
      %3157 = vmatpush.bf16.msra.mxu0 0
      %3158 = vmatpush.bf16.msra.mxu0 0
      %3159 = vmatpush.bf16.msra.mxu0 0
      %3160 = vmatpush.bf16.msra.mxu0 0
      %3161 = vmatpush.bf16.msra.mxu0 0
      %3162 = vmatpush.bf16.msra.mxu0 %v3153
      %3163 = vmatmul.bf16.gmra.mxu0 %v2489
      %v3164 = vpop.f32.mrf.mxu0
      %v3165 = vadd.f32 0.0, %v3164
      %v3166 = vpop.f32.mrf.mxu0
      %v3167 = vadd.f32 0.0, %v3166
      %3168 = vmatmul.bf16.gmra.mxu0 %v2492
      %v3169 = vpop.f32.mrf.mxu0
      %v3170 = vadd.f32 0.0, %v3169
      %v3171 = vpop.f32.mrf.mxu0
      %v3172 = vadd.f32 0.0, %v3171
      %3173 = vmatmul.bf16.gmra.mxu0 %v2495
      %v3174 = vpop.f32.mrf.mxu0
      %v3175 = vadd.f32 0.0, %v3174
      %v3176 = vpop.f32.mrf.mxu0
      %v3177 = vadd.f32 0.0, %v3176
      %3178 = vmatmul.bf16.gmra.mxu0 %v2498
      %v3179 = vpop.f32.mrf.mxu0
      %v3180 = vadd.f32 0.0, %v3179
      %v3181 = vpop.f32.mrf.mxu0
      %v3182 = vadd.f32 0.0, %v3181
      %3183 = vmatmul.bf16.gmra.mxu0 %v2501
      %v3184 = vpop.f32.mrf.mxu0
      %v3185 = vadd.f32 0.0, %v3184
      %v3186 = vpop.f32.mrf.mxu0
      %v3187 = vadd.f32 0.0, %v3186
      %3188 = vmatmul.bf16.gmra.mxu0 %v2504
      %v3189 = vpop.f32.mrf.mxu0
      %v3190 = vadd.f32 0.0, %v3189
      %v3191 = vpop.f32.mrf.mxu0
      %v3192 = vadd.f32 0.0, %v3191
      %3193 = vmatmul.bf16.gmra.mxu0 %v2507
      %v3194 = vpop.f32.mrf.mxu0
      %v3195 = vadd.f32 0.0, %v3194
      %v3196 = vpop.f32.mrf.mxu0
      %v3197 = vadd.f32 0.0, %v3196
      %3198 = vmatmul.bf16.gmra.mxu0 %v2510
      %v3199 = vpop.f32.mrf.mxu0
      %v3200 = vadd.f32 0.0, %v3199
      %v3201 = vpop.f32.mrf.mxu0
      %v3202 = vadd.f32 0.0, %v3201
      %3203 = vmatmul.bf16.gmra.mxu0 %v2513
      %v3204 = vpop.f32.mrf.mxu0
      %v3205 = vadd.f32 0.0, %v3204
      %v3206 = vpop.f32.mrf.mxu0
      %v3207 = vadd.f32 0.0, %v3206
      %3208 = vmatmul.bf16.gmra.mxu0 %v2516
      %v3209 = vpop.f32.mrf.mxu0
      %v3210 = vadd.f32 0.0, %v3209
      %v3211 = vpop.f32.mrf.mxu0
      %v3212 = vadd.f32 0.0, %v3211
      %3213 = vmatmul.bf16.gmra.mxu0 %v2519
      %v3214 = vpop.f32.mrf.mxu0
      %v3215 = vadd.f32 0.0, %v3214
      %v3216 = vpop.f32.mrf.mxu0
      %v3217 = vadd.f32 0.0, %v3216
      %3218 = vmatmul.bf16.gmra.mxu0 %v2522
      %v3219 = vpop.f32.mrf.mxu0
      %v3220 = vadd.f32 0.0, %v3219
      %v3221 = vpop.f32.mrf.mxu0
      %v3222 = vadd.f32 0.0, %v3221
      %3223 = vmatmul.bf16.gmra.mxu0 %v2525
      %v3224 = vpop.f32.mrf.mxu0
      %v3225 = vadd.f32 0.0, %v3224
      %v3226 = vpop.f32.mrf.mxu0
      %v3227 = vadd.f32 0.0, %v3226
      %3228 = vmatmul.bf16.gmra.mxu0 %v2528
      %v3229 = vpop.f32.mrf.mxu0
      %v3230 = vadd.f32 0.0, %v3229
      %v3231 = vpop.f32.mrf.mxu0
      %v3232 = vadd.f32 0.0, %v3231
      %3233 = vmatmul.bf16.gmra.mxu0 %v2531
      %v3234 = vpop.f32.mrf.mxu0
      %v3235 = vadd.f32 0.0, %v3234
      %v3236 = vpop.f32.mrf.mxu0
      %v3237 = vadd.f32 0.0, %v3236
      %3238 = vmatmul.bf16.gmra.mxu0 %v2534
      %v3239 = vpop.f32.mrf.mxu0
      %v3240 = vadd.f32 0.0, %v3239
      %v3241 = vpop.f32.mrf.mxu0
      %v3242 = vadd.f32 0.0, %v3241
      %3243 = vdwg.mxu0
      %v3244 = vadd.f32 %v3073, %v3165
      %v3245 = vadd.f32 %v3075, %v3167
      %v3246 = vadd.f32 %v3078, %v3170
      %v3247 = vadd.f32 %v3080, %v3172
      %v3248 = vadd.f32 %v3083, %v3175
      %v3249 = vadd.f32 %v3085, %v3177
      %v3250 = vadd.f32 %v3088, %v3180
      %v3251 = vadd.f32 %v3090, %v3182
      %v3252 = vadd.f32 %v3093, %v3185
      %v3253 = vadd.f32 %v3095, %v3187
      %v3254 = vadd.f32 %v3098, %v3190
      %v3255 = vadd.f32 %v3100, %v3192
      %v3256 = vadd.f32 %v3103, %v3195
      %v3257 = vadd.f32 %v3105, %v3197
      %v3258 = vadd.f32 %v3108, %v3200
      %v3259 = vadd.f32 %v3110, %v3202
      %v3260 = vadd.f32 %v3113, %v3205
      %v3261 = vadd.f32 %v3115, %v3207
      %v3262 = vadd.f32 %v3118, %v3210
      %v3263 = vadd.f32 %v3120, %v3212
      %v3264 = vadd.f32 %v3123, %v3215
      %v3265 = vadd.f32 %v3125, %v3217
      %v3266 = vadd.f32 %v3128, %v3220
      %v3267 = vadd.f32 %v3130, %v3222
      %v3268 = vadd.f32 %v3133, %v3225
      %v3269 = vadd.f32 %v3135, %v3227
      %v3270 = vadd.f32 %v3138, %v3230
      %v3271 = vadd.f32 %v3140, %v3232
      %v3272 = vadd.f32 %v3143, %v3235
      %v3273 = vadd.f32 %v3145, %v3237
      %v3274 = vadd.f32 %v3148, %v3240
      %v3275 = vadd.f32 %v3150, %v3242
      %vm3276 = vcmp.lt.s32.totalorder %v1356, 16
      %vm3277 = vcmp.lt.s32.totalorder %v1357, 16
      %vm3278 = vcmp.lt.s32.totalorder %v1358, 16
      %vm3279 = vcmp.lt.s32.totalorder %v1359, 16
      %vm3280 = vcmp.lt.s32.totalorder %v1360, 16
      %vm3281 = vcmp.lt.s32.totalorder %v1361, 16
      %vm3282 = vcmp.lt.s32.totalorder %v1362, 16
      %vm3283 = vcmp.lt.s32.totalorder %v1363, 16
      %vm3284 = vcmp.lt.s32.totalorder %v1364, 16
      %vm3285 = vcmp.lt.s32.totalorder %v1365, 16
      %vm3286 = vcmp.lt.s32.totalorder %v1366, 16
      %vm3287 = vcmp.lt.s32.totalorder %v1367, 16
      %vm3288 = vcmp.lt.s32.totalorder %v1368, 16
      %vm3289 = vcmp.lt.s32.totalorder %v1369, 16
      %vm3290 = vcmp.lt.s32.totalorder %v1370, 16
      %vm3291 = vcmp.lt.s32.totalorder %v1371, 16
      %vm3292 = vcmp.lt.s32.totalorder %v1372, 16
      %vm3293 = vcmp.lt.s32.totalorder %v1373, 16
      %vm3294 = vcmp.lt.s32.totalorder %v1374, 16
      %vm3295 = vcmp.lt.s32.totalorder %v1375, 16
      %vm3296 = vcmp.lt.s32.totalorder %v1376, 16
      %vm3297 = vcmp.lt.s32.totalorder %v1377, 16
      %vm3298 = vcmp.lt.s32.totalorder %v1378, 16
      %vm3299 = vcmp.lt.s32.totalorder %v1379, 16
      %vm3300 = vcmp.lt.s32.totalorder %v1380, 16
      %vm3301 = vcmp.lt.s32.totalorder %v1381, 16
      %vm3302 = vcmp.lt.s32.totalorder %v1382, 16
      %vm3303 = vcmp.lt.s32.totalorder %v1383, 16
      %vm3304 = vcmp.lt.s32.totalorder %v1384, 16
      %vm3305 = vcmp.lt.s32.totalorder %v1385, 16
      %vm3306 = vcmp.lt.s32.totalorder %v1386, 16
      %vm3307 = vcmp.lt.s32.totalorder %v1387, 16
      %v3308 = vsel %vm3276, 1, 0
      %v3309 = vsel %vm3277, 1, 0
      %v3310 = vsel %vm3278, 1, 0
      %v3311 = vsel %vm3279, 1, 0
      %v3312 = vsel %vm3280, 1, 0
      %v3313 = vsel %vm3281, 1, 0
      %v3314 = vsel %vm3282, 1, 0
      %v3315 = vsel %vm3283, 1, 0
      %v3316 = vsel %vm3284, 1, 0
      %v3317 = vsel %vm3285, 1, 0
      %v3318 = vsel %vm3286, 1, 0
      %v3319 = vsel %vm3287, 1, 0
      %v3320 = vsel %vm3288, 1, 0
      %v3321 = vsel %vm3289, 1, 0
      %v3322 = vsel %vm3290, 1, 0
      %v3323 = vsel %vm3291, 1, 0
      %v3324 = vsel %vm3292, 1, 0
      %v3325 = vsel %vm3293, 1, 0
      %v3326 = vsel %vm3294, 1, 0
      %v3327 = vsel %vm3295, 1, 0
      %v3328 = vsel %vm3296, 1, 0
      %v3329 = vsel %vm3297, 1, 0
      %v3330 = vsel %vm3298, 1, 0
      %v3331 = vsel %vm3299, 1, 0
      %v3332 = vsel %vm3300, 1, 0
      %v3333 = vsel %vm3301, 1, 0
      %v3334 = vsel %vm3302, 1, 0
      %v3335 = vsel %vm3303, 1, 0
      %v3336 = vsel %vm3304, 1, 0
      %v3337 = vsel %vm3305, 1, 0
      %v3338 = vsel %vm3306, 1, 0
      %v3339 = vsel %vm3307, 1, 0
      %vm3340 = vcmp.eq.s32.totalorder %v3308, 1
      %vm3341 = vcmp.eq.s32.totalorder %v3309, 1
      %vm3342 = vcmp.eq.s32.totalorder %v3310, 1
      %vm3343 = vcmp.eq.s32.totalorder %v3311, 1
      %vm3344 = vcmp.eq.s32.totalorder %v3312, 1
      %vm3345 = vcmp.eq.s32.totalorder %v3313, 1
      %vm3346 = vcmp.eq.s32.totalorder %v3314, 1
      %vm3347 = vcmp.eq.s32.totalorder %v3315, 1
      %vm3348 = vcmp.eq.s32.totalorder %v3316, 1
      %vm3349 = vcmp.eq.s32.totalorder %v3317, 1
      %vm3350 = vcmp.eq.s32.totalorder %v3318, 1
      %vm3351 = vcmp.eq.s32.totalorder %v3319, 1
      %vm3352 = vcmp.eq.s32.totalorder %v3320, 1
      %vm3353 = vcmp.eq.s32.totalorder %v3321, 1
      %vm3354 = vcmp.eq.s32.totalorder %v3322, 1
      %vm3355 = vcmp.eq.s32.totalorder %v3323, 1
      %vm3356 = vcmp.eq.s32.totalorder %v3324, 1
      %vm3357 = vcmp.eq.s32.totalorder %v3325, 1
      %vm3358 = vcmp.eq.s32.totalorder %v3326, 1
      %vm3359 = vcmp.eq.s32.totalorder %v3327, 1
      %vm3360 = vcmp.eq.s32.totalorder %v3328, 1
      %vm3361 = vcmp.eq.s32.totalorder %v3329, 1
      %vm3362 = vcmp.eq.s32.totalorder %v3330, 1
      %vm3363 = vcmp.eq.s32.totalorder %v3331, 1
      %vm3364 = vcmp.eq.s32.totalorder %v3332, 1
      %vm3365 = vcmp.eq.s32.totalorder %v3333, 1
      %vm3366 = vcmp.eq.s32.totalorder %v3334, 1
      %vm3367 = vcmp.eq.s32.totalorder %v3335, 1
      %vm3368 = vcmp.eq.s32.totalorder %v3336, 1
      %vm3369 = vcmp.eq.s32.totalorder %v3337, 1
      %vm3370 = vcmp.eq.s32.totalorder %v3338, 1
      %vm3371 = vcmp.eq.s32.totalorder %v3339, 1
      %v3372 = vsel %vm3340, 0.0, %v2658
      %v3373 = vsel %vm3341, 0.0, %v2659
      %v3374 = vsel %vm3342, 0.0, %v2628
      %v3375 = vsel %vm3343, 0.0, %v2629
      %v3376 = vsel %vm3344, 0.0, %v2630
      %v3377 = vsel %vm3345, 0.0, %v2631
      %v3378 = vsel %vm3346, 0.0, %v2632
      %v3379 = vsel %vm3347, 0.0, %v2633
      %v3380 = vsel %vm3348, 0.0, %v2634
      %v3381 = vsel %vm3349, 0.0, %v2635
      %v3382 = vsel %vm3350, 0.0, %v2636
      %v3383 = vsel %vm3351, 0.0, %v2637
      %v3384 = vsel %vm3352, 0.0, %v2638
      %v3385 = vsel %vm3353, 0.0, %v2639
      %v3386 = vsel %vm3354, 0.0, %v2640
      %v3387 = vsel %vm3355, 0.0, %v2641
      %v3388 = vsel %vm3356, 0.0, %v2642
      %v3389 = vsel %vm3357, 0.0, %v2643
      %v3390 = vsel %vm3358, 0.0, %v2644
      %v3391 = vsel %vm3359, 0.0, %v2645
      %v3392 = vsel %vm3360, 0.0, %v2646
      %v3393 = vsel %vm3361, 0.0, %v2647
      %v3394 = vsel %vm3362, 0.0, %v2648
      %v3395 = vsel %vm3363, 0.0, %v2649
      %v3396 = vsel %vm3364, 0.0, %v2650
      %v3397 = vsel %vm3365, 0.0, %v2651
      %v3398 = vsel %vm3366, 0.0, %v2652
      %v3399 = vsel %vm3367, 0.0, %v2653
      %v3400 = vsel %vm3368, 0.0, %v2654
      %v3401 = vsel %vm3369, 0.0, %v2655
      %v3402 = vsel %vm3370, 0.0, %v2656
      %v3403 = vsel %vm3371, 0.0, %v2657
      %vm3404 = vcmp.ge.s32.totalorder %v1356, 240
      %vm3405 = vcmp.ge.s32.totalorder %v1357, 240
      %vm3406 = vcmp.ge.s32.totalorder %v1358, 240
      %vm3407 = vcmp.ge.s32.totalorder %v1359, 240
      %vm3408 = vcmp.ge.s32.totalorder %v1360, 240
      %vm3409 = vcmp.ge.s32.totalorder %v1361, 240
      %vm3410 = vcmp.ge.s32.totalorder %v1362, 240
      %vm3411 = vcmp.ge.s32.totalorder %v1363, 240
      %vm3412 = vcmp.ge.s32.totalorder %v1364, 240
      %vm3413 = vcmp.ge.s32.totalorder %v1365, 240
      %vm3414 = vcmp.ge.s32.totalorder %v1366, 240
      %vm3415 = vcmp.ge.s32.totalorder %v1367, 240
      %vm3416 = vcmp.ge.s32.totalorder %v1368, 240
      %vm3417 = vcmp.ge.s32.totalorder %v1369, 240
      %vm3418 = vcmp.ge.s32.totalorder %v1370, 240
      %vm3419 = vcmp.ge.s32.totalorder %v1371, 240
      %vm3420 = vcmp.ge.s32.totalorder %v1372, 240
      %vm3421 = vcmp.ge.s32.totalorder %v1373, 240
      %vm3422 = vcmp.ge.s32.totalorder %v1374, 240
      %vm3423 = vcmp.ge.s32.totalorder %v1375, 240
      %vm3424 = vcmp.ge.s32.totalorder %v1376, 240
      %vm3425 = vcmp.ge.s32.totalorder %v1377, 240
      %vm3426 = vcmp.ge.s32.totalorder %v1378, 240
      %vm3427 = vcmp.ge.s32.totalorder %v1379, 240
      %vm3428 = vcmp.ge.s32.totalorder %v1380, 240
      %vm3429 = vcmp.ge.s32.totalorder %v1381, 240
      %vm3430 = vcmp.ge.s32.totalorder %v1382, 240
      %vm3431 = vcmp.ge.s32.totalorder %v1383, 240
      %vm3432 = vcmp.ge.s32.totalorder %v1384, 240
      %vm3433 = vcmp.ge.s32.totalorder %v1385, 240
      %vm3434 = vcmp.ge.s32.totalorder %v1386, 240
      %vm3435 = vcmp.ge.s32.totalorder %v1387, 240
      %v3436 = vsel %vm3404, 1, 0
      %v3437 = vsel %vm3405, 1, 0
      %v3438 = vsel %vm3406, 1, 0
      %v3439 = vsel %vm3407, 1, 0
      %v3440 = vsel %vm3408, 1, 0
      %v3441 = vsel %vm3409, 1, 0
      %v3442 = vsel %vm3410, 1, 0
      %v3443 = vsel %vm3411, 1, 0
      %v3444 = vsel %vm3412, 1, 0
      %v3445 = vsel %vm3413, 1, 0
      %v3446 = vsel %vm3414, 1, 0
      %v3447 = vsel %vm3415, 1, 0
      %v3448 = vsel %vm3416, 1, 0
      %v3449 = vsel %vm3417, 1, 0
      %v3450 = vsel %vm3418, 1, 0
      %v3451 = vsel %vm3419, 1, 0
      %v3452 = vsel %vm3420, 1, 0
      %v3453 = vsel %vm3421, 1, 0
      %v3454 = vsel %vm3422, 1, 0
      %v3455 = vsel %vm3423, 1, 0
      %v3456 = vsel %vm3424, 1, 0
      %v3457 = vsel %vm3425, 1, 0
      %v3458 = vsel %vm3426, 1, 0
      %v3459 = vsel %vm3427, 1, 0
      %v3460 = vsel %vm3428, 1, 0
      %v3461 = vsel %vm3429, 1, 0
      %v3462 = vsel %vm3430, 1, 0
      %v3463 = vsel %vm3431, 1, 0
      %v3464 = vsel %vm3432, 1, 0
      %v3465 = vsel %vm3433, 1, 0
      %v3466 = vsel %vm3434, 1, 0
      %v3467 = vsel %vm3435, 1, 0
      %vm3468 = vcmp.eq.s32.totalorder %v3436, 1
      %vm3469 = vcmp.eq.s32.totalorder %v3437, 1
      %vm3470 = vcmp.eq.s32.totalorder %v3438, 1
      %vm3471 = vcmp.eq.s32.totalorder %v3439, 1
      %vm3472 = vcmp.eq.s32.totalorder %v3440, 1
      %vm3473 = vcmp.eq.s32.totalorder %v3441, 1
      %vm3474 = vcmp.eq.s32.totalorder %v3442, 1
      %vm3475 = vcmp.eq.s32.totalorder %v3443, 1
      %vm3476 = vcmp.eq.s32.totalorder %v3444, 1
      %vm3477 = vcmp.eq.s32.totalorder %v3445, 1
      %vm3478 = vcmp.eq.s32.totalorder %v3446, 1
      %vm3479 = vcmp.eq.s32.totalorder %v3447, 1
      %vm3480 = vcmp.eq.s32.totalorder %v3448, 1
      %vm3481 = vcmp.eq.s32.totalorder %v3449, 1
      %vm3482 = vcmp.eq.s32.totalorder %v3450, 1
      %vm3483 = vcmp.eq.s32.totalorder %v3451, 1
      %vm3484 = vcmp.eq.s32.totalorder %v3452, 1
      %vm3485 = vcmp.eq.s32.totalorder %v3453, 1
      %vm3486 = vcmp.eq.s32.totalorder %v3454, 1
      %vm3487 = vcmp.eq.s32.totalorder %v3455, 1
      %vm3488 = vcmp.eq.s32.totalorder %v3456, 1
      %vm3489 = vcmp.eq.s32.totalorder %v3457, 1
      %vm3490 = vcmp.eq.s32.totalorder %v3458, 1
      %vm3491 = vcmp.eq.s32.totalorder %v3459, 1
      %vm3492 = vcmp.eq.s32.totalorder %v3460, 1
      %vm3493 = vcmp.eq.s32.totalorder %v3461, 1
      %vm3494 = vcmp.eq.s32.totalorder %v3462, 1
      %vm3495 = vcmp.eq.s32.totalorder %v3463, 1
      %vm3496 = vcmp.eq.s32.totalorder %v3464, 1
      %vm3497 = vcmp.eq.s32.totalorder %v3465, 1
      %vm3498 = vcmp.eq.s32.totalorder %v3466, 1
      %vm3499 = vcmp.eq.s32.totalorder %v3467, 1
      %v3500 = vsel %vm3468, 0.0, %v3246
      %v3501 = vsel %vm3469, 0.0, %v3247
      %v3502 = vsel %vm3470, 0.0, %v3248
      %v3503 = vsel %vm3471, 0.0, %v3249
      %v3504 = vsel %vm3472, 0.0, %v3250
      %v3505 = vsel %vm3473, 0.0, %v3251
      %v3506 = vsel %vm3474, 0.0, %v3252
      %v3507 = vsel %vm3475, 0.0, %v3253
      %v3508 = vsel %vm3476, 0.0, %v3254
      %v3509 = vsel %vm3477, 0.0, %v3255
      %v3510 = vsel %vm3478, 0.0, %v3256
      %v3511 = vsel %vm3479, 0.0, %v3257
      %v3512 = vsel %vm3480, 0.0, %v3258
      %v3513 = vsel %vm3481, 0.0, %v3259
      %v3514 = vsel %vm3482, 0.0, %v3260
      %v3515 = vsel %vm3483, 0.0, %v3261
      %v3516 = vsel %vm3484, 0.0, %v3262
      %v3517 = vsel %vm3485, 0.0, %v3263
      %v3518 = vsel %vm3486, 0.0, %v3264
      %v3519 = vsel %vm3487, 0.0, %v3265
      %v3520 = vsel %vm3488, 0.0, %v3266
      %v3521 = vsel %vm3489, 0.0, %v3267
      %v3522 = vsel %vm3490, 0.0, %v3268
      %v3523 = vsel %vm3491, 0.0, %v3269
      %v3524 = vsel %vm3492, 0.0, %v3270
      %v3525 = vsel %vm3493, 0.0, %v3271
      %v3526 = vsel %vm3494, 0.0, %v3272
      %v3527 = vsel %vm3495, 0.0, %v3273
      %v3528 = vsel %vm3496, 0.0, %v3274
      %v3529 = vsel %vm3497, 0.0, %v3275
      %v3530 = vsel %vm3498, 0.0, %v3244
      %v3531 = vsel %vm3499, 0.0, %v3245
      %v3532 = vadd.f32 %v3372, %v2936
      %v3533 = vadd.f32 %v3373, %v2937
      %v3534 = vadd.f32 %v3374, %v2938
      %v3535 = vadd.f32 %v3375, %v2939
      %v3536 = vadd.f32 %v3376, %v2940
      %v3537 = vadd.f32 %v3377, %v2941
      %v3538 = vadd.f32 %v3378, %v2942
      %v3539 = vadd.f32 %v3379, %v2943
      %v3540 = vadd.f32 %v3380, %v2944
      %v3541 = vadd.f32 %v3381, %v2945
      %v3542 = vadd.f32 %v3382, %v2946
      %v3543 = vadd.f32 %v3383, %v2947
      %v3544 = vadd.f32 %v3384, %v2948
      %v3545 = vadd.f32 %v3385, %v2949
      %v3546 = vadd.f32 %v3386, %v2950
      %v3547 = vadd.f32 %v3387, %v2951
      %v3548 = vadd.f32 %v3388, %v2952
      %v3549 = vadd.f32 %v3389, %v2953
      %v3550 = vadd.f32 %v3390, %v2954
      %v3551 = vadd.f32 %v3391, %v2955
      %v3552 = vadd.f32 %v3392, %v2956
      %v3553 = vadd.f32 %v3393, %v2957
      %v3554 = vadd.f32 %v3394, %v2958
      %v3555 = vadd.f32 %v3395, %v2959
      %v3556 = vadd.f32 %v3396, %v2960
      %v3557 = vadd.f32 %v3397, %v2961
      %v3558 = vadd.f32 %v3398, %v2962
      %v3559 = vadd.f32 %v3399, %v2963
      %v3560 = vadd.f32 %v3400, %v2964
      %v3561 = vadd.f32 %v3401, %v2965
      %v3562 = vadd.f32 %v3402, %v2966
      %v3563 = vadd.f32 %v3403, %v2967
      %v3564 = vadd.f32 %v3532, %v3500
      %v3565 = vadd.f32 %v3533, %v3501
      %v3566 = vadd.f32 %v3534, %v3502
      %v3567 = vadd.f32 %v3535, %v3503
      %v3568 = vadd.f32 %v3536, %v3504
      %v3569 = vadd.f32 %v3537, %v3505
      %v3570 = vadd.f32 %v3538, %v3506
      %v3571 = vadd.f32 %v3539, %v3507
      %v3572 = vadd.f32 %v3540, %v3508
      %v3573 = vadd.f32 %v3541, %v3509
      %v3574 = vadd.f32 %v3542, %v3510
      %v3575 = vadd.f32 %v3543, %v3511
      %v3576 = vadd.f32 %v3544, %v3512
      %v3577 = vadd.f32 %v3545, %v3513
      %v3578 = vadd.f32 %v3546, %v3514
      %v3579 = vadd.f32 %v3547, %v3515
      %v3580 = vadd.f32 %v3548, %v3516
      %v3581 = vadd.f32 %v3549, %v3517
      %v3582 = vadd.f32 %v3550, %v3518
      %v3583 = vadd.f32 %v3551, %v3519
      %v3584 = vadd.f32 %v3552, %v3520
      %v3585 = vadd.f32 %v3553, %v3521
      %v3586 = vadd.f32 %v3554, %v3522
      %v3587 = vadd.f32 %v3555, %v3523
      %v3588 = vadd.f32 %v3556, %v3524
      %v3589 = vadd.f32 %v3557, %v3525
      %v3590 = vadd.f32 %v3558, %v3526
      %v3591 = vadd.f32 %v3559, %v3527
      %v3592 = vadd.f32 %v3560, %v3528
      %v3593 = vadd.f32 %v3561, %v3529
      %v3594 = vadd.f32 %v3562, %v3530
      %v3595 = vadd.f32 %v3563, %v3531
      %v3597 = vperm.slane %v237, 0
      %v3599 = vadd.f32 %v3564, %v3597
      %v3600 = vadd.f32 %v3565, %v3597
      %v3601 = vadd.f32 %v3566, %v3597
      %v3602 = vadd.f32 %v3567, %v3597
      %v3603 = vadd.f32 %v3568, %v3597
      %v3604 = vadd.f32 %v3569, %v3597
      %v3605 = vadd.f32 %v3570, %v3597
      %v3606 = vadd.f32 %v3571, %v3597
      %v3607 = vadd.f32 %v3572, %v3597
      %v3608 = vadd.f32 %v3573, %v3597
      %v3609 = vadd.f32 %v3574, %v3597
      %v3610 = vadd.f32 %v3575, %v3597
      %v3611 = vadd.f32 %v3576, %v3597
      %v3612 = vadd.f32 %v3577, %v3597
      %v3613 = vadd.f32 %v3578, %v3597
      %v3614 = vadd.f32 %v3579, %v3597
      %v3615 = vadd.f32 %v3580, %v3597
      %v3616 = vadd.f32 %v3581, %v3597
      %v3617 = vadd.f32 %v3582, %v3597
      %v3618 = vadd.f32 %v3583, %v3597
      %v3619 = vadd.f32 %v3584, %v3597
      %v3620 = vadd.f32 %v3585, %v3597
      %v3621 = vadd.f32 %v3586, %v3597
      %v3622 = vadd.f32 %v3587, %v3597
      %v3623 = vadd.f32 %v3588, %v3597
      %v3624 = vadd.f32 %v3589, %v3597
      %v3625 = vadd.f32 %v3590, %v3597
      %v3626 = vadd.f32 %v3591, %v3597
      %v3627 = vadd.f32 %v3592, %v3597
      %v3628 = vadd.f32 %v3593, %v3597
      %v3629 = vadd.f32 %v3594, %v3597
      %v3630 = vadd.f32 %v3595, %v3597
      %vm3631 = vcmp.gt.f32.partialorder %v3599, 0.0
      %vm3632 = vcmp.gt.f32.partialorder %v3600, 0.0
      %vm3633 = vcmp.gt.f32.partialorder %v3601, 0.0
      %vm3634 = vcmp.gt.f32.partialorder %v3602, 0.0
      %vm3635 = vcmp.gt.f32.partialorder %v3603, 0.0
      %vm3636 = vcmp.gt.f32.partialorder %v3604, 0.0
      %vm3637 = vcmp.gt.f32.partialorder %v3605, 0.0
      %vm3638 = vcmp.gt.f32.partialorder %v3606, 0.0
      %vm3639 = vcmp.gt.f32.partialorder %v3607, 0.0
      %vm3640 = vcmp.gt.f32.partialorder %v3608, 0.0
      %vm3641 = vcmp.gt.f32.partialorder %v3609, 0.0
      %vm3642 = vcmp.gt.f32.partialorder %v3610, 0.0
      %vm3643 = vcmp.gt.f32.partialorder %v3611, 0.0
      %vm3644 = vcmp.gt.f32.partialorder %v3612, 0.0
      %vm3645 = vcmp.gt.f32.partialorder %v3613, 0.0
      %vm3646 = vcmp.gt.f32.partialorder %v3614, 0.0
      %vm3647 = vcmp.gt.f32.partialorder %v3615, 0.0
      %vm3648 = vcmp.gt.f32.partialorder %v3616, 0.0
      %vm3649 = vcmp.gt.f32.partialorder %v3617, 0.0
      %vm3650 = vcmp.gt.f32.partialorder %v3618, 0.0
      %vm3651 = vcmp.gt.f32.partialorder %v3619, 0.0
      %vm3652 = vcmp.gt.f32.partialorder %v3620, 0.0
      %vm3653 = vcmp.gt.f32.partialorder %v3621, 0.0
      %vm3654 = vcmp.gt.f32.partialorder %v3622, 0.0
      %vm3655 = vcmp.gt.f32.partialorder %v3623, 0.0
      %vm3656 = vcmp.gt.f32.partialorder %v3624, 0.0
      %vm3657 = vcmp.gt.f32.partialorder %v3625, 0.0
      %vm3658 = vcmp.gt.f32.partialorder %v3626, 0.0
      %vm3659 = vcmp.gt.f32.partialorder %v3627, 0.0
      %vm3660 = vcmp.gt.f32.partialorder %v3628, 0.0
      %vm3661 = vcmp.gt.f32.partialorder %v3629, 0.0
      %vm3662 = vcmp.gt.f32.partialorder %v3630, 0.0
      %v3663 = vmul.f32 %v3599, 0.01
      %v3664 = vmul.f32 %v3600, 0.01
      %v3665 = vmul.f32 %v3601, 0.01
      %v3666 = vmul.f32 %v3602, 0.01
      %v3667 = vmul.f32 %v3603, 0.01
      %v3668 = vmul.f32 %v3604, 0.01
      %v3669 = vmul.f32 %v3605, 0.01
      %v3670 = vmul.f32 %v3606, 0.01
      %v3671 = vmul.f32 %v3607, 0.01
      %v3672 = vmul.f32 %v3608, 0.01
      %v3673 = vmul.f32 %v3609, 0.01
      %v3674 = vmul.f32 %v3610, 0.01
      %v3675 = vmul.f32 %v3611, 0.01
      %v3676 = vmul.f32 %v3612, 0.01
      %v3677 = vmul.f32 %v3613, 0.01
      %v3678 = vmul.f32 %v3614, 0.01
      %v3679 = vmul.f32 %v3615, 0.01
      %v3680 = vmul.f32 %v3616, 0.01
      %v3681 = vmul.f32 %v3617, 0.01
      %v3682 = vmul.f32 %v3618, 0.01
      %v3683 = vmul.f32 %v3619, 0.01
      %v3684 = vmul.f32 %v3620, 0.01
      %v3685 = vmul.f32 %v3621, 0.01
      %v3686 = vmul.f32 %v3622, 0.01
      %v3687 = vmul.f32 %v3623, 0.01
      %v3688 = vmul.f32 %v3624, 0.01
      %v3689 = vmul.f32 %v3625, 0.01
      %v3690 = vmul.f32 %v3626, 0.01
      %v3691 = vmul.f32 %v3627, 0.01
      %v3692 = vmul.f32 %v3628, 0.01
      %v3693 = vmul.f32 %v3629, 0.01
      %v3694 = vmul.f32 %v3630, 0.01
      %v3695 = vsel %vm3631, %v3599, %v3663
      %v3696 = vsel %vm3632, %v3600, %v3664
      %v3697 = vsel %vm3633, %v3601, %v3665
      %v3698 = vsel %vm3634, %v3602, %v3666
      %v3699 = vsel %vm3635, %v3603, %v3667
      %v3700 = vsel %vm3636, %v3604, %v3668
      %v3701 = vsel %vm3637, %v3605, %v3669
      %v3702 = vsel %vm3638, %v3606, %v3670
      %v3703 = vsel %vm3639, %v3607, %v3671
      %v3704 = vsel %vm3640, %v3608, %v3672
      %v3705 = vsel %vm3641, %v3609, %v3673
      %v3706 = vsel %vm3642, %v3610, %v3674
      %v3707 = vsel %vm3643, %v3611, %v3675
      %v3708 = vsel %vm3644, %v3612, %v3676
      %v3709 = vsel %vm3645, %v3613, %v3677
      %v3710 = vsel %vm3646, %v3614, %v3678
      %v3711 = vsel %vm3647, %v3615, %v3679
      %v3712 = vsel %vm3648, %v3616, %v3680
      %v3713 = vsel %vm3649, %v3617, %v3681
      %v3714 = vsel %vm3650, %v3618, %v3682
      %v3715 = vsel %vm3651, %v3619, %v3683
      %v3716 = vsel %vm3652, %v3620, %v3684
      %v3717 = vsel %vm3653, %v3621, %v3685
      %v3718 = vsel %vm3654, %v3622, %v3686
      %v3719 = vsel %vm3655, %v3623, %v3687
      %v3720 = vsel %vm3656, %v3624, %v3688
      %v3721 = vsel %vm3657, %v3625, %v3689
      %v3722 = vsel %vm3658, %v3626, %v3690
      %v3723 = vsel %vm3659, %v3627, %v3691
      %v3724 = vsel %vm3660, %v3628, %v3692
      %v3725 = vsel %vm3661, %v3629, %v3693
      %v3726 = vsel %vm3662, %v3630, %v3694
      %vm3727 = vcmp.lt.s32.totalorder %v1356, 0
      %v3728 = vsub.s32 0, %v1356
      %v3729 = vsel %vm3727, %v3728, %v1356
      %v3730 = vshrl.u32 %v3729, 3
      %v3731 = vand.u32 %v3729, 7
      %v3732 = vsub.s32 0, %v3731
      %v3733 = vsel %vm3727, %v3732, %v3731
      %vm3734 = vcmp.lt.s32.totalorder %v1357, 0
      %v3735 = vsub.s32 0, %v1357
      %v3736 = vsel %vm3734, %v3735, %v1357
      %v3737 = vshrl.u32 %v3736, 3
      %v3738 = vand.u32 %v3736, 7
      %v3739 = vsub.s32 0, %v3738
      %v3740 = vsel %vm3734, %v3739, %v3738
      %vm3741 = vcmp.lt.s32.totalorder %v1358, 0
      %v3742 = vsub.s32 0, %v1358
      %v3743 = vsel %vm3741, %v3742, %v1358
      %v3744 = vshrl.u32 %v3743, 3
      %v3745 = vand.u32 %v3743, 7
      %v3746 = vsub.s32 0, %v3745
      %v3747 = vsel %vm3741, %v3746, %v3745
      %vm3748 = vcmp.lt.s32.totalorder %v1359, 0
      %v3749 = vsub.s32 0, %v1359
      %v3750 = vsel %vm3748, %v3749, %v1359
      %v3751 = vshrl.u32 %v3750, 3
      %v3752 = vand.u32 %v3750, 7
      %v3753 = vsub.s32 0, %v3752
      %v3754 = vsel %vm3748, %v3753, %v3752
      %vm3755 = vcmp.lt.s32.totalorder %v1360, 0
      %v3756 = vsub.s32 0, %v1360
      %v3757 = vsel %vm3755, %v3756, %v1360
      %v3758 = vshrl.u32 %v3757, 3
      %v3759 = vand.u32 %v3757, 7
      %v3760 = vsub.s32 0, %v3759
      %v3761 = vsel %vm3755, %v3760, %v3759
      %vm3762 = vcmp.lt.s32.totalorder %v1361, 0
      %v3763 = vsub.s32 0, %v1361
      %v3764 = vsel %vm3762, %v3763, %v1361
      %v3765 = vshrl.u32 %v3764, 3
      %v3766 = vand.u32 %v3764, 7
      %v3767 = vsub.s32 0, %v3766
      %v3768 = vsel %vm3762, %v3767, %v3766
      %vm3769 = vcmp.lt.s32.totalorder %v1362, 0
      %v3770 = vsub.s32 0, %v1362
      %v3771 = vsel %vm3769, %v3770, %v1362
      %v3772 = vshrl.u32 %v3771, 3
      %v3773 = vand.u32 %v3771, 7
      %v3774 = vsub.s32 0, %v3773
      %v3775 = vsel %vm3769, %v3774, %v3773
      %vm3776 = vcmp.lt.s32.totalorder %v1363, 0
      %v3777 = vsub.s32 0, %v1363
      %v3778 = vsel %vm3776, %v3777, %v1363
      %v3779 = vshrl.u32 %v3778, 3
      %v3780 = vand.u32 %v3778, 7
      %v3781 = vsub.s32 0, %v3780
      %v3782 = vsel %vm3776, %v3781, %v3780
      %vm3783 = vcmp.ne.s32.totalorder %v3733, 0
      %vm3784 = vcmp.ne.s32.totalorder %v3740, 0
      %vm3785 = vcmp.ne.s32.totalorder %v3747, 0
      %vm3786 = vcmp.ne.s32.totalorder %v3754, 0
      %vm3787 = vcmp.ne.s32.totalorder %v3761, 0
      %vm3788 = vcmp.ne.s32.totalorder %v3768, 0
      %vm3789 = vcmp.ne.s32.totalorder %v3775, 0
      %vm3790 = vcmp.ne.s32.totalorder %v3782, 0
      %vm3791 = vcmp.lt.s32.totalorder %v3733, 0
      %vm3792 = vcmp.lt.s32.totalorder %v3740, 0
      %vm3793 = vcmp.lt.s32.totalorder %v3747, 0
      %vm3794 = vcmp.lt.s32.totalorder %v3754, 0
      %vm3795 = vcmp.lt.s32.totalorder %v3761, 0
      %vm3796 = vcmp.lt.s32.totalorder %v3768, 0
      %vm3797 = vcmp.lt.s32.totalorder %v3775, 0
      %vm3798 = vcmp.lt.s32.totalorder %v3782, 0
      %vm3799 = vmand %vm3791, %vm3783
      %vm3800 = vmand %vm3792, %vm3784
      %vm3801 = vmand %vm3793, %vm3785
      %vm3802 = vmand %vm3794, %vm3786
      %vm3803 = vmand %vm3795, %vm3787
      %vm3804 = vmand %vm3796, %vm3788
      %vm3805 = vmand %vm3797, %vm3789
      %vm3806 = vmand %vm3798, %vm3790
      %v3807 = vadd.s32 %v3733, 8
      %v3808 = vadd.s32 %v3740, 8
      %v3809 = vadd.s32 %v3747, 8
      %v3810 = vadd.s32 %v3754, 8
      %v3811 = vadd.s32 %v3761, 8
      %v3812 = vadd.s32 %v3768, 8
      %v3813 = vadd.s32 %v3775, 8
      %v3814 = vadd.s32 %v3782, 8
      %v3815 = vsel %vm3799, %v3807, %v3733
      %v3816 = vsel %vm3800, %v3808, %v3740
      %v3817 = vsel %vm3801, %v3809, %v3747
      %v3818 = vsel %vm3802, %v3810, %v3754
      %v3819 = vsel %vm3803, %v3811, %v3761
      %v3820 = vsel %vm3804, %v3812, %v3768
      %v3821 = vsel %vm3805, %v3813, %v3775
      %v3822 = vsel %vm3806, %v3814, %v3782
      %vm3823 = vcmp.eq.s32.totalorder %v3815, 0
      %vm3824 = vcmp.eq.s32.totalorder %v3816, 0
      %vm3825 = vcmp.eq.s32.totalorder %v3817, 0
      %vm3826 = vcmp.eq.s32.totalorder %v3818, 0
      %vm3827 = vcmp.eq.s32.totalorder %v3819, 0
      %vm3828 = vcmp.eq.s32.totalorder %v3820, 0
      %vm3829 = vcmp.eq.s32.totalorder %v3821, 0
      %vm3830 = vcmp.eq.s32.totalorder %v3822, 0
      %v3831 = vrot.slane %v1347, 7
      %v3832 = vrot.slane %v1348, 7
      %v3833 = vrot.slane %v1349, 7
      %v3834 = vrot.slane %v1350, 7
      %v3835 = vrot.slane %v1351, 7
      %v3836 = vrot.slane %v1352, 7
      %v3837 = vrot.slane %v1353, 7
      %v3838 = vrot.slane %v1354, 7
      %v3839 = vsel %vm1836, %v3837, %v3838
      %v3840 = vsel %vm1836, %v3836, %v3837
      %v3841 = vsel %vm1836, %v3835, %v3836
      %v3842 = vsel %vm1836, %v3834, %v3835
      %v3843 = vsel %vm1836, %v3833, %v3834
      %v3844 = vsel %vm1836, %v3832, %v3833
      %v3845 = vsel %vm1836, %v3831, %v3832
      %v3846 = vsel %vm1836, %v3838, %v3831
      %v3847 = vsel %vm3823, 1, 0
      %v3848 = vsel %vm3824, 1, 0
      %v3849 = vsel %vm3825, 1, 0
      %v3850 = vsel %vm3826, 1, 0
      %v3851 = vsel %vm3827, 1, 0
      %v3852 = vsel %vm3828, 1, 0
      %v3853 = vsel %vm3829, 1, 0
      %v3854 = vsel %vm3830, 1, 0
      %vm3855 = vcmp.eq.s32.totalorder %v3847, 1
      %vm3856 = vcmp.eq.s32.totalorder %v3848, 1
      %vm3857 = vcmp.eq.s32.totalorder %v3849, 1
      %vm3858 = vcmp.eq.s32.totalorder %v3850, 1
      %vm3859 = vcmp.eq.s32.totalorder %v3851, 1
      %vm3860 = vcmp.eq.s32.totalorder %v3852, 1
      %vm3861 = vcmp.eq.s32.totalorder %v3853, 1
      %vm3862 = vcmp.eq.s32.totalorder %v3854, 1
      %v3863 = vsel %vm3855, 0.0, %v3846
      %v3864 = vsel %vm3856, 0.0, %v3845
      %v3865 = vsel %vm3857, 0.0, %v3844
      %v3866 = vsel %vm3858, 0.0, %v3843
      %v3867 = vsel %vm3859, 0.0, %v3842
      %v3868 = vsel %vm3860, 0.0, %v3841
      %v3869 = vsel %vm3861, 0.0, %v3840
      %v3870 = vsel %vm3862, 0.0, %v3839
      %vm3871 = vcmp.eq.s32.totalorder %v3815, 7
      %vm3872 = vcmp.eq.s32.totalorder %v3816, 7
      %vm3873 = vcmp.eq.s32.totalorder %v3817, 7
      %vm3874 = vcmp.eq.s32.totalorder %v3818, 7
      %vm3875 = vcmp.eq.s32.totalorder %v3819, 7
      %vm3876 = vcmp.eq.s32.totalorder %v3820, 7
      %vm3877 = vcmp.eq.s32.totalorder %v3821, 7
      %vm3878 = vcmp.eq.s32.totalorder %v3822, 7
      %v3879 = vrot.slane %v1347, 1
      %v3880 = vrot.slane %v1348, 1
      %v3881 = vrot.slane %v1349, 1
      %v3882 = vrot.slane %v1350, 1
      %v3883 = vrot.slane %v1351, 1
      %v3884 = vrot.slane %v1352, 1
      %v3885 = vrot.slane %v1353, 1
      %v3886 = vrot.slane %v1354, 1
      %v3887 = vsel %vm2029, %v3885, %v3886
      %v3888 = vsel %vm2029, %v3884, %v3885
      %v3889 = vsel %vm2029, %v3883, %v3884
      %v3890 = vsel %vm2029, %v3882, %v3883
      %v3891 = vsel %vm2029, %v3881, %v3882
      %v3892 = vsel %vm2029, %v3880, %v3881
      %v3893 = vsel %vm2029, %v3879, %v3880
      %v3894 = vsel %vm2029, %v3886, %v3879
      %v3895 = vsel %vm3871, 1, 0
      %v3896 = vsel %vm3872, 1, 0
      %v3897 = vsel %vm3873, 1, 0
      %v3898 = vsel %vm3874, 1, 0
      %v3899 = vsel %vm3875, 1, 0
      %v3900 = vsel %vm3876, 1, 0
      %v3901 = vsel %vm3877, 1, 0
      %v3902 = vsel %vm3878, 1, 0
      %vm3903 = vcmp.eq.s32.totalorder %v3895, 1
      %vm3904 = vcmp.eq.s32.totalorder %v3896, 1
      %vm3905 = vcmp.eq.s32.totalorder %v3897, 1
      %vm3906 = vcmp.eq.s32.totalorder %v3898, 1
      %vm3907 = vcmp.eq.s32.totalorder %v3899, 1
      %vm3908 = vcmp.eq.s32.totalorder %v3900, 1
      %vm3909 = vcmp.eq.s32.totalorder %v3901, 1
      %vm3910 = vcmp.eq.s32.totalorder %v3902, 1
      %v3911 = vsel %vm3903, 0.0, %v3893
      %v3912 = vsel %vm3904, 0.0, %v3892
      %v3913 = vsel %vm3905, 0.0, %v3891
      %v3914 = vsel %vm3906, 0.0, %v3890
      %v3915 = vsel %vm3907, 0.0, %v3889
      %v3916 = vsel %vm3908, 0.0, %v3888
      %v3917 = vsel %vm3909, 0.0, %v3887
      %v3918 = vsel %vm3910, 0.0, %v3894
      %v3919 = vpack.c.bf16 %v3864, %v3863
      %v3920 = vpack.c.bf16 %v3866, %v3865
      %v3921 = vpack.c.bf16 %v3868, %v3867
      %v3922 = vpack.c.bf16 %v3870, %v3869
      %v3923 = vpack.c.bf16 %v1348, %v1347
      %v3924 = vpack.c.bf16 %v1350, %v1349
      %v3925 = vpack.c.bf16 %v1352, %v1351
      %v3926 = vpack.c.bf16 %v1354, %v1353
      %v3927 = vpack.c.bf16 %v3912, %v3911
      %v3928 = vpack.c.bf16 %v3914, %v3913
      %v3929 = vpack.c.bf16 %v3916, %v3915
      %v3930 = vpack.c.bf16 %v3918, %v3917
      %v3932 = vsel %vm2206, %v3923, 0
      %v3935 = vsel %vm2206, %v3924, 0
      %v3938 = vsel %vm2206, %v3925, 0
      %v3941 = vsel %vm2206, %v3926, 0
      %3943 = vmatpush.bf16.msra.mxu0 0
      %3944 = vmatpush.bf16.msra.mxu0 0
      %3945 = vmatpush.bf16.msra.mxu0 0
      %3946 = vmatpush.bf16.msra.mxu0 0
      %3947 = vmatpush.bf16.msra.mxu0 0
      %3948 = vmatpush.bf16.msra.mxu0 0
      %3949 = vmatpush.bf16.msra.mxu0 0
      %3950 = vmatpush.bf16.msra.mxu0 %v2257
      %3951 = vmatmul.bf16.gmra.mxu0 %v3932
      %v3952 = vpop.f32.mrf.mxu0
      %v3953 = vadd.f32 0.0, %v3952
      %v3954 = vpop.f32.mrf.mxu0
      %v3955 = vadd.f32 0.0, %v3954
      %3956 = vmatmul.bf16.gmra.mxu0 %v3935
      %v3957 = vpop.f32.mrf.mxu0
      %v3958 = vadd.f32 0.0, %v3957
      %v3959 = vpop.f32.mrf.mxu0
      %v3960 = vadd.f32 0.0, %v3959
      %3961 = vmatmul.bf16.gmra.mxu0 %v3938
      %v3962 = vpop.f32.mrf.mxu0
      %v3963 = vadd.f32 0.0, %v3962
      %v3964 = vpop.f32.mrf.mxu0
      %v3965 = vadd.f32 0.0, %v3964
      %3966 = vmatmul.bf16.gmra.mxu0 %v3941
      %v3967 = vpop.f32.mrf.mxu0
      %v3968 = vadd.f32 0.0, %v3967
      %v3969 = vpop.f32.mrf.mxu0
      %v3970 = vadd.f32 0.0, %v3969
      %3971 = vdwg.mxu0
      %v3973 = vsel %vm2206, %v3919, 0
      %v3976 = vsel %vm2206, %v3920, 0
      %v3979 = vsel %vm2206, %v3921, 0
      %v3982 = vsel %vm2206, %v3922, 0
      %3984 = vmatpush.bf16.msra.mxu0 0
      %3985 = vmatpush.bf16.msra.mxu0 0
      %3986 = vmatpush.bf16.msra.mxu0 0
      %3987 = vmatpush.bf16.msra.mxu0 0
      %3988 = vmatpush.bf16.msra.mxu0 0
      %3989 = vmatpush.bf16.msra.mxu0 0
      %3990 = vmatpush.bf16.msra.mxu0 0
      %3991 = vmatpush.bf16.msra.mxu0 %v2397
      %3992 = vmatmul.bf16.gmra.mxu0 %v3973
      %v3993 = vpop.f32.mrf.mxu0
      %v3994 = vadd.f32 %v3953, %v3993
      %v3995 = vpop.f32.mrf.mxu0
      %v3996 = vadd.f32 %v3955, %v3995
      %3997 = vmatmul.bf16.gmra.mxu0 %v3976
      %v3998 = vpop.f32.mrf.mxu0
      %v3999 = vadd.f32 %v3958, %v3998
      %v4000 = vpop.f32.mrf.mxu0
      %v4001 = vadd.f32 %v3960, %v4000
      %4002 = vmatmul.bf16.gmra.mxu0 %v3979
      %v4003 = vpop.f32.mrf.mxu0
      %v4004 = vadd.f32 %v3963, %v4003
      %v4005 = vpop.f32.mrf.mxu0
      %v4006 = vadd.f32 %v3965, %v4005
      %4007 = vmatmul.bf16.gmra.mxu0 %v3982
      %v4008 = vpop.f32.mrf.mxu0
      %v4009 = vadd.f32 %v3968, %v4008
      %v4010 = vpop.f32.mrf.mxu0
      %v4011 = vadd.f32 %v3970, %v4010
      %4012 = vdwg.mxu0
      %v4014 = vsel %vm2206, %v3927, 0
      %v4017 = vsel %vm2206, %v3928, 0
      %v4020 = vsel %vm2206, %v3929, 0
      %v4023 = vsel %vm2206, %v3930, 0
      %4025 = vmatpush.bf16.msra.mxu0 0
      %4026 = vmatpush.bf16.msra.mxu0 0
      %4027 = vmatpush.bf16.msra.mxu0 0
      %4028 = vmatpush.bf16.msra.mxu0 0
      %4029 = vmatpush.bf16.msra.mxu0 0
      %4030 = vmatpush.bf16.msra.mxu0 0
      %4031 = vmatpush.bf16.msra.mxu0 0
      %4032 = vmatpush.bf16.msra.mxu0 %v2537
      %4033 = vmatmul.bf16.gmra.mxu0 %v4014
      %v4034 = vpop.f32.mrf.mxu0
      %v4035 = vadd.f32 0.0, %v4034
      %v4036 = vpop.f32.mrf.mxu0
      %v4037 = vadd.f32 0.0, %v4036
      %4038 = vmatmul.bf16.gmra.mxu0 %v4017
      %v4039 = vpop.f32.mrf.mxu0
      %v4040 = vadd.f32 0.0, %v4039
      %v4041 = vpop.f32.mrf.mxu0
      %v4042 = vadd.f32 0.0, %v4041
      %4043 = vmatmul.bf16.gmra.mxu0 %v4020
      %v4044 = vpop.f32.mrf.mxu0
      %v4045 = vadd.f32 0.0, %v4044
      %v4046 = vpop.f32.mrf.mxu0
      %v4047 = vadd.f32 0.0, %v4046
      %4048 = vmatmul.bf16.gmra.mxu0 %v4023
      %v4049 = vpop.f32.mrf.mxu0
      %v4050 = vadd.f32 0.0, %v4049
      %v4051 = vpop.f32.mrf.mxu0
      %v4052 = vadd.f32 0.0, %v4051
      %4053 = vdwg.mxu0
      %v4054 = vadd.f32 %v3994, %v4035
      %v4055 = vadd.f32 %v3996, %v4037
      %v4056 = vadd.f32 %v3999, %v4040
      %v4057 = vadd.f32 %v4001, %v4042
      %v4058 = vadd.f32 %v4004, %v4045
      %v4059 = vadd.f32 %v4006, %v4047
      %v4060 = vadd.f32 %v4009, %v4050
      %v4061 = vadd.f32 %v4011, %v4052
      %4062 = vmatpush.bf16.msra.mxu0 0
      %4063 = vmatpush.bf16.msra.mxu0 0
      %4064 = vmatpush.bf16.msra.mxu0 0
      %4065 = vmatpush.bf16.msra.mxu0 0
      %4066 = vmatpush.bf16.msra.mxu0 0
      %4067 = vmatpush.bf16.msra.mxu0 0
      %4068 = vmatpush.bf16.msra.mxu0 0
      %4069 = vmatpush.bf16.msra.mxu0 %v2661
      %4070 = vmatmul.bf16.gmra.mxu0 %v3932
      %v4071 = vpop.f32.mrf.mxu0
      %v4072 = vadd.f32 0.0, %v4071
      %v4073 = vpop.f32.mrf.mxu0
      %v4074 = vadd.f32 0.0, %v4073
      %4075 = vmatmul.bf16.gmra.mxu0 %v3935
      %v4076 = vpop.f32.mrf.mxu0
      %v4077 = vadd.f32 0.0, %v4076
      %v4078 = vpop.f32.mrf.mxu0
      %v4079 = vadd.f32 0.0, %v4078
      %4080 = vmatmul.bf16.gmra.mxu0 %v3938
      %v4081 = vpop.f32.mrf.mxu0
      %v4082 = vadd.f32 0.0, %v4081
      %v4083 = vpop.f32.mrf.mxu0
      %v4084 = vadd.f32 0.0, %v4083
      %4085 = vmatmul.bf16.gmra.mxu0 %v3941
      %v4086 = vpop.f32.mrf.mxu0
      %v4087 = vadd.f32 0.0, %v4086
      %v4088 = vpop.f32.mrf.mxu0
      %v4089 = vadd.f32 0.0, %v4088
      %4090 = vdwg.mxu0
      %4091 = vmatpush.bf16.msra.mxu0 0
      %4092 = vmatpush.bf16.msra.mxu0 0
      %4093 = vmatpush.bf16.msra.mxu0 0
      %4094 = vmatpush.bf16.msra.mxu0 0
      %4095 = vmatpush.bf16.msra.mxu0 0
      %4096 = vmatpush.bf16.msra.mxu0 0
      %4097 = vmatpush.bf16.msra.mxu0 0
      %4098 = vmatpush.bf16.msra.mxu0 %v2753
      %4099 = vmatmul.bf16.gmra.mxu0 %v3973
      %v4100 = vpop.f32.mrf.mxu0
      %v4101 = vadd.f32 %v4072, %v4100
      %v4102 = vpop.f32.mrf.mxu0
      %v4103 = vadd.f32 %v4074, %v4102
      %4104 = vmatmul.bf16.gmra.mxu0 %v3976
      %v4105 = vpop.f32.mrf.mxu0
      %v4106 = vadd.f32 %v4077, %v4105
      %v4107 = vpop.f32.mrf.mxu0
      %v4108 = vadd.f32 %v4079, %v4107
      %4109 = vmatmul.bf16.gmra.mxu0 %v3979
      %v4110 = vpop.f32.mrf.mxu0
      %v4111 = vadd.f32 %v4082, %v4110
      %v4112 = vpop.f32.mrf.mxu0
      %v4113 = vadd.f32 %v4084, %v4112
      %4114 = vmatmul.bf16.gmra.mxu0 %v3982
      %v4115 = vpop.f32.mrf.mxu0
      %v4116 = vadd.f32 %v4087, %v4115
      %v4117 = vpop.f32.mrf.mxu0
      %v4118 = vadd.f32 %v4089, %v4117
      %4119 = vdwg.mxu0
      %4120 = vmatpush.bf16.msra.mxu0 0
      %4121 = vmatpush.bf16.msra.mxu0 0
      %4122 = vmatpush.bf16.msra.mxu0 0
      %4123 = vmatpush.bf16.msra.mxu0 0
      %4124 = vmatpush.bf16.msra.mxu0 0
      %4125 = vmatpush.bf16.msra.mxu0 0
      %4126 = vmatpush.bf16.msra.mxu0 0
      %4127 = vmatpush.bf16.msra.mxu0 %v2845
      %4128 = vmatmul.bf16.gmra.mxu0 %v4014
      %v4129 = vpop.f32.mrf.mxu0
      %v4130 = vadd.f32 0.0, %v4129
      %v4131 = vpop.f32.mrf.mxu0
      %v4132 = vadd.f32 0.0, %v4131
      %4133 = vmatmul.bf16.gmra.mxu0 %v4017
      %v4134 = vpop.f32.mrf.mxu0
      %v4135 = vadd.f32 0.0, %v4134
      %v4136 = vpop.f32.mrf.mxu0
      %v4137 = vadd.f32 0.0, %v4136
      %4138 = vmatmul.bf16.gmra.mxu0 %v4020
      %v4139 = vpop.f32.mrf.mxu0
      %v4140 = vadd.f32 0.0, %v4139
      %v4141 = vpop.f32.mrf.mxu0
      %v4142 = vadd.f32 0.0, %v4141
      %4143 = vmatmul.bf16.gmra.mxu0 %v4023
      %v4144 = vpop.f32.mrf.mxu0
      %v4145 = vadd.f32 0.0, %v4144
      %v4146 = vpop.f32.mrf.mxu0
      %v4147 = vadd.f32 0.0, %v4146
      %4148 = vdwg.mxu0
      %v4149 = vadd.f32 %v4101, %v4130
      %v4150 = vadd.f32 %v4103, %v4132
      %v4151 = vadd.f32 %v4106, %v4135
      %v4152 = vadd.f32 %v4108, %v4137
      %v4153 = vadd.f32 %v4111, %v4140
      %v4154 = vadd.f32 %v4113, %v4142
      %v4155 = vadd.f32 %v4116, %v4145
      %v4156 = vadd.f32 %v4118, %v4147
      %4157 = vmatpush.bf16.msra.mxu0 0
      %4158 = vmatpush.bf16.msra.mxu0 0
      %4159 = vmatpush.bf16.msra.mxu0 0
      %4160 = vmatpush.bf16.msra.mxu0 0
      %4161 = vmatpush.bf16.msra.mxu0 0
      %4162 = vmatpush.bf16.msra.mxu0 0
      %4163 = vmatpush.bf16.msra.mxu0 0
      %4164 = vmatpush.bf16.msra.mxu0 %v2969
      %4165 = vmatmul.bf16.gmra.mxu0 %v3932
      %v4166 = vpop.f32.mrf.mxu0
      %v4167 = vadd.f32 0.0, %v4166
      %v4168 = vpop.f32.mrf.mxu0
      %v4169 = vadd.f32 0.0, %v4168
      %4170 = vmatmul.bf16.gmra.mxu0 %v3935
      %v4171 = vpop.f32.mrf.mxu0
      %v4172 = vadd.f32 0.0, %v4171
      %v4173 = vpop.f32.mrf.mxu0
      %v4174 = vadd.f32 0.0, %v4173
      %4175 = vmatmul.bf16.gmra.mxu0 %v3938
      %v4176 = vpop.f32.mrf.mxu0
      %v4177 = vadd.f32 0.0, %v4176
      %v4178 = vpop.f32.mrf.mxu0
      %v4179 = vadd.f32 0.0, %v4178
      %4180 = vmatmul.bf16.gmra.mxu0 %v3941
      %v4181 = vpop.f32.mrf.mxu0
      %v4182 = vadd.f32 0.0, %v4181
      %v4183 = vpop.f32.mrf.mxu0
      %v4184 = vadd.f32 0.0, %v4183
      %4185 = vdwg.mxu0
      %4186 = vmatpush.bf16.msra.mxu0 0
      %4187 = vmatpush.bf16.msra.mxu0 0
      %4188 = vmatpush.bf16.msra.mxu0 0
      %4189 = vmatpush.bf16.msra.mxu0 0
      %4190 = vmatpush.bf16.msra.mxu0 0
      %4191 = vmatpush.bf16.msra.mxu0 0
      %4192 = vmatpush.bf16.msra.mxu0 0
      %4193 = vmatpush.bf16.msra.mxu0 %v3061
      %4194 = vmatmul.bf16.gmra.mxu0 %v3973
      %v4195 = vpop.f32.mrf.mxu0
      %v4196 = vadd.f32 %v4167, %v4195
      %v4197 = vpop.f32.mrf.mxu0
      %v4198 = vadd.f32 %v4169, %v4197
      %4199 = vmatmul.bf16.gmra.mxu0 %v3976
      %v4200 = vpop.f32.mrf.mxu0
      %v4201 = vadd.f32 %v4172, %v4200
      %v4202 = vpop.f32.mrf.mxu0
      %v4203 = vadd.f32 %v4174, %v4202
      %4204 = vmatmul.bf16.gmra.mxu0 %v3979
      %v4205 = vpop.f32.mrf.mxu0
      %v4206 = vadd.f32 %v4177, %v4205
      %v4207 = vpop.f32.mrf.mxu0
      %v4208 = vadd.f32 %v4179, %v4207
      %4209 = vmatmul.bf16.gmra.mxu0 %v3982
      %v4210 = vpop.f32.mrf.mxu0
      %v4211 = vadd.f32 %v4182, %v4210
      %v4212 = vpop.f32.mrf.mxu0
      %v4213 = vadd.f32 %v4184, %v4212
      %4214 = vdwg.mxu0
      %4215 = vmatpush.bf16.msra.mxu0 0
      %4216 = vmatpush.bf16.msra.mxu0 0
      %4217 = vmatpush.bf16.msra.mxu0 0
      %4218 = vmatpush.bf16.msra.mxu0 0
      %4219 = vmatpush.bf16.msra.mxu0 0
      %4220 = vmatpush.bf16.msra.mxu0 0
      %4221 = vmatpush.bf16.msra.mxu0 0
      %4222 = vmatpush.bf16.msra.mxu0 %v3153
      %4223 = vmatmul.bf16.gmra.mxu0 %v4014
      %v4224 = vpop.f32.mrf.mxu0
      %v4225 = vadd.f32 0.0, %v4224
      %v4226 = vpop.f32.mrf.mxu0
      %v4227 = vadd.f32 0.0, %v4226
      %4228 = vmatmul.bf16.gmra.mxu0 %v4017
      %v4229 = vpop.f32.mrf.mxu0
      %v4230 = vadd.f32 0.0, %v4229
      %v4231 = vpop.f32.mrf.mxu0
      %v4232 = vadd.f32 0.0, %v4231
      %4233 = vmatmul.bf16.gmra.mxu0 %v4020
      %v4234 = vpop.f32.mrf.mxu0
      %v4235 = vadd.f32 0.0, %v4234
      %v4236 = vpop.f32.mrf.mxu0
      %v4237 = vadd.f32 0.0, %v4236
      %4238 = vmatmul.bf16.gmra.mxu0 %v4023
      %v4239 = vpop.f32.mrf.mxu0
      %v4240 = vadd.f32 0.0, %v4239
      %v4241 = vpop.f32.mrf.mxu0
      %v4242 = vadd.f32 0.0, %v4241
      %4243 = vdwg.mxu0
      %v4244 = vadd.f32 %v4196, %v4225
      %v4245 = vadd.f32 %v4198, %v4227
      %v4246 = vadd.f32 %v4201, %v4230
      %v4247 = vadd.f32 %v4203, %v4232
      %v4248 = vadd.f32 %v4206, %v4235
      %v4249 = vadd.f32 %v4208, %v4237
      %v4250 = vadd.f32 %v4211, %v4240
      %v4251 = vadd.f32 %v4213, %v4242
      %vm4252 = vcmp.lt.s32.totalorder %v1356, 8
      %vm4253 = vcmp.lt.s32.totalorder %v1357, 8
      %vm4254 = vcmp.lt.s32.totalorder %v1358, 8
      %vm4255 = vcmp.lt.s32.totalorder %v1359, 8
      %vm4256 = vcmp.lt.s32.totalorder %v1360, 8
      %vm4257 = vcmp.lt.s32.totalorder %v1361, 8
      %vm4258 = vcmp.lt.s32.totalorder %v1362, 8
      %vm4259 = vcmp.lt.s32.totalorder %v1363, 8
      %v4260 = vsel %vm4252, 1, 0
      %v4261 = vsel %vm4253, 1, 0
      %v4262 = vsel %vm4254, 1, 0
      %v4263 = vsel %vm4255, 1, 0
      %v4264 = vsel %vm4256, 1, 0
      %v4265 = vsel %vm4257, 1, 0
      %v4266 = vsel %vm4258, 1, 0
      %v4267 = vsel %vm4259, 1, 0
      %vm4268 = vcmp.eq.s32.totalorder %v4260, 1
      %vm4269 = vcmp.eq.s32.totalorder %v4261, 1
      %vm4270 = vcmp.eq.s32.totalorder %v4262, 1
      %vm4271 = vcmp.eq.s32.totalorder %v4263, 1
      %vm4272 = vcmp.eq.s32.totalorder %v4264, 1
      %vm4273 = vcmp.eq.s32.totalorder %v4265, 1
      %vm4274 = vcmp.eq.s32.totalorder %v4266, 1
      %vm4275 = vcmp.eq.s32.totalorder %v4267, 1
      %v4276 = vsel %vm4268, 0.0, %v4061
      %v4277 = vsel %vm4269, 0.0, %v4054
      %v4278 = vsel %vm4270, 0.0, %v4055
      %v4279 = vsel %vm4271, 0.0, %v4056
      %v4280 = vsel %vm4272, 0.0, %v4057
      %v4281 = vsel %vm4273, 0.0, %v4058
      %v4282 = vsel %vm4274, 0.0, %v4059
      %v4283 = vsel %vm4275, 0.0, %v4060
      %vm4284 = vcmp.ge.s32.totalorder %v1356, 56
      %vm4285 = vcmp.ge.s32.totalorder %v1357, 56
      %vm4286 = vcmp.ge.s32.totalorder %v1358, 56
      %vm4287 = vcmp.ge.s32.totalorder %v1359, 56
      %vm4288 = vcmp.ge.s32.totalorder %v1360, 56
      %vm4289 = vcmp.ge.s32.totalorder %v1361, 56
      %vm4290 = vcmp.ge.s32.totalorder %v1362, 56
      %vm4291 = vcmp.ge.s32.totalorder %v1363, 56
      %v4292 = vsel %vm4284, 1, 0
      %v4293 = vsel %vm4285, 1, 0
      %v4294 = vsel %vm4286, 1, 0
      %v4295 = vsel %vm4287, 1, 0
      %v4296 = vsel %vm4288, 1, 0
      %v4297 = vsel %vm4289, 1, 0
      %v4298 = vsel %vm4290, 1, 0
      %v4299 = vsel %vm4291, 1, 0
      %vm4300 = vcmp.eq.s32.totalorder %v4292, 1
      %vm4301 = vcmp.eq.s32.totalorder %v4293, 1
      %vm4302 = vcmp.eq.s32.totalorder %v4294, 1
      %vm4303 = vcmp.eq.s32.totalorder %v4295, 1
      %vm4304 = vcmp.eq.s32.totalorder %v4296, 1
      %vm4305 = vcmp.eq.s32.totalorder %v4297, 1
      %vm4306 = vcmp.eq.s32.totalorder %v4298, 1
      %vm4307 = vcmp.eq.s32.totalorder %v4299, 1
      %v4308 = vsel %vm4300, 0.0, %v4245
      %v4309 = vsel %vm4301, 0.0, %v4246
      %v4310 = vsel %vm4302, 0.0, %v4247
      %v4311 = vsel %vm4303, 0.0, %v4248
      %v4312 = vsel %vm4304, 0.0, %v4249
      %v4313 = vsel %vm4305, 0.0, %v4250
      %v4314 = vsel %vm4306, 0.0, %v4251
      %v4315 = vsel %vm4307, 0.0, %v4244
      %v4316 = vadd.f32 %v4276, %v4149
      %v4317 = vadd.f32 %v4277, %v4150
      %v4318 = vadd.f32 %v4278, %v4151
      %v4319 = vadd.f32 %v4279, %v4152
      %v4320 = vadd.f32 %v4280, %v4153
      %v4321 = vadd.f32 %v4281, %v4154
      %v4322 = vadd.f32 %v4282, %v4155
      %v4323 = vadd.f32 %v4283, %v4156
      %v4324 = vadd.f32 %v4316, %v4308
      %v4325 = vadd.f32 %v4317, %v4309
      %v4326 = vadd.f32 %v4318, %v4310
      %v4327 = vadd.f32 %v4319, %v4311
      %v4328 = vadd.f32 %v4320, %v4312
      %v4329 = vadd.f32 %v4321, %v4313
      %v4330 = vadd.f32 %v4322, %v4314
      %v4331 = vadd.f32 %v4323, %v4315
      %v4332 = vadd.f32 %v4324, %v3597
      %v4333 = vadd.f32 %v4325, %v3597
      %v4334 = vadd.f32 %v4326, %v3597
      %v4335 = vadd.f32 %v4327, %v3597
      %v4336 = vadd.f32 %v4328, %v3597
      %v4337 = vadd.f32 %v4329, %v3597
      %v4338 = vadd.f32 %v4330, %v3597
      %v4339 = vadd.f32 %v4331, %v3597
      %vm4340 = vcmp.gt.f32.partialorder %v4332, 0.0
      %vm4341 = vcmp.gt.f32.partialorder %v4333, 0.0
      %vm4342 = vcmp.gt.f32.partialorder %v4334, 0.0
      %vm4343 = vcmp.gt.f32.partialorder %v4335, 0.0
      %vm4344 = vcmp.gt.f32.partialorder %v4336, 0.0
      %vm4345 = vcmp.gt.f32.partialorder %v4337, 0.0
      %vm4346 = vcmp.gt.f32.partialorder %v4338, 0.0
      %vm4347 = vcmp.gt.f32.partialorder %v4339, 0.0
      %v4348 = vmul.f32 %v4332, 0.01
      %v4349 = vmul.f32 %v4333, 0.01
      %v4350 = vmul.f32 %v4334, 0.01
      %v4351 = vmul.f32 %v4335, 0.01
      %v4352 = vmul.f32 %v4336, 0.01
      %v4353 = vmul.f32 %v4337, 0.01
      %v4354 = vmul.f32 %v4338, 0.01
      %v4355 = vmul.f32 %v4339, 0.01
      %v4356 = vsel %vm4340, %v4332, %v4348
      %v4357 = vsel %vm4341, %v4333, %v4349
      %v4358 = vsel %vm4342, %v4334, %v4350
      %v4359 = vsel %vm4343, %v4335, %v4351
      %v4360 = vsel %vm4344, %v4336, %v4352
      %v4361 = vsel %vm4345, %v4337, %v4353
      %v4362 = vsel %vm4346, %v4338, %v4354
      %v4363 = vsel %vm4347, %v4339, %v4355
      %v4364 = vmul.f32 %v4356, 0.75
      %v4365 = vmul.f32 %v4357, 0.75
      %v4366 = vmul.f32 %v4358, 0.75
      %v4367 = vmul.f32 %v4359, 0.75
      %v4368 = vmul.f32 %v4360, 0.75
      %v4369 = vmul.f32 %v4361, 0.75
      %v4370 = vmul.f32 %v4362, 0.75
      %v4371 = vmul.f32 %v4363, 0.75
      %v4372 = vmul.f32 %v4356, 0.25
      %v4373 = vmul.f32 %v4357, 0.25
      %v4374 = vmul.f32 %v4358, 0.25
      %v4375 = vmul.f32 %v4359, 0.25
      %v4376 = vmul.f32 %v4360, 0.25
      %v4377 = vmul.f32 %v4361, 0.25
      %v4378 = vmul.f32 %v4362, 0.25
      %v4379 = vadd.f32 %v4364, %v4372
      %v4380 = vadd.f32 %v4365, %v4372
      %v4381 = vadd.f32 %v4366, %v4373
      %v4382 = vadd.f32 %v4367, %v4374
      %v4383 = vadd.f32 %v4368, %v4375
      %v4384 = vadd.f32 %v4369, %v4376
      %v4385 = vadd.f32 %v4370, %v4377
      %v4386 = vadd.f32 %v4371, %v4378
      %v4387 = vmul.f32 %v4363, 0.25
      %v4388 = vadd.f32 %v4364, %v4373
      %v4389 = vadd.f32 %v4365, %v4374
      %v4390 = vadd.f32 %v4366, %v4375
      %v4391 = vadd.f32 %v4367, %v4376
      %v4392 = vadd.f32 %v4368, %v4377
      %v4393 = vadd.f32 %v4369, %v4378
      %v4394 = vadd.f32 %v4370, %v4387
      %v4395 = vadd.f32 %v4371, %v4387
      %vm4396 = vcmp.eq.s32.totalorder %v1356, 0
      %v4397 = vrot.slane %v4379, 7
      %v4398 = vrot.slane %v4388, 7
      %v4399 = vrot.slane %v4380, 7
      %v4400 = vrot.slane %v4389, 7
      %v4401 = vrot.slane %v4381, 7
      %v4402 = vrot.slane %v4390, 7
      %v4403 = vrot.slane %v4382, 7
      %v4404 = vrot.slane %v4391, 7
      %v4405 = vrot.slane %v4383, 7
      %v4406 = vrot.slane %v4392, 7
      %v4407 = vrot.slane %v4384, 7
      %v4408 = vrot.slane %v4393, 7
      %v4409 = vrot.slane %v4385, 7
      %v4410 = vrot.slane %v4394, 7
      %v4411 = vrot.slane %v4386, 7
      %v4412 = vrot.slane %v4395, 7
      %v4413 = vsel %vm4396, 1, 0
      %vm4414 = vcmp.eq.s32.totalorder %v4413, 1
      %v4415 = vsel %vm4414, %v4379, %v4397
      %v4416 = vsel %vm4414, %v4388, %v4398
      %v4417 = vsel %vm4414, %v4380, %v4399
      %v4418 = vsel %vm4414, %v4389, %v4400
      %v4419 = vsel %vm4414, %v4381, %v4401
      %v4420 = vsel %vm4414, %v4390, %v4402
      %v4421 = vsel %vm4414, %v4382, %v4403
      %v4422 = vsel %vm4414, %v4391, %v4404
      %v4423 = vsel %vm4414, %v4383, %v4405
      %v4424 = vsel %vm4414, %v4392, %v4406
      %v4425 = vsel %vm4414, %v4384, %v4407
      %v4426 = vsel %vm4414, %v4393, %v4408
      %v4427 = vsel %vm4414, %v4385, %v4409
      %v4428 = vsel %vm4414, %v4394, %v4410
      %v4429 = vsel %vm4414, %v4386, %v4411
      %v4430 = vsel %vm4414, %v4395, %v4412
      %vm4431 = vcmp.eq.s32.totalorder %v1356, 7
      %v4432 = vrot.slane %v4379, 1
      %v4433 = vrot.slane %v4388, 1
      %v4434 = vrot.slane %v4380, 1
      %v4435 = vrot.slane %v4389, 1
      %v4436 = vrot.slane %v4381, 1
      %v4437 = vrot.slane %v4390, 1
      %v4438 = vrot.slane %v4382, 1
      %v4439 = vrot.slane %v4391, 1
      %v4440 = vrot.slane %v4383, 1
      %v4441 = vrot.slane %v4392, 1
      %v4442 = vrot.slane %v4384, 1
      %v4443 = vrot.slane %v4393, 1
      %v4444 = vrot.slane %v4385, 1
      %v4445 = vrot.slane %v4394, 1
      %v4446 = vrot.slane %v4386, 1
      %v4447 = vrot.slane %v4395, 1
      %v4448 = vsel %vm4431, 1, 0
      %vm4449 = vcmp.eq.s32.totalorder %v4448, 1
      %v4450 = vsel %vm4449, %v4379, %v4432
      %v4451 = vsel %vm4449, %v4388, %v4433
      %v4452 = vsel %vm4449, %v4380, %v4434
      %v4453 = vsel %vm4449, %v4389, %v4435
      %v4454 = vsel %vm4449, %v4381, %v4436
      %v4455 = vsel %vm4449, %v4390, %v4437
      %v4456 = vsel %vm4449, %v4382, %v4438
      %v4457 = vsel %vm4449, %v4391, %v4439
      %v4458 = vsel %vm4449, %v4383, %v4440
      %v4459 = vsel %vm4449, %v4392, %v4441
      %v4460 = vsel %vm4449, %v4384, %v4442
      %v4461 = vsel %vm4449, %v4393, %v4443
      %v4462 = vsel %vm4449, %v4385, %v4444
      %v4463 = vsel %vm4449, %v4394, %v4445
      %v4464 = vsel %vm4449, %v4386, %v4446
      %v4465 = vsel %vm4449, %v4395, %v4447
      %v4466 = vmul.f32 %v4379, 0.75
      %v4467 = vmul.f32 %v4388, 0.75
      %v4468 = vmul.f32 %v4380, 0.75
      %v4469 = vmul.f32 %v4389, 0.75
      %v4470 = vmul.f32 %v4381, 0.75
      %v4471 = vmul.f32 %v4390, 0.75
      %v4472 = vmul.f32 %v4382, 0.75
      %v4473 = vmul.f32 %v4391, 0.75
      %v4474 = vmul.f32 %v4383, 0.75
      %v4475 = vmul.f32 %v4392, 0.75
      %v4476 = vmul.f32 %v4384, 0.75
      %v4477 = vmul.f32 %v4393, 0.75
      %v4478 = vmul.f32 %v4385, 0.75
      %v4479 = vmul.f32 %v4394, 0.75
      %v4480 = vmul.f32 %v4386, 0.75
      %v4481 = vmul.f32 %v4395, 0.75
      %v4482 = vmul.f32 %v4415, 0.25
      %v4483 = vmul.f32 %v4416, 0.25
      %v4484 = vmul.f32 %v4417, 0.25
      %v4485 = vmul.f32 %v4418, 0.25
      %v4486 = vmul.f32 %v4419, 0.25
      %v4487 = vmul.f32 %v4420, 0.25
      %v4488 = vmul.f32 %v4421, 0.25
      %v4489 = vmul.f32 %v4422, 0.25
      %v4490 = vmul.f32 %v4423, 0.25
      %v4491 = vmul.f32 %v4424, 0.25
      %v4492 = vmul.f32 %v4425, 0.25
      %v4493 = vmul.f32 %v4426, 0.25
      %v4494 = vmul.f32 %v4427, 0.25
      %v4495 = vmul.f32 %v4428, 0.25
      %v4496 = vmul.f32 %v4429, 0.25
      %v4497 = vmul.f32 %v4430, 0.25
      %v4498 = vadd.f32 %v4466, %v4482
      %v4499 = vadd.f32 %v4467, %v4483
      %v4500 = vadd.f32 %v4468, %v4484
      %v4501 = vadd.f32 %v4469, %v4485
      %v4502 = vadd.f32 %v4470, %v4486
      %v4503 = vadd.f32 %v4471, %v4487
      %v4504 = vadd.f32 %v4472, %v4488
      %v4505 = vadd.f32 %v4473, %v4489
      %v4506 = vadd.f32 %v4474, %v4490
      %v4507 = vadd.f32 %v4475, %v4491
      %v4508 = vadd.f32 %v4476, %v4492
      %v4509 = vadd.f32 %v4477, %v4493
      %v4510 = vadd.f32 %v4478, %v4494
      %v4511 = vadd.f32 %v4479, %v4495
      %v4512 = vadd.f32 %v4480, %v4496
      %v4513 = vadd.f32 %v4481, %v4497
      %v4514 = vmul.f32 %v4450, 0.25
      %v4515 = vmul.f32 %v4451, 0.25
      %v4516 = vmul.f32 %v4452, 0.25
      %v4517 = vmul.f32 %v4453, 0.25
      %v4518 = vmul.f32 %v4454, 0.25
      %v4519 = vmul.f32 %v4455, 0.25
      %v4520 = vmul.f32 %v4456, 0.25
      %v4521 = vmul.f32 %v4457, 0.25
      %v4522 = vmul.f32 %v4458, 0.25
      %v4523 = vmul.f32 %v4459, 0.25
      %v4524 = vmul.f32 %v4460, 0.25
      %v4525 = vmul.f32 %v4461, 0.25
      %v4526 = vmul.f32 %v4462, 0.25
      %v4527 = vmul.f32 %v4463, 0.25
      %v4528 = vmul.f32 %v4464, 0.25
      %v4529 = vmul.f32 %v4465, 0.25
      %v4530 = vadd.f32 %v4466, %v4514
      %v4531 = vadd.f32 %v4467, %v4515
      %v4532 = vadd.f32 %v4468, %v4516
      %v4533 = vadd.f32 %v4469, %v4517
      %v4534 = vadd.f32 %v4470, %v4518
      %v4535 = vadd.f32 %v4471, %v4519
      %v4536 = vadd.f32 %v4472, %v4520
      %v4537 = vadd.f32 %v4473, %v4521
      %v4538 = vadd.f32 %v4474, %v4522
      %v4539 = vadd.f32 %v4475, %v4523
      %v4540 = vadd.f32 %v4476, %v4524
      %v4541 = vadd.f32 %v4477, %v4525
      %v4542 = vadd.f32 %v4478, %v4526
      %v4543 = vadd.f32 %v4479, %v4527
      %v4544 = vadd.f32 %v4480, %v4528
      %v4545 = vadd.f32 %v4481, %v4529
      %v4562 = vrot.slane %v4498, 1
      %v4563 = vrot.slane %v4498, 2
      %v4564 = vrot.slane %v4498, 3
      %v4565 = vrot.slane %v4498, 4
      %v4566 = vrot.slane %v4498, 5
      %v4567 = vrot.slane %v4498, 6
      %v4568 = vrot.slane %v4498, 7
      %v4569 = vrot.slane %v4499, 1
      %v4570 = vrot.slane %v4499, 2
      %v4571 = vrot.slane %v4499, 3
      %v4572 = vrot.slane %v4499, 4
      %v4573 = vrot.slane %v4499, 5
      %v4574 = vrot.slane %v4499, 6
      %v4575 = vrot.slane %v4499, 7
      %v4576 = vrot.slane %v4500, 1
      %v4577 = vrot.slane %v4500, 2
      %v4578 = vrot.slane %v4500, 3
      %v4579 = vrot.slane %v4500, 4
      %v4580 = vrot.slane %v4500, 5
      %v4581 = vrot.slane %v4500, 6
      %v4582 = vrot.slane %v4500, 7
      %v4583 = vrot.slane %v4501, 1
      %v4584 = vrot.slane %v4501, 2
      %v4585 = vrot.slane %v4501, 3
      %v4586 = vrot.slane %v4501, 4
      %v4587 = vrot.slane %v4501, 5
      %v4588 = vrot.slane %v4501, 6
      %v4589 = vrot.slane %v4501, 7
      %v4590 = vrot.slane %v4502, 1
      %v4591 = vrot.slane %v4502, 2
      %v4592 = vrot.slane %v4502, 3
      %v4593 = vrot.slane %v4502, 4
      %v4594 = vrot.slane %v4502, 5
      %v4595 = vrot.slane %v4502, 6
      %v4596 = vrot.slane %v4502, 7
      %v4597 = vrot.slane %v4503, 1
      %v4598 = vrot.slane %v4503, 2
      %v4599 = vrot.slane %v4503, 3
      %v4600 = vrot.slane %v4503, 4
      %v4601 = vrot.slane %v4503, 5
      %v4602 = vrot.slane %v4503, 6
      %v4603 = vrot.slane %v4503, 7
      %v4604 = vrot.slane %v4504, 1
      %v4605 = vrot.slane %v4504, 2
      %v4606 = vrot.slane %v4504, 3
      %v4607 = vrot.slane %v4504, 4
      %v4608 = vrot.slane %v4504, 5
      %v4609 = vrot.slane %v4504, 6
      %v4610 = vrot.slane %v4504, 7
      %v4611 = vrot.slane %v4505, 1
      %v4612 = vrot.slane %v4505, 2
      %v4613 = vrot.slane %v4505, 3
      %v4614 = vrot.slane %v4505, 4
      %v4615 = vrot.slane %v4505, 5
      %v4616 = vrot.slane %v4505, 6
      %v4617 = vrot.slane %v4505, 7
      %v4618 = vrot.slane %v4506, 1
      %v4619 = vrot.slane %v4506, 2
      %v4620 = vrot.slane %v4506, 3
      %v4621 = vrot.slane %v4506, 4
      %v4622 = vrot.slane %v4506, 5
      %v4623 = vrot.slane %v4506, 6
      %v4624 = vrot.slane %v4506, 7
      %v4625 = vrot.slane %v4507, 1
      %v4626 = vrot.slane %v4507, 2
      %v4627 = vrot.slane %v4507, 3
      %v4628 = vrot.slane %v4507, 4
      %v4629 = vrot.slane %v4507, 5
      %v4630 = vrot.slane %v4507, 6
      %v4631 = vrot.slane %v4507, 7
      %v4632 = vrot.slane %v4508, 1
      %v4633 = vrot.slane %v4508, 2
      %v4634 = vrot.slane %v4508, 3
      %v4635 = vrot.slane %v4508, 4
      %v4636 = vrot.slane %v4508, 5
      %v4637 = vrot.slane %v4508, 6
      %v4638 = vrot.slane %v4508, 7
      %v4639 = vrot.slane %v4509, 1
      %v4640 = vrot.slane %v4509, 2
      %v4641 = vrot.slane %v4509, 3
      %v4642 = vrot.slane %v4509, 4
      %v4643 = vrot.slane %v4509, 5
      %v4644 = vrot.slane %v4509, 6
      %v4645 = vrot.slane %v4509, 7
      %v4646 = vrot.slane %v4510, 1
      %v4647 = vrot.slane %v4510, 2
      %v4648 = vrot.slane %v4510, 3
      %v4649 = vrot.slane %v4510, 4
      %v4650 = vrot.slane %v4510, 5
      %v4651 = vrot.slane %v4510, 6
      %v4652 = vrot.slane %v4510, 7
      %v4653 = vrot.slane %v4511, 1
      %v4654 = vrot.slane %v4511, 2
      %v4655 = vrot.slane %v4511, 3
      %v4656 = vrot.slane %v4511, 4
      %v4657 = vrot.slane %v4511, 5
      %v4658 = vrot.slane %v4511, 6
      %v4659 = vrot.slane %v4511, 7
      %v4660 = vrot.slane %v4512, 1
      %v4661 = vrot.slane %v4512, 2
      %v4662 = vrot.slane %v4512, 3
      %v4663 = vrot.slane %v4512, 4
      %v4664 = vrot.slane %v4512, 5
      %v4665 = vrot.slane %v4512, 6
      %v4666 = vrot.slane %v4512, 7
      %v4667 = vrot.slane %v4513, 1
      %v4668 = vrot.slane %v4513, 2
      %v4669 = vrot.slane %v4513, 3
      %v4670 = vrot.slane %v4513, 4
      %v4671 = vrot.slane %v4513, 5
      %v4672 = vrot.slane %v4513, 6
      %v4673 = vrot.slane %v4513, 7
      %v4802 = vrot.slane %v4530, 1
      %v4803 = vrot.slane %v4530, 2
      %v4804 = vrot.slane %v4530, 3
      %v4805 = vrot.slane %v4530, 4
      %v4806 = vrot.slane %v4530, 5
      %v4807 = vrot.slane %v4530, 6
      %v4808 = vrot.slane %v4530, 7
      %v4809 = vrot.slane %v4531, 1
      %v4810 = vrot.slane %v4531, 2
      %v4811 = vrot.slane %v4531, 3
      %v4812 = vrot.slane %v4531, 4
      %v4813 = vrot.slane %v4531, 5
      %v4814 = vrot.slane %v4531, 6
      %v4815 = vrot.slane %v4531, 7
      %v4816 = vrot.slane %v4532, 1
      %v4817 = vrot.slane %v4532, 2
      %v4818 = vrot.slane %v4532, 3
      %v4819 = vrot.slane %v4532, 4
      %v4820 = vrot.slane %v4532, 5
      %v4821 = vrot.slane %v4532, 6
      %v4822 = vrot.slane %v4532, 7
      %v4823 = vrot.slane %v4533, 1
      %v4824 = vrot.slane %v4533, 2
      %v4825 = vrot.slane %v4533, 3
      %v4826 = vrot.slane %v4533, 4
      %v4827 = vrot.slane %v4533, 5
      %v4828 = vrot.slane %v4533, 6
      %v4829 = vrot.slane %v4533, 7
      %v4830 = vrot.slane %v4534, 1
      %v4831 = vrot.slane %v4534, 2
      %v4832 = vrot.slane %v4534, 3
      %v4833 = vrot.slane %v4534, 4
      %v4834 = vrot.slane %v4534, 5
      %v4835 = vrot.slane %v4534, 6
      %v4836 = vrot.slane %v4534, 7
      %v4837 = vrot.slane %v4535, 1
      %v4838 = vrot.slane %v4535, 2
      %v4839 = vrot.slane %v4535, 3
      %v4840 = vrot.slane %v4535, 4
      %v4841 = vrot.slane %v4535, 5
      %v4842 = vrot.slane %v4535, 6
      %v4843 = vrot.slane %v4535, 7
      %v4844 = vrot.slane %v4536, 1
      %v4845 = vrot.slane %v4536, 2
      %v4846 = vrot.slane %v4536, 3
      %v4847 = vrot.slane %v4536, 4
      %v4848 = vrot.slane %v4536, 5
      %v4849 = vrot.slane %v4536, 6
      %v4850 = vrot.slane %v4536, 7
      %v4851 = vrot.slane %v4537, 1
      %v4852 = vrot.slane %v4537, 2
      %v4853 = vrot.slane %v4537, 3
      %v4854 = vrot.slane %v4537, 4
      %v4855 = vrot.slane %v4537, 5
      %v4856 = vrot.slane %v4537, 6
      %v4857 = vrot.slane %v4537, 7
      %v4858 = vrot.slane %v4538, 1
      %v4859 = vrot.slane %v4538, 2
      %v4860 = vrot.slane %v4538, 3
      %v4861 = vrot.slane %v4538, 4
      %v4862 = vrot.slane %v4538, 5
      %v4863 = vrot.slane %v4538, 6
      %v4864 = vrot.slane %v4538, 7
      %v4865 = vrot.slane %v4539, 1
      %v4866 = vrot.slane %v4539, 2
      %v4867 = vrot.slane %v4539, 3
      %v4868 = vrot.slane %v4539, 4
      %v4869 = vrot.slane %v4539, 5
      %v4870 = vrot.slane %v4539, 6
      %v4871 = vrot.slane %v4539, 7
      %v4872 = vrot.slane %v4540, 1
      %v4873 = vrot.slane %v4540, 2
      %v4874 = vrot.slane %v4540, 3
      %v4875 = vrot.slane %v4540, 4
      %v4876 = vrot.slane %v4540, 5
      %v4877 = vrot.slane %v4540, 6
      %v4878 = vrot.slane %v4540, 7
      %v4879 = vrot.slane %v4541, 1
      %v4880 = vrot.slane %v4541, 2
      %v4881 = vrot.slane %v4541, 3
      %v4882 = vrot.slane %v4541, 4
      %v4883 = vrot.slane %v4541, 5
      %v4884 = vrot.slane %v4541, 6
      %v4885 = vrot.slane %v4541, 7
      %v4886 = vrot.slane %v4542, 1
      %v4887 = vrot.slane %v4542, 2
      %v4888 = vrot.slane %v4542, 3
      %v4889 = vrot.slane %v4542, 4
      %v4890 = vrot.slane %v4542, 5
      %v4891 = vrot.slane %v4542, 6
      %v4892 = vrot.slane %v4542, 7
      %v4893 = vrot.slane %v4543, 1
      %v4894 = vrot.slane %v4543, 2
      %v4895 = vrot.slane %v4543, 3
      %v4896 = vrot.slane %v4543, 4
      %v4897 = vrot.slane %v4543, 5
      %v4898 = vrot.slane %v4543, 6
      %v4899 = vrot.slane %v4543, 7
      %v4900 = vrot.slane %v4544, 1
      %v4901 = vrot.slane %v4544, 2
      %v4902 = vrot.slane %v4544, 3
      %v4903 = vrot.slane %v4544, 4
      %v4904 = vrot.slane %v4544, 5
      %v4905 = vrot.slane %v4544, 6
      %v4906 = vrot.slane %v4544, 7
      %v4907 = vrot.slane %v4545, 1
      %v4908 = vrot.slane %v4545, 2
      %v4909 = vrot.slane %v4545, 3
      %v4910 = vrot.slane %v4545, 4
      %v4911 = vrot.slane %v4545, 5
      %v4912 = vrot.slane %v4545, 6
      %v4913 = vrot.slane %v4545, 7
      %v4914 = vperm.slane %v4530, 0
      %v4915 = vperm.slane %v4802, 0
      %v4916 = vperm.slane %v4803, 0
      %v4917 = vperm.slane %v4804, 0
      %v4918 = vperm.slane %v4805, 0
      %v4919 = vperm.slane %v4806, 0
      %v4920 = vperm.slane %v4807, 0
      %v4921 = vperm.slane %v4808, 0
      %v4922 = vperm.slane %v4531, 0
      %v4923 = vperm.slane %v4809, 0
      %v4924 = vperm.slane %v4810, 0
      %v4925 = vperm.slane %v4811, 0
      %v4926 = vperm.slane %v4812, 0
      %v4927 = vperm.slane %v4813, 0
      %v4928 = vperm.slane %v4814, 0
      %v4929 = vperm.slane %v4815, 0
      %v4930 = vperm.slane %v4532, 0
      %v4931 = vperm.slane %v4816, 0
      %v4932 = vperm.slane %v4817, 0
      %v4933 = vperm.slane %v4818, 0
      %v4934 = vperm.slane %v4819, 0
      %v4935 = vperm.slane %v4820, 0
      %v4936 = vperm.slane %v4821, 0
      %v4937 = vperm.slane %v4822, 0
      %v4938 = vperm.slane %v4533, 0
      %v4939 = vperm.slane %v4823, 0
      %v4940 = vperm.slane %v4824, 0
      %v4941 = vperm.slane %v4825, 0
      %v4942 = vperm.slane %v4826, 0
      %v4943 = vperm.slane %v4827, 0
      %v4944 = vperm.slane %v4828, 0
      %v4945 = vperm.slane %v4829, 0
      %v4946 = vperm.slane %v4534, 0
      %v4947 = vperm.slane %v4830, 0
      %v4948 = vperm.slane %v4831, 0
      %v4949 = vperm.slane %v4832, 0
      %v4950 = vperm.slane %v4833, 0
      %v4951 = vperm.slane %v4834, 0
      %v4952 = vperm.slane %v4835, 0
      %v4953 = vperm.slane %v4836, 0
      %v4954 = vperm.slane %v4535, 0
      %v4955 = vperm.slane %v4837, 0
      %v4956 = vperm.slane %v4838, 0
      %v4957 = vperm.slane %v4839, 0
      %v4958 = vperm.slane %v4840, 0
      %v4959 = vperm.slane %v4841, 0
      %v4960 = vperm.slane %v4842, 0
      %v4961 = vperm.slane %v4843, 0
      %v4962 = vperm.slane %v4536, 0
      %v4963 = vperm.slane %v4844, 0
      %v4964 = vperm.slane %v4845, 0
      %v4965 = vperm.slane %v4846, 0
      %v4966 = vperm.slane %v4847, 0
      %v4967 = vperm.slane %v4848, 0
      %v4968 = vperm.slane %v4849, 0
      %v4969 = vperm.slane %v4850, 0
      %v4970 = vperm.slane %v4537, 0
      %v4971 = vperm.slane %v4851, 0
      %v4972 = vperm.slane %v4852, 0
      %v4973 = vperm.slane %v4853, 0
      %v4974 = vperm.slane %v4854, 0
      %v4975 = vperm.slane %v4855, 0
      %v4976 = vperm.slane %v4856, 0
      %v4977 = vperm.slane %v4857, 0
      %v4978 = vperm.slane %v4538, 0
      %v4979 = vperm.slane %v4858, 0
      %v4980 = vperm.slane %v4859, 0
      %v4981 = vperm.slane %v4860, 0
      %v4982 = vperm.slane %v4861, 0
      %v4983 = vperm.slane %v4862, 0
      %v4984 = vperm.slane %v4863, 0
      %v4985 = vperm.slane %v4864, 0
      %v4986 = vperm.slane %v4539, 0
      %v4987 = vperm.slane %v4865, 0
      %v4988 = vperm.slane %v4866, 0
      %v4989 = vperm.slane %v4867, 0
      %v4990 = vperm.slane %v4868, 0
      %v4991 = vperm.slane %v4869, 0
      %v4992 = vperm.slane %v4870, 0
      %v4993 = vperm.slane %v4871, 0
      %v4994 = vperm.slane %v4540, 0
      %v4995 = vperm.slane %v4872, 0
      %v4996 = vperm.slane %v4873, 0
      %v4997 = vperm.slane %v4874, 0
      %v4998 = vperm.slane %v4875, 0
      %v4999 = vperm.slane %v4876, 0
      %v5000 = vperm.slane %v4877, 0
      %v5001 = vperm.slane %v4878, 0
      %v5002 = vperm.slane %v4541, 0
      %v5003 = vperm.slane %v4879, 0
      %v5004 = vperm.slane %v4880, 0
      %v5005 = vperm.slane %v4881, 0
      %v5006 = vperm.slane %v4882, 0
      %v5007 = vperm.slane %v4883, 0
      %v5008 = vperm.slane %v4884, 0
      %v5009 = vperm.slane %v4885, 0
      %v5010 = vperm.slane %v4542, 0
      %v5011 = vperm.slane %v4886, 0
      %v5012 = vperm.slane %v4887, 0
      %v5013 = vperm.slane %v4888, 0
      %v5014 = vperm.slane %v4889, 0
      %v5015 = vperm.slane %v4890, 0
      %v5016 = vperm.slane %v4891, 0
      %v5017 = vperm.slane %v4892, 0
      %v5018 = vperm.slane %v4543, 0
      %v5019 = vperm.slane %v4893, 0
      %v5020 = vperm.slane %v4894, 0
      %v5021 = vperm.slane %v4895, 0
      %v5022 = vperm.slane %v4896, 0
      %v5023 = vperm.slane %v4897, 0
      %v5024 = vperm.slane %v4898, 0
      %v5025 = vperm.slane %v4899, 0
      %v5026 = vperm.slane %v4544, 0
      %v5027 = vperm.slane %v4900, 0
      %v5028 = vperm.slane %v4901, 0
      %v5029 = vperm.slane %v4902, 0
      %v5030 = vperm.slane %v4903, 0
      %v5031 = vperm.slane %v4904, 0
      %v5032 = vperm.slane %v4905, 0
      %v5033 = vperm.slane %v4906, 0
      %v5034 = vperm.slane %v4545, 0
      %v5035 = vperm.slane %v4907, 0
      %v5036 = vperm.slane %v4908, 0
      %v5037 = vperm.slane %v4909, 0
      %v5038 = vperm.slane %v4910, 0
      %v5039 = vperm.slane %v4911, 0
      %v5040 = vperm.slane %v4912, 0
      %v5041 = vperm.slane %v4913, 0
      %v5170 = vsel %vm2255, %v4498, %v4914
      %v5171 = vsel %vm2255, %v4562, %v4915
      %v5172 = vsel %vm2255, %v4563, %v4916
      %v5173 = vsel %vm2255, %v4564, %v4917
      %v5174 = vsel %vm2255, %v4565, %v4918
      %v5175 = vsel %vm2255, %v4566, %v4919
      %v5176 = vsel %vm2255, %v4567, %v4920
      %v5177 = vsel %vm2255, %v4568, %v4921
      %v5178 = vsel %vm2255, %v4499, %v4922
      %v5179 = vsel %vm2255, %v4569, %v4923
      %v5180 = vsel %vm2255, %v4570, %v4924
      %v5181 = vsel %vm2255, %v4571, %v4925
      %v5182 = vsel %vm2255, %v4572, %v4926
      %v5183 = vsel %vm2255, %v4573, %v4927
      %v5184 = vsel %vm2255, %v4574, %v4928
      %v5185 = vsel %vm2255, %v4575, %v4929
      %v5186 = vsel %vm2255, %v4500, %v4930
      %v5187 = vsel %vm2255, %v4576, %v4931
      %v5188 = vsel %vm2255, %v4577, %v4932
      %v5189 = vsel %vm2255, %v4578, %v4933
      %v5190 = vsel %vm2255, %v4579, %v4934
      %v5191 = vsel %vm2255, %v4580, %v4935
      %v5192 = vsel %vm2255, %v4581, %v4936
      %v5193 = vsel %vm2255, %v4582, %v4937
      %v5194 = vsel %vm2255, %v4501, %v4938
      %v5195 = vsel %vm2255, %v4583, %v4939
      %v5196 = vsel %vm2255, %v4584, %v4940
      %v5197 = vsel %vm2255, %v4585, %v4941
      %v5198 = vsel %vm2255, %v4586, %v4942
      %v5199 = vsel %vm2255, %v4587, %v4943
      %v5200 = vsel %vm2255, %v4588, %v4944
      %v5201 = vsel %vm2255, %v4589, %v4945
      %v5202 = vsel %vm2255, %v4502, %v4946
      %v5203 = vsel %vm2255, %v4590, %v4947
      %v5204 = vsel %vm2255, %v4591, %v4948
      %v5205 = vsel %vm2255, %v4592, %v4949
      %v5206 = vsel %vm2255, %v4593, %v4950
      %v5207 = vsel %vm2255, %v4594, %v4951
      %v5208 = vsel %vm2255, %v4595, %v4952
      %v5209 = vsel %vm2255, %v4596, %v4953
      %v5210 = vsel %vm2255, %v4503, %v4954
      %v5211 = vsel %vm2255, %v4597, %v4955
      %v5212 = vsel %vm2255, %v4598, %v4956
      %v5213 = vsel %vm2255, %v4599, %v4957
      %v5214 = vsel %vm2255, %v4600, %v4958
      %v5215 = vsel %vm2255, %v4601, %v4959
      %v5216 = vsel %vm2255, %v4602, %v4960
      %v5217 = vsel %vm2255, %v4603, %v4961
      %v5218 = vsel %vm2255, %v4504, %v4962
      %v5219 = vsel %vm2255, %v4604, %v4963
      %v5220 = vsel %vm2255, %v4605, %v4964
      %v5221 = vsel %vm2255, %v4606, %v4965
      %v5222 = vsel %vm2255, %v4607, %v4966
      %v5223 = vsel %vm2255, %v4608, %v4967
      %v5224 = vsel %vm2255, %v4609, %v4968
      %v5225 = vsel %vm2255, %v4610, %v4969
      %v5226 = vsel %vm2255, %v4505, %v4970
      %v5227 = vsel %vm2255, %v4611, %v4971
      %v5228 = vsel %vm2255, %v4612, %v4972
      %v5229 = vsel %vm2255, %v4613, %v4973
      %v5230 = vsel %vm2255, %v4614, %v4974
      %v5231 = vsel %vm2255, %v4615, %v4975
      %v5232 = vsel %vm2255, %v4616, %v4976
      %v5233 = vsel %vm2255, %v4617, %v4977
      %v5234 = vsel %vm2255, %v4506, %v4978
      %v5235 = vsel %vm2255, %v4618, %v4979
      %v5236 = vsel %vm2255, %v4619, %v4980
      %v5237 = vsel %vm2255, %v4620, %v4981
      %v5238 = vsel %vm2255, %v4621, %v4982
      %v5239 = vsel %vm2255, %v4622, %v4983
      %v5240 = vsel %vm2255, %v4623, %v4984
      %v5241 = vsel %vm2255, %v4624, %v4985
      %v5242 = vsel %vm2255, %v4507, %v4986
      %v5243 = vsel %vm2255, %v4625, %v4987
      %v5244 = vsel %vm2255, %v4626, %v4988
      %v5245 = vsel %vm2255, %v4627, %v4989
      %v5246 = vsel %vm2255, %v4628, %v4990
      %v5247 = vsel %vm2255, %v4629, %v4991
      %v5248 = vsel %vm2255, %v4630, %v4992
      %v5249 = vsel %vm2255, %v4631, %v4993
      %v5250 = vsel %vm2255, %v4508, %v4994
      %v5251 = vsel %vm2255, %v4632, %v4995
      %v5252 = vsel %vm2255, %v4633, %v4996
      %v5253 = vsel %vm2255, %v4634, %v4997
      %v5254 = vsel %vm2255, %v4635, %v4998
      %v5255 = vsel %vm2255, %v4636, %v4999
      %v5256 = vsel %vm2255, %v4637, %v5000
      %v5257 = vsel %vm2255, %v4638, %v5001
      %v5258 = vsel %vm2255, %v4509, %v5002
      %v5259 = vsel %vm2255, %v4639, %v5003
      %v5260 = vsel %vm2255, %v4640, %v5004
      %v5261 = vsel %vm2255, %v4641, %v5005
      %v5262 = vsel %vm2255, %v4642, %v5006
      %v5263 = vsel %vm2255, %v4643, %v5007
      %v5264 = vsel %vm2255, %v4644, %v5008
      %v5265 = vsel %vm2255, %v4645, %v5009
      %v5266 = vsel %vm2255, %v4510, %v5010
      %v5267 = vsel %vm2255, %v4646, %v5011
      %v5268 = vsel %vm2255, %v4647, %v5012
      %v5269 = vsel %vm2255, %v4648, %v5013
      %v5270 = vsel %vm2255, %v4649, %v5014
      %v5271 = vsel %vm2255, %v4650, %v5015
      %v5272 = vsel %vm2255, %v4651, %v5016
      %v5273 = vsel %vm2255, %v4652, %v5017
      %v5274 = vsel %vm2255, %v4511, %v5018
      %v5275 = vsel %vm2255, %v4653, %v5019
      %v5276 = vsel %vm2255, %v4654, %v5020
      %v5277 = vsel %vm2255, %v4655, %v5021
      %v5278 = vsel %vm2255, %v4656, %v5022
      %v5279 = vsel %vm2255, %v4657, %v5023
      %v5280 = vsel %vm2255, %v4658, %v5024
      %v5281 = vsel %vm2255, %v4659, %v5025
      %v5282 = vsel %vm2255, %v4512, %v5026
      %v5283 = vsel %vm2255, %v4660, %v5027
      %v5284 = vsel %vm2255, %v4661, %v5028
      %v5285 = vsel %vm2255, %v4662, %v5029
      %v5286 = vsel %vm2255, %v4663, %v5030
      %v5287 = vsel %vm2255, %v4664, %v5031
      %v5288 = vsel %vm2255, %v4665, %v5032
      %v5289 = vsel %vm2255, %v4666, %v5033
      %v5290 = vsel %vm2255, %v4513, %v5034
      %v5291 = vsel %vm2255, %v4667, %v5035
      %v5292 = vsel %vm2255, %v4668, %v5036
      %v5293 = vsel %vm2255, %v4669, %v5037
      %v5294 = vsel %vm2255, %v4670, %v5038
      %v5295 = vsel %vm2255, %v4671, %v5039
      %v5296 = vsel %vm2255, %v4672, %v5040
      %v5297 = vsel %vm2255, %v4673, %v5041
      %v5330 = vrot.slane %v3695, 2
      %v5331 = vrot.slane %v3695, 4
      %v5332 = vrot.slane %v3695, 6
      %v5333 = vrot.slane %v3696, 2
      %v5334 = vrot.slane %v3696, 4
      %v5335 = vrot.slane %v3696, 6
      %v5336 = vrot.slane %v3697, 2
      %v5337 = vrot.slane %v3697, 4
      %v5338 = vrot.slane %v3697, 6
      %v5339 = vrot.slane %v3698, 2
      %v5340 = vrot.slane %v3698, 4
      %v5341 = vrot.slane %v3698, 6
      %v5342 = vrot.slane %v3699, 2
      %v5343 = vrot.slane %v3699, 4
      %v5344 = vrot.slane %v3699, 6
      %v5345 = vrot.slane %v3700, 2
      %v5346 = vrot.slane %v3700, 4
      %v5347 = vrot.slane %v3700, 6
      %v5348 = vrot.slane %v3701, 2
      %v5349 = vrot.slane %v3701, 4
      %v5350 = vrot.slane %v3701, 6
      %v5351 = vrot.slane %v3702, 2
      %v5352 = vrot.slane %v3702, 4
      %v5353 = vrot.slane %v3702, 6
      %v5354 = vrot.slane %v3703, 2
      %v5355 = vrot.slane %v3703, 4
      %v5356 = vrot.slane %v3703, 6
      %v5357 = vrot.slane %v3704, 2
      %v5358 = vrot.slane %v3704, 4
      %v5359 = vrot.slane %v3704, 6
      %v5360 = vrot.slane %v3705, 2
      %v5361 = vrot.slane %v3705, 4
      %v5362 = vrot.slane %v3705, 6
      %v5363 = vrot.slane %v3706, 2
      %v5364 = vrot.slane %v3706, 4
      %v5365 = vrot.slane %v3706, 6
      %v5366 = vrot.slane %v3707, 2
      %v5367 = vrot.slane %v3707, 4
      %v5368 = vrot.slane %v3707, 6
      %v5369 = vrot.slane %v3708, 2
      %v5370 = vrot.slane %v3708, 4
      %v5371 = vrot.slane %v3708, 6
      %v5372 = vrot.slane %v3709, 2
      %v5373 = vrot.slane %v3709, 4
      %v5374 = vrot.slane %v3709, 6
      %v5375 = vrot.slane %v3710, 2
      %v5376 = vrot.slane %v3710, 4
      %v5377 = vrot.slane %v3710, 6
      %v5378 = vrot.slane %v3711, 2
      %v5379 = vrot.slane %v3711, 4
      %v5380 = vrot.slane %v3711, 6
      %v5381 = vrot.slane %v3712, 2
      %v5382 = vrot.slane %v3712, 4
      %v5383 = vrot.slane %v3712, 6
      %v5384 = vrot.slane %v3713, 2
      %v5385 = vrot.slane %v3713, 4
      %v5386 = vrot.slane %v3713, 6
      %v5387 = vrot.slane %v3714, 2
      %v5388 = vrot.slane %v3714, 4
      %v5389 = vrot.slane %v3714, 6
      %v5390 = vrot.slane %v3715, 2
      %v5391 = vrot.slane %v3715, 4
      %v5392 = vrot.slane %v3715, 6
      %v5393 = vrot.slane %v3716, 2
      %v5394 = vrot.slane %v3716, 4
      %v5395 = vrot.slane %v3716, 6
      %v5396 = vrot.slane %v3717, 2
      %v5397 = vrot.slane %v3717, 4
      %v5398 = vrot.slane %v3717, 6
      %v5399 = vrot.slane %v3718, 2
      %v5400 = vrot.slane %v3718, 4
      %v5401 = vrot.slane %v3718, 6
      %v5402 = vrot.slane %v3719, 2
      %v5403 = vrot.slane %v3719, 4
      %v5404 = vrot.slane %v3719, 6
      %v5405 = vrot.slane %v3720, 2
      %v5406 = vrot.slane %v3720, 4
      %v5407 = vrot.slane %v3720, 6
      %v5408 = vrot.slane %v3721, 2
      %v5409 = vrot.slane %v3721, 4
      %v5410 = vrot.slane %v3721, 6
      %v5411 = vrot.slane %v3722, 2
      %v5412 = vrot.slane %v3722, 4
      %v5413 = vrot.slane %v3722, 6
      %v5414 = vrot.slane %v3723, 2
      %v5415 = vrot.slane %v3723, 4
      %v5416 = vrot.slane %v3723, 6
      %v5417 = vrot.slane %v3724, 2
      %v5418 = vrot.slane %v3724, 4
      %v5419 = vrot.slane %v3724, 6
      %v5420 = vrot.slane %v3725, 2
      %v5421 = vrot.slane %v3725, 4
      %v5422 = vrot.slane %v3725, 6
      %v5423 = vrot.slane %v3726, 2
      %v5424 = vrot.slane %v3726, 4
      %v5425 = vrot.slane %v3726, 6
      %v5522 = vadd.f32 %v5170, %v3695
      %v5523 = vadd.f32 %v5171, %v5330
      %v5524 = vadd.f32 %v5172, %v5331
      %v5525 = vadd.f32 %v5173, %v5332
      %v5526 = vadd.f32 %v5174, %v3696
      %v5527 = vadd.f32 %v5175, %v5333
      %v5528 = vadd.f32 %v5176, %v5334
      %v5529 = vadd.f32 %v5177, %v5335
      %v5530 = vadd.f32 %v5178, %v3697
      %v5531 = vadd.f32 %v5179, %v5336
      %v5532 = vadd.f32 %v5180, %v5337
      %v5533 = vadd.f32 %v5181, %v5338
      %v5534 = vadd.f32 %v5182, %v3698
      %v5535 = vadd.f32 %v5183, %v5339
      %v5536 = vadd.f32 %v5184, %v5340
      %v5537 = vadd.f32 %v5185, %v5341
      %v5538 = vadd.f32 %v5186, %v3699
      %v5539 = vadd.f32 %v5187, %v5342
      %v5540 = vadd.f32 %v5188, %v5343
      %v5541 = vadd.f32 %v5189, %v5344
      %v5542 = vadd.f32 %v5190, %v3700
      %v5543 = vadd.f32 %v5191, %v5345
      %v5544 = vadd.f32 %v5192, %v5346
      %v5545 = vadd.f32 %v5193, %v5347
      %v5546 = vadd.f32 %v5194, %v3701
      %v5547 = vadd.f32 %v5195, %v5348
      %v5548 = vadd.f32 %v5196, %v5349
      %v5549 = vadd.f32 %v5197, %v5350
      %v5550 = vadd.f32 %v5198, %v3702
      %v5551 = vadd.f32 %v5199, %v5351
      %v5552 = vadd.f32 %v5200, %v5352
      %v5553 = vadd.f32 %v5201, %v5353
      %v5554 = vadd.f32 %v5202, %v3703
      %v5555 = vadd.f32 %v5203, %v5354
      %v5556 = vadd.f32 %v5204, %v5355
      %v5557 = vadd.f32 %v5205, %v5356
      %v5558 = vadd.f32 %v5206, %v3704
      %v5559 = vadd.f32 %v5207, %v5357
      %v5560 = vadd.f32 %v5208, %v5358
      %v5561 = vadd.f32 %v5209, %v5359
      %v5562 = vadd.f32 %v5210, %v3705
      %v5563 = vadd.f32 %v5211, %v5360
      %v5564 = vadd.f32 %v5212, %v5361
      %v5565 = vadd.f32 %v5213, %v5362
      %v5566 = vadd.f32 %v5214, %v3706
      %v5567 = vadd.f32 %v5215, %v5363
      %v5568 = vadd.f32 %v5216, %v5364
      %v5569 = vadd.f32 %v5217, %v5365
      %v5570 = vadd.f32 %v5218, %v3707
      %v5571 = vadd.f32 %v5219, %v5366
      %v5572 = vadd.f32 %v5220, %v5367
      %v5573 = vadd.f32 %v5221, %v5368
      %v5574 = vadd.f32 %v5222, %v3708
      %v5575 = vadd.f32 %v5223, %v5369
      %v5576 = vadd.f32 %v5224, %v5370
      %v5577 = vadd.f32 %v5225, %v5371
      %v5578 = vadd.f32 %v5226, %v3709
      %v5579 = vadd.f32 %v5227, %v5372
      %v5580 = vadd.f32 %v5228, %v5373
      %v5581 = vadd.f32 %v5229, %v5374
      %v5582 = vadd.f32 %v5230, %v3710
      %v5583 = vadd.f32 %v5231, %v5375
      %v5584 = vadd.f32 %v5232, %v5376
      %v5585 = vadd.f32 %v5233, %v5377
      %v5586 = vadd.f32 %v5234, %v3711
      %v5587 = vadd.f32 %v5235, %v5378
      %v5588 = vadd.f32 %v5236, %v5379
      %v5589 = vadd.f32 %v5237, %v5380
      %v5590 = vadd.f32 %v5238, %v3712
      %v5591 = vadd.f32 %v5239, %v5381
      %v5592 = vadd.f32 %v5240, %v5382
      %v5593 = vadd.f32 %v5241, %v5383
      %v5594 = vadd.f32 %v5242, %v3713
      %v5595 = vadd.f32 %v5243, %v5384
      %v5596 = vadd.f32 %v5244, %v5385
      %v5597 = vadd.f32 %v5245, %v5386
      %v5598 = vadd.f32 %v5246, %v3714
      %v5599 = vadd.f32 %v5247, %v5387
      %v5600 = vadd.f32 %v5248, %v5388
      %v5601 = vadd.f32 %v5249, %v5389
      %v5602 = vadd.f32 %v5250, %v3715
      %v5603 = vadd.f32 %v5251, %v5390
      %v5604 = vadd.f32 %v5252, %v5391
      %v5605 = vadd.f32 %v5253, %v5392
      %v5606 = vadd.f32 %v5254, %v3716
      %v5607 = vadd.f32 %v5255, %v5393
      %v5608 = vadd.f32 %v5256, %v5394
      %v5609 = vadd.f32 %v5257, %v5395
      %v5610 = vadd.f32 %v5258, %v3717
      %v5611 = vadd.f32 %v5259, %v5396
      %v5612 = vadd.f32 %v5260, %v5397
      %v5613 = vadd.f32 %v5261, %v5398
      %v5614 = vadd.f32 %v5262, %v3718
      %v5615 = vadd.f32 %v5263, %v5399
      %v5616 = vadd.f32 %v5264, %v5400
      %v5617 = vadd.f32 %v5265, %v5401
      %v5618 = vadd.f32 %v5266, %v3719
      %v5619 = vadd.f32 %v5267, %v5402
      %v5620 = vadd.f32 %v5268, %v5403
      %v5621 = vadd.f32 %v5269, %v5404
      %v5622 = vadd.f32 %v5270, %v3720
      %v5623 = vadd.f32 %v5271, %v5405
      %v5624 = vadd.f32 %v5272, %v5406
      %v5625 = vadd.f32 %v5273, %v5407
      %v5626 = vadd.f32 %v5274, %v3721
      %v5627 = vadd.f32 %v5275, %v5408
      %v5628 = vadd.f32 %v5276, %v5409
      %v5629 = vadd.f32 %v5277, %v5410
      %v5630 = vadd.f32 %v5278, %v3722
      %v5631 = vadd.f32 %v5279, %v5411
      %v5632 = vadd.f32 %v5280, %v5412
      %v5633 = vadd.f32 %v5281, %v5413
      %v5634 = vadd.f32 %v5282, %v3723
      %v5635 = vadd.f32 %v5283, %v5414
      %v5636 = vadd.f32 %v5284, %v5415
      %v5637 = vadd.f32 %v5285, %v5416
      %v5638 = vadd.f32 %v5286, %v3724
      %v5639 = vadd.f32 %v5287, %v5417
      %v5640 = vadd.f32 %v5288, %v5418
      %v5641 = vadd.f32 %v5289, %v5419
      %v5642 = vadd.f32 %v5290, %v3725
      %v5643 = vadd.f32 %v5291, %v5420
      %v5644 = vadd.f32 %v5292, %v5421
      %v5645 = vadd.f32 %v5293, %v5422
      %v5646 = vadd.f32 %v5294, %v3726
      %v5647 = vadd.f32 %v5295, %v5423
      %v5648 = vadd.f32 %v5296, %v5424
      %v5649 = vadd.f32 %v5297, %v5425
      %v5682 = vrot.slane %v238, 2
      %v5683 = vrot.slane %v238, 4
      %v5684 = vrot.slane %v238, 6
      %v5685 = vrot.slane %v239, 2
      %v5686 = vrot.slane %v239, 4
      %v5687 = vrot.slane %v239, 6
      %v5688 = vrot.slane %v240, 2
      %v5689 = vrot.slane %v240, 4
      %v5690 = vrot.slane %v240, 6
      %v5691 = vrot.slane %v241, 2
      %v5692 = vrot.slane %v241, 4
      %v5693 = vrot.slane %v241, 6
      %v5694 = vrot.slane %v242, 2
      %v5695 = vrot.slane %v242, 4
      %v5696 = vrot.slane %v242, 6
      %v5697 = vrot.slane %v243, 2
      %v5698 = vrot.slane %v243, 4
      %v5699 = vrot.slane %v243, 6
      %v5700 = vrot.slane %v244, 2
      %v5701 = vrot.slane %v244, 4
      %v5702 = vrot.slane %v244, 6
      %v5703 = vrot.slane %v245, 2
      %v5704 = vrot.slane %v245, 4
      %v5705 = vrot.slane %v245, 6
      %v5706 = vrot.slane %v246, 2
      %v5707 = vrot.slane %v246, 4
      %v5708 = vrot.slane %v246, 6
      %v5709 = vrot.slane %v247, 2
      %v5710 = vrot.slane %v247, 4
      %v5711 = vrot.slane %v247, 6
      %v5712 = vrot.slane %v248, 2
      %v5713 = vrot.slane %v248, 4
      %v5714 = vrot.slane %v248, 6
      %v5715 = vrot.slane %v249, 2
      %v5716 = vrot.slane %v249, 4
      %v5717 = vrot.slane %v249, 6
      %v5718 = vrot.slane %v250, 2
      %v5719 = vrot.slane %v250, 4
      %v5720 = vrot.slane %v250, 6
      %v5721 = vrot.slane %v251, 2
      %v5722 = vrot.slane %v251, 4
      %v5723 = vrot.slane %v251, 6
      %v5724 = vrot.slane %v252, 2
      %v5725 = vrot.slane %v252, 4
      %v5726 = vrot.slane %v252, 6
      %v5727 = vrot.slane %v253, 2
      %v5728 = vrot.slane %v253, 4
      %v5729 = vrot.slane %v253, 6
      %v5730 = vrot.slane %v254, 2
      %v5731 = vrot.slane %v254, 4
      %v5732 = vrot.slane %v254, 6
      %v5733 = vrot.slane %v255, 2
      %v5734 = vrot.slane %v255, 4
      %v5735 = vrot.slane %v255, 6
      %v5736 = vrot.slane %v256, 2
      %v5737 = vrot.slane %v256, 4
      %v5738 = vrot.slane %v256, 6
      %v5739 = vrot.slane %v257, 2
      %v5740 = vrot.slane %v257, 4
      %v5741 = vrot.slane %v257, 6
      %v5742 = vrot.slane %v258, 2
      %v5743 = vrot.slane %v258, 4
      %v5744 = vrot.slane %v258, 6
      %v5745 = vrot.slane %v259, 2
      %v5746 = vrot.slane %v259, 4
      %v5747 = vrot.slane %v259, 6
      %v5748 = vrot.slane %v260, 2
      %v5749 = vrot.slane %v260, 4
      %v5750 = vrot.slane %v260, 6
      %v5751 = vrot.slane %v261, 2
      %v5752 = vrot.slane %v261, 4
      %v5753 = vrot.slane %v261, 6
      %v5754 = vrot.slane %v262, 2
      %v5755 = vrot.slane %v262, 4
      %v5756 = vrot.slane %v262, 6
      %v5757 = vrot.slane %v263, 2
      %v5758 = vrot.slane %v263, 4
      %v5759 = vrot.slane %v263, 6
      %v5760 = vrot.slane %v264, 2
      %v5761 = vrot.slane %v264, 4
      %v5762 = vrot.slane %v264, 6
      %v5763 = vrot.slane %v265, 2
      %v5764 = vrot.slane %v265, 4
      %v5765 = vrot.slane %v265, 6
      %v5766 = vrot.slane %v266, 2
      %v5767 = vrot.slane %v266, 4
      %v5768 = vrot.slane %v266, 6
      %v5769 = vrot.slane %v267, 2
      %v5770 = vrot.slane %v267, 4
      %v5771 = vrot.slane %v267, 6
      %v5772 = vrot.slane %v268, 2
      %v5773 = vrot.slane %v268, 4
      %v5774 = vrot.slane %v268, 6
      %v5775 = vrot.slane %v269, 2
      %v5776 = vrot.slane %v269, 4
      %v5777 = vrot.slane %v269, 6
      %v5874 = vadd.f32 %v5522, %v238
      %v5875 = vadd.f32 %v5523, %v5682
      %v5876 = vadd.f32 %v5524, %v5683
      %v5877 = vadd.f32 %v5525, %v5684
      %v5878 = vadd.f32 %v5526, %v239
      %v5879 = vadd.f32 %v5527, %v5685
      %v5880 = vadd.f32 %v5528, %v5686
      %v5881 = vadd.f32 %v5529, %v5687
      %v5882 = vadd.f32 %v5530, %v240
      %v5883 = vadd.f32 %v5531, %v5688
      %v5884 = vadd.f32 %v5532, %v5689
      %v5885 = vadd.f32 %v5533, %v5690
      %v5886 = vadd.f32 %v5534, %v241
      %v5887 = vadd.f32 %v5535, %v5691
      %v5888 = vadd.f32 %v5536, %v5692
      %v5889 = vadd.f32 %v5537, %v5693
      %v5890 = vadd.f32 %v5538, %v242
      %v5891 = vadd.f32 %v5539, %v5694
      %v5892 = vadd.f32 %v5540, %v5695
      %v5893 = vadd.f32 %v5541, %v5696
      %v5894 = vadd.f32 %v5542, %v243
      %v5895 = vadd.f32 %v5543, %v5697
      %v5896 = vadd.f32 %v5544, %v5698
      %v5897 = vadd.f32 %v5545, %v5699
      %v5898 = vadd.f32 %v5546, %v244
      %v5899 = vadd.f32 %v5547, %v5700
      %v5900 = vadd.f32 %v5548, %v5701
      %v5901 = vadd.f32 %v5549, %v5702
      %v5902 = vadd.f32 %v5550, %v245
      %v5903 = vadd.f32 %v5551, %v5703
      %v5904 = vadd.f32 %v5552, %v5704
      %v5905 = vadd.f32 %v5553, %v5705
      %v5906 = vadd.f32 %v5554, %v246
      %v5907 = vadd.f32 %v5555, %v5706
      %v5908 = vadd.f32 %v5556, %v5707
      %v5909 = vadd.f32 %v5557, %v5708
      %v5910 = vadd.f32 %v5558, %v247
      %v5911 = vadd.f32 %v5559, %v5709
      %v5912 = vadd.f32 %v5560, %v5710
      %v5913 = vadd.f32 %v5561, %v5711
      %v5914 = vadd.f32 %v5562, %v248
      %v5915 = vadd.f32 %v5563, %v5712
      %v5916 = vadd.f32 %v5564, %v5713
      %v5917 = vadd.f32 %v5565, %v5714
      %v5918 = vadd.f32 %v5566, %v249
      %v5919 = vadd.f32 %v5567, %v5715
      %v5920 = vadd.f32 %v5568, %v5716
      %v5921 = vadd.f32 %v5569, %v5717
      %v5922 = vadd.f32 %v5570, %v250
      %v5923 = vadd.f32 %v5571, %v5718
      %v5924 = vadd.f32 %v5572, %v5719
      %v5925 = vadd.f32 %v5573, %v5720
      %v5926 = vadd.f32 %v5574, %v251
      %v5927 = vadd.f32 %v5575, %v5721
      %v5928 = vadd.f32 %v5576, %v5722
      %v5929 = vadd.f32 %v5577, %v5723
      %v5930 = vadd.f32 %v5578, %v252
      %v5931 = vadd.f32 %v5579, %v5724
      %v5932 = vadd.f32 %v5580, %v5725
      %v5933 = vadd.f32 %v5581, %v5726
      %v5934 = vadd.f32 %v5582, %v253
      %v5935 = vadd.f32 %v5583, %v5727
      %v5936 = vadd.f32 %v5584, %v5728
      %v5937 = vadd.f32 %v5585, %v5729
      %v5938 = vadd.f32 %v5586, %v254
      %v5939 = vadd.f32 %v5587, %v5730
      %v5940 = vadd.f32 %v5588, %v5731
      %v5941 = vadd.f32 %v5589, %v5732
      %v5942 = vadd.f32 %v5590, %v255
      %v5943 = vadd.f32 %v5591, %v5733
      %v5944 = vadd.f32 %v5592, %v5734
      %v5945 = vadd.f32 %v5593, %v5735
      %v5946 = vadd.f32 %v5594, %v256
      %v5947 = vadd.f32 %v5595, %v5736
      %v5948 = vadd.f32 %v5596, %v5737
      %v5949 = vadd.f32 %v5597, %v5738
      %v5950 = vadd.f32 %v5598, %v257
      %v5951 = vadd.f32 %v5599, %v5739
      %v5952 = vadd.f32 %v5600, %v5740
      %v5953 = vadd.f32 %v5601, %v5741
      %v5954 = vadd.f32 %v5602, %v258
      %v5955 = vadd.f32 %v5603, %v5742
      %v5956 = vadd.f32 %v5604, %v5743
      %v5957 = vadd.f32 %v5605, %v5744
      %v5958 = vadd.f32 %v5606, %v259
      %v5959 = vadd.f32 %v5607, %v5745
      %v5960 = vadd.f32 %v5608, %v5746
      %v5961 = vadd.f32 %v5609, %v5747
      %v5962 = vadd.f32 %v5610, %v260
      %v5963 = vadd.f32 %v5611, %v5748
      %v5964 = vadd.f32 %v5612, %v5749
      %v5965 = vadd.f32 %v5613, %v5750
      %v5966 = vadd.f32 %v5614, %v261
      %v5967 = vadd.f32 %v5615, %v5751
      %v5968 = vadd.f32 %v5616, %v5752
      %v5969 = vadd.f32 %v5617, %v5753
      %v5970 = vadd.f32 %v5618, %v262
      %v5971 = vadd.f32 %v5619, %v5754
      %v5972 = vadd.f32 %v5620, %v5755
      %v5973 = vadd.f32 %v5621, %v5756
      %v5974 = vadd.f32 %v5622, %v263
      %v5975 = vadd.f32 %v5623, %v5757
      %v5976 = vadd.f32 %v5624, %v5758
      %v5977 = vadd.f32 %v5625, %v5759
      %v5978 = vadd.f32 %v5626, %v264
      %v5979 = vadd.f32 %v5627, %v5760
      %v5980 = vadd.f32 %v5628, %v5761
      %v5981 = vadd.f32 %v5629, %v5762
      %v5982 = vadd.f32 %v5630, %v265
      %v5983 = vadd.f32 %v5631, %v5763
      %v5984 = vadd.f32 %v5632, %v5764
      %v5985 = vadd.f32 %v5633, %v5765
      %v5986 = vadd.f32 %v5634, %v266
      %v5987 = vadd.f32 %v5635, %v5766
      %v5988 = vadd.f32 %v5636, %v5767
      %v5989 = vadd.f32 %v5637, %v5768
      %v5990 = vadd.f32 %v5638, %v267
      %v5991 = vadd.f32 %v5639, %v5769
      %v5992 = vadd.f32 %v5640, %v5770
      %v5993 = vadd.f32 %v5641, %v5771
      %v5994 = vadd.f32 %v5642, %v268
      %v5995 = vadd.f32 %v5643, %v5772
      %v5996 = vadd.f32 %v5644, %v5773
      %v5997 = vadd.f32 %v5645, %v5774
      %v5998 = vadd.f32 %v5646, %v269
      %v5999 = vadd.f32 %v5647, %v5775
      %v6000 = vadd.f32 %v5648, %v5776
      %v6001 = vadd.f32 %v5649, %v5777
      %v6002 = vrot.slane %v5882, 4
      %vm6003 = vcmask 1047556
      %v6004 = vsel %vm6003, %v6002, %v5874
      %v6006 = vunpack.c.l.s4 1934713408
      %v6007 = vunpack.c.0.s8 %v6006
      %v6008 = vperm.slane %v6004, %v6007
      %v6009 = vrot.slane %v6008, 4
      %v6010 = vsel %vm6003, 0.0, %v6009
      %v6011 = vrot.slane %v5898, 4
      %v6012 = vsel %vm6003, %v6011, %v5890
      %v6014 = vunpack.c.l.s4 1934713408
      %v6015 = vunpack.c.0.s8 %v6014
      %v6016 = vperm.slane %v6012, %v6015
      %v6017 = vrot.slane %v6016, 4
      %v6018 = vsel %vm6003, 0.0, %v6017
      %v6019 = vrot.slane %v5914, 4
      %v6020 = vsel %vm6003, %v6019, %v5906
      %v6022 = vunpack.c.l.s4 1934713408
      %v6023 = vunpack.c.0.s8 %v6022
      %v6024 = vperm.slane %v6020, %v6023
      %v6025 = vrot.slane %v6024, 4
      %v6026 = vsel %vm6003, 0.0, %v6025
      %v6027 = vrot.slane %v5930, 4
      %v6028 = vsel %vm6003, %v6027, %v5922
      %v6030 = vunpack.c.l.s4 1934713408
      %v6031 = vunpack.c.0.s8 %v6030
      %v6032 = vperm.slane %v6028, %v6031
      %v6033 = vrot.slane %v6032, 4
      %v6034 = vsel %vm6003, 0.0, %v6033
      %v6035 = vrot.slane %v5946, 4
      %v6036 = vsel %vm6003, %v6035, %v5938
      %v6038 = vunpack.c.l.s4 1934713408
      %v6039 = vunpack.c.0.s8 %v6038
      %v6040 = vperm.slane %v6036, %v6039
      %v6041 = vrot.slane %v6040, 4
      %v6042 = vsel %vm6003, 0.0, %v6041
      %v6043 = vrot.slane %v5962, 4
      %v6044 = vsel %vm6003, %v6043, %v5954
      %v6046 = vunpack.c.l.s4 1934713408
      %v6047 = vunpack.c.0.s8 %v6046
      %v6048 = vperm.slane %v6044, %v6047
      %v6049 = vrot.slane %v6048, 4
      %v6050 = vsel %vm6003, 0.0, %v6049
      %v6051 = vrot.slane %v5978, 4
      %v6052 = vsel %vm6003, %v6051, %v5970
      %v6054 = vunpack.c.l.s4 1934713408
      %v6055 = vunpack.c.0.s8 %v6054
      %v6056 = vperm.slane %v6052, %v6055
      %v6057 = vrot.slane %v6056, 4
      %v6058 = vsel %vm6003, 0.0, %v6057
      %v6059 = vrot.slane %v5994, 4
      %v6060 = vsel %vm6003, %v6059, %v5986
      %v6062 = vunpack.c.l.s4 1934713408
      %v6063 = vunpack.c.0.s8 %v6062
      %v6064 = vperm.slane %v6060, %v6063
      %v6065 = vrot.slane %v6064, 4
      %v6066 = vsel %vm6003, 0.0, %v6065
      %v6067 = vrot.slane %v5883, 4
      %v6068 = vsel %vm6003, %v6067, %v5875
      %v6070 = vunpack.c.l.s4 1934713408
      %v6071 = vunpack.c.0.s8 %v6070
      %v6072 = vperm.slane %v6068, %v6071
      %v6073 = vrot.slane %v6072, 4
      %v6074 = vsel %vm6003, 0.0, %v6073
      %v6075 = vrot.slane %v5899, 4
      %v6076 = vsel %vm6003, %v6075, %v5891
      %v6078 = vunpack.c.l.s4 1934713408
      %v6079 = vunpack.c.0.s8 %v6078
      %v6080 = vperm.slane %v6076, %v6079
      %v6081 = vrot.slane %v6080, 4
      %v6082 = vsel %vm6003, 0.0, %v6081
      %v6083 = vrot.slane %v5915, 4
      %v6084 = vsel %vm6003, %v6083, %v5907
      %v6086 = vunpack.c.l.s4 1934713408
      %v6087 = vunpack.c.0.s8 %v6086
      %v6088 = vperm.slane %v6084, %v6087
      %v6089 = vrot.slane %v6088, 4
      %v6090 = vsel %vm6003, 0.0, %v6089
      %v6091 = vrot.slane %v5931, 4
      %v6092 = vsel %vm6003, %v6091, %v5923
      %v6094 = vunpack.c.l.s4 1934713408
      %v6095 = vunpack.c.0.s8 %v6094
      %v6096 = vperm.slane %v6092, %v6095
      %v6097 = vrot.slane %v6096, 4
      %v6098 = vsel %vm6003, 0.0, %v6097
      %v6099 = vrot.slane %v5947, 4
      %v6100 = vsel %vm6003, %v6099, %v5939
      %v6102 = vunpack.c.l.s4 1934713408
      %v6103 = vunpack.c.0.s8 %v6102
      %v6104 = vperm.slane %v6100, %v6103
      %v6105 = vrot.slane %v6104, 4
      %v6106 = vsel %vm6003, 0.0, %v6105
      %v6107 = vrot.slane %v5963, 4
      %v6108 = vsel %vm6003, %v6107, %v5955
      %v6110 = vunpack.c.l.s4 1934713408
      %v6111 = vunpack.c.0.s8 %v6110
      %v6112 = vperm.slane %v6108, %v6111
      %v6113 = vrot.slane %v6112, 4
      %v6114 = vsel %vm6003, 0.0, %v6113
      %v6115 = vrot.slane %v5979, 4
      %v6116 = vsel %vm6003, %v6115, %v5971
      %v6118 = vunpack.c.l.s4 1934713408
      %v6119 = vunpack.c.0.s8 %v6118
      %v6120 = vperm.slane %v6116, %v6119
      %v6121 = vrot.slane %v6120, 4
      %v6122 = vsel %vm6003, 0.0, %v6121
      %v6123 = vrot.slane %v5995, 4
      %v6124 = vsel %vm6003, %v6123, %v5987
      %v6126 = vunpack.c.l.s4 1934713408
      %v6127 = vunpack.c.0.s8 %v6126
      %v6128 = vperm.slane %v6124, %v6127
      %v6129 = vrot.slane %v6128, 4
      %v6130 = vsel %vm6003, 0.0, %v6129
      %v6131 = vrot.slane %v5884, 4
      %v6132 = vsel %vm6003, %v6131, %v5876
      %v6134 = vunpack.c.l.s4 1934713408
      %v6135 = vunpack.c.0.s8 %v6134
      %v6136 = vperm.slane %v6132, %v6135
      %v6137 = vrot.slane %v6136, 4
      %v6138 = vsel %vm6003, 0.0, %v6137
      %v6139 = vrot.slane %v5900, 4
      %v6140 = vsel %vm6003, %v6139, %v5892
      %v6142 = vunpack.c.l.s4 1934713408
      %v6143 = vunpack.c.0.s8 %v6142
      %v6144 = vperm.slane %v6140, %v6143
      %v6145 = vrot.slane %v6144, 4
      %v6146 = vsel %vm6003, 0.0, %v6145
      %v6147 = vrot.slane %v5916, 4
      %v6148 = vsel %vm6003, %v6147, %v5908
      %v6150 = vunpack.c.l.s4 1934713408
      %v6151 = vunpack.c.0.s8 %v6150
      %v6152 = vperm.slane %v6148, %v6151
      %v6153 = vrot.slane %v6152, 4
      %v6154 = vsel %vm6003, 0.0, %v6153
      %v6155 = vrot.slane %v5932, 4
      %v6156 = vsel %vm6003, %v6155, %v5924
      %v6158 = vunpack.c.l.s4 1934713408
      %v6159 = vunpack.c.0.s8 %v6158
      %v6160 = vperm.slane %v6156, %v6159
      %v6161 = vrot.slane %v6160, 4
      %v6162 = vsel %vm6003, 0.0, %v6161
      %v6163 = vrot.slane %v5948, 4
      %v6164 = vsel %vm6003, %v6163, %v5940
      %v6166 = vunpack.c.l.s4 1934713408
      %v6167 = vunpack.c.0.s8 %v6166
      %v6168 = vperm.slane %v6164, %v6167
      %v6169 = vrot.slane %v6168, 4
      %v6170 = vsel %vm6003, 0.0, %v6169
      %v6171 = vrot.slane %v5964, 4
      %v6172 = vsel %vm6003, %v6171, %v5956
      %v6174 = vunpack.c.l.s4 1934713408
      %v6175 = vunpack.c.0.s8 %v6174
      %v6176 = vperm.slane %v6172, %v6175
      %v6177 = vrot.slane %v6176, 4
      %v6178 = vsel %vm6003, 0.0, %v6177
      %v6179 = vrot.slane %v5980, 4
      %v6180 = vsel %vm6003, %v6179, %v5972
      %v6182 = vunpack.c.l.s4 1934713408
      %v6183 = vunpack.c.0.s8 %v6182
      %v6184 = vperm.slane %v6180, %v6183
      %v6185 = vrot.slane %v6184, 4
      %v6186 = vsel %vm6003, 0.0, %v6185
      %v6187 = vrot.slane %v5996, 4
      %v6188 = vsel %vm6003, %v6187, %v5988
      %v6190 = vunpack.c.l.s4 1934713408
      %v6191 = vunpack.c.0.s8 %v6190
      %v6192 = vperm.slane %v6188, %v6191
      %v6193 = vrot.slane %v6192, 4
      %v6194 = vsel %vm6003, 0.0, %v6193
      %v6195 = vrot.slane %v5885, 4
      %v6196 = vsel %vm6003, %v6195, %v5877
      %v6198 = vunpack.c.l.s4 1934713408
      %v6199 = vunpack.c.0.s8 %v6198
      %v6200 = vperm.slane %v6196, %v6199
      %v6201 = vrot.slane %v6200, 4
      %v6202 = vsel %vm6003, 0.0, %v6201
      %v6203 = vrot.slane %v5901, 4
      %v6204 = vsel %vm6003, %v6203, %v5893
      %v6206 = vunpack.c.l.s4 1934713408
      %v6207 = vunpack.c.0.s8 %v6206
      %v6208 = vperm.slane %v6204, %v6207
      %v6209 = vrot.slane %v6208, 4
      %v6210 = vsel %vm6003, 0.0, %v6209
      %v6211 = vrot.slane %v5917, 4
      %v6212 = vsel %vm6003, %v6211, %v5909
      %v6214 = vunpack.c.l.s4 1934713408
      %v6215 = vunpack.c.0.s8 %v6214
      %v6216 = vperm.slane %v6212, %v6215
      %v6217 = vrot.slane %v6216, 4
      %v6218 = vsel %vm6003, 0.0, %v6217
      %v6219 = vrot.slane %v5933, 4
      %v6220 = vsel %vm6003, %v6219, %v5925
      %v6222 = vunpack.c.l.s4 1934713408
      %v6223 = vunpack.c.0.s8 %v6222
      %v6224 = vperm.slane %v6220, %v6223
      %v6225 = vrot.slane %v6224, 4
      %v6226 = vsel %vm6003, 0.0, %v6225
      %v6227 = vrot.slane %v5949, 4
      %v6228 = vsel %vm6003, %v6227, %v5941
      %v6230 = vunpack.c.l.s4 1934713408
      %v6231 = vunpack.c.0.s8 %v6230
      %v6232 = vperm.slane %v6228, %v6231
      %v6233 = vrot.slane %v6232, 4
      %v6234 = vsel %vm6003, 0.0, %v6233
      %v6235 = vrot.slane %v5965, 4
      %v6236 = vsel %vm6003, %v6235, %v5957
      %v6238 = vunpack.c.l.s4 1934713408
      %v6239 = vunpack.c.0.s8 %v6238
      %v6240 = vperm.slane %v6236, %v6239
      %v6241 = vrot.slane %v6240, 4
      %v6242 = vsel %vm6003, 0.0, %v6241
      %v6243 = vrot.slane %v5981, 4
      %v6244 = vsel %vm6003, %v6243, %v5973
      %v6246 = vunpack.c.l.s4 1934713408
      %v6247 = vunpack.c.0.s8 %v6246
      %v6248 = vperm.slane %v6244, %v6247
      %v6249 = vrot.slane %v6248, 4
      %v6250 = vsel %vm6003, 0.0, %v6249
      %v6251 = vrot.slane %v5997, 4
      %v6252 = vsel %vm6003, %v6251, %v5989
      %v6254 = vunpack.c.l.s4 1934713408
      %v6255 = vunpack.c.0.s8 %v6254
      %v6256 = vperm.slane %v6252, %v6255
      %v6257 = vrot.slane %v6256, 4
      %v6258 = vsel %vm6003, 0.0, %v6257
      %v6259 = vrot.slane %v5886, 4
      %v6260 = vsel %vm6003, %v6259, %v5878
      %v6262 = vunpack.c.l.s4 1934713408
      %v6263 = vunpack.c.0.s8 %v6262
      %v6264 = vperm.slane %v6260, %v6263
      %v6265 = vrot.slane %v6264, 4
      %v6266 = vsel %vm6003, 0.0, %v6265
      %v6267 = vrot.slane %v5902, 4
      %v6268 = vsel %vm6003, %v6267, %v5894
      %v6270 = vunpack.c.l.s4 1934713408
      %v6271 = vunpack.c.0.s8 %v6270
      %v6272 = vperm.slane %v6268, %v6271
      %v6273 = vrot.slane %v6272, 4
      %v6274 = vsel %vm6003, 0.0, %v6273
      %v6275 = vrot.slane %v5918, 4
      %v6276 = vsel %vm6003, %v6275, %v5910
      %v6278 = vunpack.c.l.s4 1934713408
      %v6279 = vunpack.c.0.s8 %v6278
      %v6280 = vperm.slane %v6276, %v6279
      %v6281 = vrot.slane %v6280, 4
      %v6282 = vsel %vm6003, 0.0, %v6281
      %v6283 = vrot.slane %v5934, 4
      %v6284 = vsel %vm6003, %v6283, %v5926
      %v6286 = vunpack.c.l.s4 1934713408
      %v6287 = vunpack.c.0.s8 %v6286
      %v6288 = vperm.slane %v6284, %v6287
      %v6289 = vrot.slane %v6288, 4
      %v6290 = vsel %vm6003, 0.0, %v6289
      %v6291 = vrot.slane %v5950, 4
      %v6292 = vsel %vm6003, %v6291, %v5942
      %v6294 = vunpack.c.l.s4 1934713408
      %v6295 = vunpack.c.0.s8 %v6294
      %v6296 = vperm.slane %v6292, %v6295
      %v6297 = vrot.slane %v6296, 4
      %v6298 = vsel %vm6003, 0.0, %v6297
      %v6299 = vrot.slane %v5966, 4
      %v6300 = vsel %vm6003, %v6299, %v5958
      %v6302 = vunpack.c.l.s4 1934713408
      %v6303 = vunpack.c.0.s8 %v6302
      %v6304 = vperm.slane %v6300, %v6303
      %v6305 = vrot.slane %v6304, 4
      %v6306 = vsel %vm6003, 0.0, %v6305
      %v6307 = vrot.slane %v5982, 4
      %v6308 = vsel %vm6003, %v6307, %v5974
      %v6310 = vunpack.c.l.s4 1934713408
      %v6311 = vunpack.c.0.s8 %v6310
      %v6312 = vperm.slane %v6308, %v6311
      %v6313 = vrot.slane %v6312, 4
      %v6314 = vsel %vm6003, 0.0, %v6313
      %v6315 = vrot.slane %v5998, 4
      %v6316 = vsel %vm6003, %v6315, %v5990
      %v6318 = vunpack.c.l.s4 1934713408
      %v6319 = vunpack.c.0.s8 %v6318
      %v6320 = vperm.slane %v6316, %v6319
      %v6321 = vrot.slane %v6320, 4
      %v6322 = vsel %vm6003, 0.0, %v6321
      %v6323 = vrot.slane %v5887, 4
      %v6324 = vsel %vm6003, %v6323, %v5879
      %v6326 = vunpack.c.l.s4 1934713408
      %v6327 = vunpack.c.0.s8 %v6326
      %v6328 = vperm.slane %v6324, %v6327
      %v6329 = vrot.slane %v6328, 4
      %v6330 = vsel %vm6003, 0.0, %v6329
      %v6331 = vrot.slane %v5903, 4
      %v6332 = vsel %vm6003, %v6331, %v5895
      %v6334 = vunpack.c.l.s4 1934713408
      %v6335 = vunpack.c.0.s8 %v6334
      %v6336 = vperm.slane %v6332, %v6335
      %v6337 = vrot.slane %v6336, 4
      %v6338 = vsel %vm6003, 0.0, %v6337
      %v6339 = vrot.slane %v5919, 4
      %v6340 = vsel %vm6003, %v6339, %v5911
      %v6342 = vunpack.c.l.s4 1934713408
      %v6343 = vunpack.c.0.s8 %v6342
      %v6344 = vperm.slane %v6340, %v6343
      %v6345 = vrot.slane %v6344, 4
      %v6346 = vsel %vm6003, 0.0, %v6345
      %v6347 = vrot.slane %v5935, 4
      %v6348 = vsel %vm6003, %v6347, %v5927
      %v6350 = vunpack.c.l.s4 1934713408
      %v6351 = vunpack.c.0.s8 %v6350
      %v6352 = vperm.slane %v6348, %v6351
      %v6353 = vrot.slane %v6352, 4
      %v6354 = vsel %vm6003, 0.0, %v6353
      %v6355 = vrot.slane %v5951, 4
      %v6356 = vsel %vm6003, %v6355, %v5943
      %v6358 = vunpack.c.l.s4 1934713408
      %v6359 = vunpack.c.0.s8 %v6358
      %v6360 = vperm.slane %v6356, %v6359
      %v6361 = vrot.slane %v6360, 4
      %v6362 = vsel %vm6003, 0.0, %v6361
      %v6363 = vrot.slane %v5967, 4
      %v6364 = vsel %vm6003, %v6363, %v5959
      %v6366 = vunpack.c.l.s4 1934713408
      %v6367 = vunpack.c.0.s8 %v6366
      %v6368 = vperm.slane %v6364, %v6367
      %v6369 = vrot.slane %v6368, 4
      %v6370 = vsel %vm6003, 0.0, %v6369
      %v6371 = vrot.slane %v5983, 4
      %v6372 = vsel %vm6003, %v6371, %v5975
      %v6374 = vunpack.c.l.s4 1934713408
      %v6375 = vunpack.c.0.s8 %v6374
      %v6376 = vperm.slane %v6372, %v6375
      %v6377 = vrot.slane %v6376, 4
      %v6378 = vsel %vm6003, 0.0, %v6377
      %v6379 = vrot.slane %v5999, 4
      %v6380 = vsel %vm6003, %v6379, %v5991
      %v6382 = vunpack.c.l.s4 1934713408
      %v6383 = vunpack.c.0.s8 %v6382
      %v6384 = vperm.slane %v6380, %v6383
      %v6385 = vrot.slane %v6384, 4
      %v6386 = vsel %vm6003, 0.0, %v6385
      %v6387 = vrot.slane %v5888, 4
      %v6388 = vsel %vm6003, %v6387, %v5880
      %v6390 = vunpack.c.l.s4 1934713408
      %v6391 = vunpack.c.0.s8 %v6390
      %v6392 = vperm.slane %v6388, %v6391
      %v6393 = vrot.slane %v6392, 4
      %v6394 = vsel %vm6003, 0.0, %v6393
      %v6395 = vrot.slane %v5904, 4
      %v6396 = vsel %vm6003, %v6395, %v5896
      %v6398 = vunpack.c.l.s4 1934713408
      %v6399 = vunpack.c.0.s8 %v6398
      %v6400 = vperm.slane %v6396, %v6399
      %v6401 = vrot.slane %v6400, 4
      %v6402 = vsel %vm6003, 0.0, %v6401
      %v6403 = vrot.slane %v5920, 4
      %v6404 = vsel %vm6003, %v6403, %v5912
      %v6406 = vunpack.c.l.s4 1934713408
      %v6407 = vunpack.c.0.s8 %v6406
      %v6408 = vperm.slane %v6404, %v6407
      %v6409 = vrot.slane %v6408, 4
      %v6410 = vsel %vm6003, 0.0, %v6409
      %v6411 = vrot.slane %v5936, 4
      %v6412 = vsel %vm6003, %v6411, %v5928
      %v6414 = vunpack.c.l.s4 1934713408
      %v6415 = vunpack.c.0.s8 %v6414
      %v6416 = vperm.slane %v6412, %v6415
      %v6417 = vrot.slane %v6416, 4
      %v6418 = vsel %vm6003, 0.0, %v6417
      %v6419 = vrot.slane %v5952, 4
      %v6420 = vsel %vm6003, %v6419, %v5944
      %v6422 = vunpack.c.l.s4 1934713408
      %v6423 = vunpack.c.0.s8 %v6422
      %v6424 = vperm.slane %v6420, %v6423
      %v6425 = vrot.slane %v6424, 4
      %v6426 = vsel %vm6003, 0.0, %v6425
      %v6427 = vrot.slane %v5968, 4
      %v6428 = vsel %vm6003, %v6427, %v5960
      %v6430 = vunpack.c.l.s4 1934713408
      %v6431 = vunpack.c.0.s8 %v6430
      %v6432 = vperm.slane %v6428, %v6431
      %v6433 = vrot.slane %v6432, 4
      %v6434 = vsel %vm6003, 0.0, %v6433
      %v6435 = vrot.slane %v5984, 4
      %v6436 = vsel %vm6003, %v6435, %v5976
      %v6438 = vunpack.c.l.s4 1934713408
      %v6439 = vunpack.c.0.s8 %v6438
      %v6440 = vperm.slane %v6436, %v6439
      %v6441 = vrot.slane %v6440, 4
      %v6442 = vsel %vm6003, 0.0, %v6441
      %v6443 = vrot.slane %v6000, 4
      %v6444 = vsel %vm6003, %v6443, %v5992
      %v6446 = vunpack.c.l.s4 1934713408
      %v6447 = vunpack.c.0.s8 %v6446
      %v6448 = vperm.slane %v6444, %v6447
      %v6449 = vrot.slane %v6448, 4
      %v6450 = vsel %vm6003, 0.0, %v6449
      %v6451 = vrot.slane %v5889, 4
      %v6452 = vsel %vm6003, %v6451, %v5881
      %v6454 = vunpack.c.l.s4 1934713408
      %v6455 = vunpack.c.0.s8 %v6454
      %v6456 = vperm.slane %v6452, %v6455
      %v6457 = vrot.slane %v6456, 4
      %v6458 = vsel %vm6003, 0.0, %v6457
      %v6459 = vrot.slane %v5905, 4
      %v6460 = vsel %vm6003, %v6459, %v5897
      %v6462 = vunpack.c.l.s4 1934713408
      %v6463 = vunpack.c.0.s8 %v6462
      %v6464 = vperm.slane %v6460, %v6463
      %v6465 = vrot.slane %v6464, 4
      %v6466 = vsel %vm6003, 0.0, %v6465
      %v6467 = vrot.slane %v5921, 4
      %v6468 = vsel %vm6003, %v6467, %v5913
      %v6470 = vunpack.c.l.s4 1934713408
      %v6471 = vunpack.c.0.s8 %v6470
      %v6472 = vperm.slane %v6468, %v6471
      %v6473 = vrot.slane %v6472, 4
      %v6474 = vsel %vm6003, 0.0, %v6473
      %v6475 = vrot.slane %v5937, 4
      %v6476 = vsel %vm6003, %v6475, %v5929
      %v6478 = vunpack.c.l.s4 1934713408
      %v6479 = vunpack.c.0.s8 %v6478
      %v6480 = vperm.slane %v6476, %v6479
      %v6481 = vrot.slane %v6480, 4
      %v6482 = vsel %vm6003, 0.0, %v6481
      %v6483 = vrot.slane %v5953, 4
      %v6484 = vsel %vm6003, %v6483, %v5945
      %v6486 = vunpack.c.l.s4 1934713408
      %v6487 = vunpack.c.0.s8 %v6486
      %v6488 = vperm.slane %v6484, %v6487
      %v6489 = vrot.slane %v6488, 4
      %v6490 = vsel %vm6003, 0.0, %v6489
      %v6491 = vrot.slane %v5969, 4
      %v6492 = vsel %vm6003, %v6491, %v5961
      %v6494 = vunpack.c.l.s4 1934713408
      %v6495 = vunpack.c.0.s8 %v6494
      %v6496 = vperm.slane %v6492, %v6495
      %v6497 = vrot.slane %v6496, 4
      %v6498 = vsel %vm6003, 0.0, %v6497
      %v6499 = vrot.slane %v5985, 4
      %v6500 = vsel %vm6003, %v6499, %v5977
      %v6502 = vunpack.c.l.s4 1934713408
      %v6503 = vunpack.c.0.s8 %v6502
      %v6504 = vperm.slane %v6500, %v6503
      %v6505 = vrot.slane %v6504, 4
      %v6506 = vsel %vm6003, 0.0, %v6505
      %v6507 = vrot.slane %v6001, 4
      %v6508 = vsel %vm6003, %v6507, %v5993
      %v6510 = vunpack.c.l.s4 1934713408
      %v6511 = vunpack.c.0.s8 %v6510
      %v6512 = vperm.slane %v6508, %v6511
      %v6513 = vrot.slane %v6512, 4
      %v6514 = vsel %vm6003, 0.0, %v6513
      %6523 = vst [vmem:[#allocation1] ss:$4 sm:$0xff] %v6008
      %s6524 = scalar_lea.vmem [#allocation1], 1
      %6525 = vst [vmem:[%s6524] ss:$4 sm:$0xff] %v6016
      %s6526 = scalar_lea.vmem [#allocation1], 2
      %6527 = vst [vmem:[%s6526] ss:$4 sm:$0xff] %v6024
      %s6528 = scalar_lea.vmem [#allocation1], 3
      %6529 = vst [vmem:[%s6528] ss:$4 sm:$0xff] %v6032
      %s6530 = scalar_lea.vmem [#allocation1], 32
      %6531 = vst [vmem:[%s6530] ss:$4 sm:$0xff] %v6040
      %s6532 = scalar_lea.vmem [#allocation1], 33
      %6533 = vst [vmem:[%s6532] ss:$4 sm:$0xff] %v6048
      %s6534 = scalar_lea.vmem [#allocation1], 34
      %6535 = vst [vmem:[%s6534] ss:$4 sm:$0xff] %v6056
      %s6536 = scalar_lea.vmem [#allocation1], 35
      %6537 = vst [vmem:[%s6536] ss:$4 sm:$0xff] %v6064
      %v6538 = vld.sshfl [vmem:[#allocation1] sm:$0xff pattern:$0x73625140]
      %v6539 = vld.sshfl [vmem:[#allocation1 + $0x20] sm:$0xff pattern:$0x73625140]
      %6550 = vst [vmem:[#allocation1] ss:$4 sm:$0xff] %v6010
      %s6551 = scalar_lea.vmem [#allocation1], 1
      %6552 = vst [vmem:[%s6551] ss:$4 sm:$0xff] %v6018
      %s6553 = scalar_lea.vmem [#allocation1], 2
      %6554 = vst [vmem:[%s6553] ss:$4 sm:$0xff] %v6026
      %s6555 = scalar_lea.vmem [#allocation1], 3
      %6556 = vst [vmem:[%s6555] ss:$4 sm:$0xff] %v6034
      %s6557 = scalar_lea.vmem [#allocation1], 32
      %6558 = vst [vmem:[%s6557] ss:$4 sm:$0xff] %v6042
      %s6559 = scalar_lea.vmem [#allocation1], 33
      %6560 = vst [vmem:[%s6559] ss:$4 sm:$0xff] %v6050
      %s6561 = scalar_lea.vmem [#allocation1], 34
      %6562 = vst [vmem:[%s6561] ss:$4 sm:$0xff] %v6058
      %s6563 = scalar_lea.vmem [#allocation1], 35
      %6564 = vst [vmem:[%s6563] ss:$4 sm:$0xff] %v6066
      %v6565 = vld.sshfl [vmem:[#allocation1] sm:$0xff pattern:$0x73625140]
      %v6566 = vld.sshfl [vmem:[#allocation1 + $0x20] sm:$0xff pattern:$0x73625140]
      %6567 = vrot.lane.b32.xlu0 %v6565, 8
      %v6568 = vpop.permute.xlu0 %6567
      %6569 = vrot.lane.b32.xlu0 %v6566, 8
      %v6570 = vpop.permute.xlu0 %6569
      %6581 = vst [vmem:[#allocation1] ss:$4 sm:$0xff] %v6072
      %s6582 = scalar_lea.vmem [#allocation1], 1
      %6583 = vst [vmem:[%s6582] ss:$4 sm:$0xff] %v6080
      %s6584 = scalar_lea.vmem [#allocation1], 2
      %6585 = vst [vmem:[%s6584] ss:$4 sm:$0xff] %v6088
      %s6586 = scalar_lea.vmem [#allocation1], 3
      %6587 = vst [vmem:[%s6586] ss:$4 sm:$0xff] %v6096
      %s6588 = scalar_lea.vmem [#allocation1], 32
      %6589 = vst [vmem:[%s6588] ss:$4 sm:$0xff] %v6104
      %s6590 = scalar_lea.vmem [#allocation1], 33
      %6591 = vst [vmem:[%s6590] ss:$4 sm:$0xff] %v6112
      %s6592 = scalar_lea.vmem [#allocation1], 34
      %6593 = vst [vmem:[%s6592] ss:$4 sm:$0xff] %v6120
      %s6594 = scalar_lea.vmem [#allocation1], 35
      %6595 = vst [vmem:[%s6594] ss:$4 sm:$0xff] %v6128
      %v6596 = vld.sshfl [vmem:[#allocation1] sm:$0xff pattern:$0x73625140]
      %v6597 = vld.sshfl [vmem:[#allocation1 + $0x20] sm:$0xff pattern:$0x73625140]
      %6598 = vrot.lane.b32.xlu0 %v6596, 16
      %v6599 = vpop.permute.xlu0 %6598
      %6600 = vrot.lane.b32.xlu0 %v6597, 16
      %v6601 = vpop.permute.xlu0 %6600
      %6612 = vst [vmem:[#allocation1] ss:$4 sm:$0xff] %v6074
      %s6613 = scalar_lea.vmem [#allocation1], 1
      %6614 = vst [vmem:[%s6613] ss:$4 sm:$0xff] %v6082
      %s6615 = scalar_lea.vmem [#allocation1], 2
      %6616 = vst [vmem:[%s6615] ss:$4 sm:$0xff] %v6090
      %s6617 = scalar_lea.vmem [#allocation1], 3
      %6618 = vst [vmem:[%s6617] ss:$4 sm:$0xff] %v6098
      %s6619 = scalar_lea.vmem [#allocation1], 32
      %6620 = vst [vmem:[%s6619] ss:$4 sm:$0xff] %v6106
      %s6621 = scalar_lea.vmem [#allocation1], 33
      %6622 = vst [vmem:[%s6621] ss:$4 sm:$0xff] %v6114
      %s6623 = scalar_lea.vmem [#allocation1], 34
      %6624 = vst [vmem:[%s6623] ss:$4 sm:$0xff] %v6122
      %s6625 = scalar_lea.vmem [#allocation1], 35
      %6626 = vst [vmem:[%s6625] ss:$4 sm:$0xff] %v6130
      %v6627 = vld.sshfl [vmem:[#allocation1] sm:$0xff pattern:$0x73625140]
      %v6628 = vld.sshfl [vmem:[#allocation1 + $0x20] sm:$0xff pattern:$0x73625140]
      %6629 = vrot.lane.b32.xlu0 %v6627, 24
      %v6630 = vpop.permute.xlu0 %6629
      %6631 = vrot.lane.b32.xlu0 %v6628, 24
      %v6632 = vpop.permute.xlu0 %6631
      %6643 = vst [vmem:[#allocation1] ss:$4 sm:$0xff] %v6136
      %s6644 = scalar_lea.vmem [#allocation1], 1
      %6645 = vst [vmem:[%s6644] ss:$4 sm:$0xff] %v6144
      %s6646 = scalar_lea.vmem [#allocation1], 2
      %6647 = vst [vmem:[%s6646] ss:$4 sm:$0xff] %v6152
      %s6648 = scalar_lea.vmem [#allocation1], 3
      %6649 = vst [vmem:[%s6648] ss:$4 sm:$0xff] %v6160
      %s6650 = scalar_lea.vmem [#allocation1], 32
      %6651 = vst [vmem:[%s6650] ss:$4 sm:$0xff] %v6168
      %s6652 = scalar_lea.vmem [#allocation1], 33
      %6653 = vst [vmem:[%s6652] ss:$4 sm:$0xff] %v6176
      %s6654 = scalar_lea.vmem [#allocation1], 34
      %6655 = vst [vmem:[%s6654] ss:$4 sm:$0xff] %v6184
      %s6656 = scalar_lea.vmem [#allocation1], 35
      %6657 = vst [vmem:[%s6656] ss:$4 sm:$0xff] %v6192
      %v6658 = vld.sshfl [vmem:[#allocation1] sm:$0xff pattern:$0x73625140]
      %v6659 = vld.sshfl [vmem:[#allocation1 + $0x20] sm:$0xff pattern:$0x73625140]
      %6660 = vrot.lane.b32.xlu0 %v6658, 32
      %v6661 = vpop.permute.xlu0 %6660
      %6662 = vrot.lane.b32.xlu0 %v6659, 32
      %v6663 = vpop.permute.xlu0 %6662
      %6674 = vst [vmem:[#allocation1] ss:$4 sm:$0xff] %v6138
      %s6675 = scalar_lea.vmem [#allocation1], 1
      %6676 = vst [vmem:[%s6675] ss:$4 sm:$0xff] %v6146
      %s6677 = scalar_lea.vmem [#allocation1], 2
      %6678 = vst [vmem:[%s6677] ss:$4 sm:$0xff] %v6154
      %s6679 = scalar_lea.vmem [#allocation1], 3
      %6680 = vst [vmem:[%s6679] ss:$4 sm:$0xff] %v6162
      %s6681 = scalar_lea.vmem [#allocation1], 32
      %6682 = vst [vmem:[%s6681] ss:$4 sm:$0xff] %v6170
      %s6683 = scalar_lea.vmem [#allocation1], 33
      %6684 = vst [vmem:[%s6683] ss:$4 sm:$0xff] %v6178
      %s6685 = scalar_lea.vmem [#allocation1], 34
      %6686 = vst [vmem:[%s6685] ss:$4 sm:$0xff] %v6186
      %s6687 = scalar_lea.vmem [#allocation1], 35
      %6688 = vst [vmem:[%s6687] ss:$4 sm:$0xff] %v6194
      %v6689 = vld.sshfl [vmem:[#allocation1] sm:$0xff pattern:$0x73625140]
      %v6690 = vld.sshfl [vmem:[#allocation1 + $0x20] sm:$0xff pattern:$0x73625140]
      %6691 = vrot.lane.b32.xlu0 %v6689, 40
      %v6692 = vpop.permute.xlu0 %6691
      %6693 = vrot.lane.b32.xlu0 %v6690, 40
      %v6694 = vpop.permute.xlu0 %6693
      %6705 = vst [vmem:[#allocation1] ss:$4 sm:$0xff] %v6200
      %s6706 = scalar_lea.vmem [#allocation1], 1
      %6707 = vst [vmem:[%s6706] ss:$4 sm:$0xff] %v6208
      %s6708 = scalar_lea.vmem [#allocation1], 2
      %6709 = vst [vmem:[%s6708] ss:$4 sm:$0xff] %v6216
      %s6710 = scalar_lea.vmem [#allocation1], 3
      %6711 = vst [vmem:[%s6710] ss:$4 sm:$0xff] %v6224
      %s6712 = scalar_lea.vmem [#allocation1], 32
      %6713 = vst [vmem:[%s6712] ss:$4 sm:$0xff] %v6232
      %s6714 = scalar_lea.vmem [#allocation1], 33
      %6715 = vst [vmem:[%s6714] ss:$4 sm:$0xff] %v6240
      %s6716 = scalar_lea.vmem [#allocation1], 34
      %6717 = vst [vmem:[%s6716] ss:$4 sm:$0xff] %v6248
      %s6718 = scalar_lea.vmem [#allocation1], 35
      %6719 = vst [vmem:[%s6718] ss:$4 sm:$0xff] %v6256
      %v6720 = vld.sshfl [vmem:[#allocation1] sm:$0xff pattern:$0x73625140]
      %v6721 = vld.sshfl [vmem:[#allocation1 + $0x20] sm:$0xff pattern:$0x73625140]
      %6722 = vrot.lane.b32.xlu0 %v6720, 48
      %v6723 = vpop.permute.xlu0 %6722
      %6724 = vrot.lane.b32.xlu0 %v6721, 48
      %v6725 = vpop.permute.xlu0 %6724
      %6736 = vst [vmem:[#allocation1] ss:$4 sm:$0xff] %v6202
      %s6737 = scalar_lea.vmem [#allocation1], 1
      %6738 = vst [vmem:[%s6737] ss:$4 sm:$0xff] %v6210
      %s6739 = scalar_lea.vmem [#allocation1], 2
      %6740 = vst [vmem:[%s6739] ss:$4 sm:$0xff] %v6218
      %s6741 = scalar_lea.vmem [#allocation1], 3
      %6742 = vst [vmem:[%s6741] ss:$4 sm:$0xff] %v6226
      %s6743 = scalar_lea.vmem [#allocation1], 32
      %6744 = vst [vmem:[%s6743] ss:$4 sm:$0xff] %v6234
      %s6745 = scalar_lea.vmem [#allocation1], 33
      %6746 = vst [vmem:[%s6745] ss:$4 sm:$0xff] %v6242
      %s6747 = scalar_lea.vmem [#allocation1], 34
      %6748 = vst [vmem:[%s6747] ss:$4 sm:$0xff] %v6250
      %s6749 = scalar_lea.vmem [#allocation1], 35
      %6750 = vst [vmem:[%s6749] ss:$4 sm:$0xff] %v6258
      %v6751 = vld.sshfl [vmem:[#allocation1] sm:$0xff pattern:$0x73625140]
      %v6752 = vld.sshfl [vmem:[#allocation1 + $0x20] sm:$0xff pattern:$0x73625140]
      %6753 = vrot.lane.b32.xlu0 %v6751, 56
      %v6754 = vpop.permute.xlu0 %6753
      %6755 = vrot.lane.b32.xlu0 %v6752, 56
      %v6756 = vpop.permute.xlu0 %6755
      %6767 = vst [vmem:[#allocation1] ss:$4 sm:$0xff] %v6264
      %s6768 = scalar_lea.vmem [#allocation1], 1
      %6769 = vst [vmem:[%s6768] ss:$4 sm:$0xff] %v6272
      %s6770 = scalar_lea.vmem [#allocation1], 2
      %6771 = vst [vmem:[%s6770] ss:$4 sm:$0xff] %v6280
      %s6772 = scalar_lea.vmem [#allocation1], 3
      %6773 = vst [vmem:[%s6772] ss:$4 sm:$0xff] %v6288
      %s6774 = scalar_lea.vmem [#allocation1], 32
      %6775 = vst [vmem:[%s6774] ss:$4 sm:$0xff] %v6296
      %s6776 = scalar_lea.vmem [#allocation1], 33
      %6777 = vst [vmem:[%s6776] ss:$4 sm:$0xff] %v6304
      %s6778 = scalar_lea.vmem [#allocation1], 34
      %6779 = vst [vmem:[%s6778] ss:$4 sm:$0xff] %v6312
      %s6780 = scalar_lea.vmem [#allocation1], 35
      %6781 = vst [vmem:[%s6780] ss:$4 sm:$0xff] %v6320
      %v6782 = vld.sshfl [vmem:[#allocation1] sm:$0xff pattern:$0x73625140]
      %v6783 = vld.sshfl [vmem:[#allocation1 + $0x20] sm:$0xff pattern:$0x73625140]
      %6784 = vrot.lane.b32.xlu0 %v6782, 64
      %v6785 = vpop.permute.xlu0 %6784
      %6786 = vrot.lane.b32.xlu0 %v6783, 64
      %v6787 = vpop.permute.xlu0 %6786
      %6798 = vst [vmem:[#allocation1] ss:$4 sm:$0xff] %v6266
      %s6799 = scalar_lea.vmem [#allocation1], 1
      %6800 = vst [vmem:[%s6799] ss:$4 sm:$0xff] %v6274
      %s6801 = scalar_lea.vmem [#allocation1], 2
      %6802 = vst [vmem:[%s6801] ss:$4 sm:$0xff] %v6282
      %s6803 = scalar_lea.vmem [#allocation1], 3
      %6804 = vst [vmem:[%s6803] ss:$4 sm:$0xff] %v6290
      %s6805 = scalar_lea.vmem [#allocation1], 32
      %6806 = vst [vmem:[%s6805] ss:$4 sm:$0xff] %v6298
      %s6807 = scalar_lea.vmem [#allocation1], 33
      %6808 = vst [vmem:[%s6807] ss:$4 sm:$0xff] %v6306
      %s6809 = scalar_lea.vmem [#allocation1], 34
      %6810 = vst [vmem:[%s6809] ss:$4 sm:$0xff] %v6314
      %s6811 = scalar_lea.vmem [#allocation1], 35
      %6812 = vst [vmem:[%s6811] ss:$4 sm:$0xff] %v6322
      %v6813 = vld.sshfl [vmem:[#allocation1] sm:$0xff pattern:$0x73625140]
      %v6814 = vld.sshfl [vmem:[#allocation1 + $0x20] sm:$0xff pattern:$0x73625140]
      %6815 = vrot.lane.b32.xlu0 %v6813, 72
      %v6816 = vpop.permute.xlu0 %6815
      %6817 = vrot.lane.b32.xlu0 %v6814, 72
      %v6818 = vpop.permute.xlu0 %6817
      %6829 = vst [vmem:[#allocation1] ss:$4 sm:$0xff] %v6328
      %s6830 = scalar_lea.vmem [#allocation1], 1
      %6831 = vst [vmem:[%s6830] ss:$4 sm:$0xff] %v6336
      %s6832 = scalar_lea.vmem [#allocation1], 2
      %6833 = vst [vmem:[%s6832] ss:$4 sm:$0xff] %v6344
      %s6834 = scalar_lea.vmem [#allocation1], 3
      %6835 = vst [vmem:[%s6834] ss:$4 sm:$0xff] %v6352
      %s6836 = scalar_lea.vmem [#allocation1], 32
      %6837 = vst [vmem:[%s6836] ss:$4 sm:$0xff] %v6360
      %s6838 = scalar_lea.vmem [#allocation1], 33
      %6839 = vst [vmem:[%s6838] ss:$4 sm:$0xff] %v6368
      %s6840 = scalar_lea.vmem [#allocation1], 34
      %6841 = vst [vmem:[%s6840] ss:$4 sm:$0xff] %v6376
      %s6842 = scalar_lea.vmem [#allocation1], 35
      %6843 = vst [vmem:[%s6842] ss:$4 sm:$0xff] %v6384
      %v6844 = vld.sshfl [vmem:[#allocation1] sm:$0xff pattern:$0x73625140]
      %v6845 = vld.sshfl [vmem:[#allocation1 + $0x20] sm:$0xff pattern:$0x73625140]
      %6846 = vrot.lane.b32.xlu0 %v6844, 80
      %v6847 = vpop.permute.xlu0 %6846
      %6848 = vrot.lane.b32.xlu0 %v6845, 80
      %v6849 = vpop.permute.xlu0 %6848
      %6860 = vst [vmem:[#allocation1] ss:$4 sm:$0xff] %v6330
      %s6861 = scalar_lea.vmem [#allocation1], 1
      %6862 = vst [vmem:[%s6861] ss:$4 sm:$0xff] %v6338
      %s6863 = scalar_lea.vmem [#allocation1], 2
      %6864 = vst [vmem:[%s6863] ss:$4 sm:$0xff] %v6346
      %s6865 = scalar_lea.vmem [#allocation1], 3
      %6866 = vst [vmem:[%s6865] ss:$4 sm:$0xff] %v6354
      %s6867 = scalar_lea.vmem [#allocation1], 32
      %6868 = vst [vmem:[%s6867] ss:$4 sm:$0xff] %v6362
      %s6869 = scalar_lea.vmem [#allocation1], 33
      %6870 = vst [vmem:[%s6869] ss:$4 sm:$0xff] %v6370
      %s6871 = scalar_lea.vmem [#allocation1], 34
      %6872 = vst [vmem:[%s6871] ss:$4 sm:$0xff] %v6378
      %s6873 = scalar_lea.vmem [#allocation1], 35
      %6874 = vst [vmem:[%s6873] ss:$4 sm:$0xff] %v6386
      %v6875 = vld.sshfl [vmem:[#allocation1] sm:$0xff pattern:$0x73625140]
      %v6876 = vld.sshfl [vmem:[#allocation1 + $0x20] sm:$0xff pattern:$0x73625140]
      %6877 = vrot.lane.b32.xlu0 %v6875, 88
      %v6878 = vpop.permute.xlu0 %6877
      %6879 = vrot.lane.b32.xlu0 %v6876, 88
      %v6880 = vpop.permute.xlu0 %6879
      %6891 = vst [vmem:[#allocation1] ss:$4 sm:$0xff] %v6392
      %s6892 = scalar_lea.vmem [#allocation1], 1
      %6893 = vst [vmem:[%s6892] ss:$4 sm:$0xff] %v6400
      %s6894 = scalar_lea.vmem [#allocation1], 2
      %6895 = vst [vmem:[%s6894] ss:$4 sm:$0xff] %v6408
      %s6896 = scalar_lea.vmem [#allocation1], 3
      %6897 = vst [vmem:[%s6896] ss:$4 sm:$0xff] %v6416
      %s6898 = scalar_lea.vmem [#allocation1], 32
      %6899 = vst [vmem:[%s6898] ss:$4 sm:$0xff] %v6424
      %s6900 = scalar_lea.vmem [#allocation1], 33
      %6901 = vst [vmem:[%s6900] ss:$4 sm:$0xff] %v6432
      %s6902 = scalar_lea.vmem [#allocation1], 34
      %6903 = vst [vmem:[%s6902] ss:$4 sm:$0xff] %v6440
      %s6904 = scalar_lea.vmem [#allocation1], 35
      %6905 = vst [vmem:[%s6904] ss:$4 sm:$0xff] %v6448
      %v6906 = vld.sshfl [vmem:[#allocation1] sm:$0xff pattern:$0x73625140]
      %v6907 = vld.sshfl [vmem:[#allocation1 + $0x20] sm:$0xff pattern:$0x73625140]
      %6908 = vrot.lane.b32.xlu0 %v6906, 96
      %v6909 = vpop.permute.xlu0 %6908
      %6910 = vrot.lane.b32.xlu0 %v6907, 96
      %v6911 = vpop.permute.xlu0 %6910
      %6922 = vst [vmem:[#allocation1] ss:$4 sm:$0xff] %v6394
      %s6923 = scalar_lea.vmem [#allocation1], 1
      %6924 = vst [vmem:[%s6923] ss:$4 sm:$0xff] %v6402
      %s6925 = scalar_lea.vmem [#allocation1], 2
      %6926 = vst [vmem:[%s6925] ss:$4 sm:$0xff] %v6410
      %s6927 = scalar_lea.vmem [#allocation1], 3
      %6928 = vst [vmem:[%s6927] ss:$4 sm:$0xff] %v6418
      %s6929 = scalar_lea.vmem [#allocation1], 32
      %6930 = vst [vmem:[%s6929] ss:$4 sm:$0xff] %v6426
      %s6931 = scalar_lea.vmem [#allocation1], 33
      %6932 = vst [vmem:[%s6931] ss:$4 sm:$0xff] %v6434
      %s6933 = scalar_lea.vmem [#allocation1], 34
      %6934 = vst [vmem:[%s6933] ss:$4 sm:$0xff] %v6442
      %s6935 = scalar_lea.vmem [#allocation1], 35
      %6936 = vst [vmem:[%s6935] ss:$4 sm:$0xff] %v6450
      %v6937 = vld.sshfl [vmem:[#allocation1] sm:$0xff pattern:$0x73625140]
      %v6938 = vld.sshfl [vmem:[#allocation1 + $0x20] sm:$0xff pattern:$0x73625140]
      %6939 = vrot.lane.b32.xlu0 %v6937, 104
      %v6940 = vpop.permute.xlu0 %6939
      %6941 = vrot.lane.b32.xlu0 %v6938, 104
      %v6942 = vpop.permute.xlu0 %6941
      %6953 = vst [vmem:[#allocation1] ss:$4 sm:$0xff] %v6456
      %s6954 = scalar_lea.vmem [#allocation1], 1
      %6955 = vst [vmem:[%s6954] ss:$4 sm:$0xff] %v6464
      %s6956 = scalar_lea.vmem [#allocation1], 2
      %6957 = vst [vmem:[%s6956] ss:$4 sm:$0xff] %v6472
      %s6958 = scalar_lea.vmem [#allocation1], 3
      %6959 = vst [vmem:[%s6958] ss:$4 sm:$0xff] %v6480
      %s6960 = scalar_lea.vmem [#allocation1], 32
      %6961 = vst [vmem:[%s6960] ss:$4 sm:$0xff] %v6488
      %s6962 = scalar_lea.vmem [#allocation1], 33
      %6963 = vst [vmem:[%s6962] ss:$4 sm:$0xff] %v6496
      %s6964 = scalar_lea.vmem [#allocation1], 34
      %6965 = vst [vmem:[%s6964] ss:$4 sm:$0xff] %v6504
      %s6966 = scalar_lea.vmem [#allocation1], 35
      %6967 = vst [vmem:[%s6966] ss:$4 sm:$0xff] %v6512
      %v6968 = vld.sshfl [vmem:[#allocation1] sm:$0xff pattern:$0x73625140]
      %v6969 = vld.sshfl [vmem:[#allocation1 + $0x20] sm:$0xff pattern:$0x73625140]
      %6970 = vrot.lane.b32.xlu0 %v6968, 112
      %v6971 = vpop.permute.xlu0 %6970
      %6972 = vrot.lane.b32.xlu0 %v6969, 112
      %v6973 = vpop.permute.xlu0 %6972
      %6984 = vst [vmem:[#allocation1] ss:$4 sm:$0xff] %v6458
      %s6985 = scalar_lea.vmem [#allocation1], 1
      %6986 = vst [vmem:[%s6985] ss:$4 sm:$0xff] %v6466
      %s6987 = scalar_lea.vmem [#allocation1], 2
      %6988 = vst [vmem:[%s6987] ss:$4 sm:$0xff] %v6474
      %s6989 = scalar_lea.vmem [#allocation1], 3
      %6990 = vst [vmem:[%s6989] ss:$4 sm:$0xff] %v6482
      %s6991 = scalar_lea.vmem [#allocation1], 32
      %6992 = vst [vmem:[%s6991] ss:$4 sm:$0xff] %v6490
      %s6993 = scalar_lea.vmem [#allocation1], 33
      %6994 = vst [vmem:[%s6993] ss:$4 sm:$0xff] %v6498
      %s6995 = scalar_lea.vmem [#allocation1], 34
      %6996 = vst [vmem:[%s6995] ss:$4 sm:$0xff] %v6506
      %s6997 = scalar_lea.vmem [#allocation1], 35
      %6998 = vst [vmem:[%s6997] ss:$4 sm:$0xff] %v6514
      %v6999 = vld.sshfl [vmem:[#allocation1] sm:$0xff pattern:$0x73625140]
      %v7000 = vld.sshfl [vmem:[#allocation1 + $0x20] sm:$0xff pattern:$0x73625140]
      %7001 = vrot.lane.b32.xlu0 %v6999, 120
      %v7002 = vpop.permute.xlu0 %7001
      %7003 = vrot.lane.b32.xlu0 %v7000, 120
      %v7004 = vpop.permute.xlu0 %7003
      %v7007 = vsel %vm737, %v6538, %v6568
      %v7008 = vsel %vm737, %v6539, %v6570
      %vm7009 = vcmask 130048
      %v7010 = vsel %vm7009, %v7007, %v6599
      %v7011 = vsel %vm7009, %v7008, %v6601
      %vm7012 = vcmask 195584
      %v7013 = vsel %vm7012, %v7010, %v6630
      %v7014 = vsel %vm7012, %v7011, %v6632
      %vm7015 = vcmask 261120
      %v7016 = vsel %vm7015, %v7013, %v6661
      %v7017 = vsel %vm7015, %v7014, %v6663
      %vm7018 = vcmask 326656
      %v7019 = vsel %vm7018, %v7016, %v6692
      %v7020 = vsel %vm7018, %v7017, %v6694
      %vm7021 = vcmask 392192
      %v7022 = vsel %vm7021, %v7019, %v6723
      %v7023 = vsel %vm7021, %v7020, %v6725
      %vm7024 = vcmask 457728
      %v7025 = vsel %vm7024, %v7022, %v6754
      %v7026 = vsel %vm7024, %v7023, %v6756
      %vm7027 = vcmask 523264
      %v7028 = vsel %vm7027, %v7025, %v6785
      %v7029 = vsel %vm7027, %v7026, %v6787
      %vm7030 = vcmask 588800
      %v7031 = vsel %vm7030, %v7028, %v6816
      %v7032 = vsel %vm7030, %v7029, %v6818
      %vm7033 = vcmask 654336
      %v7034 = vsel %vm7033, %v7031, %v6847
      %v7035 = vsel %vm7033, %v7032, %v6849
      %vm7036 = vcmask 719872
      %v7037 = vsel %vm7036, %v7034, %v6878
      %v7038 = vsel %vm7036, %v7035, %v6880
      %vm7039 = vcmask 785408
      %v7040 = vsel %vm7039, %v7037, %v6909
      %v7041 = vsel %vm7039, %v7038, %v6911
      %vm7042 = vcmask 850944
      %v7043 = vsel %vm7042, %v7040, %v6940
      %v7044 = vsel %vm7042, %v7041, %v6942
      %vm7045 = vcmask 916480
      %v7046 = vsel %vm7045, %v7043, %v6971
      %v7047 = vsel %vm7045, %v7044, %v6973
      %vm7048 = vcmask 982016
      %v7049 = vsel %vm7048, %v7046, %v7002
      %v7050 = vsel %vm7048, %v7047, %v7004
      %7051 = vst [vmem:[%s224] sm:$0xff] %v7049
      %7052 = vst [vmem:[%s224 + $0x8] sm:$0xff] %v7050
      %p7053 = scmp.lt.s32.totalorder %s16, 1
      %s7054 = scalar_select %p7053, %s16, 1
      %s7055 = smul.addr %s7054, 2
      %s7056 = smul.addr %s7055, 8
      %s7057 = scalar_lea.vmem %s5, %s7056
      // Predicated region
      $region41: #{elastic_forward.1} parent=39 // pred_check
        %p7058 = pneg %p144
      $region42: #{elastic_forward.1} parent=39 // pred_check_branch
        %7060 = sbr.rel (%p7058) target = $region44
      $region43: #{elastic_forward.1} parent=39 // pred_region
        _
      $region44: #{elastic_forward.1} parent=39 // pred_fallthru
        _
    $region40: #{elastic_forward.1} parent=5 // pred_fallthru
      _
    %p7061 = scmp.le.s32.totalorder 2, %s11
    // Predicated region
    $region45: #{elastic_forward.1} parent=5 // pred_check
      %p7062 = pneg %p7061
    $region46: #{elastic_forward.1} parent=5 // pred_check_branch
      %7064 = sbr.rel (%p7062) target = $region48
    $region47: #{elastic_forward.1} parent=5 // pred_region
      %s7065 = ssub.s32 %s11, 2
      // Predicated region
      $region49: #{elastic_forward.1} parent=47 // pred_check
        %p7066 = pneg %p150
      $region50: #{elastic_forward.1} parent=47 // pred_check_branch
        %7068 = sbr.rel (%p7066) target = $region52
      $region51: #{elastic_forward.1} parent=47 // pred_region
        %p7069 = scmp.lt.s32.totalorder %s17, 1
        %s7070 = scalar_select %p7069, %s17, 1
        %s7071 = smul.addr %s7070, 2
        %s7072 = smul.addr %s7071, 8
        %s7073 = scalar_lea.vmem %s5, %s7072
      $region52: #{elastic_forward.1} parent=47 // pred_fallthru
        _
    $region48: #{elastic_forward.1} parent=5 // pred_fallthru
      _
  $region6: #{elastic_forward.1} parent=0 // loop_footer
    %s15 = sadd.s32 1, %s11
  $region7: #{elastic_forward.1} parent=0 // loop_footer_branch
    %10 = sbr.rel target = $region3
  $region8: #{elastic_forward.1} parent=0 // loop_exit
    _

</llo_original>
